<compile_context>
chip_gen: v7x
topology: tpu7x:2x2x1
jax: 0.10.0
libtpu: 0.0.40
codegen_flags: <defaults>
</compile_context>

<pallas_src>
import numpy as np
import jax
import jax.numpy as jnp
from jax.experimental import pallas as pl
from jax.experimental.pallas import tpu as pltpu

MAXN_STATE_NODES = 400
NODE_KEY_LIST = ['index', 'checkable', 'checked', 'clickable', 'enabled',
                 'focusable', 'focused', 'scrollable', 'long-clickable',
                 'password', 'selected', 'visible-to-user', 'bounds',
                 'content-desc', 'resource-id', 'class', 'package']
N_KEYS = len(NODE_KEY_LIST)          # 17
N_KERNELS = [10, 10, 10]
KERNEL_SIZES = [(1, 1), (2, 2), (3, 3)]

# Fused-column layout: per-branch group [wo * 10] columns, wo-major / c-minor.
_WOS = [N_KEYS - kw + 1 for (_, kw) in KERNEL_SIZES]            # [17, 16, 15]
_GROUP_SIZES = [wo * c for wo, c in zip(_WOS, N_KERNELS)]       # [170, 160, 150]
_GROUP_OFFS = list(np.cumsum([0] + _GROUP_SIZES[:-1]))          # [0, 170, 330]
N_COLS = int(sum(_GROUP_SIZES))                                 # 480
MAX_KH = max(kh for (kh, _) in KERNEL_SIZES)                    # 3
FEAT_PAD = 32                                                   # 30 -> 32


# ---------------------------------------------------------------------------
# Pallas kernel
# ---------------------------------------------------------------------------
def _state_encoder_kernel(x_ref, t0_ref, t1_ref, t2_ref, limit_ref,
                          b1_ref, b2_ref, b3_ref, wl_ref, bl_ref, out_ref):
    h = MAXN_STATE_NODES
    x = x_ref[...]                                    # (400, 17E) bf16, read once

    # One lane-dense MXU matmul per kernel row tap (N = 480 each); all three
    # share the same 480-column layout (zero blocks where a branch has no tap),
    # so combining them below needs no lane slicing at all.
    y0 = jnp.dot(x, t0_ref[...], preferred_element_type=jnp.float32)
    y1 = jnp.dot(x, t1_ref[...], preferred_element_type=jnp.float32)
    y2 = jnp.dot(x, t2_ref[...], preferred_element_type=jnp.float32)

    # Align row h+dh -> h with an XLU rotate (no unaligned sublane slices),
    # then a plain full-array add over the kernel rows.
    conv = (y0
            + pltpu.roll(y1, h - 1, 0)                # rolled[r] = y1[r + 1]
            + pltpu.roll(y2, h - 2, 0))               # rolled[r] = y2[r + 2]

    # Rows >= 400-(kh-1) contain wrapped garbage for the kh>1 branches: mask
    # them with -inf (per-column valid-row limit) before the global max.
    row = jax.lax.broadcasted_iota(jnp.int32, (h, 1), 0)
    conv = jnp.where(row < limit_ref[...], conv, -jnp.inf)

    # Global max pool, stage 1: sublane reduce over H (400 -> 1 row).
    m = jnp.max(conv, axis=0, keepdims=True)          # (1, 480)

    # Stage 2: per-branch max over the wo lane groups, as a log-depth pairwise
    # tree (replaces the old serial loop of ~45 tiny unaligned maxes).
    def group_max(r, n, c):
        if n == 1:
            return r
        half = n // 2
        a = group_max(r[:, :half * c], half, c)
        b = group_max(r[:, half * c:], n - half, c)
        return jnp.maximum(a, b)

    feats = []
    for off, sz, wo, c, b_ref in zip(_GROUP_OFFS, _GROUP_SIZES, _WOS,
                                     N_KERNELS, (b1_ref, b2_ref, b3_ref)):
        g = group_max(m[:, off:off + sz], wo, c)       # (1, 10)
        # bias + ReLU commute with the max -> applied once per channel.
        feats.append(jnp.maximum(g + b_ref[...], 0.0))
    feats.append(jnp.zeros((1, FEAT_PAD - sum(N_KERNELS)), jnp.float32))
    frow = jnp.concatenate(feats, axis=1)              # (1, 32)

    # Single fused final linear (zero-padded (32, E) weight) + ReLU.
    out = jnp.dot(frow, wl_ref[...], preferred_element_type=jnp.float32) + bl_ref[...]
    out_ref[...] = jnp.maximum(out, 0.0)


# ---------------------------------------------------------------------------
# One-time (load-time) weight re-layout for the kernel.
# ---------------------------------------------------------------------------
def _width_toeplitz(w_hwio, dh):
    """T of shape (17*E, Wo*C) such that
       (x2d @ T)[h, wo*C + c] == sum_{dw,e} x[h, wo+dw, e] * w[dh, dw, e, c]."""
    kh, kw, E, C = w_hwio.shape
    wo_n = N_KEYS - kw + 1
    w_np = np.asarray(w_hwio, dtype=np.float32)
    t = np.zeros((N_KEYS, E, wo_n, C), dtype=np.float32)
    for wo in range(wo_n):
        for dw in range(kw):
            t[wo + dw, :, wo, :] = w_np[dh, dw]
    return t.reshape(N_KEYS * E, wo_n * C)


def pack_params(params, weight_dtype=jnp.bfloat16):
    """Conv weights -> three fused per-dh (17E, 480) bf16 Toeplitz matrices
    (zero column blocks where a branch has no dh tap); final Linear weight
    zero-padded to a single (32, E) block; per-column valid-row limits."""
    E = params["convs"][0][0].shape[2]
    K = N_KEYS * E
    taps = [np.zeros((K, N_COLS), np.float32) for _ in range(MAX_KH)]
    limit = np.zeros((1, N_COLS), np.int32)
    for (kh, kw), (w, _), off, sz in zip(KERNEL_SIZES, params["convs"],
                                         _GROUP_OFFS, _GROUP_SIZES):
        for dh in range(kh):
            taps[dh][:, off:off + sz] = _width_toeplitz(w, dh)
        limit[0, off:off + sz] = MAXN_STATE_NODES - (kh - 1)
    t_mats = tuple(jnp.asarray(t, dtype=weight_dtype) for t in taps)
    biases = tuple(jnp.asarray(b, jnp.float32).reshape(1, -1)
                   for (_, b) in params["convs"])
    wl, bl = params["linear"]
    wl_pad = np.zeros((FEAT_PAD, wl.shape[1]), np.float32)
    wl_pad[:wl.shape[0], :] = np.asarray(wl, np.float32)
    return {"t": t_mats, "b": biases, "limit": jnp.asarray(limit),
            "wl": jnp.asarray(wl_pad), "bl": jnp.asarray(bl, jnp.float32)}


# ---------------------------------------------------------------------------
# Wrapper
# ---------------------------------------------------------------------------
def _full_spec(shape):
    nd = len(shape)
    return pl.BlockSpec(shape, lambda i, _nd=nd: (0,) * _nd)


def state_encoder_forward(arg_seqs, packed):
    """arg_seqs: (B=1, 400, 17, E) float32 (NHWC).  Returns (1, E)."""
    B, H, W, E = arg_seqs.shape
    assert B == 1 and H == MAXN_STATE_NODES and W == N_KEYS

    # Free contiguous view + one-time bf16 cast (halves the x DMA bytes).
    x2d = arg_seqs.reshape(H, W * E).astype(jnp.bfloat16)

    operands = (x2d, *packed["t"], packed["limit"], *packed["b"],
                packed["wl"], packed["bl"])
    in_specs = [_full_spec(op.shape) for op in operands]

    return pl.pallas_call(
        _state_encoder_kernel,
        out_shape=jax.ShapeDtypeStruct((1, E), jnp.float32),
        grid=(1,),
        in_specs=in_specs,
        out_specs=_full_spec((1, E)),
        # ~2-4 MB footprint -> fits default scoped VMEM on v5e / v6e / v7x;
        # no explicit vmem_limit_bytes needed.
        compiler_params=pltpu.CompilerParams(
            dimension_semantics=("arbitrary",)),
    )(*operands)


# ---------------------------------------------------------------------------
# Deterministic synthetic parameters (shapes from StateEncoder.__init__).
# ---------------------------------------------------------------------------
def make_params(embedding_dim, key):
    keys = jax.random.split(key, 8)
    convs = []
    for i, (kh, kw) in enumerate(KERNEL_SIZES):
        w = 0.05 * jax.random.normal(
            keys[2 * i], (kh, kw, embedding_dim, N_KERNELS[i]), jnp.float32)  # HWIO
        b = 0.05 * jax.random.normal(keys[2 * i + 1], (1, N_KERNELS[i]), jnp.float32)
        convs.append((w, b))
    wl = 0.05 * jax.random.normal(keys[6], (sum(N_KERNELS), embedding_dim), jnp.float32)
    bl = 0.05 * jax.random.normal(keys[7], (1, embedding_dim), jnp.float32)
    return {"convs": convs, "linear": (wl, bl)}


# ---------------------------------------------------------------------------
# Pure-JAX reference (f32 lax.conv) for correctness cross-check.
# ---------------------------------------------------------------------------
def reference_forward(arg_seqs, params):
    feats = []
    for (kh, kw), (w, b), nk in zip(KERNEL_SIZES, params["convs"], N_KERNELS):
        y = jax.lax.conv_general_dilated(
            arg_seqs, w, window_strides=(1, 1), padding="VALID",
            dimension_numbers=("NHWC", "HWIO", "NHWC"))
        y = jnp.maximum(y + b.reshape(1, 1, 1, nk), 0.0)
        feats.append(jnp.max(y, axis=(1, 2)))                  # (B, nk)
    feat = jnp.concatenate(feats, axis=1)                      # (B, 30)
    wl, bl = params["linear"]
    return jnp.maximum(feat @ wl + bl, 0.0)


if __name__ == "__main__":
    EMBED_DIM = 16                                             # arg_embedding_dim

    key = jax.random.PRNGKey(0)
    key_x, key_p = jax.random.split(key)
    arg_seqs = jax.random.normal(
        key_x, (1, MAXN_STATE_NODES, N_KEYS, EMBED_DIM), jnp.float32)
    params = make_params(EMBED_DIM, key_p)
    packed = pack_params(params)

    out = jax.block_until_ready(state_encoder_forward(arg_seqs, packed))
    ref = jax.block_until_ready(reference_forward(arg_seqs, params))

    assert out.shape == (1, EMBED_DIM)
    # bf16 inputs / f32 accumulation vs. f32 reference: ~1e-3 error observed,
    # 1e-2 tolerance per review guidance.
    assert jnp.allclose(out, ref, rtol=1e-2, atol=1e-2), (out, ref)
    print("KERNEL_OK")
</pallas_src>

<mosaic_0001>
module attributes {stable_mosaic.version = 11 : i64} {
  func.func @_state_encoder_kernel(%arg0: i32, %arg1: memref<400x272xbf16, #tpu.memory_space<vmem>>, %arg2: memref<272x480xbf16, #tpu.memory_space<vmem>>, %arg3: memref<272x480xbf16, #tpu.memory_space<vmem>>, %arg4: memref<272x480xbf16, #tpu.memory_space<vmem>>, %arg5: memref<1x480xi32, #tpu.memory_space<vmem>>, %arg6: memref<1x10xf32, #tpu.memory_space<vmem>>, %arg7: memref<1x10xf32, #tpu.memory_space<vmem>>, %arg8: memref<1x10xf32, #tpu.memory_space<vmem>>, %arg9: memref<32x16xf32, #tpu.memory_space<vmem>>, %arg10: memref<1x16xf32, #tpu.memory_space<vmem>>, %arg11: memref<1x16xf32, #tpu.memory_space<vmem>>) attributes {dimension_semantics = [#tpu.dimension_semantics<arbitrary>], iteration_bounds = array<i64: 1>, scalar_prefetch = 0 : i64, scratch_operands = 0 : i64, tpu.core_type = #tpu.core_type<tc>, window_params = [{pipeline_mode = #tpu.pipeline_mode<synchronous>, transform_indices = @transform_0, window_bounds = array<i64: 400, 272>}, {pipeline_mode = #tpu.pipeline_mode<synchronous>, transform_indices = @transform_1, window_bounds = array<i64: 272, 480>}, {pipeline_mode = #tpu.pipeline_mode<synchronous>, transform_indices = @transform_2, window_bounds = array<i64: 272, 480>}, {pipeline_mode = #tpu.pipeline_mode<synchronous>, transform_indices = @transform_3, window_bounds = array<i64: 272, 480>}, {pipeline_mode = #tpu.pipeline_mode<synchronous>, transform_indices = @transform_4, window_bounds = array<i64: 1, 480>}, {pipeline_mode = #tpu.pipeline_mode<synchronous>, transform_indices = @transform_5, window_bounds = array<i64: 1, 10>}, {pipeline_mode = #tpu.pipeline_mode<synchronous>, transform_indices = @transform_6, window_bounds = array<i64: 1, 10>}, {pipeline_mode = #tpu.pipeline_mode<synchronous>, transform_indices = @transform_7, window_bounds = array<i64: 1, 10>}, {pipeline_mode = #tpu.pipeline_mode<synchronous>, transform_indices = @transform_8, window_bounds = array<i64: 32, 16>}, {pipeline_mode = #tpu.pipeline_mode<synchronous>, transform_indices = @transform_9, window_bounds = array<i64: 1, 16>}, {pipeline_mode = #tpu.pipeline_mode<synchronous>, transform_indices = @transform_10, window_bounds = array<i64: 1, 16>}]} {
    %c0 = arith.constant 0 : index
    %c0_0 = arith.constant 0 : index
    %0 = vector.load %arg1[%c0, %c0_0] : memref<400x272xbf16, #tpu.memory_space<vmem>>, vector<400x272xbf16>
    %c0_1 = arith.constant 0 : index
    %c0_2 = arith.constant 0 : index
    %1 = vector.load %arg2[%c0_1, %c0_2] : memref<272x480xbf16, #tpu.memory_space<vmem>>, vector<272x480xbf16>
    %cst = arith.constant dense<0.000000e+00> : vector<400x480xf32>
    %2 = tpu.matmul %0, %1, %cst {dimension_numbers = #tpu.dot_dimension_numbers<[1], [0], [0], [1], [0, 0, 1, 1], [], []>} : vector<400x272xbf16>, vector<272x480xbf16>, vector<400x480xf32> -> vector<400x480xf32>
    %c0_3 = arith.constant 0 : index
    %c0_4 = arith.constant 0 : index
    %3 = vector.load %arg3[%c0_3, %c0_4] : memref<272x480xbf16, #tpu.memory_space<vmem>>, vector<272x480xbf16>
    %cst_5 = arith.constant dense<0.000000e+00> : vector<400x480xf32>
    %4 = tpu.matmul %0, %3, %cst_5 {dimension_numbers = #tpu.dot_dimension_numbers<[1], [0], [0], [1], [0, 0, 1, 1], [], []>} : vector<400x272xbf16>, vector<272x480xbf16>, vector<400x480xf32> -> vector<400x480xf32>
    %c0_6 = arith.constant 0 : index
    %c0_7 = arith.constant 0 : index
    %5 = vector.load %arg4[%c0_6, %c0_7] : memref<272x480xbf16, #tpu.memory_space<vmem>>, vector<272x480xbf16>
    %cst_8 = arith.constant dense<0.000000e+00> : vector<400x480xf32>
    %6 = tpu.matmul %0, %5, %cst_8 {dimension_numbers = #tpu.dot_dimension_numbers<[1], [0], [0], [1], [0, 0, 1, 1], [], []>} : vector<400x272xbf16>, vector<272x480xbf16>, vector<400x480xf32> -> vector<400x480xf32>
    %c399_i32 = arith.constant 399 : i32
    %7 = tpu.dynamic_rotate %4 by %c399_i32 dim 0 : vector<400x480xf32>, i32 -> vector<400x480xf32>
    %8 = arith.addf %2, %7 : vector<400x480xf32>
    %c398_i32 = arith.constant 398 : i32
    %9 = tpu.dynamic_rotate %6 by %c398_i32 dim 0 : vector<400x480xf32>, i32 -> vector<400x480xf32>
    %10 = arith.addf %8, %9 : vector<400x480xf32>
    %11 = tpu.iota {dimensions = array<i32: 0>} : vector<400x1xi32>
    %c0_9 = arith.constant 0 : index
    %c0_10 = arith.constant 0 : index
    %12 = vector.load %arg5[%c0_9, %c0_10] : memref<1x480xi32, #tpu.memory_space<vmem>>, vector<1x480xi32>
    %13 = vector.broadcast %11 : vector<400x1xi32> to vector<400x480xi32>
    %14 = vector.broadcast %12 : vector<1x480xi32> to vector<400x480xi32>
    %15 = arith.cmpi slt, %13, %14 : vector<400x480xi32>
    %cst_11 = arith.constant 0xFF800000 : f32
    %16 = vector.broadcast %cst_11 : f32 to vector<400x480xf32>
    %17 = arith.select %15, %10, %16 : vector<400x480xi1>, vector<400x480xf32>
    %cst_12 = arith.constant dense<0xFF800000> : vector<480xf32>
    %18 = vector.multi_reduction <maximumf>, %17, %cst_12 [0] : vector<400x480xf32> to vector<480xf32>
    %19 = vector.shape_cast %18 : vector<480xf32> to vector<1x480xf32>
    %20 = vector.extract_strided_slice %19 {offsets = [0, 0], sizes = [1, 170], strides = [1, 1]} : vector<1x480xf32> to vector<1x170xf32>
    %21 = vector.extract_strided_slice %20 {offsets = [0, 0], sizes = [1, 80], strides = [1, 1]} : vector<1x170xf32> to vector<1x80xf32>
    %22 = vector.extract_strided_slice %21 {offsets = [0, 0], sizes = [1, 40], strides = [1, 1]} : vector<1x80xf32> to vector<1x40xf32>
    %23 = vector.extract_strided_slice %22 {offsets = [0, 0], sizes = [1, 20], strides = [1, 1]} : vector<1x40xf32> to vector<1x20xf32>
    %24 = vector.extract_strided_slice %23 {offsets = [0, 0], sizes = [1, 10], strides = [1, 1]} : vector<1x20xf32> to vector<1x10xf32>
    %25 = vector.extract_strided_slice %23 {offsets = [0, 10], sizes = [1, 10], strides = [1, 1]} : vector<1x20xf32> to vector<1x10xf32>
    %26 = arith.maximumf %24, %25 : vector<1x10xf32>
    %27 = vector.extract_strided_slice %22 {offsets = [0, 20], sizes = [1, 20], strides = [1, 1]} : vector<1x40xf32> to vector<1x20xf32>
    %28 = vector.extract_strided_slice %27 {offsets = [0, 0], sizes = [1, 10], strides = [1, 1]} : vector<1x20xf32> to vector<1x10xf32>
    %29 = vector.extract_strided_slice %27 {offsets = [0, 10], sizes = [1, 10], strides = [1, 1]} : vector<1x20xf32> to vector<1x10xf32>
    %30 = arith.maximumf %28, %29 : vector<1x10xf32>
    %31 = arith.maximumf %26, %30 : vector<1x10xf32>
    %32 = vector.extract_strided_slice %21 {offsets = [0, 40], sizes = [1, 40], strides = [1, 1]} : vector<1x80xf32> to vector<1x40xf32>
    %33 = vector.extract_strided_slice %32 {offsets = [0, 0], sizes = [1, 20], strides = [1, 1]} : vector<1x40xf32> to vector<1x20xf32>
    %34 = vector.extract_strided_slice %33 {offsets = [0, 0], sizes = [1, 10], strides = [1, 1]} : vector<1x20xf32> to vector<1x10xf32>
    %35 = vector.extract_strided_slice %33 {offsets = [0, 10], sizes = [1, 10], strides = [1, 1]} : vector<1x20xf32> to vector<1x10xf32>
    %36 = arith.maximumf %34, %35 : vector<1x10xf32>
    %37 = vector.extract_strided_slice %32 {offsets = [0, 20], sizes = [1, 20], strides = [1, 1]} : vector<1x40xf32> to vector<1x20xf32>
    %38 = vector.extract_strided_slice %37 {offsets = [0, 0], sizes = [1, 10], strides = [1, 1]} : vector<1x20xf32> to vector<1x10xf32>
    %39 = vector.extract_strided_slice %37 {offsets = [0, 10], sizes = [1, 10], strides = [1, 1]} : vector<1x20xf32> to vector<1x10xf32>
    %40 = arith.maximumf %38, %39 : vector<1x10xf32>
    %41 = arith.maximumf %36, %40 : vector<1x10xf32>
    %42 = arith.maximumf %31, %41 : vector<1x10xf32>
    %43 = vector.extract_strided_slice %20 {offsets = [0, 80], sizes = [1, 90], strides = [1, 1]} : vector<1x170xf32> to vector<1x90xf32>
    %44 = vector.extract_strided_slice %43 {offsets = [0, 0], sizes = [1, 40], strides = [1, 1]} : vector<1x90xf32> to vector<1x40xf32>
    %45 = vector.extract_strided_slice %44 {offsets = [0, 0], sizes = [1, 20], strides = [1, 1]} : vector<1x40xf32> to vector<1x20xf32>
    %46 = vector.extract_strided_slice %45 {offsets = [0, 0], sizes = [1, 10], strides = [1, 1]} : vector<1x20xf32> to vector<1x10xf32>
    %47 = vector.extract_strided_slice %45 {offsets = [0, 10], sizes = [1, 10], strides = [1, 1]} : vector<1x20xf32> to vector<1x10xf32>
    %48 = arith.maximumf %46, %47 : vector<1x10xf32>
    %49 = vector.extract_strided_slice %44 {offsets = [0, 20], sizes = [1, 20], strides = [1, 1]} : vector<1x40xf32> to vector<1x20xf32>
    %50 = vector.extract_strided_slice %49 {offsets = [0, 0], sizes = [1, 10], strides = [1, 1]} : vector<1x20xf32> to vector<1x10xf32>
    %51 = vector.extract_strided_slice %49 {offsets = [0, 10], sizes = [1, 10], strides = [1, 1]} : vector<1x20xf32> to vector<1x10xf32>
    %52 = arith.maximumf %50, %51 : vector<1x10xf32>
    %53 = arith.maximumf %48, %52 : vector<1x10xf32>
    %54 = vector.extract_strided_slice %43 {offsets = [0, 40], sizes = [1, 50], strides = [1, 1]} : vector<1x90xf32> to vector<1x50xf32>
    %55 = vector.extract_strided_slice %54 {offsets = [0, 0], sizes = [1, 20], strides = [1, 1]} : vector<1x50xf32> to vector<1x20xf32>
    %56 = vector.extract_strided_slice %55 {offsets = [0, 0], sizes = [1, 10], strides = [1, 1]} : vector<1x20xf32> to vector<1x10xf32>
    %57 = vector.extract_strided_slice %55 {offsets = [0, 10], sizes = [1, 10], strides = [1, 1]} : vector<1x20xf32> to vector<1x10xf32>
    %58 = arith.maximumf %56, %57 : vector<1x10xf32>
    %59 = vector.extract_strided_slice %54 {offsets = [0, 20], sizes = [1, 30], strides = [1, 1]} : vector<1x50xf32> to vector<1x30xf32>
    %60 = vector.extract_strided_slice %59 {offsets = [0, 0], sizes = [1, 10], strides = [1, 1]} : vector<1x30xf32> to vector<1x10xf32>
    %61 = vector.extract_strided_slice %59 {offsets = [0, 10], sizes = [1, 20], strides = [1, 1]} : vector<1x30xf32> to vector<1x20xf32>
    %62 = vector.extract_strided_slice %61 {offsets = [0, 0], sizes = [1, 10], strides = [1, 1]} : vector<1x20xf32> to vector<1x10xf32>
    %63 = vector.extract_strided_slice %61 {offsets = [0, 10], sizes = [1, 10], strides = [1, 1]} : vector<1x20xf32> to vector<1x10xf32>
    %64 = arith.maximumf %62, %63 : vector<1x10xf32>
    %65 = arith.maximumf %60, %64 : vector<1x10xf32>
    %66 = arith.maximumf %58, %65 : vector<1x10xf32>
    %67 = arith.maximumf %53, %66 : vector<1x10xf32>
    %68 = arith.maximumf %42, %67 : vector<1x10xf32>
    %c0_13 = arith.constant 0 : index
    %c0_14 = arith.constant 0 : index
    %69 = vector.load %arg6[%c0_13, %c0_14] : memref<1x10xf32, #tpu.memory_space<vmem>>, vector<1x10xf32>
    %70 = arith.addf %68, %69 : vector<1x10xf32>
    %cst_15 = arith.constant 0.000000e+00 : f32
    %71 = vector.broadcast %cst_15 : f32 to vector<1x10xf32>
    %72 = arith.maximumf %70, %71 : vector<1x10xf32>
    %73 = vector.extract_strided_slice %19 {offsets = [0, 170], sizes = [1, 160], strides = [1, 1]} : vector<1x480xf32> to vector<1x160xf32>
    %74 = vector.extract_strided_slice %73 {offsets = [0, 0], sizes = [1, 80], strides = [1, 1]} : vector<1x160xf32> to vector<1x80xf32>
    %75 = vector.extract_strided_slice %74 {offsets = [0, 0], sizes = [1, 40], strides = [1, 1]} : vector<1x80xf32> to vector<1x40xf32>
    %76 = vector.extract_strided_slice %75 {offsets = [0, 0], sizes = [1, 20], strides = [1, 1]} : vector<1x40xf32> to vector<1x20xf32>
    %77 = vector.extract_strided_slice %76 {offsets = [0, 0], sizes = [1, 10], strides = [1, 1]} : vector<1x20xf32> to vector<1x10xf32>
    %78 = vector.extract_strided_slice %76 {offsets = [0, 10], sizes = [1, 10], strides = [1, 1]} : vector<1x20xf32> to vector<1x10xf32>
    %79 = arith.maximumf %77, %78 : vector<1x10xf32>
    %80 = vector.extract_strided_slice %75 {offsets = [0, 20], sizes = [1, 20], strides = [1, 1]} : vector<1x40xf32> to vector<1x20xf32>
    %81 = vector.extract_strided_slice %80 {offsets = [0, 0], sizes = [1, 10], strides = [1, 1]} : vector<1x20xf32> to vector<1x10xf32>
    %82 = vector.extract_strided_slice %80 {offsets = [0, 10], sizes = [1, 10], strides = [1, 1]} : vector<1x20xf32> to vector<1x10xf32>
    %83 = arith.maximumf %81, %82 : vector<1x10xf32>
    %84 = arith.maximumf %79, %83 : vector<1x10xf32>
    %85 = vector.extract_strided_slice %74 {offsets = [0, 40], sizes = [1, 40], strides = [1, 1]} : vector<1x80xf32> to vector<1x40xf32>
    %86 = vector.extract_strided_slice %85 {offsets = [0, 0], sizes = [1, 20], strides = [1, 1]} : vector<1x40xf32> to vector<1x20xf32>
    %87 = vector.extract_strided_slice %86 {offsets = [0, 0], sizes = [1, 10], strides = [1, 1]} : vector<1x20xf32> to vector<1x10xf32>
    %88 = vector.extract_strided_slice %86 {offsets = [0, 10], sizes = [1, 10], strides = [1, 1]} : vector<1x20xf32> to vector<1x10xf32>
    %89 = arith.maximumf %87, %88 : vector<1x10xf32>
    %90 = vector.extract_strided_slice %85 {offsets = [0, 20], sizes = [1, 20], strides = [1, 1]} : vector<1x40xf32> to vector<1x20xf32>
    %91 = vector.extract_strided_slice %90 {offsets = [0, 0], sizes = [1, 10], strides = [1, 1]} : vector<1x20xf32> to vector<1x10xf32>
    %92 = vector.extract_strided_slice %90 {offsets = [0, 10], sizes = [1, 10], strides = [1, 1]} : vector<1x20xf32> to vector<1x10xf32>
    %93 = arith.maximumf %91, %92 : vector<1x10xf32>
    %94 = arith.maximumf %89, %93 : vector<1x10xf32>
    %95 = arith.maximumf %84, %94 : vector<1x10xf32>
    %96 = vector.extract_strided_slice %73 {offsets = [0, 80], sizes = [1, 80], strides = [1, 1]} : vector<1x160xf32> to vector<1x80xf32>
    %97 = vector.extract_strided_slice %96 {offsets = [0, 0], sizes = [1, 40], strides = [1, 1]} : vector<1x80xf32> to vector<1x40xf32>
    %98 = vector.extract_strided_slice %97 {offsets = [0, 0], sizes = [1, 20], strides = [1, 1]} : vector<1x40xf32> to vector<1x20xf32>
    %99 = vector.extract_strided_slice %98 {offsets = [0, 0], sizes = [1, 10], strides = [1, 1]} : vector<1x20xf32> to vector<1x10xf32>
    %100 = vector.extract_strided_slice %98 {offsets = [0, 10], sizes = [1, 10], strides = [1, 1]} : vector<1x20xf32> to vector<1x10xf32>
    %101 = arith.maximumf %99, %100 : vector<1x10xf32>
    %102 = vector.extract_strided_slice %97 {offsets = [0, 20], sizes = [1, 20], strides = [1, 1]} : vector<1x40xf32> to vector<1x20xf32>
    %103 = vector.extract_strided_slice %102 {offsets = [0, 0], sizes = [1, 10], strides = [1, 1]} : vector<1x20xf32> to vector<1x10xf32>
    %104 = vector.extract_strided_slice %102 {offsets = [0, 10], sizes = [1, 10], strides = [1, 1]} : vector<1x20xf32> to vector<1x10xf32>
    %105 = arith.maximumf %103, %104 : vector<1x10xf32>
    %106 = arith.maximumf %101, %105 : vector<1x10xf32>
    %107 = vector.extract_strided_slice %96 {offsets = [0, 40], sizes = [1, 40], strides = [1, 1]} : vector<1x80xf32> to vector<1x40xf32>
    %108 = vector.extract_strided_slice %107 {offsets = [0, 0], sizes = [1, 20], strides = [1, 1]} : vector<1x40xf32> to vector<1x20xf32>
    %109 = vector.extract_strided_slice %108 {offsets = [0, 0], sizes = [1, 10], strides = [1, 1]} : vector<1x20xf32> to vector<1x10xf32>
    %110 = vector.extract_strided_slice %108 {offsets = [0, 10], sizes = [1, 10], strides = [1, 1]} : vector<1x20xf32> to vector<1x10xf32>
    %111 = arith.maximumf %109, %110 : vector<1x10xf32>
    %112 = vector.extract_strided_slice %107 {offsets = [0, 20], sizes = [1, 20], strides = [1, 1]} : vector<1x40xf32> to vector<1x20xf32>
    %113 = vector.extract_strided_slice %112 {offsets = [0, 0], sizes = [1, 10], strides = [1, 1]} : vector<1x20xf32> to vector<1x10xf32>
    %114 = vector.extract_strided_slice %112 {offsets = [0, 10], sizes = [1, 10], strides = [1, 1]} : vector<1x20xf32> to vector<1x10xf32>
    %115 = arith.maximumf %113, %114 : vector<1x10xf32>
    %116 = arith.maximumf %111, %115 : vector<1x10xf32>
    %117 = arith.maximumf %106, %116 : vector<1x10xf32>
    %118 = arith.maximumf %95, %117 : vector<1x10xf32>
    %c0_16 = arith.constant 0 : index
    %c0_17 = arith.constant 0 : index
    %119 = vector.load %arg7[%c0_16, %c0_17] : memref<1x10xf32, #tpu.memory_space<vmem>>, vector<1x10xf32>
    %120 = arith.addf %118, %119 : vector<1x10xf32>
    %cst_18 = arith.constant 0.000000e+00 : f32
    %121 = vector.broadcast %cst_18 : f32 to vector<1x10xf32>
    %122 = arith.maximumf %120, %121 : vector<1x10xf32>
    %123 = vector.extract_strided_slice %19 {offsets = [0, 330], sizes = [1, 150], strides = [1, 1]} : vector<1x480xf32> to vector<1x150xf32>
    %124 = vector.extract_strided_slice %123 {offsets = [0, 0], sizes = [1, 70], strides = [1, 1]} : vector<1x150xf32> to vector<1x70xf32>
    %125 = vector.extract_strided_slice %124 {offsets = [0, 0], sizes = [1, 30], strides = [1, 1]} : vector<1x70xf32> to vector<1x30xf32>
    %126 = vector.extract_strided_slice %125 {offsets = [0, 0], sizes = [1, 10], strides = [1, 1]} : vector<1x30xf32> to vector<1x10xf32>
    %127 = vector.extract_strided_slice %125 {offsets = [0, 10], sizes = [1, 20], strides = [1, 1]} : vector<1x30xf32> to vector<1x20xf32>
    %128 = vector.extract_strided_slice %127 {offsets = [0, 0], sizes = [1, 10], strides = [1, 1]} : vector<1x20xf32> to vector<1x10xf32>
    %129 = vector.extract_strided_slice %127 {offsets = [0, 10], sizes = [1, 10], strides = [1, 1]} : vector<1x20xf32> to vector<1x10xf32>
    %130 = arith.maximumf %128, %129 : vector<1x10xf32>
    %131 = arith.maximumf %126, %130 : vector<1x10xf32>
    %132 = vector.extract_strided_slice %124 {offsets = [0, 30], sizes = [1, 40], strides = [1, 1]} : vector<1x70xf32> to vector<1x40xf32>
    %133 = vector.extract_strided_slice %132 {offsets = [0, 0], sizes = [1, 20], strides = [1, 1]} : vector<1x40xf32> to vector<1x20xf32>
    %134 = vector.extract_strided_slice %133 {offsets = [0, 0], sizes = [1, 10], strides = [1, 1]} : vector<1x20xf32> to vector<1x10xf32>
    %135 = vector.extract_strided_slice %133 {offsets = [0, 10], sizes = [1, 10], strides = [1, 1]} : vector<1x20xf32> to vector<1x10xf32>
    %136 = arith.maximumf %134, %135 : vector<1x10xf32>
    %137 = vector.extract_strided_slice %132 {offsets = [0, 20], sizes = [1, 20], strides = [1, 1]} : vector<1x40xf32> to vector<1x20xf32>
    %138 = vector.extract_strided_slice %137 {offsets = [0, 0], sizes = [1, 10], strides = [1, 1]} : vector<1x20xf32> to vector<1x10xf32>
    %139 = vector.extract_strided_slice %137 {offsets = [0, 10], sizes = [1, 10], strides = [1, 1]} : vector<1x20xf32> to vector<1x10xf32>
    %140 = arith.maximumf %138, %139 : vector<1x10xf32>
    %141 = arith.maximumf %136, %140 : vector<1x10xf32>
    %142 = arith.maximumf %131, %141 : vector<1x10xf32>
    %143 = vector.extract_strided_slice %123 {offsets = [0, 70], sizes = [1, 80], strides = [1, 1]} : vector<1x150xf32> to vector<1x80xf32>
    %144 = vector.extract_strided_slice %143 {offsets = [0, 0], sizes = [1, 40], strides = [1, 1]} : vector<1x80xf32> to vector<1x40xf32>
    %145 = vector.extract_strided_slice %144 {offsets = [0, 0], sizes = [1, 20], strides = [1, 1]} : vector<1x40xf32> to vector<1x20xf32>
    %146 = vector.extract_strided_slice %145 {offsets = [0, 0], sizes = [1, 10], strides = [1, 1]} : vector<1x20xf32> to vector<1x10xf32>
    %147 = vector.extract_strided_slice %145 {offsets = [0, 10], sizes = [1, 10], strides = [1, 1]} : vector<1x20xf32> to vector<1x10xf32>
    %148 = arith.maximumf %146, %147 : vector<1x10xf32>
    %149 = vector.extract_strided_slice %144 {offsets = [0, 20], sizes = [1, 20], strides = [1, 1]} : vector<1x40xf32> to vector<1x20xf32>
    %150 = vector.extract_strided_slice %149 {offsets = [0, 0], sizes = [1, 10], strides = [1, 1]} : vector<1x20xf32> to vector<1x10xf32>
    %151 = vector.extract_strided_slice %149 {offsets = [0, 10], sizes = [1, 10], strides = [1, 1]} : vector<1x20xf32> to vector<1x10xf32>
    %152 = arith.maximumf %150, %151 : vector<1x10xf32>
    %153 = arith.maximumf %148, %152 : vector<1x10xf32>
    %154 = vector.extract_strided_slice %143 {offsets = [0, 40], sizes = [1, 40], strides = [1, 1]} : vector<1x80xf32> to vector<1x40xf32>
    %155 = vector.extract_strided_slice %154 {offsets = [0, 0], sizes = [1, 20], strides = [1, 1]} : vector<1x40xf32> to vector<1x20xf32>
    %156 = vector.extract_strided_slice %155 {offsets = [0, 0], sizes = [1, 10], strides = [1, 1]} : vector<1x20xf32> to vector<1x10xf32>
    %157 = vector.extract_strided_slice %155 {offsets = [0, 10], sizes = [1, 10], strides = [1, 1]} : vector<1x20xf32> to vector<1x10xf32>
    %158 = arith.maximumf %156, %157 : vector<1x10xf32>
    %159 = vector.extract_strided_slice %154 {offsets = [0, 20], sizes = [1, 20], strides = [1, 1]} : vector<1x40xf32> to vector<1x20xf32>
    %160 = vector.extract_strided_slice %159 {offsets = [0, 0], sizes = [1, 10], strides = [1, 1]} : vector<1x20xf32> to vector<1x10xf32>
    %161 = vector.extract_strided_slice %159 {offsets = [0, 10], sizes = [1, 10], strides = [1, 1]} : vector<1x20xf32> to vector<1x10xf32>
    %162 = arith.maximumf %160, %161 : vector<1x10xf32>
    %163 = arith.maximumf %158, %162 : vector<1x10xf32>
    %164 = arith.maximumf %153, %163 : vector<1x10xf32>
    %165 = arith.maximumf %142, %164 : vector<1x10xf32>
    %c0_19 = arith.constant 0 : index
    %c0_20 = arith.constant 0 : index
    %166 = vector.load %arg8[%c0_19, %c0_20] : memref<1x10xf32, #tpu.memory_space<vmem>>, vector<1x10xf32>
    %167 = arith.addf %165, %166 : vector<1x10xf32>
    %cst_21 = arith.constant 0.000000e+00 : f32
    %168 = vector.broadcast %cst_21 : f32 to vector<1x10xf32>
    %169 = arith.maximumf %167, %168 : vector<1x10xf32>
    %cst_22 = arith.constant 0.000000e+00 : f32
    %170 = vector.broadcast %cst_22 : f32 to vector<1x2xf32>
    %171 = tpu.concatenate %72, %122, %169, %170 in 1 : vector<1x10xf32>, vector<1x10xf32>, vector<1x10xf32>, vector<1x2xf32> -> vector<1x32xf32>
    %c0_23 = arith.constant 0 : index
    %c0_24 = arith.constant 0 : index
    %172 = vector.load %arg9[%c0_23, %c0_24] : memref<32x16xf32, #tpu.memory_space<vmem>>, vector<32x16xf32>
    %cst_25 = arith.constant dense<0.000000e+00> : vector<1x16xf32>
    %173 = tpu.matmul %171, %172, %cst_25 {dimension_numbers = #tpu.dot_dimension_numbers<[1], [0], [0], [1], [0, 0, 1, 1], [], []>} : vector<1x32xf32>, vector<32x16xf32>, vector<1x16xf32> -> vector<1x16xf32>
    %c0_26 = arith.constant 0 : index
    %c0_27 = arith.constant 0 : index
    %174 = vector.load %arg10[%c0_26, %c0_27] : memref<1x16xf32, #tpu.memory_space<vmem>>, vector<1x16xf32>
    %175 = arith.addf %173, %174 : vector<1x16xf32>
    %cst_28 = arith.constant 0.000000e+00 : f32
    %176 = vector.broadcast %cst_28 : f32 to vector<1x16xf32>
    %177 = arith.maximumf %175, %176 : vector<1x16xf32>
    %c0_29 = arith.constant 0 : index
    %c0_30 = arith.constant 0 : index
    %178 = vector.load %arg11[%c0_29, %c0_30] : memref<1x16xf32, #tpu.memory_space<vmem>>, vector<1x16xf32>
    tpu.vector_store %arg11[%c0_29, %c0_30], %177 {strides = array<i32>} : memref<1x16xf32, #tpu.memory_space<vmem>>, vector<1x16xf32>,
    return
  }
  func.func @transform_0(%arg0: i32) -> (i32, i32) {
    %c0_i32 = arith.constant 0 : i32
    %c0_i32_0 = arith.constant 0 : i32
    %c0_i32_1 = arith.constant 0 : i32
    return %c0_i32, %c0_i32_0 : i32, i32
  }
  func.func @transform_1(%arg0: i32) -> (i32, i32) {
    %c0_i32 = arith.constant 0 : i32
    %c0_i32_0 = arith.constant 0 : i32
    %c0_i32_1 = arith.constant 0 : i32
    return %c0_i32, %c0_i32_0 : i32, i32
  }
  func.func @transform_2(%arg0: i32) -> (i32, i32) {
    %c0_i32 = arith.constant 0 : i32
    %c0_i32_0 = arith.constant 0 : i32
    %c0_i32_1 = arith.constant 0 : i32
    return %c0_i32, %c0_i32_0 : i32, i32
  }
  func.func @transform_3(%arg0: i32) -> (i32, i32) {
    %c0_i32 = arith.constant 0 : i32
    %c0_i32_0 = arith.constant 0 : i32
    %c0_i32_1 = arith.constant 0 : i32
    return %c0_i32, %c0_i32_0 : i32, i32
  }
  func.func @transform_4(%arg0: i32) -> (i32, i32) {
    %c0_i32 = arith.constant 0 : i32
    %c0_i32_0 = arith.constant 0 : i32
    %c0_i32_1 = arith.constant 0 : i32
    return %c0_i32, %c0_i32_0 : i32, i32
  }
  func.func @transform_5(%arg0: i32) -> (i32, i32) {
    %c0_i32 = arith.constant 0 : i32
    %c0_i32_0 = arith.constant 0 : i32
    %c0_i32_1 = arith.constant 0 : i32
    return %c0_i32, %c0_i32_0 : i32, i32
  }
  func.func @transform_6(%arg0: i32) -> (i32, i32) {
    %c0_i32 = arith.constant 0 : i32
    %c0_i32_0 = arith.constant 0 : i32
    %c0_i32_1 = arith.constant 0 : i32
    return %c0_i32, %c0_i32_0 : i32, i32
  }
  func.func @transform_7(%arg0: i32) -> (i32, i32) {
    %c0_i32 = arith.constant 0 : i32
    %c0_i32_0 = arith.constant 0 : i32
    %c0_i32_1 = arith.constant 0 : i32
    return %c0_i32, %c0_i32_0 : i32, i32
  }
  func.func @transform_8(%arg0: i32) -> (i32, i32) {
    %c0_i32 = arith.constant 0 : i32
    %c0_i32_0 = arith.constant 0 : i32
    %c0_i32_1 = arith.constant 0 : i32
    return %c0_i32, %c0_i32_0 : i32, i32
  }
  func.func @transform_9(%arg0: i32) -> (i32, i32) {
    %c0_i32 = arith.constant 0 : i32
    %c0_i32_0 = arith.constant 0 : i32
    %c0_i32_1 = arith.constant 0 : i32
    return %c0_i32, %c0_i32_0 : i32, i32
  }
  func.func @transform_10(%arg0: i32) -> (i32, i32) {
    %c0_i32 = arith.constant 0 : i32
    %c0_i32_0 = arith.constant 0 : i32
    %c0_i32_1 = arith.constant 0 : i32
    return %c0_i32, %c0_i32_0 : i32, i32
  }
}

</mosaic_0001>

<llo_original>
// kernel: tpu_custom_call.1
$region0: #{tpu_custom_call.1}
  #allocation0 [shape = 'u32[]', space=smem, size = 0x4, offset = 0x4, fixed_abs, tag = 'smem constant byte address 0x4 - core index']
  #allocation1 [shape = 'u32[144,128]{1,0:T(1,128)}', space=vmem, size = 0x12000, scoped, tag = 'internal scratch']
  %s0 = inlined_call_operand.vmem [shape: bf16[400,272], index: 0, kind: input, shape index: {}]
  %s1 = inlined_call_operand.vmem [shape: bf16[272,480], index: 1, kind: input, shape index: {}]
  %s2 = inlined_call_operand.vmem [shape: bf16[272,480], index: 2, kind: input, shape index: {}]
  %s3 = inlined_call_operand.hbm [shape: bf16[272,480], index: 3, kind: input, shape index: {}]
  %s4 = inlined_call_operand.vmem [shape: s32[1,480], index: 4, kind: input, shape index: {}]
  %s5 = inlined_call_operand.vmem [shape: f32[1,10], index: 5, kind: input, shape index: {}]
  %s6 = inlined_call_operand.vmem [shape: f32[1,10], index: 6, kind: input, shape index: {}]
  %s7 = inlined_call_operand.vmem [shape: f32[1,10], index: 7, kind: input, shape index: {}]
  %s8 = inlined_call_operand.vmem [shape: f32[32,16], index: 8, kind: input, shape index: {}]
  %s9 = inlined_call_operand.vmem [shape: f32[1,16], index: 9, kind: input, shape index: {}]
  %s10 = inlined_call_operand.hbm [shape: f32[1,16], index: 10, kind: output, shape index: {}]
  %s11 = sld [smem:[#allocation0]]
  $region54: #{tpu_custom_call.1} parent=0
    _
  %s13 = ssub.s32 1, %s11
  %s14 = scalar_select 0, %s13, %s11
  $region1: #{tpu_custom_call.1} parent=0
    #allocation2 [shape = 'u8[278528]{0}', space=vmem, size = 0x44000, scoped, tag = 'input window, operand 3, single buffered']
    #allocation3 [shape = 's32[1]{0}', space=sflag, size = 0x4, scoped, tag = 'scoped memory for tpu_custom_call.1']
    #allocation4 [shape = 's32[1]{0}', space=sflag, size = 0x4, scoped, tag = 'scoped memory for tpu_custom_call.1']
    #allocation5 [shape = 'u8[512]{0}', space=vmem, size = 0x400, scoped, tag = 'output window, operand 0, single buffered']
    %15 = vsyncpa [#allocation3], 0
    %16 = vsyncpa [#allocation4], 0
    // Predicated region
    $region2: #{tpu_custom_call.1} parent=1 // pred_check
      _
    $region3: #{tpu_custom_call.1} parent=1 // pred_check_branch
      %18 = sbr.rel (0) target = $region5
    $region4: #{tpu_custom_call.1} parent=1 // pred_region
      _
    $region5: #{tpu_custom_call.1} parent=1 // pred_fallthru
      _
    // Predicated region
    $region6: #{tpu_custom_call.1} parent=1 // pred_check
      _
    $region7: #{tpu_custom_call.1} parent=1 // pred_check_branch
      %20 = sbr.rel (0) target = $region9
    $region8: #{tpu_custom_call.1} parent=1 // pred_region
      _
    $region9: #{tpu_custom_call.1} parent=1 // pred_fallthru
      _
    // Predicated region
    $region10: #{tpu_custom_call.1} parent=1 // pred_check
      _
    $region11: #{tpu_custom_call.1} parent=1 // pred_check_branch
      %22 = sbr.rel (0) target = $region13
    $region12: #{tpu_custom_call.1} parent=1 // pred_region
      _
    $region13: #{tpu_custom_call.1} parent=1 // pred_fallthru
      _
    // Predicated region
    $region14: #{tpu_custom_call.1} parent=1 // pred_check
      _
    $region15: #{tpu_custom_call.1} parent=1 // pred_check_branch
      %24 = sbr.rel (0) target = $region17
    $region16: #{tpu_custom_call.1} parent=1 // pred_region
      %s26 = ssub.s32 8704, 8704
      %27 = vsyncadd [#allocation3], %s26
      %s28 = sshll.u32 [#allocation2], 4
      %s29 = int_to_ptr.vmem [resolvable:$true] %s28
      %34 = dma.hbm_to_vmem [thread:$0]  %s3, 8704, %s29, [#allocation3], 256, 256, 16
    $region17: #{tpu_custom_call.1} parent=1 // pred_fallthru
      _
    // Predicated region
    $region18: #{tpu_custom_call.1} parent=1 // pred_check
      _
    $region19: #{tpu_custom_call.1} parent=1 // pred_check_branch
      %36 = sbr.rel (0) target = $region21
    $region20: #{tpu_custom_call.1} parent=1 // pred_region
      _
    $region21: #{tpu_custom_call.1} parent=1 // pred_fallthru
      _
    // Predicated region
    $region22: #{tpu_custom_call.1} parent=1 // pred_check
      _
    $region23: #{tpu_custom_call.1} parent=1 // pred_check_branch
      %38 = sbr.rel (0) target = $region25
    $region24: #{tpu_custom_call.1} parent=1 // pred_region
      _
    $region25: #{tpu_custom_call.1} parent=1 // pred_fallthru
      _
    // Predicated region
    $region26: #{tpu_custom_call.1} parent=1 // pred_check
      _
    $region27: #{tpu_custom_call.1} parent=1 // pred_check_branch
      %40 = sbr.rel (0) target = $region29
    $region28: #{tpu_custom_call.1} parent=1 // pred_region
      _
    $region29: #{tpu_custom_call.1} parent=1 // pred_fallthru
      _
    // Predicated region
    $region30: #{tpu_custom_call.1} parent=1 // pred_check
      _
    $region31: #{tpu_custom_call.1} parent=1 // pred_check_branch
      %42 = sbr.rel (0) target = $region33
    $region32: #{tpu_custom_call.1} parent=1 // pred_region
      _
    $region33: #{tpu_custom_call.1} parent=1 // pred_fallthru
      _
    // Predicated region
    $region34: #{tpu_custom_call.1} parent=1 // pred_check
      _
    $region35: #{tpu_custom_call.1} parent=1 // pred_check_branch
      %44 = sbr.rel (0) target = $region37
    $region36: #{tpu_custom_call.1} parent=1 // pred_region
      _
    $region37: #{tpu_custom_call.1} parent=1 // pred_fallthru
      _
    // Predicated region
    $region38: #{tpu_custom_call.1} parent=1 // pred_check
      _
    $region39: #{tpu_custom_call.1} parent=1 // pred_check_branch
      %46 = sbr.rel (0) target = $region41
    $region40: #{tpu_custom_call.1} parent=1 // pred_region
      _
    $region41: #{tpu_custom_call.1} parent=1 // pred_fallthru
      _
    // Predicated region
    $region42: #{tpu_custom_call.1} parent=1 // pred_check
      _
    $region43: #{tpu_custom_call.1} parent=1 // pred_check_branch
      %48 = sbr.rel (0) target = $region45
    $region44: #{tpu_custom_call.1} parent=1 // pred_region
      %49 = dma.done [#allocation3], 8704
    $region45: #{tpu_custom_call.1} parent=1 // pred_fallthru
      _
    %v51 = vld [vmem:[%s0] sm:$0xff]
    %v52 = vld [vmem:[%s0 + $0x8] sm:$0xf]
    %v53 = vld [vmem:[%s0 + $0xc] sm:$0xff]
    %v54 = vld [vmem:[%s0 + $0x14] sm:$0xf]
    %v55 = vld [vmem:[%s0 + $0x18] sm:$0xff]
    %v56 = vld [vmem:[%s0 + $0x20] sm:$0xf]
    %v57 = vld [vmem:[%s0 + $0x24] sm:$0xff]
    %v58 = vld [vmem:[%s0 + $0x2c] sm:$0xf]
    %v59 = vld [vmem:[%s0 + $0x30] sm:$0xff]
    %v60 = vld [vmem:[%s0 + $0x38] sm:$0xf]
    %v61 = vld [vmem:[%s0 + $0x3c] sm:$0xff]
    %v62 = vld [vmem:[%s0 + $0x44] sm:$0xf]
    %v63 = vld [vmem:[%s0 + $0x48] sm:$0xff]
    %v64 = vld [vmem:[%s0 + $0x50] sm:$0xf]
    %v65 = vld [vmem:[%s0 + $0x54] sm:$0xff]
    %v66 = vld [vmem:[%s0 + $0x5c] sm:$0xf]
    %v67 = vld [vmem:[%s0 + $0x60] sm:$0xff]
    %v68 = vld [vmem:[%s0 + $0x68] sm:$0xf]
    %v69 = vld [vmem:[%s0 + $0x6c] sm:$0xff]
    %v70 = vld [vmem:[%s0 + $0x74] sm:$0xf]
    %v71 = vld [vmem:[%s0 + $0x78] sm:$0xff]
    %v72 = vld [vmem:[%s0 + $0x80] sm:$0xf]
    %v73 = vld [vmem:[%s0 + $0x84] sm:$0xff]
    %v74 = vld [vmem:[%s0 + $0x8c] sm:$0xf]
    %v75 = vld [vmem:[%s0 + $0x90] sm:$0xff]
    %v76 = vld [vmem:[%s0 + $0x98] sm:$0xf]
    %v77 = vld [vmem:[%s0 + $0x9c] sm:$0xff]
    %v78 = vld [vmem:[%s0 + $0xa4] sm:$0xf]
    %v79 = vld [vmem:[%s0 + $0xa8] sm:$0xff]
    %v80 = vld [vmem:[%s0 + $0xb0] sm:$0xf]
    %v81 = vld [vmem:[%s0 + $0xb4] sm:$0xff]
    %v82 = vld [vmem:[%s0 + $0xbc] sm:$0xf]
    %v83 = vld [vmem:[%s0 + $0xc0] sm:$0xff]
    %v84 = vld [vmem:[%s0 + $0xc8] sm:$0xf]
    %v85 = vld [vmem:[%s0 + $0xcc] sm:$0xff]
    %v86 = vld [vmem:[%s0 + $0xd4] sm:$0xf]
    %v87 = vld [vmem:[%s0 + $0xd8] sm:$0xff]
    %v88 = vld [vmem:[%s0 + $0xe0] sm:$0xf]
    %v89 = vld [vmem:[%s0 + $0xe4] sm:$0xff]
    %v90 = vld [vmem:[%s0 + $0xec] sm:$0xf]
    %v91 = vld [vmem:[%s0 + $0xf0] sm:$0xff]
    %v92 = vld [vmem:[%s0 + $0xf8] sm:$0xf]
    %v93 = vld [vmem:[%s0 + $0xfc] sm:$0xff]
    %v94 = vld [vmem:[%s0 + $0x104] sm:$0xf]
    %v95 = vld [vmem:[%s0 + $0x108] sm:$0xff]
    %v96 = vld [vmem:[%s0 + $0x110] sm:$0xf]
    %v97 = vld [vmem:[%s0 + $0x114] sm:$0xff]
    %v98 = vld [vmem:[%s0 + $0x11c] sm:$0xf]
    %v99 = vld [vmem:[%s0 + $0x120] sm:$0xff]
    %v100 = vld [vmem:[%s0 + $0x128] sm:$0xf]
    %v101 = vld [vmem:[%s0 + $0x12c] sm:$0xff]
    %v102 = vld [vmem:[%s0 + $0x134] sm:$0xf]
    %v103 = vld [vmem:[%s0 + $0x138] sm:$0xff]
    %v104 = vld [vmem:[%s0 + $0x140] sm:$0xf]
    %v105 = vld [vmem:[%s0 + $0x144] sm:$0xff]
    %v106 = vld [vmem:[%s0 + $0x14c] sm:$0xf]
    %v107 = vld [vmem:[%s0 + $0x150] sm:$0xff]
    %v108 = vld [vmem:[%s0 + $0x158] sm:$0xf]
    %v109 = vld [vmem:[%s0 + $0x15c] sm:$0xff]
    %v110 = vld [vmem:[%s0 + $0x164] sm:$0xf]
    %v111 = vld [vmem:[%s0 + $0x168] sm:$0xff]
    %v112 = vld [vmem:[%s0 + $0x170] sm:$0xf]
    %v113 = vld [vmem:[%s0 + $0x174] sm:$0xff]
    %v114 = vld [vmem:[%s0 + $0x17c] sm:$0xf]
    %v115 = vld [vmem:[%s0 + $0x180] sm:$0xff]
    %v116 = vld [vmem:[%s0 + $0x188] sm:$0xf]
    %v117 = vld [vmem:[%s0 + $0x18c] sm:$0xff]
    %v118 = vld [vmem:[%s0 + $0x194] sm:$0xf]
    %v119 = vld [vmem:[%s0 + $0x198] sm:$0xff]
    %v120 = vld [vmem:[%s0 + $0x1a0] sm:$0xf]
    %v121 = vld [vmem:[%s0 + $0x1a4] sm:$0xff]
    %v122 = vld [vmem:[%s0 + $0x1ac] sm:$0xf]
    %v123 = vld [vmem:[%s0 + $0x1b0] sm:$0xff]
    %v124 = vld [vmem:[%s0 + $0x1b8] sm:$0xf]
    %v125 = vld [vmem:[%s0 + $0x1bc] sm:$0xff]
    %v126 = vld [vmem:[%s0 + $0x1c4] sm:$0xf]
    %v127 = vld [vmem:[%s0 + $0x1c8] sm:$0xff]
    %v128 = vld [vmem:[%s0 + $0x1d0] sm:$0xf]
    %v129 = vld [vmem:[%s0 + $0x1d4] sm:$0xff]
    %v130 = vld [vmem:[%s0 + $0x1dc] sm:$0xf]
    %v131 = vld [vmem:[%s0 + $0x1e0] sm:$0xff]
    %v132 = vld [vmem:[%s0 + $0x1e8] sm:$0xf]
    %v133 = vld [vmem:[%s0 + $0x1ec] sm:$0xff]
    %v134 = vld [vmem:[%s0 + $0x1f4] sm:$0xf]
    %v135 = vld [vmem:[%s0 + $0x1f8] sm:$0xff]
    %v136 = vld [vmem:[%s0 + $0x200] sm:$0xf]
    %v137 = vld [vmem:[%s0 + $0x204] sm:$0xff]
    %v138 = vld [vmem:[%s0 + $0x20c] sm:$0xf]
    %v139 = vld [vmem:[%s0 + $0x210] sm:$0xff]
    %v140 = vld [vmem:[%s0 + $0x218] sm:$0xf]
    %v141 = vld [vmem:[%s0 + $0x21c] sm:$0xff]
    %v142 = vld [vmem:[%s0 + $0x224] sm:$0xf]
    %v143 = vld [vmem:[%s0 + $0x228] sm:$0xff]
    %v144 = vld [vmem:[%s0 + $0x230] sm:$0xf]
    %v145 = vld [vmem:[%s0 + $0x234] sm:$0xff]
    %v146 = vld [vmem:[%s0 + $0x23c] sm:$0xf]
    %v147 = vld [vmem:[%s0 + $0x240] sm:$0xff]
    %v148 = vld [vmem:[%s0 + $0x248] sm:$0xf]
    %v149 = vld [vmem:[%s0 + $0x24c] sm:$0xff]
    %v150 = vld [vmem:[%s0 + $0x254] sm:$0xf]
    %v151 = vld [vmem:[%s1] sm:$0xff]
    %v152 = vld [vmem:[%s1 + $0x8] sm:$0xff]
    %v153 = vld [vmem:[%s1 + $0x10] sm:$0xff]
    %v154 = vld [vmem:[%s1 + $0x18] sm:$0xff]
    %v155 = vld [vmem:[%s1 + $0x20] sm:$0xff]
    %v156 = vld [vmem:[%s1 + $0x28] sm:$0xff]
    %v157 = vld [vmem:[%s1 + $0x30] sm:$0xff]
    %v158 = vld [vmem:[%s1 + $0x38] sm:$0xff]
    %v159 = vld [vmem:[%s1 + $0x40] sm:$0xff]
    %v160 = vld [vmem:[%s1 + $0x48] sm:$0xff]
    %v161 = vld [vmem:[%s1 + $0x50] sm:$0xff]
    %v162 = vld [vmem:[%s1 + $0x58] sm:$0xff]
    %v163 = vld [vmem:[%s1 + $0x60] sm:$0xff]
    %v164 = vld [vmem:[%s1 + $0x68] sm:$0xff]
    %v165 = vld [vmem:[%s1 + $0x70] sm:$0xff]
    %v166 = vld [vmem:[%s1 + $0x78] sm:$0xff]
    %v167 = vld [vmem:[%s1 + $0x80] sm:$0xff]
    %v168 = vld [vmem:[%s1 + $0x88] sm:$0xff]
    %v169 = vld [vmem:[%s1 + $0x90] sm:$0xff]
    %v170 = vld [vmem:[%s1 + $0x98] sm:$0xff]
    %v171 = vld [vmem:[%s1 + $0xa0] sm:$0xff]
    %v172 = vld [vmem:[%s1 + $0xa8] sm:$0xff]
    %v173 = vld [vmem:[%s1 + $0xb0] sm:$0xff]
    %v174 = vld [vmem:[%s1 + $0xb8] sm:$0xff]
    %v175 = vld [vmem:[%s1 + $0xc0] sm:$0xff]
    %v176 = vld [vmem:[%s1 + $0xc8] sm:$0xff]
    %v177 = vld [vmem:[%s1 + $0xd0] sm:$0xff]
    %v178 = vld [vmem:[%s1 + $0xd8] sm:$0xff]
    %v179 = vld [vmem:[%s1 + $0xe0] sm:$0xff]
    %v180 = vld [vmem:[%s1 + $0xe8] sm:$0xff]
    %v181 = vld [vmem:[%s1 + $0xf0] sm:$0xff]
    %v182 = vld [vmem:[%s1 + $0xf8] sm:$0xff]
    %v183 = vld [vmem:[%s1 + $0x100] sm:$0xff]
    %v184 = vld [vmem:[%s1 + $0x108] sm:$0xff]
    %v185 = vld [vmem:[%s1 + $0x110] sm:$0xff]
    %v186 = vld [vmem:[%s1 + $0x118] sm:$0xff]
    %v187 = vld [vmem:[%s1 + $0x120] sm:$0xff]
    %v188 = vld [vmem:[%s1 + $0x128] sm:$0xff]
    %v189 = vld [vmem:[%s1 + $0x130] sm:$0xff]
    %v190 = vld [vmem:[%s1 + $0x138] sm:$0xff]
    %v191 = vld [vmem:[%s1 + $0x140] sm:$0xff]
    %v192 = vld [vmem:[%s1 + $0x148] sm:$0xff]
    %v193 = vld [vmem:[%s1 + $0x150] sm:$0xff]
    %v194 = vld [vmem:[%s1 + $0x158] sm:$0xff]
    %v195 = vld [vmem:[%s1 + $0x160] sm:$0xff]
    %v196 = vld [vmem:[%s1 + $0x168] sm:$0xff]
    %v197 = vld [vmem:[%s1 + $0x170] sm:$0xff]
    %v198 = vld [vmem:[%s1 + $0x178] sm:$0xff]
    %v199 = vld [vmem:[%s1 + $0x180] sm:$0xff]
    %v200 = vld [vmem:[%s1 + $0x188] sm:$0xff]
    %v201 = vld [vmem:[%s1 + $0x190] sm:$0xff]
    %v202 = vld [vmem:[%s1 + $0x198] sm:$0xff]
    %v203 = vld [vmem:[%s1 + $0x1a0] sm:$0xff]
    %v204 = vld [vmem:[%s1 + $0x1a8] sm:$0xff]
    %v205 = vld [vmem:[%s1 + $0x1b0] sm:$0xff]
    %v206 = vld [vmem:[%s1 + $0x1b8] sm:$0xff]
    %v207 = vld [vmem:[%s1 + $0x1c0] sm:$0xff]
    %v208 = vld [vmem:[%s1 + $0x1c8] sm:$0xff]
    %v209 = vld [vmem:[%s1 + $0x1d0] sm:$0xff]
    %v210 = vld [vmem:[%s1 + $0x1d8] sm:$0xff]
    %v211 = vld [vmem:[%s1 + $0x1e0] sm:$0xff]
    %v212 = vld [vmem:[%s1 + $0x1e8] sm:$0xff]
    %v213 = vld [vmem:[%s1 + $0x1f0] sm:$0xff]
    %v214 = vld [vmem:[%s1 + $0x1f8] sm:$0xff]
    %v215 = vld [vmem:[%s1 + $0x200] sm:$0xff]
    %v216 = vld [vmem:[%s1 + $0x208] sm:$0xff]
    %v217 = vld [vmem:[%s1 + $0x210] sm:$0xff]
    %v218 = vld [vmem:[%s1 + $0x218] sm:$0xff]
    %v219 = vld [vmem:[%s2] sm:$0xff]
    %v220 = vld [vmem:[%s2 + $0x8] sm:$0xff]
    %v221 = vld [vmem:[%s2 + $0x10] sm:$0xff]
    %v222 = vld [vmem:[%s2 + $0x18] sm:$0xff]
    %v223 = vld [vmem:[%s2 + $0x20] sm:$0xff]
    %v224 = vld [vmem:[%s2 + $0x28] sm:$0xff]
    %v225 = vld [vmem:[%s2 + $0x30] sm:$0xff]
    %v226 = vld [vmem:[%s2 + $0x38] sm:$0xff]
    %v227 = vld [vmem:[%s2 + $0x40] sm:$0xff]
    %v228 = vld [vmem:[%s2 + $0x48] sm:$0xff]
    %v229 = vld [vmem:[%s2 + $0x50] sm:$0xff]
    %v230 = vld [vmem:[%s2 + $0x58] sm:$0xff]
    %v231 = vld [vmem:[%s2 + $0x60] sm:$0xff]
    %v232 = vld [vmem:[%s2 + $0x68] sm:$0xff]
    %v233 = vld [vmem:[%s2 + $0x70] sm:$0xff]
    %v234 = vld [vmem:[%s2 + $0x78] sm:$0xff]
    %v235 = vld [vmem:[%s2 + $0x80] sm:$0xff]
    %v236 = vld [vmem:[%s2 + $0x88] sm:$0xff]
    %v237 = vld [vmem:[%s2 + $0x90] sm:$0xff]
    %v238 = vld [vmem:[%s2 + $0x98] sm:$0xff]
    %v239 = vld [vmem:[%s2 + $0xa0] sm:$0xff]
    %v240 = vld [vmem:[%s2 + $0xa8] sm:$0xff]
    %v241 = vld [vmem:[%s2 + $0xb0] sm:$0xff]
    %v242 = vld [vmem:[%s2 + $0xb8] sm:$0xff]
    %v243 = vld [vmem:[%s2 + $0xc0] sm:$0xff]
    %v244 = vld [vmem:[%s2 + $0xc8] sm:$0xff]
    %v245 = vld [vmem:[%s2 + $0xd0] sm:$0xff]
    %v246 = vld [vmem:[%s2 + $0xd8] sm:$0xff]
    %v247 = vld [vmem:[%s2 + $0xe0] sm:$0xff]
    %v248 = vld [vmem:[%s2 + $0xe8] sm:$0xff]
    %v249 = vld [vmem:[%s2 + $0xf0] sm:$0xff]
    %v250 = vld [vmem:[%s2 + $0xf8] sm:$0xff]
    %v251 = vld [vmem:[%s2 + $0x100] sm:$0xff]
    %v252 = vld [vmem:[%s2 + $0x108] sm:$0xff]
    %v253 = vld [vmem:[%s2 + $0x110] sm:$0xff]
    %v254 = vld [vmem:[%s2 + $0x118] sm:$0xff]
    %v255 = vld [vmem:[%s2 + $0x120] sm:$0xff]
    %v256 = vld [vmem:[%s2 + $0x128] sm:$0xff]
    %v257 = vld [vmem:[%s2 + $0x130] sm:$0xff]
    %v258 = vld [vmem:[%s2 + $0x138] sm:$0xff]
    %v259 = vld [vmem:[%s2 + $0x140] sm:$0xff]
    %v260 = vld [vmem:[%s2 + $0x148] sm:$0xff]
    %v261 = vld [vmem:[%s2 + $0x150] sm:$0xff]
    %v262 = vld [vmem:[%s2 + $0x158] sm:$0xff]
    %v263 = vld [vmem:[%s2 + $0x160] sm:$0xff]
    %v264 = vld [vmem:[%s2 + $0x168] sm:$0xff]
    %v265 = vld [vmem:[%s2 + $0x170] sm:$0xff]
    %v266 = vld [vmem:[%s2 + $0x178] sm:$0xff]
    %v267 = vld [vmem:[%s2 + $0x180] sm:$0xff]
    %v268 = vld [vmem:[%s2 + $0x188] sm:$0xff]
    %v269 = vld [vmem:[%s2 + $0x190] sm:$0xff]
    %v270 = vld [vmem:[%s2 + $0x198] sm:$0xff]
    %v271 = vld [vmem:[%s2 + $0x1a0] sm:$0xff]
    %v272 = vld [vmem:[%s2 + $0x1a8] sm:$0xff]
    %v273 = vld [vmem:[%s2 + $0x1b0] sm:$0xff]
    %v274 = vld [vmem:[%s2 + $0x1b8] sm:$0xff]
    %v275 = vld [vmem:[%s2 + $0x1c0] sm:$0xff]
    %v276 = vld [vmem:[%s2 + $0x1c8] sm:$0xff]
    %v277 = vld [vmem:[%s2 + $0x1d0] sm:$0xff]
    %v278 = vld [vmem:[%s2 + $0x1d8] sm:$0xff]
    %v279 = vld [vmem:[%s2 + $0x1e0] sm:$0xff]
    %v280 = vld [vmem:[%s2 + $0x1e8] sm:$0xff]
    %v281 = vld [vmem:[%s2 + $0x1f0] sm:$0xff]
    %v282 = vld [vmem:[%s2 + $0x1f8] sm:$0xff]
    %v283 = vld [vmem:[%s2 + $0x200] sm:$0xff]
    %v284 = vld [vmem:[%s2 + $0x208] sm:$0xff]
    %v285 = vld [vmem:[%s2 + $0x210] sm:$0xff]
    %v286 = vld [vmem:[%s2 + $0x218] sm:$0xff]
    %v387 = vunpack.c.l.b16 %v51
    %v388 = vunpack.c.h.b16 %v51
    %v389 = vunpack.c.l.b16 %v52
    %v390 = vunpack.c.l.b16 %v53
    %v391 = vunpack.c.h.b16 %v53
    %v392 = vunpack.c.l.b16 %v54
    %v393 = vunpack.c.l.b16 %v55
    %v394 = vunpack.c.h.b16 %v55
    %v395 = vunpack.c.l.b16 %v56
    %v396 = vunpack.c.l.b16 %v57
    %v397 = vunpack.c.h.b16 %v57
    %v398 = vunpack.c.l.b16 %v58
    %v399 = vunpack.c.l.b16 %v59
    %v400 = vunpack.c.h.b16 %v59
    %v401 = vunpack.c.l.b16 %v60
    %v402 = vunpack.c.l.b16 %v61
    %v403 = vunpack.c.h.b16 %v61
    %v404 = vunpack.c.l.b16 %v62
    %v405 = vunpack.c.l.b16 %v63
    %v406 = vunpack.c.h.b16 %v63
    %v407 = vunpack.c.l.b16 %v64
    %v408 = vunpack.c.l.b16 %v65
    %v409 = vunpack.c.h.b16 %v65
    %v410 = vunpack.c.l.b16 %v66
    %v411 = vunpack.c.l.b16 %v67
    %v412 = vunpack.c.h.b16 %v67
    %v413 = vunpack.c.l.b16 %v68
    %v414 = vunpack.c.l.b16 %v69
    %v415 = vunpack.c.h.b16 %v69
    %v416 = vunpack.c.l.b16 %v70
    %v417 = vunpack.c.l.b16 %v71
    %v418 = vunpack.c.h.b16 %v71
    %v419 = vunpack.c.l.b16 %v72
    %v420 = vunpack.c.l.b16 %v73
    %v421 = vunpack.c.h.b16 %v73
    %v422 = vunpack.c.l.b16 %v74
    %v423 = vunpack.c.l.b16 %v75
    %v424 = vunpack.c.h.b16 %v75
    %v425 = vunpack.c.l.b16 %v76
    %v426 = vunpack.c.l.b16 %v77
    %v427 = vunpack.c.h.b16 %v77
    %v428 = vunpack.c.l.b16 %v78
    %v429 = vunpack.c.l.b16 %v79
    %v430 = vunpack.c.h.b16 %v79
    %v431 = vunpack.c.l.b16 %v80
    %v432 = vunpack.c.l.b16 %v81
    %v433 = vunpack.c.h.b16 %v81
    %v434 = vunpack.c.l.b16 %v82
    %v435 = vunpack.c.l.b16 %v83
    %v436 = vunpack.c.h.b16 %v83
    %v437 = vunpack.c.l.b16 %v84
    %v438 = vunpack.c.l.b16 %v85
    %v439 = vunpack.c.h.b16 %v85
    %v440 = vunpack.c.l.b16 %v86
    %v441 = vunpack.c.l.b16 %v87
    %v442 = vunpack.c.h.b16 %v87
    %v443 = vunpack.c.l.b16 %v88
    %v444 = vunpack.c.l.b16 %v89
    %v445 = vunpack.c.h.b16 %v89
    %v446 = vunpack.c.l.b16 %v90
    %v447 = vunpack.c.l.b16 %v91
    %v448 = vunpack.c.h.b16 %v91
    %v449 = vunpack.c.l.b16 %v92
    %v450 = vunpack.c.l.b16 %v93
    %v451 = vunpack.c.h.b16 %v93
    %v452 = vunpack.c.l.b16 %v94
    %v453 = vunpack.c.l.b16 %v95
    %v454 = vunpack.c.h.b16 %v95
    %v455 = vunpack.c.l.b16 %v96
    %v456 = vunpack.c.l.b16 %v97
    %v457 = vunpack.c.h.b16 %v97
    %v458 = vunpack.c.l.b16 %v98
    %v459 = vunpack.c.l.b16 %v99
    %v460 = vunpack.c.h.b16 %v99
    %v461 = vunpack.c.l.b16 %v100
    %v462 = vunpack.c.l.b16 %v101
    %v463 = vunpack.c.h.b16 %v101
    %v464 = vunpack.c.l.b16 %v102
    %v465 = vunpack.c.l.b16 %v103
    %v466 = vunpack.c.h.b16 %v103
    %v467 = vunpack.c.l.b16 %v104
    %v468 = vunpack.c.l.b16 %v105
    %v469 = vunpack.c.h.b16 %v105
    %v470 = vunpack.c.l.b16 %v106
    %v471 = vunpack.c.l.b16 %v107
    %v472 = vunpack.c.h.b16 %v107
    %v473 = vunpack.c.l.b16 %v108
    %v474 = vunpack.c.l.b16 %v109
    %v475 = vunpack.c.h.b16 %v109
    %v476 = vunpack.c.l.b16 %v110
    %v477 = vunpack.c.l.b16 %v111
    %v478 = vunpack.c.h.b16 %v111
    %v479 = vunpack.c.l.b16 %v112
    %v480 = vunpack.c.l.b16 %v113
    %v481 = vunpack.c.h.b16 %v113
    %v482 = vunpack.c.l.b16 %v114
    %v483 = vunpack.c.l.b16 %v115
    %v484 = vunpack.c.h.b16 %v115
    %v485 = vunpack.c.l.b16 %v116
    %v486 = vunpack.c.l.b16 %v117
    %v487 = vunpack.c.h.b16 %v117
    %v488 = vunpack.c.l.b16 %v118
    %v489 = vunpack.c.l.b16 %v119
    %v490 = vunpack.c.h.b16 %v119
    %v491 = vunpack.c.l.b16 %v120
    %v492 = vunpack.c.l.b16 %v121
    %v493 = vunpack.c.h.b16 %v121
    %v494 = vunpack.c.l.b16 %v122
    %v495 = vunpack.c.l.b16 %v123
    %v496 = vunpack.c.h.b16 %v123
    %v497 = vunpack.c.l.b16 %v124
    %v498 = vunpack.c.l.b16 %v125
    %v499 = vunpack.c.h.b16 %v125
    %v500 = vunpack.c.l.b16 %v126
    %v501 = vunpack.c.l.b16 %v127
    %v502 = vunpack.c.h.b16 %v127
    %v503 = vunpack.c.l.b16 %v128
    %v504 = vunpack.c.l.b16 %v129
    %v505 = vunpack.c.h.b16 %v129
    %v506 = vunpack.c.l.b16 %v130
    %v507 = vunpack.c.l.b16 %v131
    %v508 = vunpack.c.h.b16 %v131
    %v509 = vunpack.c.l.b16 %v132
    %v510 = vunpack.c.l.b16 %v133
    %v511 = vunpack.c.h.b16 %v133
    %v512 = vunpack.c.l.b16 %v134
    %v513 = vunpack.c.l.b16 %v135
    %v514 = vunpack.c.h.b16 %v135
    %v515 = vunpack.c.l.b16 %v136
    %v516 = vunpack.c.l.b16 %v137
    %v517 = vunpack.c.h.b16 %v137
    %v518 = vunpack.c.l.b16 %v138
    %v519 = vunpack.c.l.b16 %v139
    %v520 = vunpack.c.h.b16 %v139
    %v521 = vunpack.c.l.b16 %v140
    %v522 = vunpack.c.l.b16 %v141
    %v523 = vunpack.c.h.b16 %v141
    %v524 = vunpack.c.l.b16 %v142
    %v525 = vunpack.c.l.b16 %v143
    %v526 = vunpack.c.h.b16 %v143
    %v527 = vunpack.c.l.b16 %v144
    %v528 = vunpack.c.l.b16 %v145
    %v529 = vunpack.c.h.b16 %v145
    %v530 = vunpack.c.l.b16 %v146
    %v531 = vunpack.c.l.b16 %v147
    %v532 = vunpack.c.h.b16 %v147
    %v533 = vunpack.c.l.b16 %v148
    %v534 = vunpack.c.l.b16 %v149
    %v535 = vunpack.c.h.b16 %v149
    %v536 = vunpack.c.l.b16 %v150
    %v537 = vpack.c.b16 %v390, %v387
    %v538 = vpack.c.b16 %v391, %v388
    %v539 = vpack.c.b16 %v392, %v389
    %v540 = vpack.c.b16 %v396, %v393
    %v541 = vpack.c.b16 %v397, %v394
    %v542 = vpack.c.b16 %v398, %v395
    %v543 = vpack.c.b16 %v402, %v399
    %v544 = vpack.c.b16 %v403, %v400
    %v545 = vpack.c.b16 %v404, %v401
    %v546 = vpack.c.b16 %v408, %v405
    %v547 = vpack.c.b16 %v409, %v406
    %v548 = vpack.c.b16 %v410, %v407
    %v549 = vpack.c.b16 %v414, %v411
    %v550 = vpack.c.b16 %v415, %v412
    %v551 = vpack.c.b16 %v416, %v413
    %v552 = vpack.c.b16 %v420, %v417
    %v553 = vpack.c.b16 %v421, %v418
    %v554 = vpack.c.b16 %v422, %v419
    %v555 = vpack.c.b16 %v426, %v423
    %v556 = vpack.c.b16 %v427, %v424
    %v557 = vpack.c.b16 %v428, %v425
    %v558 = vpack.c.b16 %v432, %v429
    %v559 = vpack.c.b16 %v433, %v430
    %v560 = vpack.c.b16 %v434, %v431
    %v561 = vpack.c.b16 %v438, %v435
    %v562 = vpack.c.b16 %v439, %v436
    %v563 = vpack.c.b16 %v440, %v437
    %v564 = vpack.c.b16 %v444, %v441
    %v565 = vpack.c.b16 %v445, %v442
    %v566 = vpack.c.b16 %v446, %v443
    %v567 = vpack.c.b16 %v450, %v447
    %v568 = vpack.c.b16 %v451, %v448
    %v569 = vpack.c.b16 %v452, %v449
    %v570 = vpack.c.b16 %v456, %v453
    %v571 = vpack.c.b16 %v457, %v454
    %v572 = vpack.c.b16 %v458, %v455
    %v573 = vpack.c.b16 %v462, %v459
    %v574 = vpack.c.b16 %v463, %v460
    %v575 = vpack.c.b16 %v464, %v461
    %v576 = vpack.c.b16 %v468, %v465
    %v577 = vpack.c.b16 %v469, %v466
    %v578 = vpack.c.b16 %v470, %v467
    %v579 = vpack.c.b16 %v474, %v471
    %v580 = vpack.c.b16 %v475, %v472
    %v581 = vpack.c.b16 %v476, %v473
    %v582 = vpack.c.b16 %v480, %v477
    %v583 = vpack.c.b16 %v481, %v478
    %v584 = vpack.c.b16 %v482, %v479
    %v585 = vpack.c.b16 %v486, %v483
    %v586 = vpack.c.b16 %v487, %v484
    %v587 = vpack.c.b16 %v488, %v485
    %v588 = vpack.c.b16 %v492, %v489
    %v589 = vpack.c.b16 %v493, %v490
    %v590 = vpack.c.b16 %v494, %v491
    %v591 = vpack.c.b16 %v498, %v495
    %v592 = vpack.c.b16 %v499, %v496
    %v593 = vpack.c.b16 %v500, %v497
    %v594 = vpack.c.b16 %v504, %v501
    %v595 = vpack.c.b16 %v505, %v502
    %v596 = vpack.c.b16 %v506, %v503
    %v597 = vpack.c.b16 %v510, %v507
    %v598 = vpack.c.b16 %v511, %v508
    %v599 = vpack.c.b16 %v512, %v509
    %v600 = vpack.c.b16 %v516, %v513
    %v601 = vpack.c.b16 %v517, %v514
    %v602 = vpack.c.b16 %v518, %v515
    %v603 = vpack.c.b16 %v522, %v519
    %v604 = vpack.c.b16 %v523, %v520
    %v605 = vpack.c.b16 %v524, %v521
    %v606 = vpack.c.b16 %v528, %v525
    %v607 = vpack.c.b16 %v529, %v526
    %v608 = vpack.c.b16 %v530, %v527
    %v609 = vpack.c.b16 %v534, %v531
    %v610 = vpack.c.b16 %v535, %v532
    %v611 = vpack.c.b16 %v536, %v533
    %v730 = vunpack.c.l.b16 %v219
    %v731 = vunpack.c.h.b16 %v219
    %v732 = vunpack.c.l.b16 %v220
    %v733 = vunpack.c.h.b16 %v220
    %v734 = vunpack.c.l.b16 %v221
    %v735 = vunpack.c.h.b16 %v221
    %v736 = vunpack.c.l.b16 %v222
    %v737 = vunpack.c.h.b16 %v222
    %v738 = vunpack.c.l.b16 %v223
    %v739 = vunpack.c.h.b16 %v223
    %v740 = vunpack.c.l.b16 %v224
    %v741 = vunpack.c.h.b16 %v224
    %v742 = vunpack.c.l.b16 %v225
    %v743 = vunpack.c.h.b16 %v225
    %v744 = vunpack.c.l.b16 %v226
    %v745 = vunpack.c.h.b16 %v226
    %v746 = vunpack.c.l.b16 %v227
    %v747 = vunpack.c.h.b16 %v227
    %v748 = vunpack.c.l.b16 %v228
    %v749 = vunpack.c.h.b16 %v228
    %v750 = vunpack.c.l.b16 %v229
    %v751 = vunpack.c.h.b16 %v229
    %v752 = vunpack.c.l.b16 %v230
    %v753 = vunpack.c.h.b16 %v230
    %v754 = vunpack.c.l.b16 %v231
    %v755 = vunpack.c.h.b16 %v231
    %v756 = vunpack.c.l.b16 %v232
    %v757 = vunpack.c.h.b16 %v232
    %v758 = vunpack.c.l.b16 %v233
    %v759 = vunpack.c.h.b16 %v233
    %v760 = vunpack.c.l.b16 %v234
    %v761 = vunpack.c.h.b16 %v234
    %v762 = vunpack.c.l.b16 %v235
    %v763 = vunpack.c.h.b16 %v235
    %v764 = vunpack.c.l.b16 %v236
    %v765 = vunpack.c.h.b16 %v236
    %v766 = vunpack.c.l.b16 %v237
    %v767 = vunpack.c.h.b16 %v237
    %v768 = vunpack.c.l.b16 %v238
    %v769 = vunpack.c.h.b16 %v238
    %v770 = vunpack.c.l.b16 %v239
    %v771 = vunpack.c.h.b16 %v239
    %v772 = vunpack.c.l.b16 %v240
    %v773 = vunpack.c.h.b16 %v240
    %v774 = vunpack.c.l.b16 %v241
    %v775 = vunpack.c.h.b16 %v241
    %v776 = vunpack.c.l.b16 %v242
    %v777 = vunpack.c.h.b16 %v242
    %v778 = vunpack.c.l.b16 %v243
    %v779 = vunpack.c.h.b16 %v243
    %v780 = vunpack.c.l.b16 %v244
    %v781 = vunpack.c.h.b16 %v244
    %v782 = vunpack.c.l.b16 %v245
    %v783 = vunpack.c.h.b16 %v245
    %v784 = vunpack.c.l.b16 %v246
    %v785 = vunpack.c.h.b16 %v246
    %v786 = vunpack.c.l.b16 %v247
    %v787 = vunpack.c.h.b16 %v247
    %v788 = vunpack.c.l.b16 %v248
    %v789 = vunpack.c.h.b16 %v248
    %v790 = vunpack.c.l.b16 %v249
    %v791 = vunpack.c.h.b16 %v249
    %v792 = vunpack.c.l.b16 %v250
    %v793 = vunpack.c.h.b16 %v250
    %v794 = vunpack.c.l.b16 %v251
    %v795 = vunpack.c.h.b16 %v251
    %v796 = vunpack.c.l.b16 %v252
    %v797 = vunpack.c.h.b16 %v252
    %v798 = vunpack.c.l.b16 %v253
    %v799 = vunpack.c.h.b16 %v253
    %v800 = vunpack.c.l.b16 %v254
    %v801 = vunpack.c.h.b16 %v254
    %v802 = vunpack.c.l.b16 %v255
    %v803 = vunpack.c.h.b16 %v255
    %v804 = vunpack.c.l.b16 %v256
    %v805 = vunpack.c.h.b16 %v256
    %v806 = vunpack.c.l.b16 %v257
    %v807 = vunpack.c.h.b16 %v257
    %v808 = vunpack.c.l.b16 %v258
    %v809 = vunpack.c.h.b16 %v258
    %v810 = vunpack.c.l.b16 %v259
    %v811 = vunpack.c.h.b16 %v259
    %v812 = vunpack.c.l.b16 %v260
    %v813 = vunpack.c.h.b16 %v260
    %v814 = vunpack.c.l.b16 %v261
    %v815 = vunpack.c.h.b16 %v261
    %v816 = vunpack.c.l.b16 %v262
    %v817 = vunpack.c.h.b16 %v262
    %v818 = vunpack.c.l.b16 %v263
    %v819 = vunpack.c.h.b16 %v263
    %v820 = vunpack.c.l.b16 %v264
    %v821 = vunpack.c.h.b16 %v264
    %v822 = vunpack.c.l.b16 %v265
    %v823 = vunpack.c.h.b16 %v265
    %v824 = vunpack.c.l.b16 %v266
    %v825 = vunpack.c.h.b16 %v266
    %v826 = vunpack.c.l.b16 %v267
    %v827 = vunpack.c.h.b16 %v267
    %v828 = vunpack.c.l.b16 %v268
    %v829 = vunpack.c.h.b16 %v268
    %v830 = vunpack.c.l.b16 %v269
    %v831 = vunpack.c.h.b16 %v269
    %v832 = vunpack.c.l.b16 %v270
    %v833 = vunpack.c.h.b16 %v270
    %v834 = vunpack.c.l.b16 %v271
    %v835 = vunpack.c.h.b16 %v271
    %v836 = vunpack.c.l.b16 %v272
    %v837 = vunpack.c.h.b16 %v272
    %v838 = vunpack.c.l.b16 %v273
    %v839 = vunpack.c.h.b16 %v273
    %v840 = vunpack.c.l.b16 %v274
    %v841 = vunpack.c.h.b16 %v274
    %v842 = vunpack.c.l.b16 %v275
    %v843 = vunpack.c.h.b16 %v275
    %v844 = vunpack.c.l.b16 %v276
    %v845 = vunpack.c.h.b16 %v276
    %v846 = vunpack.c.l.b16 %v277
    %v847 = vunpack.c.h.b16 %v277
    %v848 = vunpack.c.l.b16 %v278
    %v849 = vunpack.c.h.b16 %v278
    %v850 = vunpack.c.l.b16 %v279
    %v851 = vunpack.c.h.b16 %v279
    %v852 = vunpack.c.l.b16 %v280
    %v853 = vunpack.c.h.b16 %v280
    %v854 = vunpack.c.l.b16 %v281
    %v855 = vunpack.c.h.b16 %v281
    %v856 = vunpack.c.l.b16 %v282
    %v857 = vunpack.c.h.b16 %v282
    %v858 = vunpack.c.l.b16 %v283
    %v859 = vunpack.c.h.b16 %v283
    %v860 = vunpack.c.l.b16 %v284
    %v861 = vunpack.c.h.b16 %v284
    %v862 = vunpack.c.l.b16 %v285
    %v863 = vunpack.c.h.b16 %v285
    %v864 = vunpack.c.l.b16 %v286
    %v865 = vunpack.c.h.b16 %v286
    %v866 = vpack.c.b16 %v734, %v730
    %v867 = vpack.c.b16 %v735, %v731
    %v868 = vpack.c.b16 %v736, %v732
    %v869 = vpack.c.b16 %v737, %v733
    %v870 = vpack.c.b16 %v742, %v738
    %v871 = vpack.c.b16 %v743, %v739
    %v872 = vpack.c.b16 %v744, %v740
    %v873 = vpack.c.b16 %v745, %v741
    %v874 = vpack.c.b16 %v750, %v746
    %v875 = vpack.c.b16 %v751, %v747
    %v876 = vpack.c.b16 %v752, %v748
    %v877 = vpack.c.b16 %v753, %v749
    %v878 = vpack.c.b16 %v758, %v754
    %v879 = vpack.c.b16 %v759, %v755
    %v880 = vpack.c.b16 %v760, %v756
    %v881 = vpack.c.b16 %v761, %v757
    %v882 = vpack.c.b16 %v766, %v762
    %v883 = vpack.c.b16 %v767, %v763
    %v884 = vpack.c.b16 %v768, %v764
    %v885 = vpack.c.b16 %v769, %v765
    %v886 = vpack.c.b16 %v774, %v770
    %v887 = vpack.c.b16 %v775, %v771
    %v888 = vpack.c.b16 %v776, %v772
    %v889 = vpack.c.b16 %v777, %v773
    %v890 = vpack.c.b16 %v782, %v778
    %v891 = vpack.c.b16 %v783, %v779
    %v892 = vpack.c.b16 %v784, %v780
    %v893 = vpack.c.b16 %v785, %v781
    %v894 = vpack.c.b16 %v790, %v786
    %v895 = vpack.c.b16 %v791, %v787
    %v896 = vpack.c.b16 %v792, %v788
    %v897 = vpack.c.b16 %v793, %v789
    %v898 = vpack.c.b16 %v798, %v794
    %v899 = vpack.c.b16 %v799, %v795
    %v900 = vpack.c.b16 %v800, %v796
    %v901 = vpack.c.b16 %v801, %v797
    %v902 = vpack.c.b16 %v806, %v802
    %v903 = vpack.c.b16 %v807, %v803
    %v904 = vpack.c.b16 %v808, %v804
    %v905 = vpack.c.b16 %v809, %v805
    %v906 = vpack.c.b16 %v814, %v810
    %v907 = vpack.c.b16 %v815, %v811
    %v908 = vpack.c.b16 %v816, %v812
    %v909 = vpack.c.b16 %v817, %v813
    %v910 = vpack.c.b16 %v822, %v818
    %v911 = vpack.c.b16 %v823, %v819
    %v912 = vpack.c.b16 %v824, %v820
    %v913 = vpack.c.b16 %v825, %v821
    %v914 = vpack.c.b16 %v830, %v826
    %v915 = vpack.c.b16 %v831, %v827
    %v916 = vpack.c.b16 %v832, %v828
    %v917 = vpack.c.b16 %v833, %v829
    %v918 = vpack.c.b16 %v838, %v834
    %v919 = vpack.c.b16 %v839, %v835
    %v920 = vpack.c.b16 %v840, %v836
    %v921 = vpack.c.b16 %v841, %v837
    %v922 = vpack.c.b16 %v846, %v842
    %v923 = vpack.c.b16 %v847, %v843
    %v924 = vpack.c.b16 %v848, %v844
    %v925 = vpack.c.b16 %v849, %v845
    %v926 = vpack.c.b16 %v854, %v850
    %v927 = vpack.c.b16 %v855, %v851
    %v928 = vpack.c.b16 %v856, %v852
    %v929 = vpack.c.b16 %v857, %v853
    %v930 = vpack.c.b16 %v862, %v858
    %v931 = vpack.c.b16 %v863, %v859
    %v932 = vpack.c.b16 %v864, %v860
    %v933 = vpack.c.b16 %v865, %v861
    %vm1002 = vcmask 130048
    %v1004 = vsel %vm1002, %v539, 0
    %v1007 = vsel %vm1002, %v542, 0
    %v1010 = vsel %vm1002, %v545, 0
    %v1013 = vsel %vm1002, %v548, 0
    %v1016 = vsel %vm1002, %v551, 0
    %v1019 = vsel %vm1002, %v554, 0
    %v1022 = vsel %vm1002, %v557, 0
    %v1025 = vsel %vm1002, %v560, 0
    %v1028 = vsel %vm1002, %v563, 0
    %v1031 = vsel %vm1002, %v566, 0
    %v1034 = vsel %vm1002, %v569, 0
    %v1037 = vsel %vm1002, %v572, 0
    %v1040 = vsel %vm1002, %v575, 0
    %v1043 = vsel %vm1002, %v578, 0
    %v1046 = vsel %vm1002, %v581, 0
    %v1049 = vsel %vm1002, %v584, 0
    %v1052 = vsel %vm1002, %v587, 0
    %v1055 = vsel %vm1002, %v590, 0
    %v1058 = vsel %vm1002, %v593, 0
    %v1061 = vsel %vm1002, %v596, 0
    %v1064 = vsel %vm1002, %v599, 0
    %v1067 = vsel %vm1002, %v602, 0
    %v1070 = vsel %vm1002, %v605, 0
    %v1073 = vsel %vm1002, %v608, 0
    %v1076 = vsel %vm1002, %v611, 0
    %1078 = vmatprep.subr.bf16.mxu0 %v867
    %1079 = vmatpush1.bf16.msra.mxu0 %v866
    %1080 = vmatprep.subr.bf16.mxu0 %v871
    %1081 = vmatpush1.bf16.msra.mxu0 %v870
    %1082 = vmatprep.subr.bf16.mxu0 %v875
    %1083 = vmatpush1.bf16.msra.mxu0 %v874
    %1084 = vmatprep.subr.bf16.mxu0 %v879
    %1085 = vmatpush1.bf16.msra.mxu0 %v878
    %1086 = vmatprep.subr.bf16.mxu0 %v883
    %1087 = vmatpush1.bf16.msra.mxu0 %v882
    %1088 = vmatprep.subr.bf16.mxu0 %v887
    %1089 = vmatpush1.bf16.msra.mxu0 %v886
    %1090 = vmatprep.subr.bf16.mxu0 %v891
    %1091 = vmatpush1.bf16.msra.mxu0 %v890
    %1092 = vmatprep.subr.bf16.mxu0 %v895
    %1093 = vmatpush1.bf16.msra.mxu0 %v894
    %1094 = vmatprep.subr.bf16.mxu0 %v899
    %1095 = vmatpush1.bf16.msra.mxu0 %v898
    %1096 = vmatprep.subr.bf16.mxu0 %v903
    %1097 = vmatpush1.bf16.msra.mxu0 %v902
    %1098 = vmatprep.subr.bf16.mxu0 %v907
    %1099 = vmatpush1.bf16.msra.mxu0 %v906
    %1100 = vmatprep.subr.bf16.mxu0 %v911
    %1101 = vmatpush1.bf16.msra.mxu0 %v910
    %1102 = vmatprep.subr.bf16.mxu0 %v915
    %1103 = vmatpush1.bf16.msra.mxu0 %v914
    %1104 = vmatprep.subr.bf16.mxu0 %v919
    %1105 = vmatpush1.bf16.msra.mxu0 %v918
    %1106 = vmatprep.subr.bf16.mxu0 %v923
    %1107 = vmatpush1.bf16.msra.mxu0 %v922
    %1108 = vmatprep.subr.bf16.mxu0 %v927
    %1109 = vmatpush1.bf16.msra.mxu0 %v926
    %1110 = vmatprep.mubr.bf16.mxu0 %v538
    %1111 = vmatmul.mubr.bf16.gmra.mrb[0].mxu0 %v537
    %v1112 = vpop.f32.mrb[0].mxu0
    %v1113 = vadd.f32 0.0, %v1112
    %v1114 = vpop.f32.mrb[0].mxu0
    %v1115 = vadd.f32 0.0, %v1114
    %v1116 = vpop.f32.mrb[0].mxu0
    %v1117 = vadd.f32 0.0, %v1116
    %v1118 = vpop.f32.mrb[0].mxu0
    %v1119 = vadd.f32 0.0, %v1118
    %1120 = vmatprep.mubr.bf16.mxu0 %v541
    %1121 = vmatmul.mubr.bf16.gmra.mrb[0].mxu0 %v540
    %v1122 = vpop.f32.mrb[0].mxu0
    %v1123 = vadd.f32 0.0, %v1122
    %v1124 = vpop.f32.mrb[0].mxu0
    %v1125 = vadd.f32 0.0, %v1124
    %v1126 = vpop.f32.mrb[0].mxu0
    %v1127 = vadd.f32 0.0, %v1126
    %v1128 = vpop.f32.mrb[0].mxu0
    %v1129 = vadd.f32 0.0, %v1128
    %1130 = vmatprep.mubr.bf16.mxu0 %v544
    %1131 = vmatmul.mubr.bf16.gmra.mrb[0].mxu0 %v543
    %v1132 = vpop.f32.mrb[0].mxu0
    %v1133 = vadd.f32 0.0, %v1132
    %v1134 = vpop.f32.mrb[0].mxu0
    %v1135 = vadd.f32 0.0, %v1134
    %v1136 = vpop.f32.mrb[0].mxu0
    %v1137 = vadd.f32 0.0, %v1136
    %v1138 = vpop.f32.mrb[0].mxu0
    %v1139 = vadd.f32 0.0, %v1138
    %1140 = vmatprep.mubr.bf16.mxu0 %v547
    %1141 = vmatmul.mubr.bf16.gmra.mrb[0].mxu0 %v546
    %v1142 = vpop.f32.mrb[0].mxu0
    %v1143 = vadd.f32 0.0, %v1142
    %v1144 = vpop.f32.mrb[0].mxu0
    %v1145 = vadd.f32 0.0, %v1144
    %v1146 = vpop.f32.mrb[0].mxu0
    %v1147 = vadd.f32 0.0, %v1146
    %v1148 = vpop.f32.mrb[0].mxu0
    %v1149 = vadd.f32 0.0, %v1148
    %1150 = vmatprep.mubr.bf16.mxu0 %v550
    %1151 = vmatmul.mubr.bf16.gmra.mrb[0].mxu0 %v549
    %v1152 = vpop.f32.mrb[0].mxu0
    %v1153 = vadd.f32 0.0, %v1152
    %v1154 = vpop.f32.mrb[0].mxu0
    %v1155 = vadd.f32 0.0, %v1154
    %v1156 = vpop.f32.mrb[0].mxu0
    %v1157 = vadd.f32 0.0, %v1156
    %v1158 = vpop.f32.mrb[0].mxu0
    %v1159 = vadd.f32 0.0, %v1158
    %1160 = vmatprep.mubr.bf16.mxu0 %v553
    %1161 = vmatmul.mubr.bf16.gmra.mrb[0].mxu0 %v552
    %v1162 = vpop.f32.mrb[0].mxu0
    %v1163 = vadd.f32 0.0, %v1162
    %v1164 = vpop.f32.mrb[0].mxu0
    %v1165 = vadd.f32 0.0, %v1164
    %v1166 = vpop.f32.mrb[0].mxu0
    %v1167 = vadd.f32 0.0, %v1166
    %v1168 = vpop.f32.mrb[0].mxu0
    %v1169 = vadd.f32 0.0, %v1168
    %1170 = vmatprep.mubr.bf16.mxu0 %v556
    %1171 = vmatmul.mubr.bf16.gmra.mrb[0].mxu0 %v555
    %v1172 = vpop.f32.mrb[0].mxu0
    %v1173 = vadd.f32 0.0, %v1172
    %v1174 = vpop.f32.mrb[0].mxu0
    %v1175 = vadd.f32 0.0, %v1174
    %v1176 = vpop.f32.mrb[0].mxu0
    %v1177 = vadd.f32 0.0, %v1176
    %v1178 = vpop.f32.mrb[0].mxu0
    %v1179 = vadd.f32 0.0, %v1178
    %1180 = vmatprep.mubr.bf16.mxu0 %v559
    %1181 = vmatmul.mubr.bf16.gmra.mrb[0].mxu0 %v558
    %v1182 = vpop.f32.mrb[0].mxu0
    %v1183 = vadd.f32 0.0, %v1182
    %v1184 = vpop.f32.mrb[0].mxu0
    %v1185 = vadd.f32 0.0, %v1184
    %v1186 = vpop.f32.mrb[0].mxu0
    %v1187 = vadd.f32 0.0, %v1186
    %v1188 = vpop.f32.mrb[0].mxu0
    %v1189 = vadd.f32 0.0, %v1188
    %1190 = vmatprep.mubr.bf16.mxu0 %v562
    %1191 = vmatmul.mubr.bf16.gmra.mrb[0].mxu0 %v561
    %v1192 = vpop.f32.mrb[0].mxu0
    %v1193 = vadd.f32 0.0, %v1192
    %v1194 = vpop.f32.mrb[0].mxu0
    %v1195 = vadd.f32 0.0, %v1194
    %v1196 = vpop.f32.mrb[0].mxu0
    %v1197 = vadd.f32 0.0, %v1196
    %v1198 = vpop.f32.mrb[0].mxu0
    %v1199 = vadd.f32 0.0, %v1198
    %1200 = vmatprep.mubr.bf16.mxu0 %v565
    %1201 = vmatmul.mubr.bf16.gmra.mrb[0].mxu0 %v564
    %v1202 = vpop.f32.mrb[0].mxu0
    %v1203 = vadd.f32 0.0, %v1202
    %v1204 = vpop.f32.mrb[0].mxu0
    %v1205 = vadd.f32 0.0, %v1204
    %v1206 = vpop.f32.mrb[0].mxu0
    %v1207 = vadd.f32 0.0, %v1206
    %v1208 = vpop.f32.mrb[0].mxu0
    %v1209 = vadd.f32 0.0, %v1208
    %1210 = vmatprep.mubr.bf16.mxu0 %v568
    %1211 = vmatmul.mubr.bf16.gmra.mrb[0].mxu0 %v567
    %v1212 = vpop.f32.mrb[0].mxu0
    %v1213 = vadd.f32 0.0, %v1212
    %v1214 = vpop.f32.mrb[0].mxu0
    %v1215 = vadd.f32 0.0, %v1214
    %v1216 = vpop.f32.mrb[0].mxu0
    %v1217 = vadd.f32 0.0, %v1216
    %v1218 = vpop.f32.mrb[0].mxu0
    %v1219 = vadd.f32 0.0, %v1218
    %1220 = vmatprep.mubr.bf16.mxu0 %v571
    %1221 = vmatmul.mubr.bf16.gmra.mrb[0].mxu0 %v570
    %v1222 = vpop.f32.mrb[0].mxu0
    %v1223 = vadd.f32 0.0, %v1222
    %v1224 = vpop.f32.mrb[0].mxu0
    %v1225 = vadd.f32 0.0, %v1224
    %v1226 = vpop.f32.mrb[0].mxu0
    %v1227 = vadd.f32 0.0, %v1226
    %v1228 = vpop.f32.mrb[0].mxu0
    %v1229 = vadd.f32 0.0, %v1228
    %1230 = vmatprep.mubr.bf16.mxu0 %v574
    %1231 = vmatmul.mubr.bf16.gmra.mrb[0].mxu0 %v573
    %v1232 = vpop.f32.mrb[0].mxu0
    %v1233 = vadd.f32 0.0, %v1232
    %v1234 = vpop.f32.mrb[0].mxu0
    %v1235 = vadd.f32 0.0, %v1234
    %v1236 = vpop.f32.mrb[0].mxu0
    %v1237 = vadd.f32 0.0, %v1236
    %v1238 = vpop.f32.mrb[0].mxu0
    %v1239 = vadd.f32 0.0, %v1238
    %1240 = vmatprep.mubr.bf16.mxu0 %v577
    %1241 = vmatmul.mubr.bf16.gmra.mrb[0].mxu0 %v576
    %v1242 = vpop.f32.mrb[0].mxu0
    %v1243 = vadd.f32 0.0, %v1242
    %v1244 = vpop.f32.mrb[0].mxu0
    %v1245 = vadd.f32 0.0, %v1244
    %v1246 = vpop.f32.mrb[0].mxu0
    %v1247 = vadd.f32 0.0, %v1246
    %v1248 = vpop.f32.mrb[0].mxu0
    %v1249 = vadd.f32 0.0, %v1248
    %1250 = vmatprep.mubr.bf16.mxu0 %v580
    %1251 = vmatmul.mubr.bf16.gmra.mrb[0].mxu0 %v579
    %v1252 = vpop.f32.mrb[0].mxu0
    %v1253 = vadd.f32 0.0, %v1252
    %v1254 = vpop.f32.mrb[0].mxu0
    %v1255 = vadd.f32 0.0, %v1254
    %v1256 = vpop.f32.mrb[0].mxu0
    %v1257 = vadd.f32 0.0, %v1256
    %v1258 = vpop.f32.mrb[0].mxu0
    %v1259 = vadd.f32 0.0, %v1258
    %1260 = vmatprep.mubr.bf16.mxu0 %v583
    %1261 = vmatmul.mubr.bf16.gmra.mrb[0].mxu0 %v582
    %v1262 = vpop.f32.mrb[0].mxu0
    %v1263 = vadd.f32 0.0, %v1262
    %v1264 = vpop.f32.mrb[0].mxu0
    %v1265 = vadd.f32 0.0, %v1264
    %v1266 = vpop.f32.mrb[0].mxu0
    %v1267 = vadd.f32 0.0, %v1266
    %v1268 = vpop.f32.mrb[0].mxu0
    %v1269 = vadd.f32 0.0, %v1268
    %1270 = vmatprep.mubr.bf16.mxu0 %v586
    %1271 = vmatmul.mubr.bf16.gmra.mrb[0].mxu0 %v585
    %v1272 = vpop.f32.mrb[0].mxu0
    %v1273 = vadd.f32 0.0, %v1272
    %v1274 = vpop.f32.mrb[0].mxu0
    %v1275 = vadd.f32 0.0, %v1274
    %v1276 = vpop.f32.mrb[0].mxu0
    %v1277 = vadd.f32 0.0, %v1276
    %v1278 = vpop.f32.mrb[0].mxu0
    %v1279 = vadd.f32 0.0, %v1278
    %1280 = vmatprep.mubr.bf16.mxu0 %v589
    %1281 = vmatmul.mubr.bf16.gmra.mrb[0].mxu0 %v588
    %v1282 = vpop.f32.mrb[0].mxu0
    %v1283 = vadd.f32 0.0, %v1282
    %v1284 = vpop.f32.mrb[0].mxu0
    %v1285 = vadd.f32 0.0, %v1284
    %v1286 = vpop.f32.mrb[0].mxu0
    %v1287 = vadd.f32 0.0, %v1286
    %v1288 = vpop.f32.mrb[0].mxu0
    %v1289 = vadd.f32 0.0, %v1288
    %1290 = vmatprep.mubr.bf16.mxu0 %v592
    %1291 = vmatmul.mubr.bf16.gmra.mrb[0].mxu0 %v591
    %v1292 = vpop.f32.mrb[0].mxu0
    %v1293 = vadd.f32 0.0, %v1292
    %v1294 = vpop.f32.mrb[0].mxu0
    %v1295 = vadd.f32 0.0, %v1294
    %v1296 = vpop.f32.mrb[0].mxu0
    %v1297 = vadd.f32 0.0, %v1296
    %v1298 = vpop.f32.mrb[0].mxu0
    %v1299 = vadd.f32 0.0, %v1298
    %1300 = vmatprep.mubr.bf16.mxu0 %v595
    %1301 = vmatmul.mubr.bf16.gmra.mrb[0].mxu0 %v594
    %v1302 = vpop.f32.mrb[0].mxu0
    %v1303 = vadd.f32 0.0, %v1302
    %v1304 = vpop.f32.mrb[0].mxu0
    %v1305 = vadd.f32 0.0, %v1304
    %v1306 = vpop.f32.mrb[0].mxu0
    %v1307 = vadd.f32 0.0, %v1306
    %v1308 = vpop.f32.mrb[0].mxu0
    %v1309 = vadd.f32 0.0, %v1308
    %1310 = vmatprep.mubr.bf16.mxu0 %v598
    %1311 = vmatmul.mubr.bf16.gmra.mrb[0].mxu0 %v597
    %v1312 = vpop.f32.mrb[0].mxu0
    %v1313 = vadd.f32 0.0, %v1312
    %v1314 = vpop.f32.mrb[0].mxu0
    %v1315 = vadd.f32 0.0, %v1314
    %v1316 = vpop.f32.mrb[0].mxu0
    %v1317 = vadd.f32 0.0, %v1316
    %v1318 = vpop.f32.mrb[0].mxu0
    %v1319 = vadd.f32 0.0, %v1318
    %1320 = vmatprep.mubr.bf16.mxu0 %v601
    %1321 = vmatmul.mubr.bf16.gmra.mrb[0].mxu0 %v600
    %v1322 = vpop.f32.mrb[0].mxu0
    %v1323 = vadd.f32 0.0, %v1322
    %v1324 = vpop.f32.mrb[0].mxu0
    %v1325 = vadd.f32 0.0, %v1324
    %v1326 = vpop.f32.mrb[0].mxu0
    %v1327 = vadd.f32 0.0, %v1326
    %v1328 = vpop.f32.mrb[0].mxu0
    %v1329 = vadd.f32 0.0, %v1328
    %1330 = vmatprep.mubr.bf16.mxu0 %v604
    %1331 = vmatmul.mubr.bf16.gmra.mrb[0].mxu0 %v603
    %v1332 = vpop.f32.mrb[0].mxu0
    %v1333 = vadd.f32 0.0, %v1332
    %v1334 = vpop.f32.mrb[0].mxu0
    %v1335 = vadd.f32 0.0, %v1334
    %v1336 = vpop.f32.mrb[0].mxu0
    %v1337 = vadd.f32 0.0, %v1336
    %v1338 = vpop.f32.mrb[0].mxu0
    %v1339 = vadd.f32 0.0, %v1338
    %1340 = vmatprep.mubr.bf16.mxu0 %v607
    %1341 = vmatmul.mubr.bf16.gmra.mrb[0].mxu0 %v606
    %v1342 = vpop.f32.mrb[0].mxu0
    %v1343 = vadd.f32 0.0, %v1342
    %v1344 = vpop.f32.mrb[0].mxu0
    %v1345 = vadd.f32 0.0, %v1344
    %v1346 = vpop.f32.mrb[0].mxu0
    %v1347 = vadd.f32 0.0, %v1346
    %v1348 = vpop.f32.mrb[0].mxu0
    %v1349 = vadd.f32 0.0, %v1348
    %1350 = vmatprep.mubr.bf16.mxu0 %v610
    %1351 = vmatmul.mubr.bf16.gmra.mrb[0].mxu0 %v609
    %v1352 = vpop.f32.mrb[0].mxu0
    %v1353 = vadd.f32 0.0, %v1352
    %v1354 = vpop.f32.mrb[0].mxu0
    %v1355 = vadd.f32 0.0, %v1354
    %v1356 = vpop.f32.mrb[0].mxu0
    %v1357 = vadd.f32 0.0, %v1356
    %v1358 = vpop.f32.mrb[0].mxu0
    %v1359 = vadd.f32 0.0, %v1358
    %1360 = vdwg.mxu0
    %1361 = vmatprep.subr.bf16.mxu0 %v931
    %1362 = vmatpush1.bf16.msra.mxu0 %v930
    %1363 = vmatprep.subr.bf16.mxu0 0
    %1364 = vmatpush1.bf16.msra.mxu0 0
    %1365 = vmatprep.subr.bf16.mxu0 0
    %1366 = vmatpush1.bf16.msra.mxu0 0
    %1367 = vmatprep.subr.bf16.mxu0 0
    %1368 = vmatpush1.bf16.msra.mxu0 0
    %1369 = vmatprep.subr.bf16.mxu0 0
    %1370 = vmatpush1.bf16.msra.mxu0 0
    %1371 = vmatprep.subr.bf16.mxu0 0
    %1372 = vmatpush1.bf16.msra.mxu0 0
    %1373 = vmatprep.subr.bf16.mxu0 0
    %1374 = vmatpush1.bf16.msra.mxu0 0
    %1375 = vmatprep.subr.bf16.mxu0 0
    %1376 = vmatpush1.bf16.msra.mxu0 0
    %1377 = vmatprep.subr.bf16.mxu0 0
    %1378 = vmatpush1.bf16.msra.mxu0 0
    %1379 = vmatprep.subr.bf16.mxu0 0
    %1380 = vmatpush1.bf16.msra.mxu0 0
    %1381 = vmatprep.subr.bf16.mxu0 0
    %1382 = vmatpush1.bf16.msra.mxu0 0
    %1383 = vmatprep.subr.bf16.mxu0 0
    %1384 = vmatpush1.bf16.msra.mxu0 0
    %1385 = vmatprep.subr.bf16.mxu0 0
    %1386 = vmatpush1.bf16.msra.mxu0 0
    %1387 = vmatprep.subr.bf16.mxu0 0
    %1388 = vmatpush1.bf16.msra.mxu0 0
    %1389 = vmatprep.subr.bf16.mxu0 0
    %1390 = vmatpush1.bf16.msra.mxu0 0
    %1391 = vmatprep.subr.bf16.mxu0 0
    %1392 = vmatpush1.bf16.msra.mxu0 0
    %1393 = vmatprep.mubr.bf16.mxu0 0
    %1394 = vmatmul.mubr.bf16.gmra.mrb[0].mxu0 %v1004
    %v1395 = vpop.f32.mrb[0].mxu0
    %v1396 = vadd.f32 %v1113, %v1395
    %v1397 = vpop.f32.mrb[0].mxu0
    %v1398 = vadd.f32 %v1115, %v1397
    %v1399 = vpop.f32.mrb[0].mxu0
    %v1400 = vadd.f32 %v1117, %v1399
    %v1401 = vpop.f32.mrb[0].mxu0
    %v1402 = vadd.f32 %v1119, %v1401
    %1403 = vmatprep.mubr.bf16.mxu0 0
    %1404 = vmatmul.mubr.bf16.gmra.mrb[0].mxu0 %v1007
    %v1405 = vpop.f32.mrb[0].mxu0
    %v1406 = vadd.f32 %v1123, %v1405
    %v1407 = vpop.f32.mrb[0].mxu0
    %v1408 = vadd.f32 %v1125, %v1407
    %v1409 = vpop.f32.mrb[0].mxu0
    %v1410 = vadd.f32 %v1127, %v1409
    %v1411 = vpop.f32.mrb[0].mxu0
    %v1412 = vadd.f32 %v1129, %v1411
    %1413 = vmatprep.mubr.bf16.mxu0 0
    %1414 = vmatmul.mubr.bf16.gmra.mrb[0].mxu0 %v1010
    %v1415 = vpop.f32.mrb[0].mxu0
    %v1416 = vadd.f32 %v1133, %v1415
    %v1417 = vpop.f32.mrb[0].mxu0
    %v1418 = vadd.f32 %v1135, %v1417
    %v1419 = vpop.f32.mrb[0].mxu0
    %v1420 = vadd.f32 %v1137, %v1419
    %v1421 = vpop.f32.mrb[0].mxu0
    %v1422 = vadd.f32 %v1139, %v1421
    %1423 = vmatprep.mubr.bf16.mxu0 0
    %1424 = vmatmul.mubr.bf16.gmra.mrb[0].mxu0 %v1013
    %v1425 = vpop.f32.mrb[0].mxu0
    %v1426 = vadd.f32 %v1143, %v1425
    %v1427 = vpop.f32.mrb[0].mxu0
    %v1428 = vadd.f32 %v1145, %v1427
    %v1429 = vpop.f32.mrb[0].mxu0
    %v1430 = vadd.f32 %v1147, %v1429
    %v1431 = vpop.f32.mrb[0].mxu0
    %v1432 = vadd.f32 %v1149, %v1431
    %1433 = vmatprep.mubr.bf16.mxu0 0
    %1434 = vmatmul.mubr.bf16.gmra.mrb[0].mxu0 %v1016
    %v1435 = vpop.f32.mrb[0].mxu0
    %v1436 = vadd.f32 %v1153, %v1435
    %v1437 = vpop.f32.mrb[0].mxu0
    %v1438 = vadd.f32 %v1155, %v1437
    %v1439 = vpop.f32.mrb[0].mxu0
    %v1440 = vadd.f32 %v1157, %v1439
    %v1441 = vpop.f32.mrb[0].mxu0
    %v1442 = vadd.f32 %v1159, %v1441
    %1443 = vmatprep.mubr.bf16.mxu0 0
    %1444 = vmatmul.mubr.bf16.gmra.mrb[0].mxu0 %v1019
    %v1445 = vpop.f32.mrb[0].mxu0
    %v1446 = vadd.f32 %v1163, %v1445
    %v1447 = vpop.f32.mrb[0].mxu0
    %v1448 = vadd.f32 %v1165, %v1447
    %v1449 = vpop.f32.mrb[0].mxu0
    %v1450 = vadd.f32 %v1167, %v1449
    %v1451 = vpop.f32.mrb[0].mxu0
    %v1452 = vadd.f32 %v1169, %v1451
    %1453 = vmatprep.mubr.bf16.mxu0 0
    %1454 = vmatmul.mubr.bf16.gmra.mrb[0].mxu0 %v1022
    %v1455 = vpop.f32.mrb[0].mxu0
    %v1456 = vadd.f32 %v1173, %v1455
    %v1457 = vpop.f32.mrb[0].mxu0
    %v1458 = vadd.f32 %v1175, %v1457
    %v1459 = vpop.f32.mrb[0].mxu0
    %v1460 = vadd.f32 %v1177, %v1459
    %v1461 = vpop.f32.mrb[0].mxu0
    %v1462 = vadd.f32 %v1179, %v1461
    %1463 = vmatprep.mubr.bf16.mxu0 0
    %1464 = vmatmul.mubr.bf16.gmra.mrb[0].mxu0 %v1025
    %v1465 = vpop.f32.mrb[0].mxu0
    %v1466 = vadd.f32 %v1183, %v1465
    %v1467 = vpop.f32.mrb[0].mxu0
    %v1468 = vadd.f32 %v1185, %v1467
    %v1469 = vpop.f32.mrb[0].mxu0
    %v1470 = vadd.f32 %v1187, %v1469
    %v1471 = vpop.f32.mrb[0].mxu0
    %v1472 = vadd.f32 %v1189, %v1471
    %1473 = vmatprep.mubr.bf16.mxu0 0
    %1474 = vmatmul.mubr.bf16.gmra.mrb[0].mxu0 %v1028
    %v1475 = vpop.f32.mrb[0].mxu0
    %v1476 = vadd.f32 %v1193, %v1475
    %v1477 = vpop.f32.mrb[0].mxu0
    %v1478 = vadd.f32 %v1195, %v1477
    %v1479 = vpop.f32.mrb[0].mxu0
    %v1480 = vadd.f32 %v1197, %v1479
    %v1481 = vpop.f32.mrb[0].mxu0
    %v1482 = vadd.f32 %v1199, %v1481
    %1483 = vmatprep.mubr.bf16.mxu0 0
    %1484 = vmatmul.mubr.bf16.gmra.mrb[0].mxu0 %v1031
    %v1485 = vpop.f32.mrb[0].mxu0
    %v1486 = vadd.f32 %v1203, %v1485
    %v1487 = vpop.f32.mrb[0].mxu0
    %v1488 = vadd.f32 %v1205, %v1487
    %v1489 = vpop.f32.mrb[0].mxu0
    %v1490 = vadd.f32 %v1207, %v1489
    %v1491 = vpop.f32.mrb[0].mxu0
    %v1492 = vadd.f32 %v1209, %v1491
    %1493 = vmatprep.mubr.bf16.mxu0 0
    %1494 = vmatmul.mubr.bf16.gmra.mrb[0].mxu0 %v1034
    %v1495 = vpop.f32.mrb[0].mxu0
    %v1496 = vadd.f32 %v1213, %v1495
    %v1497 = vpop.f32.mrb[0].mxu0
    %v1498 = vadd.f32 %v1215, %v1497
    %v1499 = vpop.f32.mrb[0].mxu0
    %v1500 = vadd.f32 %v1217, %v1499
    %v1501 = vpop.f32.mrb[0].mxu0
    %v1502 = vadd.f32 %v1219, %v1501
    %1503 = vmatprep.mubr.bf16.mxu0 0
    %1504 = vmatmul.mubr.bf16.gmra.mrb[0].mxu0 %v1037
    %v1505 = vpop.f32.mrb[0].mxu0
    %v1506 = vadd.f32 %v1223, %v1505
    %v1507 = vpop.f32.mrb[0].mxu0
    %v1508 = vadd.f32 %v1225, %v1507
    %v1509 = vpop.f32.mrb[0].mxu0
    %v1510 = vadd.f32 %v1227, %v1509
    %v1511 = vpop.f32.mrb[0].mxu0
    %v1512 = vadd.f32 %v1229, %v1511
    %1513 = vmatprep.mubr.bf16.mxu0 0
    %1514 = vmatmul.mubr.bf16.gmra.mrb[0].mxu0 %v1040
    %v1515 = vpop.f32.mrb[0].mxu0
    %v1516 = vadd.f32 %v1233, %v1515
    %v1517 = vpop.f32.mrb[0].mxu0
    %v1518 = vadd.f32 %v1235, %v1517
    %v1519 = vpop.f32.mrb[0].mxu0
    %v1520 = vadd.f32 %v1237, %v1519
    %v1521 = vpop.f32.mrb[0].mxu0
    %v1522 = vadd.f32 %v1239, %v1521
    %1523 = vmatprep.mubr.bf16.mxu0 0
    %1524 = vmatmul.mubr.bf16.gmra.mrb[0].mxu0 %v1043
    %v1525 = vpop.f32.mrb[0].mxu0
    %v1526 = vadd.f32 %v1243, %v1525
    %v1527 = vpop.f32.mrb[0].mxu0
    %v1528 = vadd.f32 %v1245, %v1527
    %v1529 = vpop.f32.mrb[0].mxu0
    %v1530 = vadd.f32 %v1247, %v1529
    %v1531 = vpop.f32.mrb[0].mxu0
    %v1532 = vadd.f32 %v1249, %v1531
    %1533 = vmatprep.mubr.bf16.mxu0 0
    %1534 = vmatmul.mubr.bf16.gmra.mrb[0].mxu0 %v1046
    %v1535 = vpop.f32.mrb[0].mxu0
    %v1536 = vadd.f32 %v1253, %v1535
    %v1537 = vpop.f32.mrb[0].mxu0
    %v1538 = vadd.f32 %v1255, %v1537
    %v1539 = vpop.f32.mrb[0].mxu0
    %v1540 = vadd.f32 %v1257, %v1539
    %v1541 = vpop.f32.mrb[0].mxu0
    %v1542 = vadd.f32 %v1259, %v1541
    %1543 = vmatprep.mubr.bf16.mxu0 0
    %1544 = vmatmul.mubr.bf16.gmra.mrb[0].mxu0 %v1049
    %v1545 = vpop.f32.mrb[0].mxu0
    %v1546 = vadd.f32 %v1263, %v1545
    %v1547 = vpop.f32.mrb[0].mxu0
    %v1548 = vadd.f32 %v1265, %v1547
    %v1549 = vpop.f32.mrb[0].mxu0
    %v1550 = vadd.f32 %v1267, %v1549
    %v1551 = vpop.f32.mrb[0].mxu0
    %v1552 = vadd.f32 %v1269, %v1551
    %1553 = vmatprep.mubr.bf16.mxu0 0
    %1554 = vmatmul.mubr.bf16.gmra.mrb[0].mxu0 %v1052
    %v1555 = vpop.f32.mrb[0].mxu0
    %v1556 = vadd.f32 %v1273, %v1555
    %v1557 = vpop.f32.mrb[0].mxu0
    %v1558 = vadd.f32 %v1275, %v1557
    %v1559 = vpop.f32.mrb[0].mxu0
    %v1560 = vadd.f32 %v1277, %v1559
    %v1561 = vpop.f32.mrb[0].mxu0
    %v1562 = vadd.f32 %v1279, %v1561
    %1563 = vmatprep.mubr.bf16.mxu0 0
    %1564 = vmatmul.mubr.bf16.gmra.mrb[0].mxu0 %v1055
    %v1565 = vpop.f32.mrb[0].mxu0
    %v1566 = vadd.f32 %v1283, %v1565
    %v1567 = vpop.f32.mrb[0].mxu0
    %v1568 = vadd.f32 %v1285, %v1567
    %v1569 = vpop.f32.mrb[0].mxu0
    %v1570 = vadd.f32 %v1287, %v1569
    %v1571 = vpop.f32.mrb[0].mxu0
    %v1572 = vadd.f32 %v1289, %v1571
    %1573 = vmatprep.mubr.bf16.mxu0 0
    %1574 = vmatmul.mubr.bf16.gmra.mrb[0].mxu0 %v1058
    %v1575 = vpop.f32.mrb[0].mxu0
    %v1576 = vadd.f32 %v1293, %v1575
    %v1577 = vpop.f32.mrb[0].mxu0
    %v1578 = vadd.f32 %v1295, %v1577
    %v1579 = vpop.f32.mrb[0].mxu0
    %v1580 = vadd.f32 %v1297, %v1579
    %v1581 = vpop.f32.mrb[0].mxu0
    %v1582 = vadd.f32 %v1299, %v1581
    %1583 = vmatprep.mubr.bf16.mxu0 0
    %1584 = vmatmul.mubr.bf16.gmra.mrb[0].mxu0 %v1061
    %v1585 = vpop.f32.mrb[0].mxu0
    %v1586 = vadd.f32 %v1303, %v1585
    %v1587 = vpop.f32.mrb[0].mxu0
    %v1588 = vadd.f32 %v1305, %v1587
    %v1589 = vpop.f32.mrb[0].mxu0
    %v1590 = vadd.f32 %v1307, %v1589
    %v1591 = vpop.f32.mrb[0].mxu0
    %v1592 = vadd.f32 %v1309, %v1591
    %1593 = vmatprep.mubr.bf16.mxu0 0
    %1594 = vmatmul.mubr.bf16.gmra.mrb[0].mxu0 %v1064
    %v1595 = vpop.f32.mrb[0].mxu0
    %v1596 = vadd.f32 %v1313, %v1595
    %v1597 = vpop.f32.mrb[0].mxu0
    %v1598 = vadd.f32 %v1315, %v1597
    %v1599 = vpop.f32.mrb[0].mxu0
    %v1600 = vadd.f32 %v1317, %v1599
    %v1601 = vpop.f32.mrb[0].mxu0
    %v1602 = vadd.f32 %v1319, %v1601
    %1603 = vmatprep.mubr.bf16.mxu0 0
    %1604 = vmatmul.mubr.bf16.gmra.mrb[0].mxu0 %v1067
    %v1605 = vpop.f32.mrb[0].mxu0
    %v1606 = vadd.f32 %v1323, %v1605
    %v1607 = vpop.f32.mrb[0].mxu0
    %v1608 = vadd.f32 %v1325, %v1607
    %v1609 = vpop.f32.mrb[0].mxu0
    %v1610 = vadd.f32 %v1327, %v1609
    %v1611 = vpop.f32.mrb[0].mxu0
    %v1612 = vadd.f32 %v1329, %v1611
    %1613 = vmatprep.mubr.bf16.mxu0 0
    %1614 = vmatmul.mubr.bf16.gmra.mrb[0].mxu0 %v1070
    %v1615 = vpop.f32.mrb[0].mxu0
    %v1616 = vadd.f32 %v1333, %v1615
    %v1617 = vpop.f32.mrb[0].mxu0
    %v1618 = vadd.f32 %v1335, %v1617
    %v1619 = vpop.f32.mrb[0].mxu0
    %v1620 = vadd.f32 %v1337, %v1619
    %v1621 = vpop.f32.mrb[0].mxu0
    %v1622 = vadd.f32 %v1339, %v1621
    %1623 = vmatprep.mubr.bf16.mxu0 0
    %1624 = vmatmul.mubr.bf16.gmra.mrb[0].mxu0 %v1073
    %v1625 = vpop.f32.mrb[0].mxu0
    %v1626 = vadd.f32 %v1343, %v1625
    %v1627 = vpop.f32.mrb[0].mxu0
    %v1628 = vadd.f32 %v1345, %v1627
    %v1629 = vpop.f32.mrb[0].mxu0
    %v1630 = vadd.f32 %v1347, %v1629
    %v1631 = vpop.f32.mrb[0].mxu0
    %v1632 = vadd.f32 %v1349, %v1631
    %1633 = vmatprep.mubr.bf16.mxu0 0
    %1634 = vmatmul.mubr.bf16.gmra.mrb[0].mxu0 %v1076
    %v1635 = vpop.f32.mrb[0].mxu0
    %v1636 = vadd.f32 %v1353, %v1635
    %v1637 = vpop.f32.mrb[0].mxu0
    %v1638 = vadd.f32 %v1355, %v1637
    %v1639 = vpop.f32.mrb[0].mxu0
    %v1640 = vadd.f32 %v1357, %v1639
    %v1641 = vpop.f32.mrb[0].mxu0
    %v1642 = vadd.f32 %v1359, %v1641
    %1643 = vdwg.mxu0
    %1644 = vmatprep.subr.bf16.mxu0 %v869
    %1645 = vmatpush1.bf16.msra.mxu0 %v868
    %1646 = vmatprep.subr.bf16.mxu0 %v873
    %1647 = vmatpush1.bf16.msra.mxu0 %v872
    %1648 = vmatprep.subr.bf16.mxu0 %v877
    %1649 = vmatpush1.bf16.msra.mxu0 %v876
    %1650 = vmatprep.subr.bf16.mxu0 %v881
    %1651 = vmatpush1.bf16.msra.mxu0 %v880
    %1652 = vmatprep.subr.bf16.mxu0 %v885
    %1653 = vmatpush1.bf16.msra.mxu0 %v884
    %1654 = vmatprep.subr.bf16.mxu0 %v889
    %1655 = vmatpush1.bf16.msra.mxu0 %v888
    %1656 = vmatprep.subr.bf16.mxu0 %v893
    %1657 = vmatpush1.bf16.msra.mxu0 %v892
    %1658 = vmatprep.subr.bf16.mxu0 %v897
    %1659 = vmatpush1.bf16.msra.mxu0 %v896
    %1660 = vmatprep.subr.bf16.mxu0 %v901
    %1661 = vmatpush1.bf16.msra.mxu0 %v900
    %1662 = vmatprep.subr.bf16.mxu0 %v905
    %1663 = vmatpush1.bf16.msra.mxu0 %v904
    %1664 = vmatprep.subr.bf16.mxu0 %v909
    %1665 = vmatpush1.bf16.msra.mxu0 %v908
    %1666 = vmatprep.subr.bf16.mxu0 %v913
    %1667 = vmatpush1.bf16.msra.mxu0 %v912
    %1668 = vmatprep.subr.bf16.mxu0 %v917
    %1669 = vmatpush1.bf16.msra.mxu0 %v916
    %1670 = vmatprep.subr.bf16.mxu0 %v921
    %1671 = vmatpush1.bf16.msra.mxu0 %v920
    %1672 = vmatprep.subr.bf16.mxu0 %v925
    %1673 = vmatpush1.bf16.msra.mxu0 %v924
    %1674 = vmatprep.subr.bf16.mxu0 %v929
    %1675 = vmatpush1.bf16.msra.mxu0 %v928
    %1676 = vmatprep.mubr.bf16.mxu0 %v538
    %1677 = vmatmul.mubr.bf16.gmra.mrb[0].mxu0 %v537
    %v1678 = vpop.f32.mrb[0].mxu0
    %v1679 = vadd.f32 0.0, %v1678
    %v1680 = vpop.f32.mrb[0].mxu0
    %v1681 = vadd.f32 0.0, %v1680
    %v1682 = vpop.f32.mrb[0].mxu0
    %v1683 = vadd.f32 0.0, %v1682
    %v1684 = vpop.f32.mrb[0].mxu0
    %v1685 = vadd.f32 0.0, %v1684
    %1686 = vmatprep.mubr.bf16.mxu0 %v541
    %1687 = vmatmul.mubr.bf16.gmra.mrb[0].mxu0 %v540
    %v1688 = vpop.f32.mrb[0].mxu0
    %v1689 = vadd.f32 0.0, %v1688
    %v1690 = vpop.f32.mrb[0].mxu0
    %v1691 = vadd.f32 0.0, %v1690
    %v1692 = vpop.f32.mrb[0].mxu0
    %v1693 = vadd.f32 0.0, %v1692
    %v1694 = vpop.f32.mrb[0].mxu0
    %v1695 = vadd.f32 0.0, %v1694
    %1696 = vmatprep.mubr.bf16.mxu0 %v544
    %1697 = vmatmul.mubr.bf16.gmra.mrb[0].mxu0 %v543
    %v1698 = vpop.f32.mrb[0].mxu0
    %v1699 = vadd.f32 0.0, %v1698
    %v1700 = vpop.f32.mrb[0].mxu0
    %v1701 = vadd.f32 0.0, %v1700
    %v1702 = vpop.f32.mrb[0].mxu0
    %v1703 = vadd.f32 0.0, %v1702
    %v1704 = vpop.f32.mrb[0].mxu0
    %v1705 = vadd.f32 0.0, %v1704
    %1706 = vmatprep.mubr.bf16.mxu0 %v547
    %1707 = vmatmul.mubr.bf16.gmra.mrb[0].mxu0 %v546
    %v1708 = vpop.f32.mrb[0].mxu0
    %v1709 = vadd.f32 0.0, %v1708
    %v1710 = vpop.f32.mrb[0].mxu0
    %v1711 = vadd.f32 0.0, %v1710
    %v1712 = vpop.f32.mrb[0].mxu0
    %v1713 = vadd.f32 0.0, %v1712
    %v1714 = vpop.f32.mrb[0].mxu0
    %v1715 = vadd.f32 0.0, %v1714
    %1716 = vmatprep.mubr.bf16.mxu0 %v550
    %1717 = vmatmul.mubr.bf16.gmra.mrb[0].mxu0 %v549
    %v1718 = vpop.f32.mrb[0].mxu0
    %v1719 = vadd.f32 0.0, %v1718
    %v1720 = vpop.f32.mrb[0].mxu0
    %v1721 = vadd.f32 0.0, %v1720
    %v1722 = vpop.f32.mrb[0].mxu0
    %v1723 = vadd.f32 0.0, %v1722
    %v1724 = vpop.f32.mrb[0].mxu0
    %v1725 = vadd.f32 0.0, %v1724
    %1726 = vmatprep.mubr.bf16.mxu0 %v553
    %1727 = vmatmul.mubr.bf16.gmra.mrb[0].mxu0 %v552
    %v1728 = vpop.f32.mrb[0].mxu0
    %v1729 = vadd.f32 0.0, %v1728
    %v1730 = vpop.f32.mrb[0].mxu0
    %v1731 = vadd.f32 0.0, %v1730
    %v1732 = vpop.f32.mrb[0].mxu0
    %v1733 = vadd.f32 0.0, %v1732
    %v1734 = vpop.f32.mrb[0].mxu0
    %v1735 = vadd.f32 0.0, %v1734
    %1736 = vmatprep.mubr.bf16.mxu0 %v556
    %1737 = vmatmul.mubr.bf16.gmra.mrb[0].mxu0 %v555
    %v1738 = vpop.f32.mrb[0].mxu0
    %v1739 = vadd.f32 0.0, %v1738
    %v1740 = vpop.f32.mrb[0].mxu0
    %v1741 = vadd.f32 0.0, %v1740
    %v1742 = vpop.f32.mrb[0].mxu0
    %v1743 = vadd.f32 0.0, %v1742
    %v1744 = vpop.f32.mrb[0].mxu0
    %v1745 = vadd.f32 0.0, %v1744
    %1746 = vmatprep.mubr.bf16.mxu0 %v559
    %1747 = vmatmul.mubr.bf16.gmra.mrb[0].mxu0 %v558
    %v1748 = vpop.f32.mrb[0].mxu0
    %v1749 = vadd.f32 0.0, %v1748
    %v1750 = vpop.f32.mrb[0].mxu0
    %v1751 = vadd.f32 0.0, %v1750
    %v1752 = vpop.f32.mrb[0].mxu0
    %v1753 = vadd.f32 0.0, %v1752
    %v1754 = vpop.f32.mrb[0].mxu0
    %v1755 = vadd.f32 0.0, %v1754
    %1756 = vmatprep.mubr.bf16.mxu0 %v562
    %1757 = vmatmul.mubr.bf16.gmra.mrb[0].mxu0 %v561
    %v1758 = vpop.f32.mrb[0].mxu0
    %v1759 = vadd.f32 0.0, %v1758
    %v1760 = vpop.f32.mrb[0].mxu0
    %v1761 = vadd.f32 0.0, %v1760
    %v1762 = vpop.f32.mrb[0].mxu0
    %v1763 = vadd.f32 0.0, %v1762
    %v1764 = vpop.f32.mrb[0].mxu0
    %v1765 = vadd.f32 0.0, %v1764
    %1766 = vmatprep.mubr.bf16.mxu0 %v565
    %1767 = vmatmul.mubr.bf16.gmra.mrb[0].mxu0 %v564
    %v1768 = vpop.f32.mrb[0].mxu0
    %v1769 = vadd.f32 0.0, %v1768
    %v1770 = vpop.f32.mrb[0].mxu0
    %v1771 = vadd.f32 0.0, %v1770
    %v1772 = vpop.f32.mrb[0].mxu0
    %v1773 = vadd.f32 0.0, %v1772
    %v1774 = vpop.f32.mrb[0].mxu0
    %v1775 = vadd.f32 0.0, %v1774
    %1776 = vmatprep.mubr.bf16.mxu0 %v568
    %1777 = vmatmul.mubr.bf16.gmra.mrb[0].mxu0 %v567
    %v1778 = vpop.f32.mrb[0].mxu0
    %v1779 = vadd.f32 0.0, %v1778
    %v1780 = vpop.f32.mrb[0].mxu0
    %v1781 = vadd.f32 0.0, %v1780
    %v1782 = vpop.f32.mrb[0].mxu0
    %v1783 = vadd.f32 0.0, %v1782
    %v1784 = vpop.f32.mrb[0].mxu0
    %v1785 = vadd.f32 0.0, %v1784
    %1786 = vmatprep.mubr.bf16.mxu0 %v571
    %1787 = vmatmul.mubr.bf16.gmra.mrb[0].mxu0 %v570
    %v1788 = vpop.f32.mrb[0].mxu0
    %v1789 = vadd.f32 0.0, %v1788
    %v1790 = vpop.f32.mrb[0].mxu0
    %v1791 = vadd.f32 0.0, %v1790
    %v1792 = vpop.f32.mrb[0].mxu0
    %v1793 = vadd.f32 0.0, %v1792
    %v1794 = vpop.f32.mrb[0].mxu0
    %v1795 = vadd.f32 0.0, %v1794
    %1796 = vmatprep.mubr.bf16.mxu0 %v574
    %1797 = vmatmul.mubr.bf16.gmra.mrb[0].mxu0 %v573
    %v1798 = vpop.f32.mrb[0].mxu0
    %v1799 = vadd.f32 0.0, %v1798
    %v1800 = vpop.f32.mrb[0].mxu0
    %v1801 = vadd.f32 0.0, %v1800
    %v1802 = vpop.f32.mrb[0].mxu0
    %v1803 = vadd.f32 0.0, %v1802
    %v1804 = vpop.f32.mrb[0].mxu0
    %v1805 = vadd.f32 0.0, %v1804
    %1806 = vmatprep.mubr.bf16.mxu0 %v577
    %1807 = vmatmul.mubr.bf16.gmra.mrb[0].mxu0 %v576
    %v1808 = vpop.f32.mrb[0].mxu0
    %v1809 = vadd.f32 0.0, %v1808
    %v1810 = vpop.f32.mrb[0].mxu0
    %v1811 = vadd.f32 0.0, %v1810
    %v1812 = vpop.f32.mrb[0].mxu0
    %v1813 = vadd.f32 0.0, %v1812
    %v1814 = vpop.f32.mrb[0].mxu0
    %v1815 = vadd.f32 0.0, %v1814
    %1816 = vmatprep.mubr.bf16.mxu0 %v580
    %1817 = vmatmul.mubr.bf16.gmra.mrb[0].mxu0 %v579
    %v1818 = vpop.f32.mrb[0].mxu0
    %v1819 = vadd.f32 0.0, %v1818
    %v1820 = vpop.f32.mrb[0].mxu0
    %v1821 = vadd.f32 0.0, %v1820
    %v1822 = vpop.f32.mrb[0].mxu0
    %v1823 = vadd.f32 0.0, %v1822
    %v1824 = vpop.f32.mrb[0].mxu0
    %v1825 = vadd.f32 0.0, %v1824
    %1826 = vmatprep.mubr.bf16.mxu0 %v583
    %1827 = vmatmul.mubr.bf16.gmra.mrb[0].mxu0 %v582
    %v1828 = vpop.f32.mrb[0].mxu0
    %v1829 = vadd.f32 0.0, %v1828
    %v1830 = vpop.f32.mrb[0].mxu0
    %v1831 = vadd.f32 0.0, %v1830
    %v1832 = vpop.f32.mrb[0].mxu0
    %v1833 = vadd.f32 0.0, %v1832
    %v1834 = vpop.f32.mrb[0].mxu0
    %v1835 = vadd.f32 0.0, %v1834
    %1836 = vmatprep.mubr.bf16.mxu0 %v586
    %1837 = vmatmul.mubr.bf16.gmra.mrb[0].mxu0 %v585
    %v1838 = vpop.f32.mrb[0].mxu0
    %v1839 = vadd.f32 0.0, %v1838
    %v1840 = vpop.f32.mrb[0].mxu0
    %v1841 = vadd.f32 0.0, %v1840
    %v1842 = vpop.f32.mrb[0].mxu0
    %v1843 = vadd.f32 0.0, %v1842
    %v1844 = vpop.f32.mrb[0].mxu0
    %v1845 = vadd.f32 0.0, %v1844
    %1846 = vmatprep.mubr.bf16.mxu0 %v589
    %1847 = vmatmul.mubr.bf16.gmra.mrb[0].mxu0 %v588
    %v1848 = vpop.f32.mrb[0].mxu0
    %v1849 = vadd.f32 0.0, %v1848
    %v1850 = vpop.f32.mrb[0].mxu0
    %v1851 = vadd.f32 0.0, %v1850
    %v1852 = vpop.f32.mrb[0].mxu0
    %v1853 = vadd.f32 0.0, %v1852
    %v1854 = vpop.f32.mrb[0].mxu0
    %v1855 = vadd.f32 0.0, %v1854
    %1856 = vmatprep.mubr.bf16.mxu0 %v592
    %1857 = vmatmul.mubr.bf16.gmra.mrb[0].mxu0 %v591
    %v1858 = vpop.f32.mrb[0].mxu0
    %v1859 = vadd.f32 0.0, %v1858
    %v1860 = vpop.f32.mrb[0].mxu0
    %v1861 = vadd.f32 0.0, %v1860
    %v1862 = vpop.f32.mrb[0].mxu0
    %v1863 = vadd.f32 0.0, %v1862
    %v1864 = vpop.f32.mrb[0].mxu0
    %v1865 = vadd.f32 0.0, %v1864
    %1866 = vmatprep.mubr.bf16.mxu0 %v595
    %1867 = vmatmul.mubr.bf16.gmra.mrb[0].mxu0 %v594
    %v1868 = vpop.f32.mrb[0].mxu0
    %v1869 = vadd.f32 0.0, %v1868
    %v1870 = vpop.f32.mrb[0].mxu0
    %v1871 = vadd.f32 0.0, %v1870
    %v1872 = vpop.f32.mrb[0].mxu0
    %v1873 = vadd.f32 0.0, %v1872
    %v1874 = vpop.f32.mrb[0].mxu0
    %v1875 = vadd.f32 0.0, %v1874
    %1876 = vmatprep.mubr.bf16.mxu0 %v598
    %1877 = vmatmul.mubr.bf16.gmra.mrb[0].mxu0 %v597
    %v1878 = vpop.f32.mrb[0].mxu0
    %v1879 = vadd.f32 0.0, %v1878
    %v1880 = vpop.f32.mrb[0].mxu0
    %v1881 = vadd.f32 0.0, %v1880
    %v1882 = vpop.f32.mrb[0].mxu0
    %v1883 = vadd.f32 0.0, %v1882
    %v1884 = vpop.f32.mrb[0].mxu0
    %v1885 = vadd.f32 0.0, %v1884
    %1886 = vmatprep.mubr.bf16.mxu0 %v601
    %1887 = vmatmul.mubr.bf16.gmra.mrb[0].mxu0 %v600
    %v1888 = vpop.f32.mrb[0].mxu0
    %v1889 = vadd.f32 0.0, %v1888
    %v1890 = vpop.f32.mrb[0].mxu0
    %v1891 = vadd.f32 0.0, %v1890
    %v1892 = vpop.f32.mrb[0].mxu0
    %v1893 = vadd.f32 0.0, %v1892
    %v1894 = vpop.f32.mrb[0].mxu0
    %v1895 = vadd.f32 0.0, %v1894
    %1896 = vmatprep.mubr.bf16.mxu0 %v604
    %1897 = vmatmul.mubr.bf16.gmra.mrb[0].mxu0 %v603
    %v1898 = vpop.f32.mrb[0].mxu0
    %v1899 = vadd.f32 0.0, %v1898
    %v1900 = vpop.f32.mrb[0].mxu0
    %v1901 = vadd.f32 0.0, %v1900
    %v1902 = vpop.f32.mrb[0].mxu0
    %v1903 = vadd.f32 0.0, %v1902
    %v1904 = vpop.f32.mrb[0].mxu0
    %v1905 = vadd.f32 0.0, %v1904
    %1906 = vmatprep.mubr.bf16.mxu0 %v607
    %1907 = vmatmul.mubr.bf16.gmra.mrb[0].mxu0 %v606
    %v1908 = vpop.f32.mrb[0].mxu0
    %v1909 = vadd.f32 0.0, %v1908
    %v1910 = vpop.f32.mrb[0].mxu0
    %v1911 = vadd.f32 0.0, %v1910
    %v1912 = vpop.f32.mrb[0].mxu0
    %v1913 = vadd.f32 0.0, %v1912
    %v1914 = vpop.f32.mrb[0].mxu0
    %v1915 = vadd.f32 0.0, %v1914
    %1916 = vmatprep.mubr.bf16.mxu0 %v610
    %1917 = vmatmul.mubr.bf16.gmra.mrb[0].mxu0 %v609
    %v1918 = vpop.f32.mrb[0].mxu0
    %v1919 = vadd.f32 0.0, %v1918
    %v1920 = vpop.f32.mrb[0].mxu0
    %v1921 = vadd.f32 0.0, %v1920
    %v1922 = vpop.f32.mrb[0].mxu0
    %v1923 = vadd.f32 0.0, %v1922
    %v1924 = vpop.f32.mrb[0].mxu0
    %v1925 = vadd.f32 0.0, %v1924
    %1926 = vdwg.mxu0
    %1927 = vmatprep.subr.bf16.mxu0 %v933
    %1928 = vmatpush1.bf16.msra.mxu0 %v932
    %1929 = vmatprep.subr.bf16.mxu0 0
    %1930 = vmatpush1.bf16.msra.mxu0 0
    %1931 = vmatprep.subr.bf16.mxu0 0
    %1932 = vmatpush1.bf16.msra.mxu0 0
    %1933 = vmatprep.subr.bf16.mxu0 0
    %1934 = vmatpush1.bf16.msra.mxu0 0
    %1935 = vmatprep.subr.bf16.mxu0 0
    %1936 = vmatpush1.bf16.msra.mxu0 0
    %1937 = vmatprep.subr.bf16.mxu0 0
    %1938 = vmatpush1.bf16.msra.mxu0 0
    %1939 = vmatprep.subr.bf16.mxu0 0
    %1940 = vmatpush1.bf16.msra.mxu0 0
    %1941 = vmatprep.subr.bf16.mxu0 0
    %1942 = vmatpush1.bf16.msra.mxu0 0
    %1943 = vmatprep.subr.bf16.mxu0 0
    %1944 = vmatpush1.bf16.msra.mxu0 0
    %1945 = vmatprep.subr.bf16.mxu0 0
    %1946 = vmatpush1.bf16.msra.mxu0 0
    %1947 = vmatprep.subr.bf16.mxu0 0
    %1948 = vmatpush1.bf16.msra.mxu0 0
    %1949 = vmatprep.subr.bf16.mxu0 0
    %1950 = vmatpush1.bf16.msra.mxu0 0
    %1951 = vmatprep.subr.bf16.mxu0 0
    %1952 = vmatpush1.bf16.msra.mxu0 0
    %1953 = vmatprep.subr.bf16.mxu0 0
    %1954 = vmatpush1.bf16.msra.mxu0 0
    %1955 = vmatprep.subr.bf16.mxu0 0
    %1956 = vmatpush1.bf16.msra.mxu0 0
    %1957 = vmatprep.subr.bf16.mxu0 0
    %1958 = vmatpush1.bf16.msra.mxu0 0
    %1959 = vmatprep.mubr.bf16.mxu0 0
    %1960 = vmatmul.mubr.bf16.gmra.mrb[0].mxu0 %v1004
    %v1961 = vpop.f32.mrb[0].mxu0
    %v1962 = vadd.f32 %v1679, %v1961
    %v1963 = vpop.f32.mrb[0].mxu0
    %v1964 = vadd.f32 %v1681, %v1963
    %v1965 = vpop.f32.mrb[0].mxu0
    %v1966 = vadd.f32 %v1683, %v1965
    %v1967 = vpop.f32.mrb[0].mxu0
    %v1968 = vadd.f32 %v1685, %v1967
    %1969 = vmatprep.mubr.bf16.mxu0 0
    %1970 = vmatmul.mubr.bf16.gmra.mrb[0].mxu0 %v1007
    %v1971 = vpop.f32.mrb[0].mxu0
    %v1972 = vadd.f32 %v1689, %v1971
    %v1973 = vpop.f32.mrb[0].mxu0
    %v1974 = vadd.f32 %v1691, %v1973
    %v1975 = vpop.f32.mrb[0].mxu0
    %v1976 = vadd.f32 %v1693, %v1975
    %v1977 = vpop.f32.mrb[0].mxu0
    %v1978 = vadd.f32 %v1695, %v1977
    %1979 = vmatprep.mubr.bf16.mxu0 0
    %1980 = vmatmul.mubr.bf16.gmra.mrb[0].mxu0 %v1010
    %v1981 = vpop.f32.mrb[0].mxu0
    %v1982 = vadd.f32 %v1699, %v1981
    %v1983 = vpop.f32.mrb[0].mxu0
    %v1984 = vadd.f32 %v1701, %v1983
    %v1985 = vpop.f32.mrb[0].mxu0
    %v1986 = vadd.f32 %v1703, %v1985
    %v1987 = vpop.f32.mrb[0].mxu0
    %v1988 = vadd.f32 %v1705, %v1987
    %1989 = vmatprep.mubr.bf16.mxu0 0
    %1990 = vmatmul.mubr.bf16.gmra.mrb[0].mxu0 %v1013
    %v1991 = vpop.f32.mrb[0].mxu0
    %v1992 = vadd.f32 %v1709, %v1991
    %v1993 = vpop.f32.mrb[0].mxu0
    %v1994 = vadd.f32 %v1711, %v1993
    %v1995 = vpop.f32.mrb[0].mxu0
    %v1996 = vadd.f32 %v1713, %v1995
    %v1997 = vpop.f32.mrb[0].mxu0
    %v1998 = vadd.f32 %v1715, %v1997
    %1999 = vmatprep.mubr.bf16.mxu0 0
    %2000 = vmatmul.mubr.bf16.gmra.mrb[0].mxu0 %v1016
    %v2001 = vpop.f32.mrb[0].mxu0
    %v2002 = vadd.f32 %v1719, %v2001
    %v2003 = vpop.f32.mrb[0].mxu0
    %v2004 = vadd.f32 %v1721, %v2003
    %v2005 = vpop.f32.mrb[0].mxu0
    %v2006 = vadd.f32 %v1723, %v2005
    %v2007 = vpop.f32.mrb[0].mxu0
    %v2008 = vadd.f32 %v1725, %v2007
    %2009 = vmatprep.mubr.bf16.mxu0 0
    %2010 = vmatmul.mubr.bf16.gmra.mrb[0].mxu0 %v1019
    %v2011 = vpop.f32.mrb[0].mxu0
    %v2012 = vadd.f32 %v1729, %v2011
    %v2013 = vpop.f32.mrb[0].mxu0
    %v2014 = vadd.f32 %v1731, %v2013
    %v2015 = vpop.f32.mrb[0].mxu0
    %v2016 = vadd.f32 %v1733, %v2015
    %v2017 = vpop.f32.mrb[0].mxu0
    %v2018 = vadd.f32 %v1735, %v2017
    %2019 = vmatprep.mubr.bf16.mxu0 0
    %2020 = vmatmul.mubr.bf16.gmra.mrb[0].mxu0 %v1022
    %v2021 = vpop.f32.mrb[0].mxu0
    %v2022 = vadd.f32 %v1739, %v2021
    %v2023 = vpop.f32.mrb[0].mxu0
    %v2024 = vadd.f32 %v1741, %v2023
    %v2025 = vpop.f32.mrb[0].mxu0
    %v2026 = vadd.f32 %v1743, %v2025
    %v2027 = vpop.f32.mrb[0].mxu0
    %v2028 = vadd.f32 %v1745, %v2027
    %2029 = vmatprep.mubr.bf16.mxu0 0
    %2030 = vmatmul.mubr.bf16.gmra.mrb[0].mxu0 %v1025
    %v2031 = vpop.f32.mrb[0].mxu0
    %v2032 = vadd.f32 %v1749, %v2031
    %v2033 = vpop.f32.mrb[0].mxu0
    %v2034 = vadd.f32 %v1751, %v2033
    %v2035 = vpop.f32.mrb[0].mxu0
    %v2036 = vadd.f32 %v1753, %v2035
    %v2037 = vpop.f32.mrb[0].mxu0
    %v2038 = vadd.f32 %v1755, %v2037
    %2039 = vmatprep.mubr.bf16.mxu0 0
    %2040 = vmatmul.mubr.bf16.gmra.mrb[0].mxu0 %v1028
    %v2041 = vpop.f32.mrb[0].mxu0
    %v2042 = vadd.f32 %v1759, %v2041
    %v2043 = vpop.f32.mrb[0].mxu0
    %v2044 = vadd.f32 %v1761, %v2043
    %v2045 = vpop.f32.mrb[0].mxu0
    %v2046 = vadd.f32 %v1763, %v2045
    %v2047 = vpop.f32.mrb[0].mxu0
    %v2048 = vadd.f32 %v1765, %v2047
    %2049 = vmatprep.mubr.bf16.mxu0 0
    %2050 = vmatmul.mubr.bf16.gmra.mrb[0].mxu0 %v1031
    %v2051 = vpop.f32.mrb[0].mxu0
    %v2052 = vadd.f32 %v1769, %v2051
    %v2053 = vpop.f32.mrb[0].mxu0
    %v2054 = vadd.f32 %v1771, %v2053
    %v2055 = vpop.f32.mrb[0].mxu0
    %v2056 = vadd.f32 %v1773, %v2055
    %v2057 = vpop.f32.mrb[0].mxu0
    %v2058 = vadd.f32 %v1775, %v2057
    %2059 = vmatprep.mubr.bf16.mxu0 0
    %2060 = vmatmul.mubr.bf16.gmra.mrb[0].mxu0 %v1034
    %v2061 = vpop.f32.mrb[0].mxu0
    %v2062 = vadd.f32 %v1779, %v2061
    %v2063 = vpop.f32.mrb[0].mxu0
    %v2064 = vadd.f32 %v1781, %v2063
    %v2065 = vpop.f32.mrb[0].mxu0
    %v2066 = vadd.f32 %v1783, %v2065
    %v2067 = vpop.f32.mrb[0].mxu0
    %v2068 = vadd.f32 %v1785, %v2067
    %2069 = vmatprep.mubr.bf16.mxu0 0
    %2070 = vmatmul.mubr.bf16.gmra.mrb[0].mxu0 %v1037
    %v2071 = vpop.f32.mrb[0].mxu0
    %v2072 = vadd.f32 %v1789, %v2071
    %v2073 = vpop.f32.mrb[0].mxu0
    %v2074 = vadd.f32 %v1791, %v2073
    %v2075 = vpop.f32.mrb[0].mxu0
    %v2076 = vadd.f32 %v1793, %v2075
    %v2077 = vpop.f32.mrb[0].mxu0
    %v2078 = vadd.f32 %v1795, %v2077
    %2079 = vmatprep.mubr.bf16.mxu0 0
    %2080 = vmatmul.mubr.bf16.gmra.mrb[0].mxu0 %v1040
    %v2081 = vpop.f32.mrb[0].mxu0
    %v2082 = vadd.f32 %v1799, %v2081
    %v2083 = vpop.f32.mrb[0].mxu0
    %v2084 = vadd.f32 %v1801, %v2083
    %v2085 = vpop.f32.mrb[0].mxu0
    %v2086 = vadd.f32 %v1803, %v2085
    %v2087 = vpop.f32.mrb[0].mxu0
    %v2088 = vadd.f32 %v1805, %v2087
    %2089 = vmatprep.mubr.bf16.mxu0 0
    %2090 = vmatmul.mubr.bf16.gmra.mrb[0].mxu0 %v1043
    %v2091 = vpop.f32.mrb[0].mxu0
    %v2092 = vadd.f32 %v1809, %v2091
    %v2093 = vpop.f32.mrb[0].mxu0
    %v2094 = vadd.f32 %v1811, %v2093
    %v2095 = vpop.f32.mrb[0].mxu0
    %v2096 = vadd.f32 %v1813, %v2095
    %v2097 = vpop.f32.mrb[0].mxu0
    %v2098 = vadd.f32 %v1815, %v2097
    %2099 = vmatprep.mubr.bf16.mxu0 0
    %2100 = vmatmul.mubr.bf16.gmra.mrb[0].mxu0 %v1046
    %v2101 = vpop.f32.mrb[0].mxu0
    %v2102 = vadd.f32 %v1819, %v2101
    %v2103 = vpop.f32.mrb[0].mxu0
    %v2104 = vadd.f32 %v1821, %v2103
    %v2105 = vpop.f32.mrb[0].mxu0
    %v2106 = vadd.f32 %v1823, %v2105
    %v2107 = vpop.f32.mrb[0].mxu0
    %v2108 = vadd.f32 %v1825, %v2107
    %2109 = vmatprep.mubr.bf16.mxu0 0
    %2110 = vmatmul.mubr.bf16.gmra.mrb[0].mxu0 %v1049
    %v2111 = vpop.f32.mrb[0].mxu0
    %v2112 = vadd.f32 %v1829, %v2111
    %v2113 = vpop.f32.mrb[0].mxu0
    %v2114 = vadd.f32 %v1831, %v2113
    %v2115 = vpop.f32.mrb[0].mxu0
    %v2116 = vadd.f32 %v1833, %v2115
    %v2117 = vpop.f32.mrb[0].mxu0
    %v2118 = vadd.f32 %v1835, %v2117
    %2119 = vmatprep.mubr.bf16.mxu0 0
    %2120 = vmatmul.mubr.bf16.gmra.mrb[0].mxu0 %v1052
    %v2121 = vpop.f32.mrb[0].mxu0
    %v2122 = vadd.f32 %v1839, %v2121
    %v2123 = vpop.f32.mrb[0].mxu0
    %v2124 = vadd.f32 %v1841, %v2123
    %v2125 = vpop.f32.mrb[0].mxu0
    %v2126 = vadd.f32 %v1843, %v2125
    %v2127 = vpop.f32.mrb[0].mxu0
    %v2128 = vadd.f32 %v1845, %v2127
    %2129 = vmatprep.mubr.bf16.mxu0 0
    %2130 = vmatmul.mubr.bf16.gmra.mrb[0].mxu0 %v1055
    %v2131 = vpop.f32.mrb[0].mxu0
    %v2132 = vadd.f32 %v1849, %v2131
    %v2133 = vpop.f32.mrb[0].mxu0
    %v2134 = vadd.f32 %v1851, %v2133
    %v2135 = vpop.f32.mrb[0].mxu0
    %v2136 = vadd.f32 %v1853, %v2135
    %v2137 = vpop.f32.mrb[0].mxu0
    %v2138 = vadd.f32 %v1855, %v2137
    %2139 = vmatprep.mubr.bf16.mxu0 0
    %2140 = vmatmul.mubr.bf16.gmra.mrb[0].mxu0 %v1058
    %v2141 = vpop.f32.mrb[0].mxu0
    %v2142 = vadd.f32 %v1859, %v2141
    %v2143 = vpop.f32.mrb[0].mxu0
    %v2144 = vadd.f32 %v1861, %v2143
    %v2145 = vpop.f32.mrb[0].mxu0
    %v2146 = vadd.f32 %v1863, %v2145
    %v2147 = vpop.f32.mrb[0].mxu0
    %v2148 = vadd.f32 %v1865, %v2147
    %2149 = vmatprep.mubr.bf16.mxu0 0
    %2150 = vmatmul.mubr.bf16.gmra.mrb[0].mxu0 %v1061
    %v2151 = vpop.f32.mrb[0].mxu0
    %v2152 = vadd.f32 %v1869, %v2151
    %v2153 = vpop.f32.mrb[0].mxu0
    %v2154 = vadd.f32 %v1871, %v2153
    %v2155 = vpop.f32.mrb[0].mxu0
    %v2156 = vadd.f32 %v1873, %v2155
    %v2157 = vpop.f32.mrb[0].mxu0
    %v2158 = vadd.f32 %v1875, %v2157
    %2159 = vmatprep.mubr.bf16.mxu0 0
    %2160 = vmatmul.mubr.bf16.gmra.mrb[0].mxu0 %v1064
    %v2161 = vpop.f32.mrb[0].mxu0
    %v2162 = vadd.f32 %v1879, %v2161
    %v2163 = vpop.f32.mrb[0].mxu0
    %v2164 = vadd.f32 %v1881, %v2163
    %v2165 = vpop.f32.mrb[0].mxu0
    %v2166 = vadd.f32 %v1883, %v2165
    %v2167 = vpop.f32.mrb[0].mxu0
    %v2168 = vadd.f32 %v1885, %v2167
    %2169 = vmatprep.mubr.bf16.mxu0 0
    %2170 = vmatmul.mubr.bf16.gmra.mrb[0].mxu0 %v1067
    %v2171 = vpop.f32.mrb[0].mxu0
    %v2172 = vadd.f32 %v1889, %v2171
    %v2173 = vpop.f32.mrb[0].mxu0
    %v2174 = vadd.f32 %v1891, %v2173
    %v2175 = vpop.f32.mrb[0].mxu0
    %v2176 = vadd.f32 %v1893, %v2175
    %v2177 = vpop.f32.mrb[0].mxu0
    %v2178 = vadd.f32 %v1895, %v2177
    %2179 = vmatprep.mubr.bf16.mxu0 0
    %2180 = vmatmul.mubr.bf16.gmra.mrb[0].mxu0 %v1070
    %v2181 = vpop.f32.mrb[0].mxu0
    %v2182 = vadd.f32 %v1899, %v2181
    %v2183 = vpop.f32.mrb[0].mxu0
    %v2184 = vadd.f32 %v1901, %v2183
    %v2185 = vpop.f32.mrb[0].mxu0
    %v2186 = vadd.f32 %v1903, %v2185
    %v2187 = vpop.f32.mrb[0].mxu0
    %v2188 = vadd.f32 %v1905, %v2187
    %2189 = vmatprep.mubr.bf16.mxu0 0
    %2190 = vmatmul.mubr.bf16.gmra.mrb[0].mxu0 %v1073
    %v2191 = vpop.f32.mrb[0].mxu0
    %v2192 = vadd.f32 %v1909, %v2191
    %v2193 = vpop.f32.mrb[0].mxu0
    %v2194 = vadd.f32 %v1911, %v2193
    %v2195 = vpop.f32.mrb[0].mxu0
    %v2196 = vadd.f32 %v1913, %v2195
    %v2197 = vpop.f32.mrb[0].mxu0
    %v2198 = vadd.f32 %v1915, %v2197
    %2199 = vmatprep.mubr.bf16.mxu0 0
    %2200 = vmatmul.mubr.bf16.gmra.mrb[0].mxu0 %v1076
    %v2201 = vpop.f32.mrb[0].mxu0
    %v2202 = vadd.f32 %v1919, %v2201
    %v2203 = vpop.f32.mrb[0].mxu0
    %v2204 = vadd.f32 %v1921, %v2203
    %v2205 = vpop.f32.mrb[0].mxu0
    %v2206 = vadd.f32 %v1923, %v2205
    %v2207 = vpop.f32.mrb[0].mxu0
    %v2208 = vadd.f32 %v1925, %v2207
    %2209 = vdwg.mxu0
    %v2210 = vld [vmem:[#allocation2] sm:$0xff]
    %v2211 = vld [vmem:[#allocation2 + $0x8] sm:$0xff]
    %v2212 = vld [vmem:[#allocation2 + $0x10] sm:$0xff]
    %v2213 = vld [vmem:[#allocation2 + $0x18] sm:$0xff]
    %v2214 = vld [vmem:[#allocation2 + $0x20] sm:$0xff]
    %v2215 = vld [vmem:[#allocation2 + $0x28] sm:$0xff]
    %v2216 = vld [vmem:[#allocation2 + $0x30] sm:$0xff]
    %v2217 = vld [vmem:[#allocation2 + $0x38] sm:$0xff]
    %v2218 = vld [vmem:[#allocation2 + $0x40] sm:$0xff]
    %v2219 = vld [vmem:[#allocation2 + $0x48] sm:$0xff]
    %v2220 = vld [vmem:[#allocation2 + $0x50] sm:$0xff]
    %v2221 = vld [vmem:[#allocation2 + $0x58] sm:$0xff]
    %v2222 = vld [vmem:[#allocation2 + $0x60] sm:$0xff]
    %v2223 = vld [vmem:[#allocation2 + $0x68] sm:$0xff]
    %v2224 = vld [vmem:[#allocation2 + $0x70] sm:$0xff]
    %v2225 = vld [vmem:[#allocation2 + $0x78] sm:$0xff]
    %v2226 = vld [vmem:[#allocation2 + $0x80] sm:$0xff]
    %v2227 = vld [vmem:[#allocation2 + $0x88] sm:$0xff]
    %v2228 = vld [vmem:[#allocation2 + $0x90] sm:$0xff]
    %v2229 = vld [vmem:[#allocation2 + $0x98] sm:$0xff]
    %v2230 = vld [vmem:[#allocation2 + $0xa0] sm:$0xff]
    %v2231 = vld [vmem:[#allocation2 + $0xa8] sm:$0xff]
    %v2232 = vld [vmem:[#allocation2 + $0xb0] sm:$0xff]
    %v2233 = vld [vmem:[#allocation2 + $0xb8] sm:$0xff]
    %v2234 = vld [vmem:[#allocation2 + $0xc0] sm:$0xff]
    %v2235 = vld [vmem:[#allocation2 + $0xc8] sm:$0xff]
    %v2236 = vld [vmem:[#allocation2 + $0xd0] sm:$0xff]
    %v2237 = vld [vmem:[#allocation2 + $0xd8] sm:$0xff]
    %v2238 = vld [vmem:[#allocation2 + $0xe0] sm:$0xff]
    %v2239 = vld [vmem:[#allocation2 + $0xe8] sm:$0xff]
    %v2240 = vld [vmem:[#allocation2 + $0xf0] sm:$0xff]
    %v2241 = vld [vmem:[#allocation2 + $0xf8] sm:$0xff]
    %v2242 = vld [vmem:[#allocation2 + $0x100] sm:$0xff]
    %v2243 = vld [vmem:[#allocation2 + $0x108] sm:$0xff]
    %v2244 = vld [vmem:[#allocation2 + $0x110] sm:$0xff]
    %v2245 = vld [vmem:[#allocation2 + $0x118] sm:$0xff]
    %v2246 = vld [vmem:[#allocation2 + $0x120] sm:$0xff]
    %v2247 = vld [vmem:[#allocation2 + $0x128] sm:$0xff]
    %v2248 = vld [vmem:[#allocation2 + $0x130] sm:$0xff]
    %v2249 = vld [vmem:[#allocation2 + $0x138] sm:$0xff]
    %v2250 = vld [vmem:[#allocation2 + $0x140] sm:$0xff]
    %v2251 = vld [vmem:[#allocation2 + $0x148] sm:$0xff]
    %v2252 = vld [vmem:[#allocation2 + $0x150] sm:$0xff]
    %v2253 = vld [vmem:[#allocation2 + $0x158] sm:$0xff]
    %v2254 = vld [vmem:[#allocation2 + $0x160] sm:$0xff]
    %v2255 = vld [vmem:[#allocation2 + $0x168] sm:$0xff]
    %v2256 = vld [vmem:[#allocation2 + $0x170] sm:$0xff]
    %v2257 = vld [vmem:[#allocation2 + $0x178] sm:$0xff]
    %v2258 = vld [vmem:[#allocation2 + $0x180] sm:$0xff]
    %v2259 = vld [vmem:[#allocation2 + $0x188] sm:$0xff]
    %v2260 = vld [vmem:[#allocation2 + $0x190] sm:$0xff]
    %v2261 = vld [vmem:[#allocation2 + $0x198] sm:$0xff]
    %v2262 = vld [vmem:[#allocation2 + $0x1a0] sm:$0xff]
    %v2263 = vld [vmem:[#allocation2 + $0x1a8] sm:$0xff]
    %v2264 = vld [vmem:[#allocation2 + $0x1b0] sm:$0xff]
    %v2265 = vld [vmem:[#allocation2 + $0x1b8] sm:$0xff]
    %v2266 = vld [vmem:[#allocation2 + $0x1c0] sm:$0xff]
    %v2267 = vld [vmem:[#allocation2 + $0x1c8] sm:$0xff]
    %v2268 = vld [vmem:[#allocation2 + $0x1d0] sm:$0xff]
    %v2269 = vld [vmem:[#allocation2 + $0x1d8] sm:$0xff]
    %v2270 = vld [vmem:[#allocation2 + $0x1e0] sm:$0xff]
    %v2271 = vld [vmem:[#allocation2 + $0x1e8] sm:$0xff]
    %v2272 = vld [vmem:[#allocation2 + $0x1f0] sm:$0xff]
    %v2273 = vld [vmem:[#allocation2 + $0x1f8] sm:$0xff]
    %v2274 = vld [vmem:[#allocation2 + $0x200] sm:$0xff]
    %v2275 = vld [vmem:[#allocation2 + $0x208] sm:$0xff]
    %v2276 = vld [vmem:[#allocation2 + $0x210] sm:$0xff]
    %v2277 = vld [vmem:[#allocation2 + $0x218] sm:$0xff]
    %v2346 = vunpack.c.l.b16 %v2210
    %v2347 = vunpack.c.h.b16 %v2210
    %v2348 = vunpack.c.l.b16 %v2211
    %v2349 = vunpack.c.h.b16 %v2211
    %v2350 = vunpack.c.l.b16 %v2212
    %v2351 = vunpack.c.h.b16 %v2212
    %v2352 = vunpack.c.l.b16 %v2213
    %v2353 = vunpack.c.h.b16 %v2213
    %v2354 = vunpack.c.l.b16 %v2214
    %v2355 = vunpack.c.h.b16 %v2214
    %v2356 = vunpack.c.l.b16 %v2215
    %v2357 = vunpack.c.h.b16 %v2215
    %v2358 = vunpack.c.l.b16 %v2216
    %v2359 = vunpack.c.h.b16 %v2216
    %v2360 = vunpack.c.l.b16 %v2217
    %v2361 = vunpack.c.h.b16 %v2217
    %v2362 = vunpack.c.l.b16 %v2218
    %v2363 = vunpack.c.h.b16 %v2218
    %v2364 = vunpack.c.l.b16 %v2219
    %v2365 = vunpack.c.h.b16 %v2219
    %v2366 = vunpack.c.l.b16 %v2220
    %v2367 = vunpack.c.h.b16 %v2220
    %v2368 = vunpack.c.l.b16 %v2221
    %v2369 = vunpack.c.h.b16 %v2221
    %v2370 = vunpack.c.l.b16 %v2222
    %v2371 = vunpack.c.h.b16 %v2222
    %v2372 = vunpack.c.l.b16 %v2223
    %v2373 = vunpack.c.h.b16 %v2223
    %v2374 = vunpack.c.l.b16 %v2224
    %v2375 = vunpack.c.h.b16 %v2224
    %v2376 = vunpack.c.l.b16 %v2225
    %v2377 = vunpack.c.h.b16 %v2225
    %v2378 = vunpack.c.l.b16 %v2226
    %v2379 = vunpack.c.h.b16 %v2226
    %v2380 = vunpack.c.l.b16 %v2227
    %v2381 = vunpack.c.h.b16 %v2227
    %v2382 = vunpack.c.l.b16 %v2228
    %v2383 = vunpack.c.h.b16 %v2228
    %v2384 = vunpack.c.l.b16 %v2229
    %v2385 = vunpack.c.h.b16 %v2229
    %v2386 = vunpack.c.l.b16 %v2230
    %v2387 = vunpack.c.h.b16 %v2230
    %v2388 = vunpack.c.l.b16 %v2231
    %v2389 = vunpack.c.h.b16 %v2231
    %v2390 = vunpack.c.l.b16 %v2232
    %v2391 = vunpack.c.h.b16 %v2232
    %v2392 = vunpack.c.l.b16 %v2233
    %v2393 = vunpack.c.h.b16 %v2233
    %v2394 = vunpack.c.l.b16 %v2234
    %v2395 = vunpack.c.h.b16 %v2234
    %v2396 = vunpack.c.l.b16 %v2235
    %v2397 = vunpack.c.h.b16 %v2235
    %v2398 = vunpack.c.l.b16 %v2236
    %v2399 = vunpack.c.h.b16 %v2236
    %v2400 = vunpack.c.l.b16 %v2237
    %v2401 = vunpack.c.h.b16 %v2237
    %v2402 = vunpack.c.l.b16 %v2238
    %v2403 = vunpack.c.h.b16 %v2238
    %v2404 = vunpack.c.l.b16 %v2239
    %v2405 = vunpack.c.h.b16 %v2239
    %v2406 = vunpack.c.l.b16 %v2240
    %v2407 = vunpack.c.h.b16 %v2240
    %v2408 = vunpack.c.l.b16 %v2241
    %v2409 = vunpack.c.h.b16 %v2241
    %v2410 = vunpack.c.l.b16 %v2242
    %v2411 = vunpack.c.h.b16 %v2242
    %v2412 = vunpack.c.l.b16 %v2243
    %v2413 = vunpack.c.h.b16 %v2243
    %v2414 = vunpack.c.l.b16 %v2244
    %v2415 = vunpack.c.h.b16 %v2244
    %v2416 = vunpack.c.l.b16 %v2245
    %v2417 = vunpack.c.h.b16 %v2245
    %v2418 = vunpack.c.l.b16 %v2246
    %v2419 = vunpack.c.h.b16 %v2246
    %v2420 = vunpack.c.l.b16 %v2247
    %v2421 = vunpack.c.h.b16 %v2247
    %v2422 = vunpack.c.l.b16 %v2248
    %v2423 = vunpack.c.h.b16 %v2248
    %v2424 = vunpack.c.l.b16 %v2249
    %v2425 = vunpack.c.h.b16 %v2249
    %v2426 = vunpack.c.l.b16 %v2250
    %v2427 = vunpack.c.h.b16 %v2250
    %v2428 = vunpack.c.l.b16 %v2251
    %v2429 = vunpack.c.h.b16 %v2251
    %v2430 = vunpack.c.l.b16 %v2252
    %v2431 = vunpack.c.h.b16 %v2252
    %v2432 = vunpack.c.l.b16 %v2253
    %v2433 = vunpack.c.h.b16 %v2253
    %v2434 = vunpack.c.l.b16 %v2254
    %v2435 = vunpack.c.h.b16 %v2254
    %v2436 = vunpack.c.l.b16 %v2255
    %v2437 = vunpack.c.h.b16 %v2255
    %v2438 = vunpack.c.l.b16 %v2256
    %v2439 = vunpack.c.h.b16 %v2256
    %v2440 = vunpack.c.l.b16 %v2257
    %v2441 = vunpack.c.h.b16 %v2257
    %v2442 = vunpack.c.l.b16 %v2258
    %v2443 = vunpack.c.h.b16 %v2258
    %v2444 = vunpack.c.l.b16 %v2259
    %v2445 = vunpack.c.h.b16 %v2259
    %v2446 = vunpack.c.l.b16 %v2260
    %v2447 = vunpack.c.h.b16 %v2260
    %v2448 = vunpack.c.l.b16 %v2261
    %v2449 = vunpack.c.h.b16 %v2261
    %v2450 = vunpack.c.l.b16 %v2262
    %v2451 = vunpack.c.h.b16 %v2262
    %v2452 = vunpack.c.l.b16 %v2263
    %v2453 = vunpack.c.h.b16 %v2263
    %v2454 = vunpack.c.l.b16 %v2264
    %v2455 = vunpack.c.h.b16 %v2264
    %v2456 = vunpack.c.l.b16 %v2265
    %v2457 = vunpack.c.h.b16 %v2265
    %v2458 = vunpack.c.l.b16 %v2266
    %v2459 = vunpack.c.h.b16 %v2266
    %v2460 = vunpack.c.l.b16 %v2267
    %v2461 = vunpack.c.h.b16 %v2267
    %v2462 = vunpack.c.l.b16 %v2268
    %v2463 = vunpack.c.h.b16 %v2268
    %v2464 = vunpack.c.l.b16 %v2269
    %v2465 = vunpack.c.h.b16 %v2269
    %v2466 = vunpack.c.l.b16 %v2270
    %v2467 = vunpack.c.h.b16 %v2270
    %v2468 = vunpack.c.l.b16 %v2271
    %v2469 = vunpack.c.h.b16 %v2271
    %v2470 = vunpack.c.l.b16 %v2272
    %v2471 = vunpack.c.h.b16 %v2272
    %v2472 = vunpack.c.l.b16 %v2273
    %v2473 = vunpack.c.h.b16 %v2273
    %v2474 = vunpack.c.l.b16 %v2274
    %v2475 = vunpack.c.h.b16 %v2274
    %v2476 = vunpack.c.l.b16 %v2275
    %v2477 = vunpack.c.h.b16 %v2275
    %v2478 = vunpack.c.l.b16 %v2276
    %v2479 = vunpack.c.h.b16 %v2276
    %v2480 = vunpack.c.l.b16 %v2277
    %v2481 = vunpack.c.h.b16 %v2277
    %v2482 = vpack.c.b16 %v2350, %v2346
    %v2483 = vpack.c.b16 %v2351, %v2347
    %v2484 = vpack.c.b16 %v2352, %v2348
    %v2485 = vpack.c.b16 %v2353, %v2349
    %v2486 = vpack.c.b16 %v2358, %v2354
    %v2487 = vpack.c.b16 %v2359, %v2355
    %v2488 = vpack.c.b16 %v2360, %v2356
    %v2489 = vpack.c.b16 %v2361, %v2357
    %v2490 = vpack.c.b16 %v2366, %v2362
    %v2491 = vpack.c.b16 %v2367, %v2363
    %v2492 = vpack.c.b16 %v2368, %v2364
    %v2493 = vpack.c.b16 %v2369, %v2365
    %v2494 = vpack.c.b16 %v2374, %v2370
    %v2495 = vpack.c.b16 %v2375, %v2371
    %v2496 = vpack.c.b16 %v2376, %v2372
    %v2497 = vpack.c.b16 %v2377, %v2373
    %v2498 = vpack.c.b16 %v2382, %v2378
    %v2499 = vpack.c.b16 %v2383, %v2379
    %v2500 = vpack.c.b16 %v2384, %v2380
    %v2501 = vpack.c.b16 %v2385, %v2381
    %v2502 = vpack.c.b16 %v2390, %v2386
    %v2503 = vpack.c.b16 %v2391, %v2387
    %v2504 = vpack.c.b16 %v2392, %v2388
    %v2505 = vpack.c.b16 %v2393, %v2389
    %v2506 = vpack.c.b16 %v2398, %v2394
    %v2507 = vpack.c.b16 %v2399, %v2395
    %v2508 = vpack.c.b16 %v2400, %v2396
    %v2509 = vpack.c.b16 %v2401, %v2397
    %v2510 = vpack.c.b16 %v2406, %v2402
    %v2511 = vpack.c.b16 %v2407, %v2403
    %v2512 = vpack.c.b16 %v2408, %v2404
    %v2513 = vpack.c.b16 %v2409, %v2405
    %v2514 = vpack.c.b16 %v2414, %v2410
    %v2515 = vpack.c.b16 %v2415, %v2411
    %v2516 = vpack.c.b16 %v2416, %v2412
    %v2517 = vpack.c.b16 %v2417, %v2413
    %v2518 = vpack.c.b16 %v2422, %v2418
    %v2519 = vpack.c.b16 %v2423, %v2419
    %v2520 = vpack.c.b16 %v2424, %v2420
    %v2521 = vpack.c.b16 %v2425, %v2421
    %v2522 = vpack.c.b16 %v2430, %v2426
    %v2523 = vpack.c.b16 %v2431, %v2427
    %v2524 = vpack.c.b16 %v2432, %v2428
    %v2525 = vpack.c.b16 %v2433, %v2429
    %v2526 = vpack.c.b16 %v2438, %v2434
    %v2527 = vpack.c.b16 %v2439, %v2435
    %v2528 = vpack.c.b16 %v2440, %v2436
    %v2529 = vpack.c.b16 %v2441, %v2437
    %v2530 = vpack.c.b16 %v2446, %v2442
    %v2531 = vpack.c.b16 %v2447, %v2443
    %v2532 = vpack.c.b16 %v2448, %v2444
    %v2533 = vpack.c.b16 %v2449, %v2445
    %v2534 = vpack.c.b16 %v2454, %v2450
    %v2535 = vpack.c.b16 %v2455, %v2451
    %v2536 = vpack.c.b16 %v2456, %v2452
    %v2537 = vpack.c.b16 %v2457, %v2453
    %v2538 = vpack.c.b16 %v2462, %v2458
    %v2539 = vpack.c.b16 %v2463, %v2459
    %v2540 = vpack.c.b16 %v2464, %v2460
    %v2541 = vpack.c.b16 %v2465, %v2461
    %v2542 = vpack.c.b16 %v2470, %v2466
    %v2543 = vpack.c.b16 %v2471, %v2467
    %v2544 = vpack.c.b16 %v2472, %v2468
    %v2545 = vpack.c.b16 %v2473, %v2469
    %v2546 = vpack.c.b16 %v2478, %v2474
    %v2547 = vpack.c.b16 %v2479, %v2475
    %v2548 = vpack.c.b16 %v2480, %v2476
    %v2549 = vpack.c.b16 %v2481, %v2477
    %2618 = vmatprep.subr.bf16.mxu0 %v2483
    %2619 = vmatpush1.bf16.msra.mxu0 %v2482
    %2620 = vmatprep.subr.bf16.mxu0 %v2487
    %2621 = vmatpush1.bf16.msra.mxu0 %v2486
    %2622 = vmatprep.subr.bf16.mxu0 %v2491
    %2623 = vmatpush1.bf16.msra.mxu0 %v2490
    %2624 = vmatprep.subr.bf16.mxu0 %v2495
    %2625 = vmatpush1.bf16.msra.mxu0 %v2494
    %2626 = vmatprep.subr.bf16.mxu0 %v2499
    %2627 = vmatpush1.bf16.msra.mxu0 %v2498
    %2628 = vmatprep.subr.bf16.mxu0 %v2503
    %2629 = vmatpush1.bf16.msra.mxu0 %v2502
    %2630 = vmatprep.subr.bf16.mxu0 %v2507
    %2631 = vmatpush1.bf16.msra.mxu0 %v2506
    %2632 = vmatprep.subr.bf16.mxu0 %v2511
    %2633 = vmatpush1.bf16.msra.mxu0 %v2510
    %2634 = vmatprep.subr.bf16.mxu0 %v2515
    %2635 = vmatpush1.bf16.msra.mxu0 %v2514
    %2636 = vmatprep.subr.bf16.mxu0 %v2519
    %2637 = vmatpush1.bf16.msra.mxu0 %v2518
    %2638 = vmatprep.subr.bf16.mxu0 %v2523
    %2639 = vmatpush1.bf16.msra.mxu0 %v2522
    %2640 = vmatprep.subr.bf16.mxu0 %v2527
    %2641 = vmatpush1.bf16.msra.mxu0 %v2526
    %2642 = vmatprep.subr.bf16.mxu0 %v2531
    %2643 = vmatpush1.bf16.msra.mxu0 %v2530
    %2644 = vmatprep.subr.bf16.mxu0 %v2535
    %2645 = vmatpush1.bf16.msra.mxu0 %v2534
    %2646 = vmatprep.subr.bf16.mxu0 %v2539
    %2647 = vmatpush1.bf16.msra.mxu0 %v2538
    %2648 = vmatprep.subr.bf16.mxu0 %v2543
    %2649 = vmatpush1.bf16.msra.mxu0 %v2542
    %2650 = vmatprep.mubr.bf16.mxu0 %v538
    %2651 = vmatmul.mubr.bf16.gmra.mrb[0].mxu0 %v537
    %v2652 = vpop.f32.mrb[0].mxu0
    %v2653 = vadd.f32 0.0, %v2652
    %v2654 = vpop.f32.mrb[0].mxu0
    %v2655 = vadd.f32 0.0, %v2654
    %v2656 = vpop.f32.mrb[0].mxu0
    %v2657 = vadd.f32 0.0, %v2656
    %v2658 = vpop.f32.mrb[0].mxu0
    %v2659 = vadd.f32 0.0, %v2658
    %2660 = vmatprep.mubr.bf16.mxu0 %v541
    %2661 = vmatmul.mubr.bf16.gmra.mrb[0].mxu0 %v540
    %v2662 = vpop.f32.mrb[0].mxu0
    %v2663 = vadd.f32 0.0, %v2662
    %v2664 = vpop.f32.mrb[0].mxu0
    %v2665 = vadd.f32 0.0, %v2664
    %v2666 = vpop.f32.mrb[0].mxu0
    %v2667 = vadd.f32 0.0, %v2666
    %v2668 = vpop.f32.mrb[0].mxu0
    %v2669 = vadd.f32 0.0, %v2668
    %2670 = vmatprep.mubr.bf16.mxu0 %v544
    %2671 = vmatmul.mubr.bf16.gmra.mrb[0].mxu0 %v543
    %v2672 = vpop.f32.mrb[0].mxu0
    %v2673 = vadd.f32 0.0, %v2672
    %v2674 = vpop.f32.mrb[0].mxu0
    %v2675 = vadd.f32 0.0, %v2674
    %v2676 = vpop.f32.mrb[0].mxu0
    %v2677 = vadd.f32 0.0, %v2676
    %v2678 = vpop.f32.mrb[0].mxu0
    %v2679 = vadd.f32 0.0, %v2678
    %2680 = vmatprep.mubr.bf16.mxu0 %v547
    %2681 = vmatmul.mubr.bf16.gmra.mrb[0].mxu0 %v546
    %v2682 = vpop.f32.mrb[0].mxu0
    %v2683 = vadd.f32 0.0, %v2682
    %v2684 = vpop.f32.mrb[0].mxu0
    %v2685 = vadd.f32 0.0, %v2684
    %v2686 = vpop.f32.mrb[0].mxu0
    %v2687 = vadd.f32 0.0, %v2686
    %v2688 = vpop.f32.mrb[0].mxu0
    %v2689 = vadd.f32 0.0, %v2688
    %2690 = vmatprep.mubr.bf16.mxu0 %v550
    %2691 = vmatmul.mubr.bf16.gmra.mrb[0].mxu0 %v549
    %v2692 = vpop.f32.mrb[0].mxu0
    %v2693 = vadd.f32 0.0, %v2692
    %v2694 = vpop.f32.mrb[0].mxu0
    %v2695 = vadd.f32 0.0, %v2694
    %v2696 = vpop.f32.mrb[0].mxu0
    %v2697 = vadd.f32 0.0, %v2696
    %v2698 = vpop.f32.mrb[0].mxu0
    %v2699 = vadd.f32 0.0, %v2698
    %2700 = vmatprep.mubr.bf16.mxu0 %v553
    %2701 = vmatmul.mubr.bf16.gmra.mrb[0].mxu0 %v552
    %v2702 = vpop.f32.mrb[0].mxu0
    %v2703 = vadd.f32 0.0, %v2702
    %v2704 = vpop.f32.mrb[0].mxu0
    %v2705 = vadd.f32 0.0, %v2704
    %v2706 = vpop.f32.mrb[0].mxu0
    %v2707 = vadd.f32 0.0, %v2706
    %v2708 = vpop.f32.mrb[0].mxu0
    %v2709 = vadd.f32 0.0, %v2708
    %2710 = vmatprep.mubr.bf16.mxu0 %v556
    %2711 = vmatmul.mubr.bf16.gmra.mrb[0].mxu0 %v555
    %v2712 = vpop.f32.mrb[0].mxu0
    %v2713 = vadd.f32 0.0, %v2712
    %v2714 = vpop.f32.mrb[0].mxu0
    %v2715 = vadd.f32 0.0, %v2714
    %v2716 = vpop.f32.mrb[0].mxu0
    %v2717 = vadd.f32 0.0, %v2716
    %v2718 = vpop.f32.mrb[0].mxu0
    %v2719 = vadd.f32 0.0, %v2718
    %2720 = vmatprep.mubr.bf16.mxu0 %v559
    %2721 = vmatmul.mubr.bf16.gmra.mrb[0].mxu0 %v558
    %v2722 = vpop.f32.mrb[0].mxu0
    %v2723 = vadd.f32 0.0, %v2722
    %v2724 = vpop.f32.mrb[0].mxu0
    %v2725 = vadd.f32 0.0, %v2724
    %v2726 = vpop.f32.mrb[0].mxu0
    %v2727 = vadd.f32 0.0, %v2726
    %v2728 = vpop.f32.mrb[0].mxu0
    %v2729 = vadd.f32 0.0, %v2728
    %2730 = vmatprep.mubr.bf16.mxu0 %v562
    %2731 = vmatmul.mubr.bf16.gmra.mrb[0].mxu0 %v561
    %v2732 = vpop.f32.mrb[0].mxu0
    %v2733 = vadd.f32 0.0, %v2732
    %v2734 = vpop.f32.mrb[0].mxu0
    %v2735 = vadd.f32 0.0, %v2734
    %v2736 = vpop.f32.mrb[0].mxu0
    %v2737 = vadd.f32 0.0, %v2736
    %v2738 = vpop.f32.mrb[0].mxu0
    %v2739 = vadd.f32 0.0, %v2738
    %2740 = vmatprep.mubr.bf16.mxu0 %v565
    %2741 = vmatmul.mubr.bf16.gmra.mrb[0].mxu0 %v564
    %v2742 = vpop.f32.mrb[0].mxu0
    %v2743 = vadd.f32 0.0, %v2742
    %v2744 = vpop.f32.mrb[0].mxu0
    %v2745 = vadd.f32 0.0, %v2744
    %v2746 = vpop.f32.mrb[0].mxu0
    %v2747 = vadd.f32 0.0, %v2746
    %v2748 = vpop.f32.mrb[0].mxu0
    %v2749 = vadd.f32 0.0, %v2748
    %2750 = vmatprep.mubr.bf16.mxu0 %v568
    %2751 = vmatmul.mubr.bf16.gmra.mrb[0].mxu0 %v567
    %v2752 = vpop.f32.mrb[0].mxu0
    %v2753 = vadd.f32 0.0, %v2752
    %v2754 = vpop.f32.mrb[0].mxu0
    %v2755 = vadd.f32 0.0, %v2754
    %v2756 = vpop.f32.mrb[0].mxu0
    %v2757 = vadd.f32 0.0, %v2756
    %v2758 = vpop.f32.mrb[0].mxu0
    %v2759 = vadd.f32 0.0, %v2758
    %2760 = vmatprep.mubr.bf16.mxu0 %v571
    %2761 = vmatmul.mubr.bf16.gmra.mrb[0].mxu0 %v570
    %v2762 = vpop.f32.mrb[0].mxu0
    %v2763 = vadd.f32 0.0, %v2762
    %v2764 = vpop.f32.mrb[0].mxu0
    %v2765 = vadd.f32 0.0, %v2764
    %v2766 = vpop.f32.mrb[0].mxu0
    %v2767 = vadd.f32 0.0, %v2766
    %v2768 = vpop.f32.mrb[0].mxu0
    %v2769 = vadd.f32 0.0, %v2768
    %2770 = vmatprep.mubr.bf16.mxu0 %v574
    %2771 = vmatmul.mubr.bf16.gmra.mrb[0].mxu0 %v573
    %v2772 = vpop.f32.mrb[0].mxu0
    %v2773 = vadd.f32 0.0, %v2772
    %v2774 = vpop.f32.mrb[0].mxu0
    %v2775 = vadd.f32 0.0, %v2774
    %v2776 = vpop.f32.mrb[0].mxu0
    %v2777 = vadd.f32 0.0, %v2776
    %v2778 = vpop.f32.mrb[0].mxu0
    %v2779 = vadd.f32 0.0, %v2778
    %2780 = vmatprep.mubr.bf16.mxu0 %v577
    %2781 = vmatmul.mubr.bf16.gmra.mrb[0].mxu0 %v576
    %v2782 = vpop.f32.mrb[0].mxu0
    %v2783 = vadd.f32 0.0, %v2782
    %v2784 = vpop.f32.mrb[0].mxu0
    %v2785 = vadd.f32 0.0, %v2784
    %v2786 = vpop.f32.mrb[0].mxu0
    %v2787 = vadd.f32 0.0, %v2786
    %v2788 = vpop.f32.mrb[0].mxu0
    %v2789 = vadd.f32 0.0, %v2788
    %2790 = vmatprep.mubr.bf16.mxu0 %v580
    %2791 = vmatmul.mubr.bf16.gmra.mrb[0].mxu0 %v579
    %v2792 = vpop.f32.mrb[0].mxu0
    %v2793 = vadd.f32 0.0, %v2792
    %v2794 = vpop.f32.mrb[0].mxu0
    %v2795 = vadd.f32 0.0, %v2794
    %v2796 = vpop.f32.mrb[0].mxu0
    %v2797 = vadd.f32 0.0, %v2796
    %v2798 = vpop.f32.mrb[0].mxu0
    %v2799 = vadd.f32 0.0, %v2798
    %2800 = vmatprep.mubr.bf16.mxu0 %v583
    %2801 = vmatmul.mubr.bf16.gmra.mrb[0].mxu0 %v582
    %v2802 = vpop.f32.mrb[0].mxu0
    %v2803 = vadd.f32 0.0, %v2802
    %v2804 = vpop.f32.mrb[0].mxu0
    %v2805 = vadd.f32 0.0, %v2804
    %v2806 = vpop.f32.mrb[0].mxu0
    %v2807 = vadd.f32 0.0, %v2806
    %v2808 = vpop.f32.mrb[0].mxu0
    %v2809 = vadd.f32 0.0, %v2808
    %2810 = vmatprep.mubr.bf16.mxu0 %v586
    %2811 = vmatmul.mubr.bf16.gmra.mrb[0].mxu0 %v585
    %v2812 = vpop.f32.mrb[0].mxu0
    %v2813 = vadd.f32 0.0, %v2812
    %v2814 = vpop.f32.mrb[0].mxu0
    %v2815 = vadd.f32 0.0, %v2814
    %v2816 = vpop.f32.mrb[0].mxu0
    %v2817 = vadd.f32 0.0, %v2816
    %v2818 = vpop.f32.mrb[0].mxu0
    %v2819 = vadd.f32 0.0, %v2818
    %2820 = vmatprep.mubr.bf16.mxu0 %v589
    %2821 = vmatmul.mubr.bf16.gmra.mrb[0].mxu0 %v588
    %v2822 = vpop.f32.mrb[0].mxu0
    %v2823 = vadd.f32 0.0, %v2822
    %v2824 = vpop.f32.mrb[0].mxu0
    %v2825 = vadd.f32 0.0, %v2824
    %v2826 = vpop.f32.mrb[0].mxu0
    %v2827 = vadd.f32 0.0, %v2826
    %v2828 = vpop.f32.mrb[0].mxu0
    %v2829 = vadd.f32 0.0, %v2828
    %2830 = vmatprep.mubr.bf16.mxu0 %v592
    %2831 = vmatmul.mubr.bf16.gmra.mrb[0].mxu0 %v591
    %v2832 = vpop.f32.mrb[0].mxu0
    %v2833 = vadd.f32 0.0, %v2832
    %v2834 = vpop.f32.mrb[0].mxu0
    %v2835 = vadd.f32 0.0, %v2834
    %v2836 = vpop.f32.mrb[0].mxu0
    %v2837 = vadd.f32 0.0, %v2836
    %v2838 = vpop.f32.mrb[0].mxu0
    %v2839 = vadd.f32 0.0, %v2838
    %2840 = vmatprep.mubr.bf16.mxu0 %v595
    %2841 = vmatmul.mubr.bf16.gmra.mrb[0].mxu0 %v594
    %v2842 = vpop.f32.mrb[0].mxu0
    %v2843 = vadd.f32 0.0, %v2842
    %v2844 = vpop.f32.mrb[0].mxu0
    %v2845 = vadd.f32 0.0, %v2844
    %v2846 = vpop.f32.mrb[0].mxu0
    %v2847 = vadd.f32 0.0, %v2846
    %v2848 = vpop.f32.mrb[0].mxu0
    %v2849 = vadd.f32 0.0, %v2848
    %2850 = vmatprep.mubr.bf16.mxu0 %v598
    %2851 = vmatmul.mubr.bf16.gmra.mrb[0].mxu0 %v597
    %v2852 = vpop.f32.mrb[0].mxu0
    %v2853 = vadd.f32 0.0, %v2852
    %v2854 = vpop.f32.mrb[0].mxu0
    %v2855 = vadd.f32 0.0, %v2854
    %v2856 = vpop.f32.mrb[0].mxu0
    %v2857 = vadd.f32 0.0, %v2856
    %v2858 = vpop.f32.mrb[0].mxu0
    %v2859 = vadd.f32 0.0, %v2858
    %2860 = vmatprep.mubr.bf16.mxu0 %v601
    %2861 = vmatmul.mubr.bf16.gmra.mrb[0].mxu0 %v600
    %v2862 = vpop.f32.mrb[0].mxu0
    %v2863 = vadd.f32 0.0, %v2862
    %v2864 = vpop.f32.mrb[0].mxu0
    %v2865 = vadd.f32 0.0, %v2864
    %v2866 = vpop.f32.mrb[0].mxu0
    %v2867 = vadd.f32 0.0, %v2866
    %v2868 = vpop.f32.mrb[0].mxu0
    %v2869 = vadd.f32 0.0, %v2868
    %2870 = vmatprep.mubr.bf16.mxu0 %v604
    %2871 = vmatmul.mubr.bf16.gmra.mrb[0].mxu0 %v603
    %v2872 = vpop.f32.mrb[0].mxu0
    %v2873 = vadd.f32 0.0, %v2872
    %v2874 = vpop.f32.mrb[0].mxu0
    %v2875 = vadd.f32 0.0, %v2874
    %v2876 = vpop.f32.mrb[0].mxu0
    %v2877 = vadd.f32 0.0, %v2876
    %v2878 = vpop.f32.mrb[0].mxu0
    %v2879 = vadd.f32 0.0, %v2878
    %2880 = vmatprep.mubr.bf16.mxu0 %v607
    %2881 = vmatmul.mubr.bf16.gmra.mrb[0].mxu0 %v606
    %v2882 = vpop.f32.mrb[0].mxu0
    %v2883 = vadd.f32 0.0, %v2882
    %v2884 = vpop.f32.mrb[0].mxu0
    %v2885 = vadd.f32 0.0, %v2884
    %v2886 = vpop.f32.mrb[0].mxu0
    %v2887 = vadd.f32 0.0, %v2886
    %v2888 = vpop.f32.mrb[0].mxu0
    %v2889 = vadd.f32 0.0, %v2888
    %2890 = vmatprep.mubr.bf16.mxu0 %v610
    %2891 = vmatmul.mubr.bf16.gmra.mrb[0].mxu0 %v609
    %v2892 = vpop.f32.mrb[0].mxu0
    %v2893 = vadd.f32 0.0, %v2892
    %v2894 = vpop.f32.mrb[0].mxu0
    %v2895 = vadd.f32 0.0, %v2894
    %v2896 = vpop.f32.mrb[0].mxu0
    %v2897 = vadd.f32 0.0, %v2896
    %v2898 = vpop.f32.mrb[0].mxu0
    %v2899 = vadd.f32 0.0, %v2898
    %2900 = vdwg.mxu0
    %2901 = vmatprep.subr.bf16.mxu0 %v2547
    %2902 = vmatpush1.bf16.msra.mxu0 %v2546
    %2903 = vmatprep.subr.bf16.mxu0 0
    %2904 = vmatpush1.bf16.msra.mxu0 0
    %2905 = vmatprep.subr.bf16.mxu0 0
    %2906 = vmatpush1.bf16.msra.mxu0 0
    %2907 = vmatprep.subr.bf16.mxu0 0
    %2908 = vmatpush1.bf16.msra.mxu0 0
    %2909 = vmatprep.subr.bf16.mxu0 0
    %2910 = vmatpush1.bf16.msra.mxu0 0
    %2911 = vmatprep.subr.bf16.mxu0 0
    %2912 = vmatpush1.bf16.msra.mxu0 0
    %2913 = vmatprep.subr.bf16.mxu0 0
    %2914 = vmatpush1.bf16.msra.mxu0 0
    %2915 = vmatprep.subr.bf16.mxu0 0
    %2916 = vmatpush1.bf16.msra.mxu0 0
    %2917 = vmatprep.subr.bf16.mxu0 0
    %2918 = vmatpush1.bf16.msra.mxu0 0
    %2919 = vmatprep.subr.bf16.mxu0 0
    %2920 = vmatpush1.bf16.msra.mxu0 0
    %2921 = vmatprep.subr.bf16.mxu0 0
    %2922 = vmatpush1.bf16.msra.mxu0 0
    %2923 = vmatprep.subr.bf16.mxu0 0
    %2924 = vmatpush1.bf16.msra.mxu0 0
    %2925 = vmatprep.subr.bf16.mxu0 0
    %2926 = vmatpush1.bf16.msra.mxu0 0
    %2927 = vmatprep.subr.bf16.mxu0 0
    %2928 = vmatpush1.bf16.msra.mxu0 0
    %2929 = vmatprep.subr.bf16.mxu0 0
    %2930 = vmatpush1.bf16.msra.mxu0 0
    %2931 = vmatprep.subr.bf16.mxu0 0
    %2932 = vmatpush1.bf16.msra.mxu0 0
    %2933 = vmatprep.mubr.bf16.mxu0 0
    %2934 = vmatmul.mubr.bf16.gmra.mrb[0].mxu0 %v1004
    %v2935 = vpop.f32.mrb[0].mxu0
    %v2936 = vadd.f32 %v2653, %v2935
    %v2937 = vpop.f32.mrb[0].mxu0
    %v2938 = vadd.f32 %v2655, %v2937
    %v2939 = vpop.f32.mrb[0].mxu0
    %v2940 = vadd.f32 %v2657, %v2939
    %v2941 = vpop.f32.mrb[0].mxu0
    %v2942 = vadd.f32 %v2659, %v2941
    %2943 = vmatprep.mubr.bf16.mxu0 0
    %2944 = vmatmul.mubr.bf16.gmra.mrb[0].mxu0 %v1007
    %v2945 = vpop.f32.mrb[0].mxu0
    %v2946 = vadd.f32 %v2663, %v2945
    %v2947 = vpop.f32.mrb[0].mxu0
    %v2948 = vadd.f32 %v2665, %v2947
    %v2949 = vpop.f32.mrb[0].mxu0
    %v2950 = vadd.f32 %v2667, %v2949
    %v2951 = vpop.f32.mrb[0].mxu0
    %v2952 = vadd.f32 %v2669, %v2951
    %2953 = vmatprep.mubr.bf16.mxu0 0
    %2954 = vmatmul.mubr.bf16.gmra.mrb[0].mxu0 %v1010
    %v2955 = vpop.f32.mrb[0].mxu0
    %v2956 = vadd.f32 %v2673, %v2955
    %v2957 = vpop.f32.mrb[0].mxu0
    %v2958 = vadd.f32 %v2675, %v2957
    %v2959 = vpop.f32.mrb[0].mxu0
    %v2960 = vadd.f32 %v2677, %v2959
    %v2961 = vpop.f32.mrb[0].mxu0
    %v2962 = vadd.f32 %v2679, %v2961
    %2963 = vmatprep.mubr.bf16.mxu0 0
    %2964 = vmatmul.mubr.bf16.gmra.mrb[0].mxu0 %v1013
    %v2965 = vpop.f32.mrb[0].mxu0
    %v2966 = vadd.f32 %v2683, %v2965
    %v2967 = vpop.f32.mrb[0].mxu0
    %v2968 = vadd.f32 %v2685, %v2967
    %v2969 = vpop.f32.mrb[0].mxu0
    %v2970 = vadd.f32 %v2687, %v2969
    %v2971 = vpop.f32.mrb[0].mxu0
    %v2972 = vadd.f32 %v2689, %v2971
    %2973 = vmatprep.mubr.bf16.mxu0 0
    %2974 = vmatmul.mubr.bf16.gmra.mrb[0].mxu0 %v1016
    %v2975 = vpop.f32.mrb[0].mxu0
    %v2976 = vadd.f32 %v2693, %v2975
    %v2977 = vpop.f32.mrb[0].mxu0
    %v2978 = vadd.f32 %v2695, %v2977
    %v2979 = vpop.f32.mrb[0].mxu0
    %v2980 = vadd.f32 %v2697, %v2979
    %v2981 = vpop.f32.mrb[0].mxu0
    %v2982 = vadd.f32 %v2699, %v2981
    %2983 = vmatprep.mubr.bf16.mxu0 0
    %2984 = vmatmul.mubr.bf16.gmra.mrb[0].mxu0 %v1019
    %v2985 = vpop.f32.mrb[0].mxu0
    %v2986 = vadd.f32 %v2703, %v2985
    %v2987 = vpop.f32.mrb[0].mxu0
    %v2988 = vadd.f32 %v2705, %v2987
    %v2989 = vpop.f32.mrb[0].mxu0
    %v2990 = vadd.f32 %v2707, %v2989
    %v2991 = vpop.f32.mrb[0].mxu0
    %v2992 = vadd.f32 %v2709, %v2991
    %2993 = vmatprep.mubr.bf16.mxu0 0
    %2994 = vmatmul.mubr.bf16.gmra.mrb[0].mxu0 %v1022
    %v2995 = vpop.f32.mrb[0].mxu0
    %v2996 = vadd.f32 %v2713, %v2995
    %v2997 = vpop.f32.mrb[0].mxu0
    %v2998 = vadd.f32 %v2715, %v2997
    %v2999 = vpop.f32.mrb[0].mxu0
    %v3000 = vadd.f32 %v2717, %v2999
    %v3001 = vpop.f32.mrb[0].mxu0
    %v3002 = vadd.f32 %v2719, %v3001
    %3003 = vmatprep.mubr.bf16.mxu0 0
    %3004 = vmatmul.mubr.bf16.gmra.mrb[0].mxu0 %v1025
    %v3005 = vpop.f32.mrb[0].mxu0
    %v3006 = vadd.f32 %v2723, %v3005
    %v3007 = vpop.f32.mrb[0].mxu0
    %v3008 = vadd.f32 %v2725, %v3007
    %v3009 = vpop.f32.mrb[0].mxu0
    %v3010 = vadd.f32 %v2727, %v3009
    %v3011 = vpop.f32.mrb[0].mxu0
    %v3012 = vadd.f32 %v2729, %v3011
    %3013 = vmatprep.mubr.bf16.mxu0 0
    %3014 = vmatmul.mubr.bf16.gmra.mrb[0].mxu0 %v1028
    %v3015 = vpop.f32.mrb[0].mxu0
    %v3016 = vadd.f32 %v2733, %v3015
    %v3017 = vpop.f32.mrb[0].mxu0
    %v3018 = vadd.f32 %v2735, %v3017
    %v3019 = vpop.f32.mrb[0].mxu0
    %v3020 = vadd.f32 %v2737, %v3019
    %v3021 = vpop.f32.mrb[0].mxu0
    %v3022 = vadd.f32 %v2739, %v3021
    %3023 = vmatprep.mubr.bf16.mxu0 0
    %3024 = vmatmul.mubr.bf16.gmra.mrb[0].mxu0 %v1031
    %v3025 = vpop.f32.mrb[0].mxu0
    %v3026 = vadd.f32 %v2743, %v3025
    %v3027 = vpop.f32.mrb[0].mxu0
    %v3028 = vadd.f32 %v2745, %v3027
    %v3029 = vpop.f32.mrb[0].mxu0
    %v3030 = vadd.f32 %v2747, %v3029
    %v3031 = vpop.f32.mrb[0].mxu0
    %v3032 = vadd.f32 %v2749, %v3031
    %3033 = vmatprep.mubr.bf16.mxu0 0
    %3034 = vmatmul.mubr.bf16.gmra.mrb[0].mxu0 %v1034
    %v3035 = vpop.f32.mrb[0].mxu0
    %v3036 = vadd.f32 %v2753, %v3035
    %v3037 = vpop.f32.mrb[0].mxu0
    %v3038 = vadd.f32 %v2755, %v3037
    %v3039 = vpop.f32.mrb[0].mxu0
    %v3040 = vadd.f32 %v2757, %v3039
    %v3041 = vpop.f32.mrb[0].mxu0
    %v3042 = vadd.f32 %v2759, %v3041
    %3043 = vmatprep.mubr.bf16.mxu0 0
    %3044 = vmatmul.mubr.bf16.gmra.mrb[0].mxu0 %v1037
    %v3045 = vpop.f32.mrb[0].mxu0
    %v3046 = vadd.f32 %v2763, %v3045
    %v3047 = vpop.f32.mrb[0].mxu0
    %v3048 = vadd.f32 %v2765, %v3047
    %v3049 = vpop.f32.mrb[0].mxu0
    %v3050 = vadd.f32 %v2767, %v3049
    %v3051 = vpop.f32.mrb[0].mxu0
    %v3052 = vadd.f32 %v2769, %v3051
    %3053 = vmatprep.mubr.bf16.mxu0 0
    %3054 = vmatmul.mubr.bf16.gmra.mrb[0].mxu0 %v1040
    %v3055 = vpop.f32.mrb[0].mxu0
    %v3056 = vadd.f32 %v2773, %v3055
    %v3057 = vpop.f32.mrb[0].mxu0
    %v3058 = vadd.f32 %v2775, %v3057
    %v3059 = vpop.f32.mrb[0].mxu0
    %v3060 = vadd.f32 %v2777, %v3059
    %v3061 = vpop.f32.mrb[0].mxu0
    %v3062 = vadd.f32 %v2779, %v3061
    %3063 = vmatprep.mubr.bf16.mxu0 0
    %3064 = vmatmul.mubr.bf16.gmra.mrb[0].mxu0 %v1043
    %v3065 = vpop.f32.mrb[0].mxu0
    %v3066 = vadd.f32 %v2783, %v3065
    %v3067 = vpop.f32.mrb[0].mxu0
    %v3068 = vadd.f32 %v2785, %v3067
    %v3069 = vpop.f32.mrb[0].mxu0
    %v3070 = vadd.f32 %v2787, %v3069
    %v3071 = vpop.f32.mrb[0].mxu0
    %v3072 = vadd.f32 %v2789, %v3071
    %3073 = vmatprep.mubr.bf16.mxu0 0
    %3074 = vmatmul.mubr.bf16.gmra.mrb[0].mxu0 %v1046
    %v3075 = vpop.f32.mrb[0].mxu0
    %v3076 = vadd.f32 %v2793, %v3075
    %v3077 = vpop.f32.mrb[0].mxu0
    %v3078 = vadd.f32 %v2795, %v3077
    %v3079 = vpop.f32.mrb[0].mxu0
    %v3080 = vadd.f32 %v2797, %v3079
    %v3081 = vpop.f32.mrb[0].mxu0
    %v3082 = vadd.f32 %v2799, %v3081
    %3083 = vmatprep.mubr.bf16.mxu0 0
    %3084 = vmatmul.mubr.bf16.gmra.mrb[0].mxu0 %v1049
    %v3085 = vpop.f32.mrb[0].mxu0
    %v3086 = vadd.f32 %v2803, %v3085
    %v3087 = vpop.f32.mrb[0].mxu0
    %v3088 = vadd.f32 %v2805, %v3087
    %v3089 = vpop.f32.mrb[0].mxu0
    %v3090 = vadd.f32 %v2807, %v3089
    %v3091 = vpop.f32.mrb[0].mxu0
    %v3092 = vadd.f32 %v2809, %v3091
    %3093 = vmatprep.mubr.bf16.mxu0 0
    %3094 = vmatmul.mubr.bf16.gmra.mrb[0].mxu0 %v1052
    %v3095 = vpop.f32.mrb[0].mxu0
    %v3096 = vadd.f32 %v2813, %v3095
    %v3097 = vpop.f32.mrb[0].mxu0
    %v3098 = vadd.f32 %v2815, %v3097
    %v3099 = vpop.f32.mrb[0].mxu0
    %v3100 = vadd.f32 %v2817, %v3099
    %v3101 = vpop.f32.mrb[0].mxu0
    %v3102 = vadd.f32 %v2819, %v3101
    %3103 = vmatprep.mubr.bf16.mxu0 0
    %3104 = vmatmul.mubr.bf16.gmra.mrb[0].mxu0 %v1055
    %v3105 = vpop.f32.mrb[0].mxu0
    %v3106 = vadd.f32 %v2823, %v3105
    %v3107 = vpop.f32.mrb[0].mxu0
    %v3108 = vadd.f32 %v2825, %v3107
    %v3109 = vpop.f32.mrb[0].mxu0
    %v3110 = vadd.f32 %v2827, %v3109
    %v3111 = vpop.f32.mrb[0].mxu0
    %v3112 = vadd.f32 %v2829, %v3111
    %3113 = vmatprep.mubr.bf16.mxu0 0
    %3114 = vmatmul.mubr.bf16.gmra.mrb[0].mxu0 %v1058
    %v3115 = vpop.f32.mrb[0].mxu0
    %v3116 = vadd.f32 %v2833, %v3115
    %v3117 = vpop.f32.mrb[0].mxu0
    %v3118 = vadd.f32 %v2835, %v3117
    %v3119 = vpop.f32.mrb[0].mxu0
    %v3120 = vadd.f32 %v2837, %v3119
    %v3121 = vpop.f32.mrb[0].mxu0
    %v3122 = vadd.f32 %v2839, %v3121
    %3123 = vmatprep.mubr.bf16.mxu0 0
    %3124 = vmatmul.mubr.bf16.gmra.mrb[0].mxu0 %v1061
    %v3125 = vpop.f32.mrb[0].mxu0
    %v3126 = vadd.f32 %v2843, %v3125
    %v3127 = vpop.f32.mrb[0].mxu0
    %v3128 = vadd.f32 %v2845, %v3127
    %v3129 = vpop.f32.mrb[0].mxu0
    %v3130 = vadd.f32 %v2847, %v3129
    %v3131 = vpop.f32.mrb[0].mxu0
    %v3132 = vadd.f32 %v2849, %v3131
    %3133 = vmatprep.mubr.bf16.mxu0 0
    %3134 = vmatmul.mubr.bf16.gmra.mrb[0].mxu0 %v1064
    %v3135 = vpop.f32.mrb[0].mxu0
    %v3136 = vadd.f32 %v2853, %v3135
    %v3137 = vpop.f32.mrb[0].mxu0
    %v3138 = vadd.f32 %v2855, %v3137
    %v3139 = vpop.f32.mrb[0].mxu0
    %v3140 = vadd.f32 %v2857, %v3139
    %v3141 = vpop.f32.mrb[0].mxu0
    %v3142 = vadd.f32 %v2859, %v3141
    %3143 = vmatprep.mubr.bf16.mxu0 0
    %3144 = vmatmul.mubr.bf16.gmra.mrb[0].mxu0 %v1067
    %v3145 = vpop.f32.mrb[0].mxu0
    %v3146 = vadd.f32 %v2863, %v3145
    %v3147 = vpop.f32.mrb[0].mxu0
    %v3148 = vadd.f32 %v2865, %v3147
    %v3149 = vpop.f32.mrb[0].mxu0
    %v3150 = vadd.f32 %v2867, %v3149
    %v3151 = vpop.f32.mrb[0].mxu0
    %v3152 = vadd.f32 %v2869, %v3151
    %3153 = vmatprep.mubr.bf16.mxu0 0
    %3154 = vmatmul.mubr.bf16.gmra.mrb[0].mxu0 %v1070
    %v3155 = vpop.f32.mrb[0].mxu0
    %v3156 = vadd.f32 %v2873, %v3155
    %v3157 = vpop.f32.mrb[0].mxu0
    %v3158 = vadd.f32 %v2875, %v3157
    %v3159 = vpop.f32.mrb[0].mxu0
    %v3160 = vadd.f32 %v2877, %v3159
    %v3161 = vpop.f32.mrb[0].mxu0
    %v3162 = vadd.f32 %v2879, %v3161
    %3163 = vmatprep.mubr.bf16.mxu0 0
    %3164 = vmatmul.mubr.bf16.gmra.mrb[0].mxu0 %v1073
    %v3165 = vpop.f32.mrb[0].mxu0
    %v3166 = vadd.f32 %v2883, %v3165
    %v3167 = vpop.f32.mrb[0].mxu0
    %v3168 = vadd.f32 %v2885, %v3167
    %v3169 = vpop.f32.mrb[0].mxu0
    %v3170 = vadd.f32 %v2887, %v3169
    %v3171 = vpop.f32.mrb[0].mxu0
    %v3172 = vadd.f32 %v2889, %v3171
    %3173 = vmatprep.mubr.bf16.mxu0 0
    %3174 = vmatmul.mubr.bf16.gmra.mrb[0].mxu0 %v1076
    %v3175 = vpop.f32.mrb[0].mxu0
    %v3176 = vadd.f32 %v2893, %v3175
    %v3177 = vpop.f32.mrb[0].mxu0
    %v3178 = vadd.f32 %v2895, %v3177
    %v3179 = vpop.f32.mrb[0].mxu0
    %v3180 = vadd.f32 %v2897, %v3179
    %v3181 = vpop.f32.mrb[0].mxu0
    %v3182 = vadd.f32 %v2899, %v3181
    %3183 = vdwg.mxu0
    %3184 = vmatprep.subr.bf16.mxu0 %v2485
    %3185 = vmatpush1.bf16.msra.mxu0 %v2484
    %3186 = vmatprep.subr.bf16.mxu0 %v2489
    %3187 = vmatpush1.bf16.msra.mxu0 %v2488
    %3188 = vmatprep.subr.bf16.mxu0 %v2493
    %3189 = vmatpush1.bf16.msra.mxu0 %v2492
    %3190 = vmatprep.subr.bf16.mxu0 %v2497
    %3191 = vmatpush1.bf16.msra.mxu0 %v2496
    %3192 = vmatprep.subr.bf16.mxu0 %v2501
    %3193 = vmatpush1.bf16.msra.mxu0 %v2500
    %3194 = vmatprep.subr.bf16.mxu0 %v2505
    %3195 = vmatpush1.bf16.msra.mxu0 %v2504
    %3196 = vmatprep.subr.bf16.mxu0 %v2509
    %3197 = vmatpush1.bf16.msra.mxu0 %v2508
    %3198 = vmatprep.subr.bf16.mxu0 %v2513
    %3199 = vmatpush1.bf16.msra.mxu0 %v2512
    %3200 = vmatprep.subr.bf16.mxu0 %v2517
    %3201 = vmatpush1.bf16.msra.mxu0 %v2516
    %3202 = vmatprep.subr.bf16.mxu0 %v2521
    %3203 = vmatpush1.bf16.msra.mxu0 %v2520
    %3204 = vmatprep.subr.bf16.mxu0 %v2525
    %3205 = vmatpush1.bf16.msra.mxu0 %v2524
    %3206 = vmatprep.subr.bf16.mxu0 %v2529
    %3207 = vmatpush1.bf16.msra.mxu0 %v2528
    %3208 = vmatprep.subr.bf16.mxu0 %v2533
    %3209 = vmatpush1.bf16.msra.mxu0 %v2532
    %3210 = vmatprep.subr.bf16.mxu0 %v2537
    %3211 = vmatpush1.bf16.msra.mxu0 %v2536
    %3212 = vmatprep.subr.bf16.mxu0 %v2541
    %3213 = vmatpush1.bf16.msra.mxu0 %v2540
    %3214 = vmatprep.subr.bf16.mxu0 %v2545
    %3215 = vmatpush1.bf16.msra.mxu0 %v2544
    %3216 = vmatprep.mubr.bf16.mxu0 %v538
    %3217 = vmatmul.mubr.bf16.gmra.mrb[0].mxu0 %v537
    %v3218 = vpop.f32.mrb[0].mxu0
    %v3219 = vadd.f32 0.0, %v3218
    %v3220 = vpop.f32.mrb[0].mxu0
    %v3221 = vadd.f32 0.0, %v3220
    %v3222 = vpop.f32.mrb[0].mxu0
    %v3223 = vadd.f32 0.0, %v3222
    %v3224 = vpop.f32.mrb[0].mxu0
    %v3225 = vadd.f32 0.0, %v3224
    %3226 = vmatprep.mubr.bf16.mxu0 %v541
    %3227 = vmatmul.mubr.bf16.gmra.mrb[0].mxu0 %v540
    %v3228 = vpop.f32.mrb[0].mxu0
    %v3229 = vadd.f32 0.0, %v3228
    %v3230 = vpop.f32.mrb[0].mxu0
    %v3231 = vadd.f32 0.0, %v3230
    %v3232 = vpop.f32.mrb[0].mxu0
    %v3233 = vadd.f32 0.0, %v3232
    %v3234 = vpop.f32.mrb[0].mxu0
    %v3235 = vadd.f32 0.0, %v3234
    %3236 = vmatprep.mubr.bf16.mxu0 %v544
    %3237 = vmatmul.mubr.bf16.gmra.mrb[0].mxu0 %v543
    %v3238 = vpop.f32.mrb[0].mxu0
    %v3239 = vadd.f32 0.0, %v3238
    %v3240 = vpop.f32.mrb[0].mxu0
    %v3241 = vadd.f32 0.0, %v3240
    %v3242 = vpop.f32.mrb[0].mxu0
    %v3243 = vadd.f32 0.0, %v3242
    %v3244 = vpop.f32.mrb[0].mxu0
    %v3245 = vadd.f32 0.0, %v3244
    %3246 = vmatprep.mubr.bf16.mxu0 %v547
    %3247 = vmatmul.mubr.bf16.gmra.mrb[0].mxu0 %v546
    %v3248 = vpop.f32.mrb[0].mxu0
    %v3249 = vadd.f32 0.0, %v3248
    %v3250 = vpop.f32.mrb[0].mxu0
    %v3251 = vadd.f32 0.0, %v3250
    %v3252 = vpop.f32.mrb[0].mxu0
    %v3253 = vadd.f32 0.0, %v3252
    %v3254 = vpop.f32.mrb[0].mxu0
    %v3255 = vadd.f32 0.0, %v3254
    %3256 = vmatprep.mubr.bf16.mxu0 %v550
    %3257 = vmatmul.mubr.bf16.gmra.mrb[0].mxu0 %v549
    %v3258 = vpop.f32.mrb[0].mxu0
    %v3259 = vadd.f32 0.0, %v3258
    %v3260 = vpop.f32.mrb[0].mxu0
    %v3261 = vadd.f32 0.0, %v3260
    %v3262 = vpop.f32.mrb[0].mxu0
    %v3263 = vadd.f32 0.0, %v3262
    %v3264 = vpop.f32.mrb[0].mxu0
    %v3265 = vadd.f32 0.0, %v3264
    %3266 = vmatprep.mubr.bf16.mxu0 %v553
    %3267 = vmatmul.mubr.bf16.gmra.mrb[0].mxu0 %v552
    %v3268 = vpop.f32.mrb[0].mxu0
    %v3269 = vadd.f32 0.0, %v3268
    %v3270 = vpop.f32.mrb[0].mxu0
    %v3271 = vadd.f32 0.0, %v3270
    %v3272 = vpop.f32.mrb[0].mxu0
    %v3273 = vadd.f32 0.0, %v3272
    %v3274 = vpop.f32.mrb[0].mxu0
    %v3275 = vadd.f32 0.0, %v3274
    %3276 = vmatprep.mubr.bf16.mxu0 %v556
    %3277 = vmatmul.mubr.bf16.gmra.mrb[0].mxu0 %v555
    %v3278 = vpop.f32.mrb[0].mxu0
    %v3279 = vadd.f32 0.0, %v3278
    %v3280 = vpop.f32.mrb[0].mxu0
    %v3281 = vadd.f32 0.0, %v3280
    %v3282 = vpop.f32.mrb[0].mxu0
    %v3283 = vadd.f32 0.0, %v3282
    %v3284 = vpop.f32.mrb[0].mxu0
    %v3285 = vadd.f32 0.0, %v3284
    %3286 = vmatprep.mubr.bf16.mxu0 %v559
    %3287 = vmatmul.mubr.bf16.gmra.mrb[0].mxu0 %v558
    %v3288 = vpop.f32.mrb[0].mxu0
    %v3289 = vadd.f32 0.0, %v3288
    %v3290 = vpop.f32.mrb[0].mxu0
    %v3291 = vadd.f32 0.0, %v3290
    %v3292 = vpop.f32.mrb[0].mxu0
    %v3293 = vadd.f32 0.0, %v3292
    %v3294 = vpop.f32.mrb[0].mxu0
    %v3295 = vadd.f32 0.0, %v3294
    %3296 = vmatprep.mubr.bf16.mxu0 %v562
    %3297 = vmatmul.mubr.bf16.gmra.mrb[0].mxu0 %v561
    %v3298 = vpop.f32.mrb[0].mxu0
    %v3299 = vadd.f32 0.0, %v3298
    %v3300 = vpop.f32.mrb[0].mxu0
    %v3301 = vadd.f32 0.0, %v3300
    %v3302 = vpop.f32.mrb[0].mxu0
    %v3303 = vadd.f32 0.0, %v3302
    %v3304 = vpop.f32.mrb[0].mxu0
    %v3305 = vadd.f32 0.0, %v3304
    %3306 = vmatprep.mubr.bf16.mxu0 %v565
    %3307 = vmatmul.mubr.bf16.gmra.mrb[0].mxu0 %v564
    %v3308 = vpop.f32.mrb[0].mxu0
    %v3309 = vadd.f32 0.0, %v3308
    %v3310 = vpop.f32.mrb[0].mxu0
    %v3311 = vadd.f32 0.0, %v3310
    %v3312 = vpop.f32.mrb[0].mxu0
    %v3313 = vadd.f32 0.0, %v3312
    %v3314 = vpop.f32.mrb[0].mxu0
    %v3315 = vadd.f32 0.0, %v3314
    %3316 = vmatprep.mubr.bf16.mxu0 %v568
    %3317 = vmatmul.mubr.bf16.gmra.mrb[0].mxu0 %v567
    %v3318 = vpop.f32.mrb[0].mxu0
    %v3319 = vadd.f32 0.0, %v3318
    %v3320 = vpop.f32.mrb[0].mxu0
    %v3321 = vadd.f32 0.0, %v3320
    %v3322 = vpop.f32.mrb[0].mxu0
    %v3323 = vadd.f32 0.0, %v3322
    %v3324 = vpop.f32.mrb[0].mxu0
    %v3325 = vadd.f32 0.0, %v3324
    %3326 = vmatprep.mubr.bf16.mxu0 %v571
    %3327 = vmatmul.mubr.bf16.gmra.mrb[0].mxu0 %v570
    %v3328 = vpop.f32.mrb[0].mxu0
    %v3329 = vadd.f32 0.0, %v3328
    %v3330 = vpop.f32.mrb[0].mxu0
    %v3331 = vadd.f32 0.0, %v3330
    %v3332 = vpop.f32.mrb[0].mxu0
    %v3333 = vadd.f32 0.0, %v3332
    %v3334 = vpop.f32.mrb[0].mxu0
    %v3335 = vadd.f32 0.0, %v3334
    %3336 = vmatprep.mubr.bf16.mxu0 %v574
    %3337 = vmatmul.mubr.bf16.gmra.mrb[0].mxu0 %v573
    %v3338 = vpop.f32.mrb[0].mxu0
    %v3339 = vadd.f32 0.0, %v3338
    %v3340 = vpop.f32.mrb[0].mxu0
    %v3341 = vadd.f32 0.0, %v3340
    %v3342 = vpop.f32.mrb[0].mxu0
    %v3343 = vadd.f32 0.0, %v3342
    %v3344 = vpop.f32.mrb[0].mxu0
    %v3345 = vadd.f32 0.0, %v3344
    %3346 = vmatprep.mubr.bf16.mxu0 %v577
    %3347 = vmatmul.mubr.bf16.gmra.mrb[0].mxu0 %v576
    %v3348 = vpop.f32.mrb[0].mxu0
    %v3349 = vadd.f32 0.0, %v3348
    %v3350 = vpop.f32.mrb[0].mxu0
    %v3351 = vadd.f32 0.0, %v3350
    %v3352 = vpop.f32.mrb[0].mxu0
    %v3353 = vadd.f32 0.0, %v3352
    %v3354 = vpop.f32.mrb[0].mxu0
    %v3355 = vadd.f32 0.0, %v3354
    %3356 = vmatprep.mubr.bf16.mxu0 %v580
    %3357 = vmatmul.mubr.bf16.gmra.mrb[0].mxu0 %v579
    %v3358 = vpop.f32.mrb[0].mxu0
    %v3359 = vadd.f32 0.0, %v3358
    %v3360 = vpop.f32.mrb[0].mxu0
    %v3361 = vadd.f32 0.0, %v3360
    %v3362 = vpop.f32.mrb[0].mxu0
    %v3363 = vadd.f32 0.0, %v3362
    %v3364 = vpop.f32.mrb[0].mxu0
    %v3365 = vadd.f32 0.0, %v3364
    %3366 = vmatprep.mubr.bf16.mxu0 %v583
    %3367 = vmatmul.mubr.bf16.gmra.mrb[0].mxu0 %v582
    %v3368 = vpop.f32.mrb[0].mxu0
    %v3369 = vadd.f32 0.0, %v3368
    %v3370 = vpop.f32.mrb[0].mxu0
    %v3371 = vadd.f32 0.0, %v3370
    %v3372 = vpop.f32.mrb[0].mxu0
    %v3373 = vadd.f32 0.0, %v3372
    %v3374 = vpop.f32.mrb[0].mxu0
    %v3375 = vadd.f32 0.0, %v3374
    %3376 = vmatprep.mubr.bf16.mxu0 %v586
    %3377 = vmatmul.mubr.bf16.gmra.mrb[0].mxu0 %v585
    %v3378 = vpop.f32.mrb[0].mxu0
    %v3379 = vadd.f32 0.0, %v3378
    %v3380 = vpop.f32.mrb[0].mxu0
    %v3381 = vadd.f32 0.0, %v3380
    %v3382 = vpop.f32.mrb[0].mxu0
    %v3383 = vadd.f32 0.0, %v3382
    %v3384 = vpop.f32.mrb[0].mxu0
    %v3385 = vadd.f32 0.0, %v3384
    %3386 = vmatprep.mubr.bf16.mxu0 %v589
    %3387 = vmatmul.mubr.bf16.gmra.mrb[0].mxu0 %v588
    %v3388 = vpop.f32.mrb[0].mxu0
    %v3389 = vadd.f32 0.0, %v3388
    %v3390 = vpop.f32.mrb[0].mxu0
    %v3391 = vadd.f32 0.0, %v3390
    %v3392 = vpop.f32.mrb[0].mxu0
    %v3393 = vadd.f32 0.0, %v3392
    %v3394 = vpop.f32.mrb[0].mxu0
    %v3395 = vadd.f32 0.0, %v3394
    %3396 = vmatprep.mubr.bf16.mxu0 %v592
    %3397 = vmatmul.mubr.bf16.gmra.mrb[0].mxu0 %v591
    %v3398 = vpop.f32.mrb[0].mxu0
    %v3399 = vadd.f32 0.0, %v3398
    %v3400 = vpop.f32.mrb[0].mxu0
    %v3401 = vadd.f32 0.0, %v3400
    %v3402 = vpop.f32.mrb[0].mxu0
    %v3403 = vadd.f32 0.0, %v3402
    %v3404 = vpop.f32.mrb[0].mxu0
    %v3405 = vadd.f32 0.0, %v3404
    %3406 = vmatprep.mubr.bf16.mxu0 %v595
    %3407 = vmatmul.mubr.bf16.gmra.mrb[0].mxu0 %v594
    %v3408 = vpop.f32.mrb[0].mxu0
    %v3409 = vadd.f32 0.0, %v3408
    %v3410 = vpop.f32.mrb[0].mxu0
    %v3411 = vadd.f32 0.0, %v3410
    %v3412 = vpop.f32.mrb[0].mxu0
    %v3413 = vadd.f32 0.0, %v3412
    %v3414 = vpop.f32.mrb[0].mxu0
    %v3415 = vadd.f32 0.0, %v3414
    %3416 = vmatprep.mubr.bf16.mxu0 %v598
    %3417 = vmatmul.mubr.bf16.gmra.mrb[0].mxu0 %v597
    %v3418 = vpop.f32.mrb[0].mxu0
    %v3419 = vadd.f32 0.0, %v3418
    %v3420 = vpop.f32.mrb[0].mxu0
    %v3421 = vadd.f32 0.0, %v3420
    %v3422 = vpop.f32.mrb[0].mxu0
    %v3423 = vadd.f32 0.0, %v3422
    %v3424 = vpop.f32.mrb[0].mxu0
    %v3425 = vadd.f32 0.0, %v3424
    %3426 = vmatprep.mubr.bf16.mxu0 %v601
    %3427 = vmatmul.mubr.bf16.gmra.mrb[0].mxu0 %v600
    %v3428 = vpop.f32.mrb[0].mxu0
    %v3429 = vadd.f32 0.0, %v3428
    %v3430 = vpop.f32.mrb[0].mxu0
    %v3431 = vadd.f32 0.0, %v3430
    %v3432 = vpop.f32.mrb[0].mxu0
    %v3433 = vadd.f32 0.0, %v3432
    %v3434 = vpop.f32.mrb[0].mxu0
    %v3435 = vadd.f32 0.0, %v3434
    %3436 = vmatprep.mubr.bf16.mxu0 %v604
    %3437 = vmatmul.mubr.bf16.gmra.mrb[0].mxu0 %v603
    %v3438 = vpop.f32.mrb[0].mxu0
    %v3439 = vadd.f32 0.0, %v3438
    %v3440 = vpop.f32.mrb[0].mxu0
    %v3441 = vadd.f32 0.0, %v3440
    %v3442 = vpop.f32.mrb[0].mxu0
    %v3443 = vadd.f32 0.0, %v3442
    %v3444 = vpop.f32.mrb[0].mxu0
    %v3445 = vadd.f32 0.0, %v3444
    %3446 = vmatprep.mubr.bf16.mxu0 %v607
    %3447 = vmatmul.mubr.bf16.gmra.mrb[0].mxu0 %v606
    %v3448 = vpop.f32.mrb[0].mxu0
    %v3449 = vadd.f32 0.0, %v3448
    %v3450 = vpop.f32.mrb[0].mxu0
    %v3451 = vadd.f32 0.0, %v3450
    %v3452 = vpop.f32.mrb[0].mxu0
    %v3453 = vadd.f32 0.0, %v3452
    %v3454 = vpop.f32.mrb[0].mxu0
    %v3455 = vadd.f32 0.0, %v3454
    %3456 = vmatprep.mubr.bf16.mxu0 %v610
    %3457 = vmatmul.mubr.bf16.gmra.mrb[0].mxu0 %v609
    %v3458 = vpop.f32.mrb[0].mxu0
    %v3459 = vadd.f32 0.0, %v3458
    %v3460 = vpop.f32.mrb[0].mxu0
    %v3461 = vadd.f32 0.0, %v3460
    %v3462 = vpop.f32.mrb[0].mxu0
    %v3463 = vadd.f32 0.0, %v3462
    %v3464 = vpop.f32.mrb[0].mxu0
    %v3465 = vadd.f32 0.0, %v3464
    %3466 = vdwg.mxu0
    %3467 = vmatprep.subr.bf16.mxu0 %v2549
    %3468 = vmatpush1.bf16.msra.mxu0 %v2548
    %3469 = vmatprep.subr.bf16.mxu0 0
    %3470 = vmatpush1.bf16.msra.mxu0 0
    %3471 = vmatprep.subr.bf16.mxu0 0
    %3472 = vmatpush1.bf16.msra.mxu0 0
    %3473 = vmatprep.subr.bf16.mxu0 0
    %3474 = vmatpush1.bf16.msra.mxu0 0
    %3475 = vmatprep.subr.bf16.mxu0 0
    %3476 = vmatpush1.bf16.msra.mxu0 0
    %3477 = vmatprep.subr.bf16.mxu0 0
    %3478 = vmatpush1.bf16.msra.mxu0 0
    %3479 = vmatprep.subr.bf16.mxu0 0
    %3480 = vmatpush1.bf16.msra.mxu0 0
    %3481 = vmatprep.subr.bf16.mxu0 0
    %3482 = vmatpush1.bf16.msra.mxu0 0
    %3483 = vmatprep.subr.bf16.mxu0 0
    %3484 = vmatpush1.bf16.msra.mxu0 0
    %3485 = vmatprep.subr.bf16.mxu0 0
    %3486 = vmatpush1.bf16.msra.mxu0 0
    %3487 = vmatprep.subr.bf16.mxu0 0
    %3488 = vmatpush1.bf16.msra.mxu0 0
    %3489 = vmatprep.subr.bf16.mxu0 0
    %3490 = vmatpush1.bf16.msra.mxu0 0
    %3491 = vmatprep.subr.bf16.mxu0 0
    %3492 = vmatpush1.bf16.msra.mxu0 0
    %3493 = vmatprep.subr.bf16.mxu0 0
    %3494 = vmatpush1.bf16.msra.mxu0 0
    %3495 = vmatprep.subr.bf16.mxu0 0
    %3496 = vmatpush1.bf16.msra.mxu0 0
    %3497 = vmatprep.subr.bf16.mxu0 0
    %3498 = vmatpush1.bf16.msra.mxu0 0
    %3499 = vmatprep.mubr.bf16.mxu0 0
    %3500 = vmatmul.mubr.bf16.gmra.mrb[0].mxu0 %v1004
    %v3501 = vpop.f32.mrb[0].mxu0
    %v3502 = vadd.f32 %v3219, %v3501
    %v3503 = vpop.f32.mrb[0].mxu0
    %v3504 = vadd.f32 %v3221, %v3503
    %v3505 = vpop.f32.mrb[0].mxu0
    %v3506 = vadd.f32 %v3223, %v3505
    %v3507 = vpop.f32.mrb[0].mxu0
    %v3508 = vadd.f32 %v3225, %v3507
    %3509 = vmatprep.mubr.bf16.mxu0 0
    %3510 = vmatmul.mubr.bf16.gmra.mrb[0].mxu0 %v1007
    %v3511 = vpop.f32.mrb[0].mxu0
    %v3512 = vadd.f32 %v3229, %v3511
    %v3513 = vpop.f32.mrb[0].mxu0
    %v3514 = vadd.f32 %v3231, %v3513
    %v3515 = vpop.f32.mrb[0].mxu0
    %v3516 = vadd.f32 %v3233, %v3515
    %v3517 = vpop.f32.mrb[0].mxu0
    %v3518 = vadd.f32 %v3235, %v3517
    %3519 = vmatprep.mubr.bf16.mxu0 0
    %3520 = vmatmul.mubr.bf16.gmra.mrb[0].mxu0 %v1010
    %v3521 = vpop.f32.mrb[0].mxu0
    %v3522 = vadd.f32 %v3239, %v3521
    %v3523 = vpop.f32.mrb[0].mxu0
    %v3524 = vadd.f32 %v3241, %v3523
    %v3525 = vpop.f32.mrb[0].mxu0
    %v3526 = vadd.f32 %v3243, %v3525
    %v3527 = vpop.f32.mrb[0].mxu0
    %v3528 = vadd.f32 %v3245, %v3527
    %3529 = vmatprep.mubr.bf16.mxu0 0
    %3530 = vmatmul.mubr.bf16.gmra.mrb[0].mxu0 %v1013
    %v3531 = vpop.f32.mrb[0].mxu0
    %v3532 = vadd.f32 %v3249, %v3531
    %v3533 = vpop.f32.mrb[0].mxu0
    %v3534 = vadd.f32 %v3251, %v3533
    %v3535 = vpop.f32.mrb[0].mxu0
    %v3536 = vadd.f32 %v3253, %v3535
    %v3537 = vpop.f32.mrb[0].mxu0
    %v3538 = vadd.f32 %v3255, %v3537
    %3539 = vmatprep.mubr.bf16.mxu0 0
    %3540 = vmatmul.mubr.bf16.gmra.mrb[0].mxu0 %v1016
    %v3541 = vpop.f32.mrb[0].mxu0
    %v3542 = vadd.f32 %v3259, %v3541
    %v3543 = vpop.f32.mrb[0].mxu0
    %v3544 = vadd.f32 %v3261, %v3543
    %v3545 = vpop.f32.mrb[0].mxu0
    %v3546 = vadd.f32 %v3263, %v3545
    %v3547 = vpop.f32.mrb[0].mxu0
    %v3548 = vadd.f32 %v3265, %v3547
    %3549 = vmatprep.mubr.bf16.mxu0 0
    %3550 = vmatmul.mubr.bf16.gmra.mrb[0].mxu0 %v1019
    %v3551 = vpop.f32.mrb[0].mxu0
    %v3552 = vadd.f32 %v3269, %v3551
    %v3553 = vpop.f32.mrb[0].mxu0
    %v3554 = vadd.f32 %v3271, %v3553
    %v3555 = vpop.f32.mrb[0].mxu0
    %v3556 = vadd.f32 %v3273, %v3555
    %v3557 = vpop.f32.mrb[0].mxu0
    %v3558 = vadd.f32 %v3275, %v3557
    %3559 = vmatprep.mubr.bf16.mxu0 0
    %3560 = vmatmul.mubr.bf16.gmra.mrb[0].mxu0 %v1022
    %v3561 = vpop.f32.mrb[0].mxu0
    %v3562 = vadd.f32 %v3279, %v3561
    %v3563 = vpop.f32.mrb[0].mxu0
    %v3564 = vadd.f32 %v3281, %v3563
    %v3565 = vpop.f32.mrb[0].mxu0
    %v3566 = vadd.f32 %v3283, %v3565
    %v3567 = vpop.f32.mrb[0].mxu0
    %v3568 = vadd.f32 %v3285, %v3567
    %3569 = vmatprep.mubr.bf16.mxu0 0
    %3570 = vmatmul.mubr.bf16.gmra.mrb[0].mxu0 %v1025
    %v3571 = vpop.f32.mrb[0].mxu0
    %v3572 = vadd.f32 %v3289, %v3571
    %v3573 = vpop.f32.mrb[0].mxu0
    %v3574 = vadd.f32 %v3291, %v3573
    %v3575 = vpop.f32.mrb[0].mxu0
    %v3576 = vadd.f32 %v3293, %v3575
    %v3577 = vpop.f32.mrb[0].mxu0
    %v3578 = vadd.f32 %v3295, %v3577
    %3579 = vmatprep.mubr.bf16.mxu0 0
    %3580 = vmatmul.mubr.bf16.gmra.mrb[0].mxu0 %v1028
    %v3581 = vpop.f32.mrb[0].mxu0
    %v3582 = vadd.f32 %v3299, %v3581
    %v3583 = vpop.f32.mrb[0].mxu0
    %v3584 = vadd.f32 %v3301, %v3583
    %v3585 = vpop.f32.mrb[0].mxu0
    %v3586 = vadd.f32 %v3303, %v3585
    %v3587 = vpop.f32.mrb[0].mxu0
    %v3588 = vadd.f32 %v3305, %v3587
    %3589 = vmatprep.mubr.bf16.mxu0 0
    %3590 = vmatmul.mubr.bf16.gmra.mrb[0].mxu0 %v1031
    %v3591 = vpop.f32.mrb[0].mxu0
    %v3592 = vadd.f32 %v3309, %v3591
    %v3593 = vpop.f32.mrb[0].mxu0
    %v3594 = vadd.f32 %v3311, %v3593
    %v3595 = vpop.f32.mrb[0].mxu0
    %v3596 = vadd.f32 %v3313, %v3595
    %v3597 = vpop.f32.mrb[0].mxu0
    %v3598 = vadd.f32 %v3315, %v3597
    %3599 = vmatprep.mubr.bf16.mxu0 0
    %3600 = vmatmul.mubr.bf16.gmra.mrb[0].mxu0 %v1034
    %v3601 = vpop.f32.mrb[0].mxu0
    %v3602 = vadd.f32 %v3319, %v3601
    %v3603 = vpop.f32.mrb[0].mxu0
    %v3604 = vadd.f32 %v3321, %v3603
    %v3605 = vpop.f32.mrb[0].mxu0
    %v3606 = vadd.f32 %v3323, %v3605
    %v3607 = vpop.f32.mrb[0].mxu0
    %v3608 = vadd.f32 %v3325, %v3607
    %3609 = vmatprep.mubr.bf16.mxu0 0
    %3610 = vmatmul.mubr.bf16.gmra.mrb[0].mxu0 %v1037
    %v3611 = vpop.f32.mrb[0].mxu0
    %v3612 = vadd.f32 %v3329, %v3611
    %v3613 = vpop.f32.mrb[0].mxu0
    %v3614 = vadd.f32 %v3331, %v3613
    %v3615 = vpop.f32.mrb[0].mxu0
    %v3616 = vadd.f32 %v3333, %v3615
    %v3617 = vpop.f32.mrb[0].mxu0
    %v3618 = vadd.f32 %v3335, %v3617
    %3619 = vmatprep.mubr.bf16.mxu0 0
    %3620 = vmatmul.mubr.bf16.gmra.mrb[0].mxu0 %v1040
    %v3621 = vpop.f32.mrb[0].mxu0
    %v3622 = vadd.f32 %v3339, %v3621
    %v3623 = vpop.f32.mrb[0].mxu0
    %v3624 = vadd.f32 %v3341, %v3623
    %v3625 = vpop.f32.mrb[0].mxu0
    %v3626 = vadd.f32 %v3343, %v3625
    %v3627 = vpop.f32.mrb[0].mxu0
    %v3628 = vadd.f32 %v3345, %v3627
    %3629 = vmatprep.mubr.bf16.mxu0 0
    %3630 = vmatmul.mubr.bf16.gmra.mrb[0].mxu0 %v1043
    %v3631 = vpop.f32.mrb[0].mxu0
    %v3632 = vadd.f32 %v3349, %v3631
    %v3633 = vpop.f32.mrb[0].mxu0
    %v3634 = vadd.f32 %v3351, %v3633
    %v3635 = vpop.f32.mrb[0].mxu0
    %v3636 = vadd.f32 %v3353, %v3635
    %v3637 = vpop.f32.mrb[0].mxu0
    %v3638 = vadd.f32 %v3355, %v3637
    %3639 = vmatprep.mubr.bf16.mxu0 0
    %3640 = vmatmul.mubr.bf16.gmra.mrb[0].mxu0 %v1046
    %v3641 = vpop.f32.mrb[0].mxu0
    %v3642 = vadd.f32 %v3359, %v3641
    %v3643 = vpop.f32.mrb[0].mxu0
    %v3644 = vadd.f32 %v3361, %v3643
    %v3645 = vpop.f32.mrb[0].mxu0
    %v3646 = vadd.f32 %v3363, %v3645
    %v3647 = vpop.f32.mrb[0].mxu0
    %v3648 = vadd.f32 %v3365, %v3647
    %3649 = vmatprep.mubr.bf16.mxu0 0
    %3650 = vmatmul.mubr.bf16.gmra.mrb[0].mxu0 %v1049
    %v3651 = vpop.f32.mrb[0].mxu0
    %v3652 = vadd.f32 %v3369, %v3651
    %v3653 = vpop.f32.mrb[0].mxu0
    %v3654 = vadd.f32 %v3371, %v3653
    %v3655 = vpop.f32.mrb[0].mxu0
    %v3656 = vadd.f32 %v3373, %v3655
    %v3657 = vpop.f32.mrb[0].mxu0
    %v3658 = vadd.f32 %v3375, %v3657
    %3659 = vmatprep.mubr.bf16.mxu0 0
    %3660 = vmatmul.mubr.bf16.gmra.mrb[0].mxu0 %v1052
    %v3661 = vpop.f32.mrb[0].mxu0
    %v3662 = vadd.f32 %v3379, %v3661
    %v3663 = vpop.f32.mrb[0].mxu0
    %v3664 = vadd.f32 %v3381, %v3663
    %v3665 = vpop.f32.mrb[0].mxu0
    %v3666 = vadd.f32 %v3383, %v3665
    %v3667 = vpop.f32.mrb[0].mxu0
    %v3668 = vadd.f32 %v3385, %v3667
    %3669 = vmatprep.mubr.bf16.mxu0 0
    %3670 = vmatmul.mubr.bf16.gmra.mrb[0].mxu0 %v1055
    %v3671 = vpop.f32.mrb[0].mxu0
    %v3672 = vadd.f32 %v3389, %v3671
    %v3673 = vpop.f32.mrb[0].mxu0
    %v3674 = vadd.f32 %v3391, %v3673
    %v3675 = vpop.f32.mrb[0].mxu0
    %v3676 = vadd.f32 %v3393, %v3675
    %v3677 = vpop.f32.mrb[0].mxu0
    %v3678 = vadd.f32 %v3395, %v3677
    %3679 = vmatprep.mubr.bf16.mxu0 0
    %3680 = vmatmul.mubr.bf16.gmra.mrb[0].mxu0 %v1058
    %v3681 = vpop.f32.mrb[0].mxu0
    %v3682 = vadd.f32 %v3399, %v3681
    %v3683 = vpop.f32.mrb[0].mxu0
    %v3684 = vadd.f32 %v3401, %v3683
    %v3685 = vpop.f32.mrb[0].mxu0
    %v3686 = vadd.f32 %v3403, %v3685
    %v3687 = vpop.f32.mrb[0].mxu0
    %v3688 = vadd.f32 %v3405, %v3687
    %3689 = vmatprep.mubr.bf16.mxu0 0
    %3690 = vmatmul.mubr.bf16.gmra.mrb[0].mxu0 %v1061
    %v3691 = vpop.f32.mrb[0].mxu0
    %v3692 = vadd.f32 %v3409, %v3691
    %v3693 = vpop.f32.mrb[0].mxu0
    %v3694 = vadd.f32 %v3411, %v3693
    %v3695 = vpop.f32.mrb[0].mxu0
    %v3696 = vadd.f32 %v3413, %v3695
    %v3697 = vpop.f32.mrb[0].mxu0
    %v3698 = vadd.f32 %v3415, %v3697
    %3699 = vmatprep.mubr.bf16.mxu0 0
    %3700 = vmatmul.mubr.bf16.gmra.mrb[0].mxu0 %v1064
    %v3701 = vpop.f32.mrb[0].mxu0
    %v3702 = vadd.f32 %v3419, %v3701
    %v3703 = vpop.f32.mrb[0].mxu0
    %v3704 = vadd.f32 %v3421, %v3703
    %v3705 = vpop.f32.mrb[0].mxu0
    %v3706 = vadd.f32 %v3423, %v3705
    %v3707 = vpop.f32.mrb[0].mxu0
    %v3708 = vadd.f32 %v3425, %v3707
    %3709 = vmatprep.mubr.bf16.mxu0 0
    %3710 = vmatmul.mubr.bf16.gmra.mrb[0].mxu0 %v1067
    %v3711 = vpop.f32.mrb[0].mxu0
    %v3712 = vadd.f32 %v3429, %v3711
    %v3713 = vpop.f32.mrb[0].mxu0
    %v3714 = vadd.f32 %v3431, %v3713
    %v3715 = vpop.f32.mrb[0].mxu0
    %v3716 = vadd.f32 %v3433, %v3715
    %v3717 = vpop.f32.mrb[0].mxu0
    %v3718 = vadd.f32 %v3435, %v3717
    %3719 = vmatprep.mubr.bf16.mxu0 0
    %3720 = vmatmul.mubr.bf16.gmra.mrb[0].mxu0 %v1070
    %v3721 = vpop.f32.mrb[0].mxu0
    %v3722 = vadd.f32 %v3439, %v3721
    %v3723 = vpop.f32.mrb[0].mxu0
    %v3724 = vadd.f32 %v3441, %v3723
    %v3725 = vpop.f32.mrb[0].mxu0
    %v3726 = vadd.f32 %v3443, %v3725
    %v3727 = vpop.f32.mrb[0].mxu0
    %v3728 = vadd.f32 %v3445, %v3727
    %3729 = vmatprep.mubr.bf16.mxu0 0
    %3730 = vmatmul.mubr.bf16.gmra.mrb[0].mxu0 %v1073
    %v3731 = vpop.f32.mrb[0].mxu0
    %v3732 = vadd.f32 %v3449, %v3731
    %v3733 = vpop.f32.mrb[0].mxu0
    %v3734 = vadd.f32 %v3451, %v3733
    %v3735 = vpop.f32.mrb[0].mxu0
    %v3736 = vadd.f32 %v3453, %v3735
    %v3737 = vpop.f32.mrb[0].mxu0
    %v3738 = vadd.f32 %v3455, %v3737
    %3739 = vmatprep.mubr.bf16.mxu0 0
    %3740 = vmatmul.mubr.bf16.gmra.mrb[0].mxu0 %v1076
    %v3741 = vpop.f32.mrb[0].mxu0
    %v3742 = vadd.f32 %v3459, %v3741
    %v3743 = vpop.f32.mrb[0].mxu0
    %v3744 = vadd.f32 %v3461, %v3743
    %v3745 = vpop.f32.mrb[0].mxu0
    %v3746 = vadd.f32 %v3463, %v3745
    %v3747 = vpop.f32.mrb[0].mxu0
    %v3748 = vadd.f32 %v3465, %v3747
    %3749 = vdwg.mxu0
    %v3750 = vrot.slane %v1396, 1
    %v3751 = vrot.slane %v1398, 1
    %v3752 = vrot.slane %v1962, 1
    %v3753 = vrot.slane %v1964, 1
    %v3754 = vrot.slane %v1400, 1
    %v3755 = vrot.slane %v1402, 1
    %v3756 = vrot.slane %v1966, 1
    %v3757 = vrot.slane %v1968, 1
    %v3758 = vrot.slane %v1406, 1
    %v3759 = vrot.slane %v1408, 1
    %v3760 = vrot.slane %v1972, 1
    %v3761 = vrot.slane %v1974, 1
    %v3762 = vrot.slane %v1410, 1
    %v3763 = vrot.slane %v1412, 1
    %v3764 = vrot.slane %v1976, 1
    %v3765 = vrot.slane %v1978, 1
    %v3766 = vrot.slane %v1416, 1
    %v3767 = vrot.slane %v1418, 1
    %v3768 = vrot.slane %v1982, 1
    %v3769 = vrot.slane %v1984, 1
    %v3770 = vrot.slane %v1420, 1
    %v3771 = vrot.slane %v1422, 1
    %v3772 = vrot.slane %v1986, 1
    %v3773 = vrot.slane %v1988, 1
    %v3774 = vrot.slane %v1426, 1
    %v3775 = vrot.slane %v1428, 1
    %v3776 = vrot.slane %v1992, 1
    %v3777 = vrot.slane %v1994, 1
    %v3778 = vrot.slane %v1430, 1
    %v3779 = vrot.slane %v1432, 1
    %v3780 = vrot.slane %v1996, 1
    %v3781 = vrot.slane %v1998, 1
    %v3782 = vrot.slane %v1436, 1
    %v3783 = vrot.slane %v1438, 1
    %v3784 = vrot.slane %v2002, 1
    %v3785 = vrot.slane %v2004, 1
    %v3786 = vrot.slane %v1440, 1
    %v3787 = vrot.slane %v1442, 1
    %v3788 = vrot.slane %v2006, 1
    %v3789 = vrot.slane %v2008, 1
    %v3790 = vrot.slane %v1446, 1
    %v3791 = vrot.slane %v1448, 1
    %v3792 = vrot.slane %v2012, 1
    %v3793 = vrot.slane %v2014, 1
    %v3794 = vrot.slane %v1450, 1
    %v3795 = vrot.slane %v1452, 1
    %v3796 = vrot.slane %v2016, 1
    %v3797 = vrot.slane %v2018, 1
    %v3798 = vrot.slane %v1456, 1
    %v3799 = vrot.slane %v1458, 1
    %v3800 = vrot.slane %v2022, 1
    %v3801 = vrot.slane %v2024, 1
    %v3802 = vrot.slane %v1460, 1
    %v3803 = vrot.slane %v1462, 1
    %v3804 = vrot.slane %v2026, 1
    %v3805 = vrot.slane %v2028, 1
    %v3806 = vrot.slane %v1466, 1
    %v3807 = vrot.slane %v1468, 1
    %v3808 = vrot.slane %v2032, 1
    %v3809 = vrot.slane %v2034, 1
    %v3810 = vrot.slane %v1470, 1
    %v3811 = vrot.slane %v1472, 1
    %v3812 = vrot.slane %v2036, 1
    %v3813 = vrot.slane %v2038, 1
    %v3814 = vrot.slane %v1476, 1
    %v3815 = vrot.slane %v1478, 1
    %v3816 = vrot.slane %v2042, 1
    %v3817 = vrot.slane %v2044, 1
    %v3818 = vrot.slane %v1480, 1
    %v3819 = vrot.slane %v1482, 1
    %v3820 = vrot.slane %v2046, 1
    %v3821 = vrot.slane %v2048, 1
    %v3822 = vrot.slane %v1486, 1
    %v3823 = vrot.slane %v1488, 1
    %v3824 = vrot.slane %v2052, 1
    %v3825 = vrot.slane %v2054, 1
    %v3826 = vrot.slane %v1490, 1
    %v3827 = vrot.slane %v1492, 1
    %v3828 = vrot.slane %v2056, 1
    %v3829 = vrot.slane %v2058, 1
    %v3830 = vrot.slane %v1496, 1
    %v3831 = vrot.slane %v1498, 1
    %v3832 = vrot.slane %v2062, 1
    %v3833 = vrot.slane %v2064, 1
    %v3834 = vrot.slane %v1500, 1
    %v3835 = vrot.slane %v1502, 1
    %v3836 = vrot.slane %v2066, 1
    %v3837 = vrot.slane %v2068, 1
    %v3838 = vrot.slane %v1506, 1
    %v3839 = vrot.slane %v1508, 1
    %v3840 = vrot.slane %v2072, 1
    %v3841 = vrot.slane %v2074, 1
    %v3842 = vrot.slane %v1510, 1
    %v3843 = vrot.slane %v1512, 1
    %v3844 = vrot.slane %v2076, 1
    %v3845 = vrot.slane %v2078, 1
    %v3846 = vrot.slane %v1516, 1
    %v3847 = vrot.slane %v1518, 1
    %v3848 = vrot.slane %v2082, 1
    %v3849 = vrot.slane %v2084, 1
    %v3850 = vrot.slane %v1520, 1
    %v3851 = vrot.slane %v1522, 1
    %v3852 = vrot.slane %v2086, 1
    %v3853 = vrot.slane %v2088, 1
    %v3854 = vrot.slane %v1526, 1
    %v3855 = vrot.slane %v1528, 1
    %v3856 = vrot.slane %v2092, 1
    %v3857 = vrot.slane %v2094, 1
    %v3858 = vrot.slane %v1530, 1
    %v3859 = vrot.slane %v1532, 1
    %v3860 = vrot.slane %v2096, 1
    %v3861 = vrot.slane %v2098, 1
    %v3862 = vrot.slane %v1536, 1
    %v3863 = vrot.slane %v1538, 1
    %v3864 = vrot.slane %v2102, 1
    %v3865 = vrot.slane %v2104, 1
    %v3866 = vrot.slane %v1540, 1
    %v3867 = vrot.slane %v1542, 1
    %v3868 = vrot.slane %v2106, 1
    %v3869 = vrot.slane %v2108, 1
    %v3870 = vrot.slane %v1546, 1
    %v3871 = vrot.slane %v1548, 1
    %v3872 = vrot.slane %v2112, 1
    %v3873 = vrot.slane %v2114, 1
    %v3874 = vrot.slane %v1550, 1
    %v3875 = vrot.slane %v1552, 1
    %v3876 = vrot.slane %v2116, 1
    %v3877 = vrot.slane %v2118, 1
    %v3878 = vrot.slane %v1556, 1
    %v3879 = vrot.slane %v1558, 1
    %v3880 = vrot.slane %v2122, 1
    %v3881 = vrot.slane %v2124, 1
    %v3882 = vrot.slane %v1560, 1
    %v3883 = vrot.slane %v1562, 1
    %v3884 = vrot.slane %v2126, 1
    %v3885 = vrot.slane %v2128, 1
    %v3886 = vrot.slane %v1566, 1
    %v3887 = vrot.slane %v1568, 1
    %v3888 = vrot.slane %v2132, 1
    %v3889 = vrot.slane %v2134, 1
    %v3890 = vrot.slane %v1570, 1
    %v3891 = vrot.slane %v1572, 1
    %v3892 = vrot.slane %v2136, 1
    %v3893 = vrot.slane %v2138, 1
    %v3894 = vrot.slane %v1576, 1
    %v3895 = vrot.slane %v1578, 1
    %v3896 = vrot.slane %v2142, 1
    %v3897 = vrot.slane %v2144, 1
    %v3898 = vrot.slane %v1580, 1
    %v3899 = vrot.slane %v1582, 1
    %v3900 = vrot.slane %v2146, 1
    %v3901 = vrot.slane %v2148, 1
    %v3902 = vrot.slane %v1586, 1
    %v3903 = vrot.slane %v1588, 1
    %v3904 = vrot.slane %v2152, 1
    %v3905 = vrot.slane %v2154, 1
    %v3906 = vrot.slane %v1590, 1
    %v3907 = vrot.slane %v1592, 1
    %v3908 = vrot.slane %v2156, 1
    %v3909 = vrot.slane %v2158, 1
    %v3910 = vrot.slane %v1596, 1
    %v3911 = vrot.slane %v1598, 1
    %v3912 = vrot.slane %v2162, 1
    %v3913 = vrot.slane %v2164, 1
    %v3914 = vrot.slane %v1600, 1
    %v3915 = vrot.slane %v1602, 1
    %v3916 = vrot.slane %v2166, 1
    %v3917 = vrot.slane %v2168, 1
    %v3918 = vrot.slane %v1606, 1
    %v3919 = vrot.slane %v1608, 1
    %v3920 = vrot.slane %v2172, 1
    %v3921 = vrot.slane %v2174, 1
    %v3922 = vrot.slane %v1610, 1
    %v3923 = vrot.slane %v1612, 1
    %v3924 = vrot.slane %v2176, 1
    %v3925 = vrot.slane %v2178, 1
    %v3926 = vrot.slane %v1616, 1
    %v3927 = vrot.slane %v1618, 1
    %v3928 = vrot.slane %v2182, 1
    %v3929 = vrot.slane %v2184, 1
    %v3930 = vrot.slane %v1620, 1
    %v3931 = vrot.slane %v1622, 1
    %v3932 = vrot.slane %v2186, 1
    %v3933 = vrot.slane %v2188, 1
    %v3934 = vrot.slane %v1626, 1
    %v3935 = vrot.slane %v1628, 1
    %v3936 = vrot.slane %v2192, 1
    %v3937 = vrot.slane %v2194, 1
    %v3938 = vrot.slane %v1630, 1
    %v3939 = vrot.slane %v1632, 1
    %v3940 = vrot.slane %v2196, 1
    %v3941 = vrot.slane %v2198, 1
    %v3942 = vrot.slane %v1636, 1
    %v3943 = vrot.slane %v1638, 1
    %v3944 = vrot.slane %v2202, 1
    %v3945 = vrot.slane %v2204, 1
    %v3946 = vrot.slane %v1640, 1
    %v3947 = vrot.slane %v1642, 1
    %v3948 = vrot.slane %v2206, 1
    %v3949 = vrot.slane %v2208, 1
    %v3950 = vlaneseq
    %v3951 = vshrl.u32 %v3950, 7
    %vm3952 = vcmp.lt.s32.totalorder %v3951, 7
    %v3953 = vsel %vm3952, %v3942, %v3946
    %v3954 = vsel %vm3952, %v3943, %v3947
    %v3955 = vsel %vm3952, %v3944, %v3948
    %v3956 = vsel %vm3952, %v3945, %v3949
    %v3957 = vsel %vm3952, %v3938, %v3942
    %v3958 = vsel %vm3952, %v3939, %v3943
    %v3959 = vsel %vm3952, %v3940, %v3944
    %v3960 = vsel %vm3952, %v3941, %v3945
    %v3961 = vsel %vm3952, %v3934, %v3938
    %v3962 = vsel %vm3952, %v3935, %v3939
    %v3963 = vsel %vm3952, %v3936, %v3940
    %v3964 = vsel %vm3952, %v3937, %v3941
    %v3965 = vsel %vm3952, %v3930, %v3934
    %v3966 = vsel %vm3952, %v3931, %v3935
    %v3967 = vsel %vm3952, %v3932, %v3936
    %v3968 = vsel %vm3952, %v3933, %v3937
    %v3969 = vsel %vm3952, %v3926, %v3930
    %v3970 = vsel %vm3952, %v3927, %v3931
    %v3971 = vsel %vm3952, %v3928, %v3932
    %v3972 = vsel %vm3952, %v3929, %v3933
    %v3973 = vsel %vm3952, %v3922, %v3926
    %v3974 = vsel %vm3952, %v3923, %v3927
    %v3975 = vsel %vm3952, %v3924, %v3928
    %v3976 = vsel %vm3952, %v3925, %v3929
    %v3977 = vsel %vm3952, %v3918, %v3922
    %v3978 = vsel %vm3952, %v3919, %v3923
    %v3979 = vsel %vm3952, %v3920, %v3924
    %v3980 = vsel %vm3952, %v3921, %v3925
    %v3981 = vsel %vm3952, %v3914, %v3918
    %v3982 = vsel %vm3952, %v3915, %v3919
    %v3983 = vsel %vm3952, %v3916, %v3920
    %v3984 = vsel %vm3952, %v3917, %v3921
    %v3985 = vsel %vm3952, %v3910, %v3914
    %v3986 = vsel %vm3952, %v3911, %v3915
    %v3987 = vsel %vm3952, %v3912, %v3916
    %v3988 = vsel %vm3952, %v3913, %v3917
    %v3989 = vsel %vm3952, %v3906, %v3910
    %v3990 = vsel %vm3952, %v3907, %v3911
    %v3991 = vsel %vm3952, %v3908, %v3912
    %v3992 = vsel %vm3952, %v3909, %v3913
    %v3993 = vsel %vm3952, %v3902, %v3906
    %v3994 = vsel %vm3952, %v3903, %v3907
    %v3995 = vsel %vm3952, %v3904, %v3908
    %v3996 = vsel %vm3952, %v3905, %v3909
    %v3997 = vsel %vm3952, %v3898, %v3902
    %v3998 = vsel %vm3952, %v3899, %v3903
    %v3999 = vsel %vm3952, %v3900, %v3904
    %v4000 = vsel %vm3952, %v3901, %v3905
    %v4001 = vsel %vm3952, %v3894, %v3898
    %v4002 = vsel %vm3952, %v3895, %v3899
    %v4003 = vsel %vm3952, %v3896, %v3900
    %v4004 = vsel %vm3952, %v3897, %v3901
    %v4005 = vsel %vm3952, %v3890, %v3894
    %v4006 = vsel %vm3952, %v3891, %v3895
    %v4007 = vsel %vm3952, %v3892, %v3896
    %v4008 = vsel %vm3952, %v3893, %v3897
    %v4009 = vsel %vm3952, %v3886, %v3890
    %v4010 = vsel %vm3952, %v3887, %v3891
    %v4011 = vsel %vm3952, %v3888, %v3892
    %v4012 = vsel %vm3952, %v3889, %v3893
    %v4013 = vsel %vm3952, %v3882, %v3886
    %v4014 = vsel %vm3952, %v3883, %v3887
    %v4015 = vsel %vm3952, %v3884, %v3888
    %v4016 = vsel %vm3952, %v3885, %v3889
    %v4017 = vsel %vm3952, %v3878, %v3882
    %v4018 = vsel %vm3952, %v3879, %v3883
    %v4019 = vsel %vm3952, %v3880, %v3884
    %v4020 = vsel %vm3952, %v3881, %v3885
    %v4021 = vsel %vm3952, %v3874, %v3878
    %v4022 = vsel %vm3952, %v3875, %v3879
    %v4023 = vsel %vm3952, %v3876, %v3880
    %v4024 = vsel %vm3952, %v3877, %v3881
    %v4025 = vsel %vm3952, %v3870, %v3874
    %v4026 = vsel %vm3952, %v3871, %v3875
    %v4027 = vsel %vm3952, %v3872, %v3876
    %v4028 = vsel %vm3952, %v3873, %v3877
    %v4029 = vsel %vm3952, %v3866, %v3870
    %v4030 = vsel %vm3952, %v3867, %v3871
    %v4031 = vsel %vm3952, %v3868, %v3872
    %v4032 = vsel %vm3952, %v3869, %v3873
    %v4033 = vsel %vm3952, %v3862, %v3866
    %v4034 = vsel %vm3952, %v3863, %v3867
    %v4035 = vsel %vm3952, %v3864, %v3868
    %v4036 = vsel %vm3952, %v3865, %v3869
    %v4037 = vsel %vm3952, %v3858, %v3862
    %v4038 = vsel %vm3952, %v3859, %v3863
    %v4039 = vsel %vm3952, %v3860, %v3864
    %v4040 = vsel %vm3952, %v3861, %v3865
    %v4041 = vsel %vm3952, %v3854, %v3858
    %v4042 = vsel %vm3952, %v3855, %v3859
    %v4043 = vsel %vm3952, %v3856, %v3860
    %v4044 = vsel %vm3952, %v3857, %v3861
    %v4045 = vsel %vm3952, %v3850, %v3854
    %v4046 = vsel %vm3952, %v3851, %v3855
    %v4047 = vsel %vm3952, %v3852, %v3856
    %v4048 = vsel %vm3952, %v3853, %v3857
    %v4049 = vsel %vm3952, %v3846, %v3850
    %v4050 = vsel %vm3952, %v3847, %v3851
    %v4051 = vsel %vm3952, %v3848, %v3852
    %v4052 = vsel %vm3952, %v3849, %v3853
    %v4053 = vsel %vm3952, %v3842, %v3846
    %v4054 = vsel %vm3952, %v3843, %v3847
    %v4055 = vsel %vm3952, %v3844, %v3848
    %v4056 = vsel %vm3952, %v3845, %v3849
    %v4057 = vsel %vm3952, %v3838, %v3842
    %v4058 = vsel %vm3952, %v3839, %v3843
    %v4059 = vsel %vm3952, %v3840, %v3844
    %v4060 = vsel %vm3952, %v3841, %v3845
    %v4061 = vsel %vm3952, %v3834, %v3838
    %v4062 = vsel %vm3952, %v3835, %v3839
    %v4063 = vsel %vm3952, %v3836, %v3840
    %v4064 = vsel %vm3952, %v3837, %v3841
    %v4065 = vsel %vm3952, %v3830, %v3834
    %v4066 = vsel %vm3952, %v3831, %v3835
    %v4067 = vsel %vm3952, %v3832, %v3836
    %v4068 = vsel %vm3952, %v3833, %v3837
    %v4069 = vsel %vm3952, %v3826, %v3830
    %v4070 = vsel %vm3952, %v3827, %v3831
    %v4071 = vsel %vm3952, %v3828, %v3832
    %v4072 = vsel %vm3952, %v3829, %v3833
    %v4073 = vsel %vm3952, %v3822, %v3826
    %v4074 = vsel %vm3952, %v3823, %v3827
    %v4075 = vsel %vm3952, %v3824, %v3828
    %v4076 = vsel %vm3952, %v3825, %v3829
    %v4077 = vsel %vm3952, %v3818, %v3822
    %v4078 = vsel %vm3952, %v3819, %v3823
    %v4079 = vsel %vm3952, %v3820, %v3824
    %v4080 = vsel %vm3952, %v3821, %v3825
    %v4081 = vsel %vm3952, %v3814, %v3818
    %v4082 = vsel %vm3952, %v3815, %v3819
    %v4083 = vsel %vm3952, %v3816, %v3820
    %v4084 = vsel %vm3952, %v3817, %v3821
    %v4085 = vsel %vm3952, %v3810, %v3814
    %v4086 = vsel %vm3952, %v3811, %v3815
    %v4087 = vsel %vm3952, %v3812, %v3816
    %v4088 = vsel %vm3952, %v3813, %v3817
    %v4089 = vsel %vm3952, %v3806, %v3810
    %v4090 = vsel %vm3952, %v3807, %v3811
    %v4091 = vsel %vm3952, %v3808, %v3812
    %v4092 = vsel %vm3952, %v3809, %v3813
    %v4093 = vsel %vm3952, %v3802, %v3806
    %v4094 = vsel %vm3952, %v3803, %v3807
    %v4095 = vsel %vm3952, %v3804, %v3808
    %v4096 = vsel %vm3952, %v3805, %v3809
    %v4097 = vsel %vm3952, %v3798, %v3802
    %v4098 = vsel %vm3952, %v3799, %v3803
    %v4099 = vsel %vm3952, %v3800, %v3804
    %v4100 = vsel %vm3952, %v3801, %v3805
    %v4101 = vsel %vm3952, %v3794, %v3798
    %v4102 = vsel %vm3952, %v3795, %v3799
    %v4103 = vsel %vm3952, %v3796, %v3800
    %v4104 = vsel %vm3952, %v3797, %v3801
    %v4105 = vsel %vm3952, %v3790, %v3794
    %v4106 = vsel %vm3952, %v3791, %v3795
    %v4107 = vsel %vm3952, %v3792, %v3796
    %v4108 = vsel %vm3952, %v3793, %v3797
    %v4109 = vsel %vm3952, %v3786, %v3790
    %v4110 = vsel %vm3952, %v3787, %v3791
    %v4111 = vsel %vm3952, %v3788, %v3792
    %v4112 = vsel %vm3952, %v3789, %v3793
    %v4113 = vsel %vm3952, %v3782, %v3786
    %v4114 = vsel %vm3952, %v3783, %v3787
    %v4115 = vsel %vm3952, %v3784, %v3788
    %v4116 = vsel %vm3952, %v3785, %v3789
    %v4117 = vsel %vm3952, %v3778, %v3782
    %v4118 = vsel %vm3952, %v3779, %v3783
    %v4119 = vsel %vm3952, %v3780, %v3784
    %v4120 = vsel %vm3952, %v3781, %v3785
    %v4121 = vsel %vm3952, %v3774, %v3778
    %v4122 = vsel %vm3952, %v3775, %v3779
    %v4123 = vsel %vm3952, %v3776, %v3780
    %v4124 = vsel %vm3952, %v3777, %v3781
    %v4125 = vsel %vm3952, %v3770, %v3774
    %v4126 = vsel %vm3952, %v3771, %v3775
    %v4127 = vsel %vm3952, %v3772, %v3776
    %v4128 = vsel %vm3952, %v3773, %v3777
    %v4129 = vsel %vm3952, %v3766, %v3770
    %v4130 = vsel %vm3952, %v3767, %v3771
    %v4131 = vsel %vm3952, %v3768, %v3772
    %v4132 = vsel %vm3952, %v3769, %v3773
    %v4133 = vsel %vm3952, %v3762, %v3766
    %v4134 = vsel %vm3952, %v3763, %v3767
    %v4135 = vsel %vm3952, %v3764, %v3768
    %v4136 = vsel %vm3952, %v3765, %v3769
    %v4137 = vsel %vm3952, %v3758, %v3762
    %v4138 = vsel %vm3952, %v3759, %v3763
    %v4139 = vsel %vm3952, %v3760, %v3764
    %v4140 = vsel %vm3952, %v3761, %v3765
    %v4141 = vsel %vm3952, %v3754, %v3758
    %v4142 = vsel %vm3952, %v3755, %v3759
    %v4143 = vsel %vm3952, %v3756, %v3760
    %v4144 = vsel %vm3952, %v3757, %v3761
    %v4145 = vsel %vm3952, %v3750, %v3754
    %v4146 = vsel %vm3952, %v3751, %v3755
    %v4147 = vsel %vm3952, %v3752, %v3756
    %v4148 = vsel %vm3952, %v3753, %v3757
    %v4149 = vsel %vm3952, %v3946, %v3750
    %v4150 = vsel %vm3952, %v3947, %v3751
    %v4151 = vsel %vm3952, %v3948, %v3752
    %v4152 = vsel %vm3952, %v3949, %v3753
    %v4221 = vunpack.c.l.b16 %v151
    %v4222 = vunpack.c.h.b16 %v151
    %v4223 = vunpack.c.l.b16 %v152
    %v4224 = vunpack.c.h.b16 %v152
    %v4225 = vunpack.c.l.b16 %v153
    %v4226 = vunpack.c.h.b16 %v153
    %v4227 = vunpack.c.l.b16 %v154
    %v4228 = vunpack.c.h.b16 %v154
    %v4229 = vunpack.c.l.b16 %v155
    %v4230 = vunpack.c.h.b16 %v155
    %v4231 = vunpack.c.l.b16 %v156
    %v4232 = vunpack.c.h.b16 %v156
    %v4233 = vunpack.c.l.b16 %v157
    %v4234 = vunpack.c.h.b16 %v157
    %v4235 = vunpack.c.l.b16 %v158
    %v4236 = vunpack.c.h.b16 %v158
    %v4237 = vunpack.c.l.b16 %v159
    %v4238 = vunpack.c.h.b16 %v159
    %v4239 = vunpack.c.l.b16 %v160
    %v4240 = vunpack.c.h.b16 %v160
    %v4241 = vunpack.c.l.b16 %v161
    %v4242 = vunpack.c.h.b16 %v161
    %v4243 = vunpack.c.l.b16 %v162
    %v4244 = vunpack.c.h.b16 %v162
    %v4245 = vunpack.c.l.b16 %v163
    %v4246 = vunpack.c.h.b16 %v163
    %v4247 = vunpack.c.l.b16 %v164
    %v4248 = vunpack.c.h.b16 %v164
    %v4249 = vunpack.c.l.b16 %v165
    %v4250 = vunpack.c.h.b16 %v165
    %v4251 = vunpack.c.l.b16 %v166
    %v4252 = vunpack.c.h.b16 %v166
    %v4253 = vunpack.c.l.b16 %v167
    %v4254 = vunpack.c.h.b16 %v167
    %v4255 = vunpack.c.l.b16 %v168
    %v4256 = vunpack.c.h.b16 %v168
    %v4257 = vunpack.c.l.b16 %v169
    %v4258 = vunpack.c.h.b16 %v169
    %v4259 = vunpack.c.l.b16 %v170
    %v4260 = vunpack.c.h.b16 %v170
    %v4261 = vunpack.c.l.b16 %v171
    %v4262 = vunpack.c.h.b16 %v171
    %v4263 = vunpack.c.l.b16 %v172
    %v4264 = vunpack.c.h.b16 %v172
    %v4265 = vunpack.c.l.b16 %v173
    %v4266 = vunpack.c.h.b16 %v173
    %v4267 = vunpack.c.l.b16 %v174
    %v4268 = vunpack.c.h.b16 %v174
    %v4269 = vunpack.c.l.b16 %v175
    %v4270 = vunpack.c.h.b16 %v175
    %v4271 = vunpack.c.l.b16 %v176
    %v4272 = vunpack.c.h.b16 %v176
    %v4273 = vunpack.c.l.b16 %v177
    %v4274 = vunpack.c.h.b16 %v177
    %v4275 = vunpack.c.l.b16 %v178
    %v4276 = vunpack.c.h.b16 %v178
    %v4277 = vunpack.c.l.b16 %v179
    %v4278 = vunpack.c.h.b16 %v179
    %v4279 = vunpack.c.l.b16 %v180
    %v4280 = vunpack.c.h.b16 %v180
    %v4281 = vunpack.c.l.b16 %v181
    %v4282 = vunpack.c.h.b16 %v181
    %v4283 = vunpack.c.l.b16 %v182
    %v4284 = vunpack.c.h.b16 %v182
    %v4285 = vunpack.c.l.b16 %v183
    %v4286 = vunpack.c.h.b16 %v183
    %v4287 = vunpack.c.l.b16 %v184
    %v4288 = vunpack.c.h.b16 %v184
    %v4289 = vunpack.c.l.b16 %v185
    %v4290 = vunpack.c.h.b16 %v185
    %v4291 = vunpack.c.l.b16 %v186
    %v4292 = vunpack.c.h.b16 %v186
    %v4293 = vunpack.c.l.b16 %v187
    %v4294 = vunpack.c.h.b16 %v187
    %v4295 = vunpack.c.l.b16 %v188
    %v4296 = vunpack.c.h.b16 %v188
    %v4297 = vunpack.c.l.b16 %v189
    %v4298 = vunpack.c.h.b16 %v189
    %v4299 = vunpack.c.l.b16 %v190
    %v4300 = vunpack.c.h.b16 %v190
    %v4301 = vunpack.c.l.b16 %v191
    %v4302 = vunpack.c.h.b16 %v191
    %v4303 = vunpack.c.l.b16 %v192
    %v4304 = vunpack.c.h.b16 %v192
    %v4305 = vunpack.c.l.b16 %v193
    %v4306 = vunpack.c.h.b16 %v193
    %v4307 = vunpack.c.l.b16 %v194
    %v4308 = vunpack.c.h.b16 %v194
    %v4309 = vunpack.c.l.b16 %v195
    %v4310 = vunpack.c.h.b16 %v195
    %v4311 = vunpack.c.l.b16 %v196
    %v4312 = vunpack.c.h.b16 %v196
    %v4313 = vunpack.c.l.b16 %v197
    %v4314 = vunpack.c.h.b16 %v197
    %v4315 = vunpack.c.l.b16 %v198
    %v4316 = vunpack.c.h.b16 %v198
    %v4317 = vunpack.c.l.b16 %v199
    %v4318 = vunpack.c.h.b16 %v199
    %v4319 = vunpack.c.l.b16 %v200
    %v4320 = vunpack.c.h.b16 %v200
    %v4321 = vunpack.c.l.b16 %v201
    %v4322 = vunpack.c.h.b16 %v201
    %v4323 = vunpack.c.l.b16 %v202
    %v4324 = vunpack.c.h.b16 %v202
    %v4325 = vunpack.c.l.b16 %v203
    %v4326 = vunpack.c.h.b16 %v203
    %v4327 = vunpack.c.l.b16 %v204
    %v4328 = vunpack.c.h.b16 %v204
    %v4329 = vunpack.c.l.b16 %v205
    %v4330 = vunpack.c.h.b16 %v205
    %v4331 = vunpack.c.l.b16 %v206
    %v4332 = vunpack.c.h.b16 %v206
    %v4333 = vunpack.c.l.b16 %v207
    %v4334 = vunpack.c.h.b16 %v207
    %v4335 = vunpack.c.l.b16 %v208
    %v4336 = vunpack.c.h.b16 %v208
    %v4337 = vunpack.c.l.b16 %v209
    %v4338 = vunpack.c.h.b16 %v209
    %v4339 = vunpack.c.l.b16 %v210
    %v4340 = vunpack.c.h.b16 %v210
    %v4341 = vunpack.c.l.b16 %v211
    %v4342 = vunpack.c.h.b16 %v211
    %v4343 = vunpack.c.l.b16 %v212
    %v4344 = vunpack.c.h.b16 %v212
    %v4345 = vunpack.c.l.b16 %v213
    %v4346 = vunpack.c.h.b16 %v213
    %v4347 = vunpack.c.l.b16 %v214
    %v4348 = vunpack.c.h.b16 %v214
    %v4349 = vunpack.c.l.b16 %v215
    %v4350 = vunpack.c.h.b16 %v215
    %v4351 = vunpack.c.l.b16 %v216
    %v4352 = vunpack.c.h.b16 %v216
    %v4353 = vunpack.c.l.b16 %v217
    %v4354 = vunpack.c.h.b16 %v217
    %v4355 = vunpack.c.l.b16 %v218
    %v4356 = vunpack.c.h.b16 %v218
    %v4357 = vpack.c.b16 %v4225, %v4221
    %v4358 = vpack.c.b16 %v4226, %v4222
    %v4359 = vpack.c.b16 %v4227, %v4223
    %v4360 = vpack.c.b16 %v4228, %v4224
    %v4361 = vpack.c.b16 %v4233, %v4229
    %v4362 = vpack.c.b16 %v4234, %v4230
    %v4363 = vpack.c.b16 %v4235, %v4231
    %v4364 = vpack.c.b16 %v4236, %v4232
    %v4365 = vpack.c.b16 %v4241, %v4237
    %v4366 = vpack.c.b16 %v4242, %v4238
    %v4367 = vpack.c.b16 %v4243, %v4239
    %v4368 = vpack.c.b16 %v4244, %v4240
    %v4369 = vpack.c.b16 %v4249, %v4245
    %v4370 = vpack.c.b16 %v4250, %v4246
    %v4371 = vpack.c.b16 %v4251, %v4247
    %v4372 = vpack.c.b16 %v4252, %v4248
    %v4373 = vpack.c.b16 %v4257, %v4253
    %v4374 = vpack.c.b16 %v4258, %v4254
    %v4375 = vpack.c.b16 %v4259, %v4255
    %v4376 = vpack.c.b16 %v4260, %v4256
    %v4377 = vpack.c.b16 %v4265, %v4261
    %v4378 = vpack.c.b16 %v4266, %v4262
    %v4379 = vpack.c.b16 %v4267, %v4263
    %v4380 = vpack.c.b16 %v4268, %v4264
    %v4381 = vpack.c.b16 %v4273, %v4269
    %v4382 = vpack.c.b16 %v4274, %v4270
    %v4383 = vpack.c.b16 %v4275, %v4271
    %v4384 = vpack.c.b16 %v4276, %v4272
    %v4385 = vpack.c.b16 %v4281, %v4277
    %v4386 = vpack.c.b16 %v4282, %v4278
    %v4387 = vpack.c.b16 %v4283, %v4279
    %v4388 = vpack.c.b16 %v4284, %v4280
    %v4389 = vpack.c.b16 %v4289, %v4285
    %v4390 = vpack.c.b16 %v4290, %v4286
    %v4391 = vpack.c.b16 %v4291, %v4287
    %v4392 = vpack.c.b16 %v4292, %v4288
    %v4393 = vpack.c.b16 %v4297, %v4293
    %v4394 = vpack.c.b16 %v4298, %v4294
    %v4395 = vpack.c.b16 %v4299, %v4295
    %v4396 = vpack.c.b16 %v4300, %v4296
    %v4397 = vpack.c.b16 %v4305, %v4301
    %v4398 = vpack.c.b16 %v4306, %v4302
    %v4399 = vpack.c.b16 %v4307, %v4303
    %v4400 = vpack.c.b16 %v4308, %v4304
    %v4401 = vpack.c.b16 %v4313, %v4309
    %v4402 = vpack.c.b16 %v4314, %v4310
    %v4403 = vpack.c.b16 %v4315, %v4311
    %v4404 = vpack.c.b16 %v4316, %v4312
    %v4405 = vpack.c.b16 %v4321, %v4317
    %v4406 = vpack.c.b16 %v4322, %v4318
    %v4407 = vpack.c.b16 %v4323, %v4319
    %v4408 = vpack.c.b16 %v4324, %v4320
    %v4409 = vpack.c.b16 %v4329, %v4325
    %v4410 = vpack.c.b16 %v4330, %v4326
    %v4411 = vpack.c.b16 %v4331, %v4327
    %v4412 = vpack.c.b16 %v4332, %v4328
    %v4413 = vpack.c.b16 %v4337, %v4333
    %v4414 = vpack.c.b16 %v4338, %v4334
    %v4415 = vpack.c.b16 %v4339, %v4335
    %v4416 = vpack.c.b16 %v4340, %v4336
    %v4417 = vpack.c.b16 %v4345, %v4341
    %v4418 = vpack.c.b16 %v4346, %v4342
    %v4419 = vpack.c.b16 %v4347, %v4343
    %v4420 = vpack.c.b16 %v4348, %v4344
    %v4421 = vpack.c.b16 %v4353, %v4349
    %v4422 = vpack.c.b16 %v4354, %v4350
    %v4423 = vpack.c.b16 %v4355, %v4351
    %v4424 = vpack.c.b16 %v4356, %v4352
    %4493 = vmatprep.subr.bf16.mxu0 %v4358
    %4494 = vmatpush1.bf16.msra.mxu0 %v4357
    %4495 = vmatprep.subr.bf16.mxu0 %v4362
    %4496 = vmatpush1.bf16.msra.mxu0 %v4361
    %4497 = vmatprep.subr.bf16.mxu0 %v4366
    %4498 = vmatpush1.bf16.msra.mxu0 %v4365
    %4499 = vmatprep.subr.bf16.mxu0 %v4370
    %4500 = vmatpush1.bf16.msra.mxu0 %v4369
    %4501 = vmatprep.subr.bf16.mxu0 %v4374
    %4502 = vmatpush1.bf16.msra.mxu0 %v4373
    %4503 = vmatprep.subr.bf16.mxu0 %v4378
    %4504 = vmatpush1.bf16.msra.mxu0 %v4377
    %4505 = vmatprep.subr.bf16.mxu0 %v4382
    %4506 = vmatpush1.bf16.msra.mxu0 %v4381
    %4507 = vmatprep.subr.bf16.mxu0 %v4386
    %4508 = vmatpush1.bf16.msra.mxu0 %v4385
    %4509 = vmatprep.subr.bf16.mxu0 %v4390
    %4510 = vmatpush1.bf16.msra.mxu0 %v4389
    %4511 = vmatprep.subr.bf16.mxu0 %v4394
    %4512 = vmatpush1.bf16.msra.mxu0 %v4393
    %4513 = vmatprep.subr.bf16.mxu0 %v4398
    %4514 = vmatpush1.bf16.msra.mxu0 %v4397
    %4515 = vmatprep.subr.bf16.mxu0 %v4402
    %4516 = vmatpush1.bf16.msra.mxu0 %v4401
    %4517 = vmatprep.subr.bf16.mxu0 %v4406
    %4518 = vmatpush1.bf16.msra.mxu0 %v4405
    %4519 = vmatprep.subr.bf16.mxu0 %v4410
    %4520 = vmatpush1.bf16.msra.mxu0 %v4409
    %4521 = vmatprep.subr.bf16.mxu0 %v4414
    %4522 = vmatpush1.bf16.msra.mxu0 %v4413
    %4523 = vmatprep.subr.bf16.mxu0 %v4418
    %4524 = vmatpush1.bf16.msra.mxu0 %v4417
    %4525 = vmatprep.mubr.bf16.mxu0 %v538
    %4526 = vmatmul.mubr.bf16.gmra.mrb[0].mxu0 %v537
    %v4527 = vpop.f32.mrb[0].mxu0
    %v4528 = vadd.f32 %v4145, %v4527
    %v4529 = vpop.f32.mrb[0].mxu0
    %v4530 = vadd.f32 %v4146, %v4529
    %v4531 = vpop.f32.mrb[0].mxu0
    %v4532 = vadd.f32 %v4141, %v4531
    %v4533 = vpop.f32.mrb[0].mxu0
    %v4534 = vadd.f32 %v4142, %v4533
    %4535 = vmatprep.mubr.bf16.mxu0 %v541
    %4536 = vmatmul.mubr.bf16.gmra.mrb[0].mxu0 %v540
    %v4537 = vpop.f32.mrb[0].mxu0
    %v4538 = vadd.f32 %v4137, %v4537
    %v4539 = vpop.f32.mrb[0].mxu0
    %v4540 = vadd.f32 %v4138, %v4539
    %v4541 = vpop.f32.mrb[0].mxu0
    %v4542 = vadd.f32 %v4133, %v4541
    %v4543 = vpop.f32.mrb[0].mxu0
    %v4544 = vadd.f32 %v4134, %v4543
    %4545 = vmatprep.mubr.bf16.mxu0 %v544
    %4546 = vmatmul.mubr.bf16.gmra.mrb[0].mxu0 %v543
    %v4547 = vpop.f32.mrb[0].mxu0
    %v4548 = vadd.f32 %v4129, %v4547
    %v4549 = vpop.f32.mrb[0].mxu0
    %v4550 = vadd.f32 %v4130, %v4549
    %v4551 = vpop.f32.mrb[0].mxu0
    %v4552 = vadd.f32 %v4125, %v4551
    %v4553 = vpop.f32.mrb[0].mxu0
    %v4554 = vadd.f32 %v4126, %v4553
    %4555 = vmatprep.mubr.bf16.mxu0 %v547
    %4556 = vmatmul.mubr.bf16.gmra.mrb[0].mxu0 %v546
    %v4557 = vpop.f32.mrb[0].mxu0
    %v4558 = vadd.f32 %v4121, %v4557
    %v4559 = vpop.f32.mrb[0].mxu0
    %v4560 = vadd.f32 %v4122, %v4559
    %v4561 = vpop.f32.mrb[0].mxu0
    %v4562 = vadd.f32 %v4117, %v4561
    %v4563 = vpop.f32.mrb[0].mxu0
    %v4564 = vadd.f32 %v4118, %v4563
    %4565 = vmatprep.mubr.bf16.mxu0 %v550
    %4566 = vmatmul.mubr.bf16.gmra.mrb[0].mxu0 %v549
    %v4567 = vpop.f32.mrb[0].mxu0
    %v4568 = vadd.f32 %v4113, %v4567
    %v4569 = vpop.f32.mrb[0].mxu0
    %v4570 = vadd.f32 %v4114, %v4569
    %v4571 = vpop.f32.mrb[0].mxu0
    %v4572 = vadd.f32 %v4109, %v4571
    %v4573 = vpop.f32.mrb[0].mxu0
    %v4574 = vadd.f32 %v4110, %v4573
    %4575 = vmatprep.mubr.bf16.mxu0 %v553
    %4576 = vmatmul.mubr.bf16.gmra.mrb[0].mxu0 %v552
    %v4577 = vpop.f32.mrb[0].mxu0
    %v4578 = vadd.f32 %v4105, %v4577
    %v4579 = vpop.f32.mrb[0].mxu0
    %v4580 = vadd.f32 %v4106, %v4579
    %v4581 = vpop.f32.mrb[0].mxu0
    %v4582 = vadd.f32 %v4101, %v4581
    %v4583 = vpop.f32.mrb[0].mxu0
    %v4584 = vadd.f32 %v4102, %v4583
    %4585 = vmatprep.mubr.bf16.mxu0 %v556
    %4586 = vmatmul.mubr.bf16.gmra.mrb[0].mxu0 %v555
    %v4587 = vpop.f32.mrb[0].mxu0
    %v4588 = vadd.f32 %v4097, %v4587
    %v4589 = vpop.f32.mrb[0].mxu0
    %v4590 = vadd.f32 %v4098, %v4589
    %v4591 = vpop.f32.mrb[0].mxu0
    %v4592 = vadd.f32 %v4093, %v4591
    %v4593 = vpop.f32.mrb[0].mxu0
    %v4594 = vadd.f32 %v4094, %v4593
    %4595 = vmatprep.mubr.bf16.mxu0 %v559
    %4596 = vmatmul.mubr.bf16.gmra.mrb[0].mxu0 %v558
    %v4597 = vpop.f32.mrb[0].mxu0
    %v4598 = vadd.f32 %v4089, %v4597
    %v4599 = vpop.f32.mrb[0].mxu0
    %v4600 = vadd.f32 %v4090, %v4599
    %v4601 = vpop.f32.mrb[0].mxu0
    %v4602 = vadd.f32 %v4085, %v4601
    %v4603 = vpop.f32.mrb[0].mxu0
    %v4604 = vadd.f32 %v4086, %v4603
    %4605 = vmatprep.mubr.bf16.mxu0 %v562
    %4606 = vmatmul.mubr.bf16.gmra.mrb[0].mxu0 %v561
    %v4607 = vpop.f32.mrb[0].mxu0
    %v4608 = vadd.f32 %v4081, %v4607
    %v4609 = vpop.f32.mrb[0].mxu0
    %v4610 = vadd.f32 %v4082, %v4609
    %v4611 = vpop.f32.mrb[0].mxu0
    %v4612 = vadd.f32 %v4077, %v4611
    %v4613 = vpop.f32.mrb[0].mxu0
    %v4614 = vadd.f32 %v4078, %v4613
    %4615 = vmatprep.mubr.bf16.mxu0 %v565
    %4616 = vmatmul.mubr.bf16.gmra.mrb[0].mxu0 %v564
    %v4617 = vpop.f32.mrb[0].mxu0
    %v4618 = vadd.f32 %v4073, %v4617
    %v4619 = vpop.f32.mrb[0].mxu0
    %v4620 = vadd.f32 %v4074, %v4619
    %v4621 = vpop.f32.mrb[0].mxu0
    %v4622 = vadd.f32 %v4069, %v4621
    %v4623 = vpop.f32.mrb[0].mxu0
    %v4624 = vadd.f32 %v4070, %v4623
    %4625 = vmatprep.mubr.bf16.mxu0 %v568
    %4626 = vmatmul.mubr.bf16.gmra.mrb[0].mxu0 %v567
    %v4627 = vpop.f32.mrb[0].mxu0
    %v4628 = vadd.f32 %v4065, %v4627
    %v4629 = vpop.f32.mrb[0].mxu0
    %v4630 = vadd.f32 %v4066, %v4629
    %v4631 = vpop.f32.mrb[0].mxu0
    %v4632 = vadd.f32 %v4061, %v4631
    %v4633 = vpop.f32.mrb[0].mxu0
    %v4634 = vadd.f32 %v4062, %v4633
    %4635 = vmatprep.mubr.bf16.mxu0 %v571
    %4636 = vmatmul.mubr.bf16.gmra.mrb[0].mxu0 %v570
    %v4637 = vpop.f32.mrb[0].mxu0
    %v4638 = vadd.f32 %v4057, %v4637
    %v4639 = vpop.f32.mrb[0].mxu0
    %v4640 = vadd.f32 %v4058, %v4639
    %v4641 = vpop.f32.mrb[0].mxu0
    %v4642 = vadd.f32 %v4053, %v4641
    %v4643 = vpop.f32.mrb[0].mxu0
    %v4644 = vadd.f32 %v4054, %v4643
    %4645 = vmatprep.mubr.bf16.mxu0 %v574
    %4646 = vmatmul.mubr.bf16.gmra.mrb[0].mxu0 %v573
    %v4647 = vpop.f32.mrb[0].mxu0
    %v4648 = vadd.f32 %v4049, %v4647
    %v4649 = vpop.f32.mrb[0].mxu0
    %v4650 = vadd.f32 %v4050, %v4649
    %v4651 = vpop.f32.mrb[0].mxu0
    %v4652 = vadd.f32 %v4045, %v4651
    %v4653 = vpop.f32.mrb[0].mxu0
    %v4654 = vadd.f32 %v4046, %v4653
    %4655 = vmatprep.mubr.bf16.mxu0 %v577
    %4656 = vmatmul.mubr.bf16.gmra.mrb[0].mxu0 %v576
    %v4657 = vpop.f32.mrb[0].mxu0
    %v4658 = vadd.f32 %v4041, %v4657
    %v4659 = vpop.f32.mrb[0].mxu0
    %v4660 = vadd.f32 %v4042, %v4659
    %v4661 = vpop.f32.mrb[0].mxu0
    %v4662 = vadd.f32 %v4037, %v4661
    %v4663 = vpop.f32.mrb[0].mxu0
    %v4664 = vadd.f32 %v4038, %v4663
    %4665 = vmatprep.mubr.bf16.mxu0 %v580
    %4666 = vmatmul.mubr.bf16.gmra.mrb[0].mxu0 %v579
    %v4667 = vpop.f32.mrb[0].mxu0
    %v4668 = vadd.f32 %v4033, %v4667
    %v4669 = vpop.f32.mrb[0].mxu0
    %v4670 = vadd.f32 %v4034, %v4669
    %v4671 = vpop.f32.mrb[0].mxu0
    %v4672 = vadd.f32 %v4029, %v4671
    %v4673 = vpop.f32.mrb[0].mxu0
    %v4674 = vadd.f32 %v4030, %v4673
    %4675 = vmatprep.mubr.bf16.mxu0 %v583
    %4676 = vmatmul.mubr.bf16.gmra.mrb[0].mxu0 %v582
    %v4677 = vpop.f32.mrb[0].mxu0
    %v4678 = vadd.f32 %v4025, %v4677
    %v4679 = vpop.f32.mrb[0].mxu0
    %v4680 = vadd.f32 %v4026, %v4679
    %v4681 = vpop.f32.mrb[0].mxu0
    %v4682 = vadd.f32 %v4021, %v4681
    %v4683 = vpop.f32.mrb[0].mxu0
    %v4684 = vadd.f32 %v4022, %v4683
    %4685 = vmatprep.mubr.bf16.mxu0 %v586
    %4686 = vmatmul.mubr.bf16.gmra.mrb[0].mxu0 %v585
    %v4687 = vpop.f32.mrb[0].mxu0
    %v4688 = vadd.f32 %v4017, %v4687
    %v4689 = vpop.f32.mrb[0].mxu0
    %v4690 = vadd.f32 %v4018, %v4689
    %v4691 = vpop.f32.mrb[0].mxu0
    %v4692 = vadd.f32 %v4013, %v4691
    %v4693 = vpop.f32.mrb[0].mxu0
    %v4694 = vadd.f32 %v4014, %v4693
    %4695 = vmatprep.mubr.bf16.mxu0 %v589
    %4696 = vmatmul.mubr.bf16.gmra.mrb[0].mxu0 %v588
    %v4697 = vpop.f32.mrb[0].mxu0
    %v4698 = vadd.f32 %v4009, %v4697
    %v4699 = vpop.f32.mrb[0].mxu0
    %v4700 = vadd.f32 %v4010, %v4699
    %v4701 = vpop.f32.mrb[0].mxu0
    %v4702 = vadd.f32 %v4005, %v4701
    %v4703 = vpop.f32.mrb[0].mxu0
    %v4704 = vadd.f32 %v4006, %v4703
    %4705 = vmatprep.mubr.bf16.mxu0 %v592
    %4706 = vmatmul.mubr.bf16.gmra.mrb[0].mxu0 %v591
    %v4707 = vpop.f32.mrb[0].mxu0
    %v4708 = vadd.f32 %v4001, %v4707
    %v4709 = vpop.f32.mrb[0].mxu0
    %v4710 = vadd.f32 %v4002, %v4709
    %v4711 = vpop.f32.mrb[0].mxu0
    %v4712 = vadd.f32 %v3997, %v4711
    %v4713 = vpop.f32.mrb[0].mxu0
    %v4714 = vadd.f32 %v3998, %v4713
    %4715 = vmatprep.mubr.bf16.mxu0 %v595
    %4716 = vmatmul.mubr.bf16.gmra.mrb[0].mxu0 %v594
    %v4717 = vpop.f32.mrb[0].mxu0
    %v4718 = vadd.f32 %v3993, %v4717
    %v4719 = vpop.f32.mrb[0].mxu0
    %v4720 = vadd.f32 %v3994, %v4719
    %v4721 = vpop.f32.mrb[0].mxu0
    %v4722 = vadd.f32 %v3989, %v4721
    %v4723 = vpop.f32.mrb[0].mxu0
    %v4724 = vadd.f32 %v3990, %v4723
    %4725 = vmatprep.mubr.bf16.mxu0 %v598
    %4726 = vmatmul.mubr.bf16.gmra.mrb[0].mxu0 %v597
    %v4727 = vpop.f32.mrb[0].mxu0
    %v4728 = vadd.f32 %v3985, %v4727
    %v4729 = vpop.f32.mrb[0].mxu0
    %v4730 = vadd.f32 %v3986, %v4729
    %v4731 = vpop.f32.mrb[0].mxu0
    %v4732 = vadd.f32 %v3981, %v4731
    %v4733 = vpop.f32.mrb[0].mxu0
    %v4734 = vadd.f32 %v3982, %v4733
    %4735 = vmatprep.mubr.bf16.mxu0 %v601
    %4736 = vmatmul.mubr.bf16.gmra.mrb[0].mxu0 %v600
    %v4737 = vpop.f32.mrb[0].mxu0
    %v4738 = vadd.f32 %v3977, %v4737
    %v4739 = vpop.f32.mrb[0].mxu0
    %v4740 = vadd.f32 %v3978, %v4739
    %v4741 = vpop.f32.mrb[0].mxu0
    %v4742 = vadd.f32 %v3973, %v4741
    %v4743 = vpop.f32.mrb[0].mxu0
    %v4744 = vadd.f32 %v3974, %v4743
    %4745 = vmatprep.mubr.bf16.mxu0 %v604
    %4746 = vmatmul.mubr.bf16.gmra.mrb[0].mxu0 %v603
    %v4747 = vpop.f32.mrb[0].mxu0
    %v4748 = vadd.f32 %v3969, %v4747
    %v4749 = vpop.f32.mrb[0].mxu0
    %v4750 = vadd.f32 %v3970, %v4749
    %v4751 = vpop.f32.mrb[0].mxu0
    %v4752 = vadd.f32 %v3965, %v4751
    %v4753 = vpop.f32.mrb[0].mxu0
    %v4754 = vadd.f32 %v3966, %v4753
    %4755 = vmatprep.mubr.bf16.mxu0 %v607
    %4756 = vmatmul.mubr.bf16.gmra.mrb[0].mxu0 %v606
    %v4757 = vpop.f32.mrb[0].mxu0
    %v4758 = vadd.f32 %v3961, %v4757
    %v4759 = vpop.f32.mrb[0].mxu0
    %v4760 = vadd.f32 %v3962, %v4759
    %v4761 = vpop.f32.mrb[0].mxu0
    %v4762 = vadd.f32 %v3957, %v4761
    %v4763 = vpop.f32.mrb[0].mxu0
    %v4764 = vadd.f32 %v3958, %v4763
    %4765 = vmatprep.mubr.bf16.mxu0 %v610
    %4766 = vmatmul.mubr.bf16.gmra.mrb[0].mxu0 %v609
    %v4767 = vpop.f32.mrb[0].mxu0
    %v4768 = vadd.f32 %v3953, %v4767
    %v4769 = vpop.f32.mrb[0].mxu0
    %v4770 = vadd.f32 %v3954, %v4769
    %v4771 = vpop.f32.mrb[0].mxu0
    %v4772 = vadd.f32 %v4149, %v4771
    %v4773 = vpop.f32.mrb[0].mxu0
    %v4774 = vadd.f32 %v4150, %v4773
    %4775 = vdwg.mxu0
    %4776 = vmatprep.subr.bf16.mxu0 %v4422
    %4777 = vmatpush1.bf16.msra.mxu0 %v4421
    %4778 = vmatprep.subr.bf16.mxu0 0
    %4779 = vmatpush1.bf16.msra.mxu0 0
    %4780 = vmatprep.subr.bf16.mxu0 0
    %4781 = vmatpush1.bf16.msra.mxu0 0
    %4782 = vmatprep.subr.bf16.mxu0 0
    %4783 = vmatpush1.bf16.msra.mxu0 0
    %4784 = vmatprep.subr.bf16.mxu0 0
    %4785 = vmatpush1.bf16.msra.mxu0 0
    %4786 = vmatprep.subr.bf16.mxu0 0
    %4787 = vmatpush1.bf16.msra.mxu0 0
    %4788 = vmatprep.subr.bf16.mxu0 0
    %4789 = vmatpush1.bf16.msra.mxu0 0
    %4790 = vmatprep.subr.bf16.mxu0 0
    %4791 = vmatpush1.bf16.msra.mxu0 0
    %4792 = vmatprep.subr.bf16.mxu0 0
    %4793 = vmatpush1.bf16.msra.mxu0 0
    %4794 = vmatprep.subr.bf16.mxu0 0
    %4795 = vmatpush1.bf16.msra.mxu0 0
    %4796 = vmatprep.subr.bf16.mxu0 0
    %4797 = vmatpush1.bf16.msra.mxu0 0
    %4798 = vmatprep.subr.bf16.mxu0 0
    %4799 = vmatpush1.bf16.msra.mxu0 0
    %4800 = vmatprep.subr.bf16.mxu0 0
    %4801 = vmatpush1.bf16.msra.mxu0 0
    %4802 = vmatprep.subr.bf16.mxu0 0
    %4803 = vmatpush1.bf16.msra.mxu0 0
    %4804 = vmatprep.subr.bf16.mxu0 0
    %4805 = vmatpush1.bf16.msra.mxu0 0
    %4806 = vmatprep.subr.bf16.mxu0 0
    %4807 = vmatpush1.bf16.msra.mxu0 0
    %4808 = vmatprep.mubr.bf16.mxu0 0
    %4809 = vmatmul.mubr.bf16.gmra.mrb[0].mxu0 %v1004
    %v4810 = vpop.f32.mrb[0].mxu0
    %v4811 = vadd.f32 %v4528, %v4810
    %v4812 = vpop.f32.mrb[0].mxu0
    %v4813 = vadd.f32 %v4530, %v4812
    %v4814 = vpop.f32.mrb[0].mxu0
    %v4815 = vadd.f32 %v4532, %v4814
    %v4816 = vpop.f32.mrb[0].mxu0
    %v4817 = vadd.f32 %v4534, %v4816
    %4818 = vmatprep.mubr.bf16.mxu0 0
    %4819 = vmatmul.mubr.bf16.gmra.mrb[0].mxu0 %v1007
    %v4820 = vpop.f32.mrb[0].mxu0
    %v4821 = vadd.f32 %v4538, %v4820
    %v4822 = vpop.f32.mrb[0].mxu0
    %v4823 = vadd.f32 %v4540, %v4822
    %v4824 = vpop.f32.mrb[0].mxu0
    %v4825 = vadd.f32 %v4542, %v4824
    %v4826 = vpop.f32.mrb[0].mxu0
    %v4827 = vadd.f32 %v4544, %v4826
    %4828 = vmatprep.mubr.bf16.mxu0 0
    %4829 = vmatmul.mubr.bf16.gmra.mrb[0].mxu0 %v1010
    %v4830 = vpop.f32.mrb[0].mxu0
    %v4831 = vadd.f32 %v4548, %v4830
    %v4832 = vpop.f32.mrb[0].mxu0
    %v4833 = vadd.f32 %v4550, %v4832
    %v4834 = vpop.f32.mrb[0].mxu0
    %v4835 = vadd.f32 %v4552, %v4834
    %v4836 = vpop.f32.mrb[0].mxu0
    %v4837 = vadd.f32 %v4554, %v4836
    %4838 = vmatprep.mubr.bf16.mxu0 0
    %4839 = vmatmul.mubr.bf16.gmra.mrb[0].mxu0 %v1013
    %v4840 = vpop.f32.mrb[0].mxu0
    %v4841 = vadd.f32 %v4558, %v4840
    %v4842 = vpop.f32.mrb[0].mxu0
    %v4843 = vadd.f32 %v4560, %v4842
    %v4844 = vpop.f32.mrb[0].mxu0
    %v4845 = vadd.f32 %v4562, %v4844
    %v4846 = vpop.f32.mrb[0].mxu0
    %v4847 = vadd.f32 %v4564, %v4846
    %4848 = vmatprep.mubr.bf16.mxu0 0
    %4849 = vmatmul.mubr.bf16.gmra.mrb[0].mxu0 %v1016
    %v4850 = vpop.f32.mrb[0].mxu0
    %v4851 = vadd.f32 %v4568, %v4850
    %v4852 = vpop.f32.mrb[0].mxu0
    %v4853 = vadd.f32 %v4570, %v4852
    %v4854 = vpop.f32.mrb[0].mxu0
    %v4855 = vadd.f32 %v4572, %v4854
    %v4856 = vpop.f32.mrb[0].mxu0
    %v4857 = vadd.f32 %v4574, %v4856
    %4858 = vmatprep.mubr.bf16.mxu0 0
    %4859 = vmatmul.mubr.bf16.gmra.mrb[0].mxu0 %v1019
    %v4860 = vpop.f32.mrb[0].mxu0
    %v4861 = vadd.f32 %v4578, %v4860
    %v4862 = vpop.f32.mrb[0].mxu0
    %v4863 = vadd.f32 %v4580, %v4862
    %v4864 = vpop.f32.mrb[0].mxu0
    %v4865 = vadd.f32 %v4582, %v4864
    %v4866 = vpop.f32.mrb[0].mxu0
    %v4867 = vadd.f32 %v4584, %v4866
    %4868 = vmatprep.mubr.bf16.mxu0 0
    %4869 = vmatmul.mubr.bf16.gmra.mrb[0].mxu0 %v1022
    %v4870 = vpop.f32.mrb[0].mxu0
    %v4871 = vadd.f32 %v4588, %v4870
    %v4872 = vpop.f32.mrb[0].mxu0
    %v4873 = vadd.f32 %v4590, %v4872
    %v4874 = vpop.f32.mrb[0].mxu0
    %v4875 = vadd.f32 %v4592, %v4874
    %v4876 = vpop.f32.mrb[0].mxu0
    %v4877 = vadd.f32 %v4594, %v4876
    %4878 = vmatprep.mubr.bf16.mxu0 0
    %4879 = vmatmul.mubr.bf16.gmra.mrb[0].mxu0 %v1025
    %v4880 = vpop.f32.mrb[0].mxu0
    %v4881 = vadd.f32 %v4598, %v4880
    %v4882 = vpop.f32.mrb[0].mxu0
    %v4883 = vadd.f32 %v4600, %v4882
    %v4884 = vpop.f32.mrb[0].mxu0
    %v4885 = vadd.f32 %v4602, %v4884
    %v4886 = vpop.f32.mrb[0].mxu0
    %v4887 = vadd.f32 %v4604, %v4886
    %4888 = vmatprep.mubr.bf16.mxu0 0
    %4889 = vmatmul.mubr.bf16.gmra.mrb[0].mxu0 %v1028
    %v4890 = vpop.f32.mrb[0].mxu0
    %v4891 = vadd.f32 %v4608, %v4890
    %v4892 = vpop.f32.mrb[0].mxu0
    %v4893 = vadd.f32 %v4610, %v4892
    %v4894 = vpop.f32.mrb[0].mxu0
    %v4895 = vadd.f32 %v4612, %v4894
    %v4896 = vpop.f32.mrb[0].mxu0
    %v4897 = vadd.f32 %v4614, %v4896
    %4898 = vmatprep.mubr.bf16.mxu0 0
    %4899 = vmatmul.mubr.bf16.gmra.mrb[0].mxu0 %v1031
    %v4900 = vpop.f32.mrb[0].mxu0
    %v4901 = vadd.f32 %v4618, %v4900
    %v4902 = vpop.f32.mrb[0].mxu0
    %v4903 = vadd.f32 %v4620, %v4902
    %v4904 = vpop.f32.mrb[0].mxu0
    %v4905 = vadd.f32 %v4622, %v4904
    %v4906 = vpop.f32.mrb[0].mxu0
    %v4907 = vadd.f32 %v4624, %v4906
    %4908 = vmatprep.mubr.bf16.mxu0 0
    %4909 = vmatmul.mubr.bf16.gmra.mrb[0].mxu0 %v1034
    %v4910 = vpop.f32.mrb[0].mxu0
    %v4911 = vadd.f32 %v4628, %v4910
    %v4912 = vpop.f32.mrb[0].mxu0
    %v4913 = vadd.f32 %v4630, %v4912
    %v4914 = vpop.f32.mrb[0].mxu0
    %v4915 = vadd.f32 %v4632, %v4914
    %v4916 = vpop.f32.mrb[0].mxu0
    %v4917 = vadd.f32 %v4634, %v4916
    %4918 = vmatprep.mubr.bf16.mxu0 0
    %4919 = vmatmul.mubr.bf16.gmra.mrb[0].mxu0 %v1037
    %v4920 = vpop.f32.mrb[0].mxu0
    %v4921 = vadd.f32 %v4638, %v4920
    %v4922 = vpop.f32.mrb[0].mxu0
    %v4923 = vadd.f32 %v4640, %v4922
    %v4924 = vpop.f32.mrb[0].mxu0
    %v4925 = vadd.f32 %v4642, %v4924
    %v4926 = vpop.f32.mrb[0].mxu0
    %v4927 = vadd.f32 %v4644, %v4926
    %4928 = vmatprep.mubr.bf16.mxu0 0
    %4929 = vmatmul.mubr.bf16.gmra.mrb[0].mxu0 %v1040
    %v4930 = vpop.f32.mrb[0].mxu0
    %v4931 = vadd.f32 %v4648, %v4930
    %v4932 = vpop.f32.mrb[0].mxu0
    %v4933 = vadd.f32 %v4650, %v4932
    %v4934 = vpop.f32.mrb[0].mxu0
    %v4935 = vadd.f32 %v4652, %v4934
    %v4936 = vpop.f32.mrb[0].mxu0
    %v4937 = vadd.f32 %v4654, %v4936
    %4938 = vmatprep.mubr.bf16.mxu0 0
    %4939 = vmatmul.mubr.bf16.gmra.mrb[0].mxu0 %v1043
    %v4940 = vpop.f32.mrb[0].mxu0
    %v4941 = vadd.f32 %v4658, %v4940
    %v4942 = vpop.f32.mrb[0].mxu0
    %v4943 = vadd.f32 %v4660, %v4942
    %v4944 = vpop.f32.mrb[0].mxu0
    %v4945 = vadd.f32 %v4662, %v4944
    %v4946 = vpop.f32.mrb[0].mxu0
    %v4947 = vadd.f32 %v4664, %v4946
    %4948 = vmatprep.mubr.bf16.mxu0 0
    %4949 = vmatmul.mubr.bf16.gmra.mrb[0].mxu0 %v1046
    %v4950 = vpop.f32.mrb[0].mxu0
    %v4951 = vadd.f32 %v4668, %v4950
    %v4952 = vpop.f32.mrb[0].mxu0
    %v4953 = vadd.f32 %v4670, %v4952
    %v4954 = vpop.f32.mrb[0].mxu0
    %v4955 = vadd.f32 %v4672, %v4954
    %v4956 = vpop.f32.mrb[0].mxu0
    %v4957 = vadd.f32 %v4674, %v4956
    %4958 = vmatprep.mubr.bf16.mxu0 0
    %4959 = vmatmul.mubr.bf16.gmra.mrb[0].mxu0 %v1049
    %v4960 = vpop.f32.mrb[0].mxu0
    %v4961 = vadd.f32 %v4678, %v4960
    %v4962 = vpop.f32.mrb[0].mxu0
    %v4963 = vadd.f32 %v4680, %v4962
    %v4964 = vpop.f32.mrb[0].mxu0
    %v4965 = vadd.f32 %v4682, %v4964
    %v4966 = vpop.f32.mrb[0].mxu0
    %v4967 = vadd.f32 %v4684, %v4966
    %4968 = vmatprep.mubr.bf16.mxu0 0
    %4969 = vmatmul.mubr.bf16.gmra.mrb[0].mxu0 %v1052
    %v4970 = vpop.f32.mrb[0].mxu0
    %v4971 = vadd.f32 %v4688, %v4970
    %v4972 = vpop.f32.mrb[0].mxu0
    %v4973 = vadd.f32 %v4690, %v4972
    %v4974 = vpop.f32.mrb[0].mxu0
    %v4975 = vadd.f32 %v4692, %v4974
    %v4976 = vpop.f32.mrb[0].mxu0
    %v4977 = vadd.f32 %v4694, %v4976
    %4978 = vmatprep.mubr.bf16.mxu0 0
    %4979 = vmatmul.mubr.bf16.gmra.mrb[0].mxu0 %v1055
    %v4980 = vpop.f32.mrb[0].mxu0
    %v4981 = vadd.f32 %v4698, %v4980
    %v4982 = vpop.f32.mrb[0].mxu0
    %v4983 = vadd.f32 %v4700, %v4982
    %v4984 = vpop.f32.mrb[0].mxu0
    %v4985 = vadd.f32 %v4702, %v4984
    %v4986 = vpop.f32.mrb[0].mxu0
    %v4987 = vadd.f32 %v4704, %v4986
    %4988 = vmatprep.mubr.bf16.mxu0 0
    %4989 = vmatmul.mubr.bf16.gmra.mrb[0].mxu0 %v1058
    %v4990 = vpop.f32.mrb[0].mxu0
    %v4991 = vadd.f32 %v4708, %v4990
    %v4992 = vpop.f32.mrb[0].mxu0
    %v4993 = vadd.f32 %v4710, %v4992
    %v4994 = vpop.f32.mrb[0].mxu0
    %v4995 = vadd.f32 %v4712, %v4994
    %v4996 = vpop.f32.mrb[0].mxu0
    %v4997 = vadd.f32 %v4714, %v4996
    %4998 = vmatprep.mubr.bf16.mxu0 0
    %4999 = vmatmul.mubr.bf16.gmra.mrb[0].mxu0 %v1061
    %v5000 = vpop.f32.mrb[0].mxu0
    %v5001 = vadd.f32 %v4718, %v5000
    %v5002 = vpop.f32.mrb[0].mxu0
    %v5003 = vadd.f32 %v4720, %v5002
    %v5004 = vpop.f32.mrb[0].mxu0
    %v5005 = vadd.f32 %v4722, %v5004
    %v5006 = vpop.f32.mrb[0].mxu0
    %v5007 = vadd.f32 %v4724, %v5006
    %5008 = vmatprep.mubr.bf16.mxu0 0
    %5009 = vmatmul.mubr.bf16.gmra.mrb[0].mxu0 %v1064
    %v5010 = vpop.f32.mrb[0].mxu0
    %v5011 = vadd.f32 %v4728, %v5010
    %v5012 = vpop.f32.mrb[0].mxu0
    %v5013 = vadd.f32 %v4730, %v5012
    %v5014 = vpop.f32.mrb[0].mxu0
    %v5015 = vadd.f32 %v4732, %v5014
    %v5016 = vpop.f32.mrb[0].mxu0
    %v5017 = vadd.f32 %v4734, %v5016
    %5018 = vmatprep.mubr.bf16.mxu0 0
    %5019 = vmatmul.mubr.bf16.gmra.mrb[0].mxu0 %v1067
    %v5020 = vpop.f32.mrb[0].mxu0
    %v5021 = vadd.f32 %v4738, %v5020
    %v5022 = vpop.f32.mrb[0].mxu0
    %v5023 = vadd.f32 %v4740, %v5022
    %v5024 = vpop.f32.mrb[0].mxu0
    %v5025 = vadd.f32 %v4742, %v5024
    %v5026 = vpop.f32.mrb[0].mxu0
    %v5027 = vadd.f32 %v4744, %v5026
    %5028 = vmatprep.mubr.bf16.mxu0 0
    %5029 = vmatmul.mubr.bf16.gmra.mrb[0].mxu0 %v1070
    %v5030 = vpop.f32.mrb[0].mxu0
    %v5031 = vadd.f32 %v4748, %v5030
    %v5032 = vpop.f32.mrb[0].mxu0
    %v5033 = vadd.f32 %v4750, %v5032
    %v5034 = vpop.f32.mrb[0].mxu0
    %v5035 = vadd.f32 %v4752, %v5034
    %v5036 = vpop.f32.mrb[0].mxu0
    %v5037 = vadd.f32 %v4754, %v5036
    %5038 = vmatprep.mubr.bf16.mxu0 0
    %5039 = vmatmul.mubr.bf16.gmra.mrb[0].mxu0 %v1073
    %v5040 = vpop.f32.mrb[0].mxu0
    %v5041 = vadd.f32 %v4758, %v5040
    %v5042 = vpop.f32.mrb[0].mxu0
    %v5043 = vadd.f32 %v4760, %v5042
    %v5044 = vpop.f32.mrb[0].mxu0
    %v5045 = vadd.f32 %v4762, %v5044
    %v5046 = vpop.f32.mrb[0].mxu0
    %v5047 = vadd.f32 %v4764, %v5046
    %5048 = vmatprep.mubr.bf16.mxu0 0
    %5049 = vmatmul.mubr.bf16.gmra.mrb[0].mxu0 %v1076
    %v5050 = vpop.f32.mrb[0].mxu0
    %v5051 = vadd.f32 %v4768, %v5050
    %v5052 = vpop.f32.mrb[0].mxu0
    %v5053 = vadd.f32 %v4770, %v5052
    %v5054 = vpop.f32.mrb[0].mxu0
    %v5055 = vadd.f32 %v4772, %v5054
    %v5056 = vpop.f32.mrb[0].mxu0
    %v5057 = vadd.f32 %v4774, %v5056
    %5058 = vdwg.mxu0
    %5059 = vmatprep.subr.bf16.mxu0 %v4360
    %5060 = vmatpush1.bf16.msra.mxu0 %v4359
    %5061 = vmatprep.subr.bf16.mxu0 %v4364
    %5062 = vmatpush1.bf16.msra.mxu0 %v4363
    %5063 = vmatprep.subr.bf16.mxu0 %v4368
    %5064 = vmatpush1.bf16.msra.mxu0 %v4367
    %5065 = vmatprep.subr.bf16.mxu0 %v4372
    %5066 = vmatpush1.bf16.msra.mxu0 %v4371
    %5067 = vmatprep.subr.bf16.mxu0 %v4376
    %5068 = vmatpush1.bf16.msra.mxu0 %v4375
    %5069 = vmatprep.subr.bf16.mxu0 %v4380
    %5070 = vmatpush1.bf16.msra.mxu0 %v4379
    %5071 = vmatprep.subr.bf16.mxu0 %v4384
    %5072 = vmatpush1.bf16.msra.mxu0 %v4383
    %5073 = vmatprep.subr.bf16.mxu0 %v4388
    %5074 = vmatpush1.bf16.msra.mxu0 %v4387
    %5075 = vmatprep.subr.bf16.mxu0 %v4392
    %5076 = vmatpush1.bf16.msra.mxu0 %v4391
    %5077 = vmatprep.subr.bf16.mxu0 %v4396
    %5078 = vmatpush1.bf16.msra.mxu0 %v4395
    %5079 = vmatprep.subr.bf16.mxu0 %v4400
    %5080 = vmatpush1.bf16.msra.mxu0 %v4399
    %5081 = vmatprep.subr.bf16.mxu0 %v4404
    %5082 = vmatpush1.bf16.msra.mxu0 %v4403
    %5083 = vmatprep.subr.bf16.mxu0 %v4408
    %5084 = vmatpush1.bf16.msra.mxu0 %v4407
    %5085 = vmatprep.subr.bf16.mxu0 %v4412
    %5086 = vmatpush1.bf16.msra.mxu0 %v4411
    %5087 = vmatprep.subr.bf16.mxu0 %v4416
    %5088 = vmatpush1.bf16.msra.mxu0 %v4415
    %5089 = vmatprep.subr.bf16.mxu0 %v4420
    %5090 = vmatpush1.bf16.msra.mxu0 %v4419
    %5091 = vmatprep.mubr.bf16.mxu0 %v538
    %5092 = vmatmul.mubr.bf16.gmra.mrb[0].mxu0 %v537
    %v5093 = vpop.f32.mrb[0].mxu0
    %v5094 = vadd.f32 %v4147, %v5093
    %v5095 = vpop.f32.mrb[0].mxu0
    %v5096 = vadd.f32 %v4148, %v5095
    %v5097 = vpop.f32.mrb[0].mxu0
    %v5098 = vadd.f32 %v4143, %v5097
    %v5099 = vpop.f32.mrb[0].mxu0
    %v5100 = vadd.f32 %v4144, %v5099
    %5101 = vmatprep.mubr.bf16.mxu0 %v541
    %5102 = vmatmul.mubr.bf16.gmra.mrb[0].mxu0 %v540
    %v5103 = vpop.f32.mrb[0].mxu0
    %v5104 = vadd.f32 %v4139, %v5103
    %v5105 = vpop.f32.mrb[0].mxu0
    %v5106 = vadd.f32 %v4140, %v5105
    %v5107 = vpop.f32.mrb[0].mxu0
    %v5108 = vadd.f32 %v4135, %v5107
    %v5109 = vpop.f32.mrb[0].mxu0
    %v5110 = vadd.f32 %v4136, %v5109
    %5111 = vmatprep.mubr.bf16.mxu0 %v544
    %5112 = vmatmul.mubr.bf16.gmra.mrb[0].mxu0 %v543
    %v5113 = vpop.f32.mrb[0].mxu0
    %v5114 = vadd.f32 %v4131, %v5113
    %v5115 = vpop.f32.mrb[0].mxu0
    %v5116 = vadd.f32 %v4132, %v5115
    %v5117 = vpop.f32.mrb[0].mxu0
    %v5118 = vadd.f32 %v4127, %v5117
    %v5119 = vpop.f32.mrb[0].mxu0
    %v5120 = vadd.f32 %v4128, %v5119
    %5121 = vmatprep.mubr.bf16.mxu0 %v547
    %5122 = vmatmul.mubr.bf16.gmra.mrb[0].mxu0 %v546
    %v5123 = vpop.f32.mrb[0].mxu0
    %v5124 = vadd.f32 %v4123, %v5123
    %v5125 = vpop.f32.mrb[0].mxu0
    %v5126 = vadd.f32 %v4124, %v5125
    %v5127 = vpop.f32.mrb[0].mxu0
    %v5128 = vadd.f32 %v4119, %v5127
    %v5129 = vpop.f32.mrb[0].mxu0
    %v5130 = vadd.f32 %v4120, %v5129
    %5131 = vmatprep.mubr.bf16.mxu0 %v550
    %5132 = vmatmul.mubr.bf16.gmra.mrb[0].mxu0 %v549
    %v5133 = vpop.f32.mrb[0].mxu0
    %v5134 = vadd.f32 %v4115, %v5133
    %v5135 = vpop.f32.mrb[0].mxu0
    %v5136 = vadd.f32 %v4116, %v5135
    %v5137 = vpop.f32.mrb[0].mxu0
    %v5138 = vadd.f32 %v4111, %v5137
    %v5139 = vpop.f32.mrb[0].mxu0
    %v5140 = vadd.f32 %v4112, %v5139
    %5141 = vmatprep.mubr.bf16.mxu0 %v553
    %5142 = vmatmul.mubr.bf16.gmra.mrb[0].mxu0 %v552
    %v5143 = vpop.f32.mrb[0].mxu0
    %v5144 = vadd.f32 %v4107, %v5143
    %v5145 = vpop.f32.mrb[0].mxu0
    %v5146 = vadd.f32 %v4108, %v5145
    %v5147 = vpop.f32.mrb[0].mxu0
    %v5148 = vadd.f32 %v4103, %v5147
    %v5149 = vpop.f32.mrb[0].mxu0
    %v5150 = vadd.f32 %v4104, %v5149
    %5151 = vmatprep.mubr.bf16.mxu0 %v556
    %5152 = vmatmul.mubr.bf16.gmra.mrb[0].mxu0 %v555
    %v5153 = vpop.f32.mrb[0].mxu0
    %v5154 = vadd.f32 %v4099, %v5153
    %v5155 = vpop.f32.mrb[0].mxu0
    %v5156 = vadd.f32 %v4100, %v5155
    %v5157 = vpop.f32.mrb[0].mxu0
    %v5158 = vadd.f32 %v4095, %v5157
    %v5159 = vpop.f32.mrb[0].mxu0
    %v5160 = vadd.f32 %v4096, %v5159
    %5161 = vmatprep.mubr.bf16.mxu0 %v559
    %5162 = vmatmul.mubr.bf16.gmra.mrb[0].mxu0 %v558
    %v5163 = vpop.f32.mrb[0].mxu0
    %v5164 = vadd.f32 %v4091, %v5163
    %v5165 = vpop.f32.mrb[0].mxu0
    %v5166 = vadd.f32 %v4092, %v5165
    %v5167 = vpop.f32.mrb[0].mxu0
    %v5168 = vadd.f32 %v4087, %v5167
    %v5169 = vpop.f32.mrb[0].mxu0
    %v5170 = vadd.f32 %v4088, %v5169
    %5171 = vmatprep.mubr.bf16.mxu0 %v562
    %5172 = vmatmul.mubr.bf16.gmra.mrb[0].mxu0 %v561
    %v5173 = vpop.f32.mrb[0].mxu0
    %v5174 = vadd.f32 %v4083, %v5173
    %v5175 = vpop.f32.mrb[0].mxu0
    %v5176 = vadd.f32 %v4084, %v5175
    %v5177 = vpop.f32.mrb[0].mxu0
    %v5178 = vadd.f32 %v4079, %v5177
    %v5179 = vpop.f32.mrb[0].mxu0
    %v5180 = vadd.f32 %v4080, %v5179
    %5181 = vmatprep.mubr.bf16.mxu0 %v565
    %5182 = vmatmul.mubr.bf16.gmra.mrb[0].mxu0 %v564
    %v5183 = vpop.f32.mrb[0].mxu0
    %v5184 = vadd.f32 %v4075, %v5183
    %v5185 = vpop.f32.mrb[0].mxu0
    %v5186 = vadd.f32 %v4076, %v5185
    %v5187 = vpop.f32.mrb[0].mxu0
    %v5188 = vadd.f32 %v4071, %v5187
    %v5189 = vpop.f32.mrb[0].mxu0
    %v5190 = vadd.f32 %v4072, %v5189
    %5191 = vmatprep.mubr.bf16.mxu0 %v568
    %5192 = vmatmul.mubr.bf16.gmra.mrb[0].mxu0 %v567
    %v5193 = vpop.f32.mrb[0].mxu0
    %v5194 = vadd.f32 %v4067, %v5193
    %v5195 = vpop.f32.mrb[0].mxu0
    %v5196 = vadd.f32 %v4068, %v5195
    %v5197 = vpop.f32.mrb[0].mxu0
    %v5198 = vadd.f32 %v4063, %v5197
    %v5199 = vpop.f32.mrb[0].mxu0
    %v5200 = vadd.f32 %v4064, %v5199
    %5201 = vmatprep.mubr.bf16.mxu0 %v571
    %5202 = vmatmul.mubr.bf16.gmra.mrb[0].mxu0 %v570
    %v5203 = vpop.f32.mrb[0].mxu0
    %v5204 = vadd.f32 %v4059, %v5203
    %v5205 = vpop.f32.mrb[0].mxu0
    %v5206 = vadd.f32 %v4060, %v5205
    %v5207 = vpop.f32.mrb[0].mxu0
    %v5208 = vadd.f32 %v4055, %v5207
    %v5209 = vpop.f32.mrb[0].mxu0
    %v5210 = vadd.f32 %v4056, %v5209
    %5211 = vmatprep.mubr.bf16.mxu0 %v574
    %5212 = vmatmul.mubr.bf16.gmra.mrb[0].mxu0 %v573
    %v5213 = vpop.f32.mrb[0].mxu0
    %v5214 = vadd.f32 %v4051, %v5213
    %v5215 = vpop.f32.mrb[0].mxu0
    %v5216 = vadd.f32 %v4052, %v5215
    %v5217 = vpop.f32.mrb[0].mxu0
    %v5218 = vadd.f32 %v4047, %v5217
    %v5219 = vpop.f32.mrb[0].mxu0
    %v5220 = vadd.f32 %v4048, %v5219
    %5221 = vmatprep.mubr.bf16.mxu0 %v577
    %5222 = vmatmul.mubr.bf16.gmra.mrb[0].mxu0 %v576
    %v5223 = vpop.f32.mrb[0].mxu0
    %v5224 = vadd.f32 %v4043, %v5223
    %v5225 = vpop.f32.mrb[0].mxu0
    %v5226 = vadd.f32 %v4044, %v5225
    %v5227 = vpop.f32.mrb[0].mxu0
    %v5228 = vadd.f32 %v4039, %v5227
    %v5229 = vpop.f32.mrb[0].mxu0
    %v5230 = vadd.f32 %v4040, %v5229
    %5231 = vmatprep.mubr.bf16.mxu0 %v580
    %5232 = vmatmul.mubr.bf16.gmra.mrb[0].mxu0 %v579
    %v5233 = vpop.f32.mrb[0].mxu0
    %v5234 = vadd.f32 %v4035, %v5233
    %v5235 = vpop.f32.mrb[0].mxu0
    %v5236 = vadd.f32 %v4036, %v5235
    %v5237 = vpop.f32.mrb[0].mxu0
    %v5238 = vadd.f32 %v4031, %v5237
    %v5239 = vpop.f32.mrb[0].mxu0
    %v5240 = vadd.f32 %v4032, %v5239
    %5241 = vmatprep.mubr.bf16.mxu0 %v583
    %5242 = vmatmul.mubr.bf16.gmra.mrb[0].mxu0 %v582
    %v5243 = vpop.f32.mrb[0].mxu0
    %v5244 = vadd.f32 %v4027, %v5243
    %v5245 = vpop.f32.mrb[0].mxu0
    %v5246 = vadd.f32 %v4028, %v5245
    %v5247 = vpop.f32.mrb[0].mxu0
    %v5248 = vadd.f32 %v4023, %v5247
    %v5249 = vpop.f32.mrb[0].mxu0
    %v5250 = vadd.f32 %v4024, %v5249
    %5251 = vmatprep.mubr.bf16.mxu0 %v586
    %5252 = vmatmul.mubr.bf16.gmra.mrb[0].mxu0 %v585
    %v5253 = vpop.f32.mrb[0].mxu0
    %v5254 = vadd.f32 %v4019, %v5253
    %v5255 = vpop.f32.mrb[0].mxu0
    %v5256 = vadd.f32 %v4020, %v5255
    %v5257 = vpop.f32.mrb[0].mxu0
    %v5258 = vadd.f32 %v4015, %v5257
    %v5259 = vpop.f32.mrb[0].mxu0
    %v5260 = vadd.f32 %v4016, %v5259
    %5261 = vmatprep.mubr.bf16.mxu0 %v589
    %5262 = vmatmul.mubr.bf16.gmra.mrb[0].mxu0 %v588
    %v5263 = vpop.f32.mrb[0].mxu0
    %v5264 = vadd.f32 %v4011, %v5263
    %v5265 = vpop.f32.mrb[0].mxu0
    %v5266 = vadd.f32 %v4012, %v5265
    %v5267 = vpop.f32.mrb[0].mxu0
    %v5268 = vadd.f32 %v4007, %v5267
    %v5269 = vpop.f32.mrb[0].mxu0
    %v5270 = vadd.f32 %v4008, %v5269
    %5271 = vmatprep.mubr.bf16.mxu0 %v592
    %5272 = vmatmul.mubr.bf16.gmra.mrb[0].mxu0 %v591
    %v5273 = vpop.f32.mrb[0].mxu0
    %v5274 = vadd.f32 %v4003, %v5273
    %v5275 = vpop.f32.mrb[0].mxu0
    %v5276 = vadd.f32 %v4004, %v5275
    %v5277 = vpop.f32.mrb[0].mxu0
    %v5278 = vadd.f32 %v3999, %v5277
    %v5279 = vpop.f32.mrb[0].mxu0
    %v5280 = vadd.f32 %v4000, %v5279
    %5281 = vmatprep.mubr.bf16.mxu0 %v595
    %5282 = vmatmul.mubr.bf16.gmra.mrb[0].mxu0 %v594
    %v5283 = vpop.f32.mrb[0].mxu0
    %v5284 = vadd.f32 %v3995, %v5283
    %v5285 = vpop.f32.mrb[0].mxu0
    %v5286 = vadd.f32 %v3996, %v5285
    %v5287 = vpop.f32.mrb[0].mxu0
    %v5288 = vadd.f32 %v3991, %v5287
    %v5289 = vpop.f32.mrb[0].mxu0
    %v5290 = vadd.f32 %v3992, %v5289
    %5291 = vmatprep.mubr.bf16.mxu0 %v598
    %5292 = vmatmul.mubr.bf16.gmra.mrb[0].mxu0 %v597
    %v5293 = vpop.f32.mrb[0].mxu0
    %v5294 = vadd.f32 %v3987, %v5293
    %v5295 = vpop.f32.mrb[0].mxu0
    %v5296 = vadd.f32 %v3988, %v5295
    %v5297 = vpop.f32.mrb[0].mxu0
    %v5298 = vadd.f32 %v3983, %v5297
    %v5299 = vpop.f32.mrb[0].mxu0
    %v5300 = vadd.f32 %v3984, %v5299
    %5301 = vmatprep.mubr.bf16.mxu0 %v601
    %5302 = vmatmul.mubr.bf16.gmra.mrb[0].mxu0 %v600
    %v5303 = vpop.f32.mrb[0].mxu0
    %v5304 = vadd.f32 %v3979, %v5303
    %v5305 = vpop.f32.mrb[0].mxu0
    %v5306 = vadd.f32 %v3980, %v5305
    %v5307 = vpop.f32.mrb[0].mxu0
    %v5308 = vadd.f32 %v3975, %v5307
    %v5309 = vpop.f32.mrb[0].mxu0
    %v5310 = vadd.f32 %v3976, %v5309
    %5311 = vmatprep.mubr.bf16.mxu0 %v604
    %5312 = vmatmul.mubr.bf16.gmra.mrb[0].mxu0 %v603
    %v5313 = vpop.f32.mrb[0].mxu0
    %v5314 = vadd.f32 %v3971, %v5313
    %v5315 = vpop.f32.mrb[0].mxu0
    %v5316 = vadd.f32 %v3972, %v5315
    %v5317 = vpop.f32.mrb[0].mxu0
    %v5318 = vadd.f32 %v3967, %v5317
    %v5319 = vpop.f32.mrb[0].mxu0
    %v5320 = vadd.f32 %v3968, %v5319
    %5321 = vmatprep.mubr.bf16.mxu0 %v607
    %5322 = vmatmul.mubr.bf16.gmra.mrb[0].mxu0 %v606
    %v5323 = vpop.f32.mrb[0].mxu0
    %v5324 = vadd.f32 %v3963, %v5323
    %v5325 = vpop.f32.mrb[0].mxu0
    %v5326 = vadd.f32 %v3964, %v5325
    %v5327 = vpop.f32.mrb[0].mxu0
    %v5328 = vadd.f32 %v3959, %v5327
    %v5329 = vpop.f32.mrb[0].mxu0
    %v5330 = vadd.f32 %v3960, %v5329
    %5331 = vmatprep.mubr.bf16.mxu0 %v610
    %5332 = vmatmul.mubr.bf16.gmra.mrb[0].mxu0 %v609
    %v5333 = vpop.f32.mrb[0].mxu0
    %v5334 = vadd.f32 %v3955, %v5333
    %v5335 = vpop.f32.mrb[0].mxu0
    %v5336 = vadd.f32 %v3956, %v5335
    %v5337 = vpop.f32.mrb[0].mxu0
    %v5338 = vadd.f32 %v4151, %v5337
    %v5339 = vpop.f32.mrb[0].mxu0
    %v5340 = vadd.f32 %v4152, %v5339
    %5341 = vdwg.mxu0
    %5342 = vmatprep.subr.bf16.mxu0 %v4424
    %5343 = vmatpush1.bf16.msra.mxu0 %v4423
    %5344 = vmatprep.subr.bf16.mxu0 0
    %5345 = vmatpush1.bf16.msra.mxu0 0
    %5346 = vmatprep.subr.bf16.mxu0 0
    %5347 = vmatpush1.bf16.msra.mxu0 0
    %5348 = vmatprep.subr.bf16.mxu0 0
    %5349 = vmatpush1.bf16.msra.mxu0 0
    %5350 = vmatprep.subr.bf16.mxu0 0
    %5351 = vmatpush1.bf16.msra.mxu0 0
    %5352 = vmatprep.subr.bf16.mxu0 0
    %5353 = vmatpush1.bf16.msra.mxu0 0
    %5354 = vmatprep.subr.bf16.mxu0 0
    %5355 = vmatpush1.bf16.msra.mxu0 0
    %5356 = vmatprep.subr.bf16.mxu0 0
    %5357 = vmatpush1.bf16.msra.mxu0 0
    %5358 = vmatprep.subr.bf16.mxu0 0
    %5359 = vmatpush1.bf16.msra.mxu0 0
    %5360 = vmatprep.subr.bf16.mxu0 0
    %5361 = vmatpush1.bf16.msra.mxu0 0
    %5362 = vmatprep.subr.bf16.mxu0 0
    %5363 = vmatpush1.bf16.msra.mxu0 0
    %5364 = vmatprep.subr.bf16.mxu0 0
    %5365 = vmatpush1.bf16.msra.mxu0 0
    %5366 = vmatprep.subr.bf16.mxu0 0
    %5367 = vmatpush1.bf16.msra.mxu0 0
    %5368 = vmatprep.subr.bf16.mxu0 0
    %5369 = vmatpush1.bf16.msra.mxu0 0
    %5370 = vmatprep.subr.bf16.mxu0 0
    %5371 = vmatpush1.bf16.msra.mxu0 0
    %5372 = vmatprep.subr.bf16.mxu0 0
    %5373 = vmatpush1.bf16.msra.mxu0 0
    %5374 = vmatprep.mubr.bf16.mxu0 0
    %5375 = vmatmul.mubr.bf16.gmra.mrb[0].mxu0 %v1004
    %v5376 = vpop.f32.mrb[0].mxu0
    %v5377 = vadd.f32 %v5094, %v5376
    %v5378 = vpop.f32.mrb[0].mxu0
    %v5379 = vadd.f32 %v5096, %v5378
    %v5380 = vpop.f32.mrb[0].mxu0
    %v5381 = vadd.f32 %v5098, %v5380
    %v5382 = vpop.f32.mrb[0].mxu0
    %v5383 = vadd.f32 %v5100, %v5382
    %5384 = vmatprep.mubr.bf16.mxu0 0
    %5385 = vmatmul.mubr.bf16.gmra.mrb[0].mxu0 %v1007
    %v5386 = vpop.f32.mrb[0].mxu0
    %v5387 = vadd.f32 %v5104, %v5386
    %v5388 = vpop.f32.mrb[0].mxu0
    %v5389 = vadd.f32 %v5106, %v5388
    %v5390 = vpop.f32.mrb[0].mxu0
    %v5391 = vadd.f32 %v5108, %v5390
    %v5392 = vpop.f32.mrb[0].mxu0
    %v5393 = vadd.f32 %v5110, %v5392
    %5394 = vmatprep.mubr.bf16.mxu0 0
    %5395 = vmatmul.mubr.bf16.gmra.mrb[0].mxu0 %v1010
    %v5396 = vpop.f32.mrb[0].mxu0
    %v5397 = vadd.f32 %v5114, %v5396
    %v5398 = vpop.f32.mrb[0].mxu0
    %v5399 = vadd.f32 %v5116, %v5398
    %v5400 = vpop.f32.mrb[0].mxu0
    %v5401 = vadd.f32 %v5118, %v5400
    %v5402 = vpop.f32.mrb[0].mxu0
    %v5403 = vadd.f32 %v5120, %v5402
    %5404 = vmatprep.mubr.bf16.mxu0 0
    %5405 = vmatmul.mubr.bf16.gmra.mrb[0].mxu0 %v1013
    %v5406 = vpop.f32.mrb[0].mxu0
    %v5407 = vadd.f32 %v5124, %v5406
    %v5408 = vpop.f32.mrb[0].mxu0
    %v5409 = vadd.f32 %v5126, %v5408
    %v5410 = vpop.f32.mrb[0].mxu0
    %v5411 = vadd.f32 %v5128, %v5410
    %v5412 = vpop.f32.mrb[0].mxu0
    %v5413 = vadd.f32 %v5130, %v5412
    %5414 = vmatprep.mubr.bf16.mxu0 0
    %5415 = vmatmul.mubr.bf16.gmra.mrb[0].mxu0 %v1016
    %v5416 = vpop.f32.mrb[0].mxu0
    %v5417 = vadd.f32 %v5134, %v5416
    %v5418 = vpop.f32.mrb[0].mxu0
    %v5419 = vadd.f32 %v5136, %v5418
    %v5420 = vpop.f32.mrb[0].mxu0
    %v5421 = vadd.f32 %v5138, %v5420
    %v5422 = vpop.f32.mrb[0].mxu0
    %v5423 = vadd.f32 %v5140, %v5422
    %5424 = vmatprep.mubr.bf16.mxu0 0
    %5425 = vmatmul.mubr.bf16.gmra.mrb[0].mxu0 %v1019
    %v5426 = vpop.f32.mrb[0].mxu0
    %v5427 = vadd.f32 %v5144, %v5426
    %v5428 = vpop.f32.mrb[0].mxu0
    %v5429 = vadd.f32 %v5146, %v5428
    %v5430 = vpop.f32.mrb[0].mxu0
    %v5431 = vadd.f32 %v5148, %v5430
    %v5432 = vpop.f32.mrb[0].mxu0
    %v5433 = vadd.f32 %v5150, %v5432
    %5434 = vmatprep.mubr.bf16.mxu0 0
    %5435 = vmatmul.mubr.bf16.gmra.mrb[0].mxu0 %v1022
    %v5436 = vpop.f32.mrb[0].mxu0
    %v5437 = vadd.f32 %v5154, %v5436
    %v5438 = vpop.f32.mrb[0].mxu0
    %v5439 = vadd.f32 %v5156, %v5438
    %v5440 = vpop.f32.mrb[0].mxu0
    %v5441 = vadd.f32 %v5158, %v5440
    %v5442 = vpop.f32.mrb[0].mxu0
    %v5443 = vadd.f32 %v5160, %v5442
    %5444 = vmatprep.mubr.bf16.mxu0 0
    %5445 = vmatmul.mubr.bf16.gmra.mrb[0].mxu0 %v1025
    %v5446 = vpop.f32.mrb[0].mxu0
    %v5447 = vadd.f32 %v5164, %v5446
    %v5448 = vpop.f32.mrb[0].mxu0
    %v5449 = vadd.f32 %v5166, %v5448
    %v5450 = vpop.f32.mrb[0].mxu0
    %v5451 = vadd.f32 %v5168, %v5450
    %v5452 = vpop.f32.mrb[0].mxu0
    %v5453 = vadd.f32 %v5170, %v5452
    %5454 = vmatprep.mubr.bf16.mxu0 0
    %5455 = vmatmul.mubr.bf16.gmra.mrb[0].mxu0 %v1028
    %v5456 = vpop.f32.mrb[0].mxu0
    %v5457 = vadd.f32 %v5174, %v5456
    %v5458 = vpop.f32.mrb[0].mxu0
    %v5459 = vadd.f32 %v5176, %v5458
    %v5460 = vpop.f32.mrb[0].mxu0
    %v5461 = vadd.f32 %v5178, %v5460
    %v5462 = vpop.f32.mrb[0].mxu0
    %v5463 = vadd.f32 %v5180, %v5462
    %5464 = vmatprep.mubr.bf16.mxu0 0
    %5465 = vmatmul.mubr.bf16.gmra.mrb[0].mxu0 %v1031
    %v5466 = vpop.f32.mrb[0].mxu0
    %v5467 = vadd.f32 %v5184, %v5466
    %v5468 = vpop.f32.mrb[0].mxu0
    %v5469 = vadd.f32 %v5186, %v5468
    %v5470 = vpop.f32.mrb[0].mxu0
    %v5471 = vadd.f32 %v5188, %v5470
    %v5472 = vpop.f32.mrb[0].mxu0
    %v5473 = vadd.f32 %v5190, %v5472
    %5474 = vmatprep.mubr.bf16.mxu0 0
    %5475 = vmatmul.mubr.bf16.gmra.mrb[0].mxu0 %v1034
    %v5476 = vpop.f32.mrb[0].mxu0
    %v5477 = vadd.f32 %v5194, %v5476
    %v5478 = vpop.f32.mrb[0].mxu0
    %v5479 = vadd.f32 %v5196, %v5478
    %v5480 = vpop.f32.mrb[0].mxu0
    %v5481 = vadd.f32 %v5198, %v5480
    %v5482 = vpop.f32.mrb[0].mxu0
    %v5483 = vadd.f32 %v5200, %v5482
    %5484 = vmatprep.mubr.bf16.mxu0 0
    %5485 = vmatmul.mubr.bf16.gmra.mrb[0].mxu0 %v1037
    %v5486 = vpop.f32.mrb[0].mxu0
    %v5487 = vadd.f32 %v5204, %v5486
    %v5488 = vpop.f32.mrb[0].mxu0
    %v5489 = vadd.f32 %v5206, %v5488
    %v5490 = vpop.f32.mrb[0].mxu0
    %v5491 = vadd.f32 %v5208, %v5490
    %v5492 = vpop.f32.mrb[0].mxu0
    %v5493 = vadd.f32 %v5210, %v5492
    %5494 = vmatprep.mubr.bf16.mxu0 0
    %5495 = vmatmul.mubr.bf16.gmra.mrb[0].mxu0 %v1040
    %v5496 = vpop.f32.mrb[0].mxu0
    %v5497 = vadd.f32 %v5214, %v5496
    %v5498 = vpop.f32.mrb[0].mxu0
    %v5499 = vadd.f32 %v5216, %v5498
    %v5500 = vpop.f32.mrb[0].mxu0
    %v5501 = vadd.f32 %v5218, %v5500
    %v5502 = vpop.f32.mrb[0].mxu0
    %v5503 = vadd.f32 %v5220, %v5502
    %5504 = vmatprep.mubr.bf16.mxu0 0
    %5505 = vmatmul.mubr.bf16.gmra.mrb[0].mxu0 %v1043
    %v5506 = vpop.f32.mrb[0].mxu0
    %v5507 = vadd.f32 %v5224, %v5506
    %v5508 = vpop.f32.mrb[0].mxu0
    %v5509 = vadd.f32 %v5226, %v5508
    %v5510 = vpop.f32.mrb[0].mxu0
    %v5511 = vadd.f32 %v5228, %v5510
    %v5512 = vpop.f32.mrb[0].mxu0
    %v5513 = vadd.f32 %v5230, %v5512
    %5514 = vmatprep.mubr.bf16.mxu0 0
    %5515 = vmatmul.mubr.bf16.gmra.mrb[0].mxu0 %v1046
    %v5516 = vpop.f32.mrb[0].mxu0
    %v5517 = vadd.f32 %v5234, %v5516
    %v5518 = vpop.f32.mrb[0].mxu0
    %v5519 = vadd.f32 %v5236, %v5518
    %v5520 = vpop.f32.mrb[0].mxu0
    %v5521 = vadd.f32 %v5238, %v5520
    %v5522 = vpop.f32.mrb[0].mxu0
    %v5523 = vadd.f32 %v5240, %v5522
    %5524 = vmatprep.mubr.bf16.mxu0 0
    %5525 = vmatmul.mubr.bf16.gmra.mrb[0].mxu0 %v1049
    %v5526 = vpop.f32.mrb[0].mxu0
    %v5527 = vadd.f32 %v5244, %v5526
    %v5528 = vpop.f32.mrb[0].mxu0
    %v5529 = vadd.f32 %v5246, %v5528
    %v5530 = vpop.f32.mrb[0].mxu0
    %v5531 = vadd.f32 %v5248, %v5530
    %v5532 = vpop.f32.mrb[0].mxu0
    %v5533 = vadd.f32 %v5250, %v5532
    %5534 = vmatprep.mubr.bf16.mxu0 0
    %5535 = vmatmul.mubr.bf16.gmra.mrb[0].mxu0 %v1052
    %v5536 = vpop.f32.mrb[0].mxu0
    %v5537 = vadd.f32 %v5254, %v5536
    %v5538 = vpop.f32.mrb[0].mxu0
    %v5539 = vadd.f32 %v5256, %v5538
    %v5540 = vpop.f32.mrb[0].mxu0
    %v5541 = vadd.f32 %v5258, %v5540
    %v5542 = vpop.f32.mrb[0].mxu0
    %v5543 = vadd.f32 %v5260, %v5542
    %5544 = vmatprep.mubr.bf16.mxu0 0
    %5545 = vmatmul.mubr.bf16.gmra.mrb[0].mxu0 %v1055
    %v5546 = vpop.f32.mrb[0].mxu0
    %v5547 = vadd.f32 %v5264, %v5546
    %v5548 = vpop.f32.mrb[0].mxu0
    %v5549 = vadd.f32 %v5266, %v5548
    %v5550 = vpop.f32.mrb[0].mxu0
    %v5551 = vadd.f32 %v5268, %v5550
    %v5552 = vpop.f32.mrb[0].mxu0
    %v5553 = vadd.f32 %v5270, %v5552
    %5554 = vmatprep.mubr.bf16.mxu0 0
    %5555 = vmatmul.mubr.bf16.gmra.mrb[0].mxu0 %v1058
    %v5556 = vpop.f32.mrb[0].mxu0
    %v5557 = vadd.f32 %v5274, %v5556
    %v5558 = vpop.f32.mrb[0].mxu0
    %v5559 = vadd.f32 %v5276, %v5558
    %v5560 = vpop.f32.mrb[0].mxu0
    %v5561 = vadd.f32 %v5278, %v5560
    %v5562 = vpop.f32.mrb[0].mxu0
    %v5563 = vadd.f32 %v5280, %v5562
    %5564 = vmatprep.mubr.bf16.mxu0 0
    %5565 = vmatmul.mubr.bf16.gmra.mrb[0].mxu0 %v1061
    %v5566 = vpop.f32.mrb[0].mxu0
    %v5567 = vadd.f32 %v5284, %v5566
    %v5568 = vpop.f32.mrb[0].mxu0
    %v5569 = vadd.f32 %v5286, %v5568
    %v5570 = vpop.f32.mrb[0].mxu0
    %v5571 = vadd.f32 %v5288, %v5570
    %v5572 = vpop.f32.mrb[0].mxu0
    %v5573 = vadd.f32 %v5290, %v5572
    %5574 = vmatprep.mubr.bf16.mxu0 0
    %5575 = vmatmul.mubr.bf16.gmra.mrb[0].mxu0 %v1064
    %v5576 = vpop.f32.mrb[0].mxu0
    %v5577 = vadd.f32 %v5294, %v5576
    %v5578 = vpop.f32.mrb[0].mxu0
    %v5579 = vadd.f32 %v5296, %v5578
    %v5580 = vpop.f32.mrb[0].mxu0
    %v5581 = vadd.f32 %v5298, %v5580
    %v5582 = vpop.f32.mrb[0].mxu0
    %v5583 = vadd.f32 %v5300, %v5582
    %5584 = vmatprep.mubr.bf16.mxu0 0
    %5585 = vmatmul.mubr.bf16.gmra.mrb[0].mxu0 %v1067
    %v5586 = vpop.f32.mrb[0].mxu0
    %v5587 = vadd.f32 %v5304, %v5586
    %v5588 = vpop.f32.mrb[0].mxu0
    %v5589 = vadd.f32 %v5306, %v5588
    %v5590 = vpop.f32.mrb[0].mxu0
    %v5591 = vadd.f32 %v5308, %v5590
    %v5592 = vpop.f32.mrb[0].mxu0
    %v5593 = vadd.f32 %v5310, %v5592
    %5594 = vmatprep.mubr.bf16.mxu0 0
    %5595 = vmatmul.mubr.bf16.gmra.mrb[0].mxu0 %v1070
    %v5596 = vpop.f32.mrb[0].mxu0
    %v5597 = vadd.f32 %v5314, %v5596
    %v5598 = vpop.f32.mrb[0].mxu0
    %v5599 = vadd.f32 %v5316, %v5598
    %v5600 = vpop.f32.mrb[0].mxu0
    %v5601 = vadd.f32 %v5318, %v5600
    %v5602 = vpop.f32.mrb[0].mxu0
    %v5603 = vadd.f32 %v5320, %v5602
    %5604 = vmatprep.mubr.bf16.mxu0 0
    %5605 = vmatmul.mubr.bf16.gmra.mrb[0].mxu0 %v1073
    %v5606 = vpop.f32.mrb[0].mxu0
    %v5607 = vadd.f32 %v5324, %v5606
    %v5608 = vpop.f32.mrb[0].mxu0
    %v5609 = vadd.f32 %v5326, %v5608
    %v5610 = vpop.f32.mrb[0].mxu0
    %v5611 = vadd.f32 %v5328, %v5610
    %v5612 = vpop.f32.mrb[0].mxu0
    %v5613 = vadd.f32 %v5330, %v5612
    %5614 = vmatprep.mubr.bf16.mxu0 0
    %5615 = vmatmul.mubr.bf16.gmra.mrb[0].mxu0 %v1076
    %v5616 = vpop.f32.mrb[0].mxu0
    %v5617 = vadd.f32 %v5334, %v5616
    %v5618 = vpop.f32.mrb[0].mxu0
    %v5619 = vadd.f32 %v5336, %v5618
    %v5620 = vpop.f32.mrb[0].mxu0
    %v5621 = vadd.f32 %v5338, %v5620
    %v5622 = vpop.f32.mrb[0].mxu0
    %v5623 = vadd.f32 %v5340, %v5622
    %5624 = vdwg.mxu0
    %v5625 = vrot.slane %v2936, 2
    %v5626 = vrot.slane %v2938, 2
    %v5627 = vrot.slane %v3502, 2
    %v5628 = vrot.slane %v3504, 2
    %v5629 = vrot.slane %v2940, 2
    %v5630 = vrot.slane %v2942, 2
    %v5631 = vrot.slane %v3506, 2
    %v5632 = vrot.slane %v3508, 2
    %v5633 = vrot.slane %v2946, 2
    %v5634 = vrot.slane %v2948, 2
    %v5635 = vrot.slane %v3512, 2
    %v5636 = vrot.slane %v3514, 2
    %v5637 = vrot.slane %v2950, 2
    %v5638 = vrot.slane %v2952, 2
    %v5639 = vrot.slane %v3516, 2
    %v5640 = vrot.slane %v3518, 2
    %v5641 = vrot.slane %v2956, 2
    %v5642 = vrot.slane %v2958, 2
    %v5643 = vrot.slane %v3522, 2
    %v5644 = vrot.slane %v3524, 2
    %v5645 = vrot.slane %v2960, 2
    %v5646 = vrot.slane %v2962, 2
    %v5647 = vrot.slane %v3526, 2
    %v5648 = vrot.slane %v3528, 2
    %v5649 = vrot.slane %v2966, 2
    %v5650 = vrot.slane %v2968, 2
    %v5651 = vrot.slane %v3532, 2
    %v5652 = vrot.slane %v3534, 2
    %v5653 = vrot.slane %v2970, 2
    %v5654 = vrot.slane %v2972, 2
    %v5655 = vrot.slane %v3536, 2
    %v5656 = vrot.slane %v3538, 2
    %v5657 = vrot.slane %v2976, 2
    %v5658 = vrot.slane %v2978, 2
    %v5659 = vrot.slane %v3542, 2
    %v5660 = vrot.slane %v3544, 2
    %v5661 = vrot.slane %v2980, 2
    %v5662 = vrot.slane %v2982, 2
    %v5663 = vrot.slane %v3546, 2
    %v5664 = vrot.slane %v3548, 2
    %v5665 = vrot.slane %v2986, 2
    %v5666 = vrot.slane %v2988, 2
    %v5667 = vrot.slane %v3552, 2
    %v5668 = vrot.slane %v3554, 2
    %v5669 = vrot.slane %v2990, 2
    %v5670 = vrot.slane %v2992, 2
    %v5671 = vrot.slane %v3556, 2
    %v5672 = vrot.slane %v3558, 2
    %v5673 = vrot.slane %v2996, 2
    %v5674 = vrot.slane %v2998, 2
    %v5675 = vrot.slane %v3562, 2
    %v5676 = vrot.slane %v3564, 2
    %v5677 = vrot.slane %v3000, 2
    %v5678 = vrot.slane %v3002, 2
    %v5679 = vrot.slane %v3566, 2
    %v5680 = vrot.slane %v3568, 2
    %v5681 = vrot.slane %v3006, 2
    %v5682 = vrot.slane %v3008, 2
    %v5683 = vrot.slane %v3572, 2
    %v5684 = vrot.slane %v3574, 2
    %v5685 = vrot.slane %v3010, 2
    %v5686 = vrot.slane %v3012, 2
    %v5687 = vrot.slane %v3576, 2
    %v5688 = vrot.slane %v3578, 2
    %v5689 = vrot.slane %v3016, 2
    %v5690 = vrot.slane %v3018, 2
    %v5691 = vrot.slane %v3582, 2
    %v5692 = vrot.slane %v3584, 2
    %v5693 = vrot.slane %v3020, 2
    %v5694 = vrot.slane %v3022, 2
    %v5695 = vrot.slane %v3586, 2
    %v5696 = vrot.slane %v3588, 2
    %v5697 = vrot.slane %v3026, 2
    %v5698 = vrot.slane %v3028, 2
    %v5699 = vrot.slane %v3592, 2
    %v5700 = vrot.slane %v3594, 2
    %v5701 = vrot.slane %v3030, 2
    %v5702 = vrot.slane %v3032, 2
    %v5703 = vrot.slane %v3596, 2
    %v5704 = vrot.slane %v3598, 2
    %v5705 = vrot.slane %v3036, 2
    %v5706 = vrot.slane %v3038, 2
    %v5707 = vrot.slane %v3602, 2
    %v5708 = vrot.slane %v3604, 2
    %v5709 = vrot.slane %v3040, 2
    %v5710 = vrot.slane %v3042, 2
    %v5711 = vrot.slane %v3606, 2
    %v5712 = vrot.slane %v3608, 2
    %v5713 = vrot.slane %v3046, 2
    %v5714 = vrot.slane %v3048, 2
    %v5715 = vrot.slane %v3612, 2
    %v5716 = vrot.slane %v3614, 2
    %v5717 = vrot.slane %v3050, 2
    %v5718 = vrot.slane %v3052, 2
    %v5719 = vrot.slane %v3616, 2
    %v5720 = vrot.slane %v3618, 2
    %v5721 = vrot.slane %v3056, 2
    %v5722 = vrot.slane %v3058, 2
    %v5723 = vrot.slane %v3622, 2
    %v5724 = vrot.slane %v3624, 2
    %v5725 = vrot.slane %v3060, 2
    %v5726 = vrot.slane %v3062, 2
    %v5727 = vrot.slane %v3626, 2
    %v5728 = vrot.slane %v3628, 2
    %v5729 = vrot.slane %v3066, 2
    %v5730 = vrot.slane %v3068, 2
    %v5731 = vrot.slane %v3632, 2
    %v5732 = vrot.slane %v3634, 2
    %v5733 = vrot.slane %v3070, 2
    %v5734 = vrot.slane %v3072, 2
    %v5735 = vrot.slane %v3636, 2
    %v5736 = vrot.slane %v3638, 2
    %v5737 = vrot.slane %v3076, 2
    %v5738 = vrot.slane %v3078, 2
    %v5739 = vrot.slane %v3642, 2
    %v5740 = vrot.slane %v3644, 2
    %v5741 = vrot.slane %v3080, 2
    %v5742 = vrot.slane %v3082, 2
    %v5743 = vrot.slane %v3646, 2
    %v5744 = vrot.slane %v3648, 2
    %v5745 = vrot.slane %v3086, 2
    %v5746 = vrot.slane %v3088, 2
    %v5747 = vrot.slane %v3652, 2
    %v5748 = vrot.slane %v3654, 2
    %v5749 = vrot.slane %v3090, 2
    %v5750 = vrot.slane %v3092, 2
    %v5751 = vrot.slane %v3656, 2
    %v5752 = vrot.slane %v3658, 2
    %v5753 = vrot.slane %v3096, 2
    %v5754 = vrot.slane %v3098, 2
    %v5755 = vrot.slane %v3662, 2
    %v5756 = vrot.slane %v3664, 2
    %v5757 = vrot.slane %v3100, 2
    %v5758 = vrot.slane %v3102, 2
    %v5759 = vrot.slane %v3666, 2
    %v5760 = vrot.slane %v3668, 2
    %v5761 = vrot.slane %v3106, 2
    %v5762 = vrot.slane %v3108, 2
    %v5763 = vrot.slane %v3672, 2
    %v5764 = vrot.slane %v3674, 2
    %v5765 = vrot.slane %v3110, 2
    %v5766 = vrot.slane %v3112, 2
    %v5767 = vrot.slane %v3676, 2
    %v5768 = vrot.slane %v3678, 2
    %v5769 = vrot.slane %v3116, 2
    %v5770 = vrot.slane %v3118, 2
    %v5771 = vrot.slane %v3682, 2
    %v5772 = vrot.slane %v3684, 2
    %v5773 = vrot.slane %v3120, 2
    %v5774 = vrot.slane %v3122, 2
    %v5775 = vrot.slane %v3686, 2
    %v5776 = vrot.slane %v3688, 2
    %v5777 = vrot.slane %v3126, 2
    %v5778 = vrot.slane %v3128, 2
    %v5779 = vrot.slane %v3692, 2
    %v5780 = vrot.slane %v3694, 2
    %v5781 = vrot.slane %v3130, 2
    %v5782 = vrot.slane %v3132, 2
    %v5783 = vrot.slane %v3696, 2
    %v5784 = vrot.slane %v3698, 2
    %v5785 = vrot.slane %v3136, 2
    %v5786 = vrot.slane %v3138, 2
    %v5787 = vrot.slane %v3702, 2
    %v5788 = vrot.slane %v3704, 2
    %v5789 = vrot.slane %v3140, 2
    %v5790 = vrot.slane %v3142, 2
    %v5791 = vrot.slane %v3706, 2
    %v5792 = vrot.slane %v3708, 2
    %v5793 = vrot.slane %v3146, 2
    %v5794 = vrot.slane %v3148, 2
    %v5795 = vrot.slane %v3712, 2
    %v5796 = vrot.slane %v3714, 2
    %v5797 = vrot.slane %v3150, 2
    %v5798 = vrot.slane %v3152, 2
    %v5799 = vrot.slane %v3716, 2
    %v5800 = vrot.slane %v3718, 2
    %v5801 = vrot.slane %v3156, 2
    %v5802 = vrot.slane %v3158, 2
    %v5803 = vrot.slane %v3722, 2
    %v5804 = vrot.slane %v3724, 2
    %v5805 = vrot.slane %v3160, 2
    %v5806 = vrot.slane %v3162, 2
    %v5807 = vrot.slane %v3726, 2
    %v5808 = vrot.slane %v3728, 2
    %v5809 = vrot.slane %v3166, 2
    %v5810 = vrot.slane %v3168, 2
    %v5811 = vrot.slane %v3732, 2
    %v5812 = vrot.slane %v3734, 2
    %v5813 = vrot.slane %v3170, 2
    %v5814 = vrot.slane %v3172, 2
    %v5815 = vrot.slane %v3736, 2
    %v5816 = vrot.slane %v3738, 2
    %v5817 = vrot.slane %v3176, 2
    %v5818 = vrot.slane %v3178, 2
    %v5819 = vrot.slane %v3742, 2
    %v5820 = vrot.slane %v3744, 2
    %v5821 = vrot.slane %v3180, 2
    %v5822 = vrot.slane %v3182, 2
    %v5823 = vrot.slane %v3746, 2
    %v5824 = vrot.slane %v3748, 2
    %vm5825 = vcmp.lt.s32.totalorder %v3951, 6
    %v5826 = vsel %vm5825, %v5817, %v5821
    %v5827 = vsel %vm5825, %v5818, %v5822
    %v5828 = vsel %vm5825, %v5819, %v5823
    %v5829 = vsel %vm5825, %v5820, %v5824
    %v5830 = vsel %vm5825, %v5813, %v5817
    %v5831 = vsel %vm5825, %v5814, %v5818
    %v5832 = vsel %vm5825, %v5815, %v5819
    %v5833 = vsel %vm5825, %v5816, %v5820
    %v5834 = vsel %vm5825, %v5809, %v5813
    %v5835 = vsel %vm5825, %v5810, %v5814
    %v5836 = vsel %vm5825, %v5811, %v5815
    %v5837 = vsel %vm5825, %v5812, %v5816
    %v5838 = vsel %vm5825, %v5805, %v5809
    %v5839 = vsel %vm5825, %v5806, %v5810
    %v5840 = vsel %vm5825, %v5807, %v5811
    %v5841 = vsel %vm5825, %v5808, %v5812
    %v5842 = vsel %vm5825, %v5801, %v5805
    %v5843 = vsel %vm5825, %v5802, %v5806
    %v5844 = vsel %vm5825, %v5803, %v5807
    %v5845 = vsel %vm5825, %v5804, %v5808
    %v5846 = vsel %vm5825, %v5797, %v5801
    %v5847 = vsel %vm5825, %v5798, %v5802
    %v5848 = vsel %vm5825, %v5799, %v5803
    %v5849 = vsel %vm5825, %v5800, %v5804
    %v5850 = vsel %vm5825, %v5793, %v5797
    %v5851 = vsel %vm5825, %v5794, %v5798
    %v5852 = vsel %vm5825, %v5795, %v5799
    %v5853 = vsel %vm5825, %v5796, %v5800
    %v5854 = vsel %vm5825, %v5789, %v5793
    %v5855 = vsel %vm5825, %v5790, %v5794
    %v5856 = vsel %vm5825, %v5791, %v5795
    %v5857 = vsel %vm5825, %v5792, %v5796
    %v5858 = vsel %vm5825, %v5785, %v5789
    %v5859 = vsel %vm5825, %v5786, %v5790
    %v5860 = vsel %vm5825, %v5787, %v5791
    %v5861 = vsel %vm5825, %v5788, %v5792
    %v5862 = vsel %vm5825, %v5781, %v5785
    %v5863 = vsel %vm5825, %v5782, %v5786
    %v5864 = vsel %vm5825, %v5783, %v5787
    %v5865 = vsel %vm5825, %v5784, %v5788
    %v5866 = vsel %vm5825, %v5777, %v5781
    %v5867 = vsel %vm5825, %v5778, %v5782
    %v5868 = vsel %vm5825, %v5779, %v5783
    %v5869 = vsel %vm5825, %v5780, %v5784
    %v5870 = vsel %vm5825, %v5773, %v5777
    %v5871 = vsel %vm5825, %v5774, %v5778
    %v5872 = vsel %vm5825, %v5775, %v5779
    %v5873 = vsel %vm5825, %v5776, %v5780
    %v5874 = vsel %vm5825, %v5769, %v5773
    %v5875 = vsel %vm5825, %v5770, %v5774
    %v5876 = vsel %vm5825, %v5771, %v5775
    %v5877 = vsel %vm5825, %v5772, %v5776
    %v5878 = vsel %vm5825, %v5765, %v5769
    %v5879 = vsel %vm5825, %v5766, %v5770
    %v5880 = vsel %vm5825, %v5767, %v5771
    %v5881 = vsel %vm5825, %v5768, %v5772
    %v5882 = vsel %vm5825, %v5761, %v5765
    %v5883 = vsel %vm5825, %v5762, %v5766
    %v5884 = vsel %vm5825, %v5763, %v5767
    %v5885 = vsel %vm5825, %v5764, %v5768
    %v5886 = vsel %vm5825, %v5757, %v5761
    %v5887 = vsel %vm5825, %v5758, %v5762
    %v5888 = vsel %vm5825, %v5759, %v5763
    %v5889 = vsel %vm5825, %v5760, %v5764
    %v5890 = vsel %vm5825, %v5753, %v5757
    %v5891 = vsel %vm5825, %v5754, %v5758
    %v5892 = vsel %vm5825, %v5755, %v5759
    %v5893 = vsel %vm5825, %v5756, %v5760
    %v5894 = vsel %vm5825, %v5749, %v5753
    %v5895 = vsel %vm5825, %v5750, %v5754
    %v5896 = vsel %vm5825, %v5751, %v5755
    %v5897 = vsel %vm5825, %v5752, %v5756
    %v5898 = vsel %vm5825, %v5745, %v5749
    %v5899 = vsel %vm5825, %v5746, %v5750
    %v5900 = vsel %vm5825, %v5747, %v5751
    %v5901 = vsel %vm5825, %v5748, %v5752
    %v5902 = vsel %vm5825, %v5741, %v5745
    %v5903 = vsel %vm5825, %v5742, %v5746
    %v5904 = vsel %vm5825, %v5743, %v5747
    %v5905 = vsel %vm5825, %v5744, %v5748
    %v5906 = vsel %vm5825, %v5737, %v5741
    %v5907 = vsel %vm5825, %v5738, %v5742
    %v5908 = vsel %vm5825, %v5739, %v5743
    %v5909 = vsel %vm5825, %v5740, %v5744
    %v5910 = vsel %vm5825, %v5733, %v5737
    %v5911 = vsel %vm5825, %v5734, %v5738
    %v5912 = vsel %vm5825, %v5735, %v5739
    %v5913 = vsel %vm5825, %v5736, %v5740
    %v5914 = vsel %vm5825, %v5729, %v5733
    %v5915 = vsel %vm5825, %v5730, %v5734
    %v5916 = vsel %vm5825, %v5731, %v5735
    %v5917 = vsel %vm5825, %v5732, %v5736
    %v5918 = vsel %vm5825, %v5725, %v5729
    %v5919 = vsel %vm5825, %v5726, %v5730
    %v5920 = vsel %vm5825, %v5727, %v5731
    %v5921 = vsel %vm5825, %v5728, %v5732
    %v5922 = vsel %vm5825, %v5721, %v5725
    %v5923 = vsel %vm5825, %v5722, %v5726
    %v5924 = vsel %vm5825, %v5723, %v5727
    %v5925 = vsel %vm5825, %v5724, %v5728
    %v5926 = vsel %vm5825, %v5717, %v5721
    %v5927 = vsel %vm5825, %v5718, %v5722
    %v5928 = vsel %vm5825, %v5719, %v5723
    %v5929 = vsel %vm5825, %v5720, %v5724
    %v5930 = vsel %vm5825, %v5713, %v5717
    %v5931 = vsel %vm5825, %v5714, %v5718
    %v5932 = vsel %vm5825, %v5715, %v5719
    %v5933 = vsel %vm5825, %v5716, %v5720
    %v5934 = vsel %vm5825, %v5709, %v5713
    %v5935 = vsel %vm5825, %v5710, %v5714
    %v5936 = vsel %vm5825, %v5711, %v5715
    %v5937 = vsel %vm5825, %v5712, %v5716
    %v5938 = vsel %vm5825, %v5705, %v5709
    %v5939 = vsel %vm5825, %v5706, %v5710
    %v5940 = vsel %vm5825, %v5707, %v5711
    %v5941 = vsel %vm5825, %v5708, %v5712
    %v5942 = vsel %vm5825, %v5701, %v5705
    %v5943 = vsel %vm5825, %v5702, %v5706
    %v5944 = vsel %vm5825, %v5703, %v5707
    %v5945 = vsel %vm5825, %v5704, %v5708
    %v5946 = vsel %vm5825, %v5697, %v5701
    %v5947 = vsel %vm5825, %v5698, %v5702
    %v5948 = vsel %vm5825, %v5699, %v5703
    %v5949 = vsel %vm5825, %v5700, %v5704
    %v5950 = vsel %vm5825, %v5693, %v5697
    %v5951 = vsel %vm5825, %v5694, %v5698
    %v5952 = vsel %vm5825, %v5695, %v5699
    %v5953 = vsel %vm5825, %v5696, %v5700
    %v5954 = vsel %vm5825, %v5689, %v5693
    %v5955 = vsel %vm5825, %v5690, %v5694
    %v5956 = vsel %vm5825, %v5691, %v5695
    %v5957 = vsel %vm5825, %v5692, %v5696
    %v5958 = vsel %vm5825, %v5685, %v5689
    %v5959 = vsel %vm5825, %v5686, %v5690
    %v5960 = vsel %vm5825, %v5687, %v5691
    %v5961 = vsel %vm5825, %v5688, %v5692
    %v5962 = vsel %vm5825, %v5681, %v5685
    %v5963 = vsel %vm5825, %v5682, %v5686
    %v5964 = vsel %vm5825, %v5683, %v5687
    %v5965 = vsel %vm5825, %v5684, %v5688
    %v5966 = vsel %vm5825, %v5677, %v5681
    %v5967 = vsel %vm5825, %v5678, %v5682
    %v5968 = vsel %vm5825, %v5679, %v5683
    %v5969 = vsel %vm5825, %v5680, %v5684
    %v5970 = vsel %vm5825, %v5673, %v5677
    %v5971 = vsel %vm5825, %v5674, %v5678
    %v5972 = vsel %vm5825, %v5675, %v5679
    %v5973 = vsel %vm5825, %v5676, %v5680
    %v5974 = vsel %vm5825, %v5669, %v5673
    %v5975 = vsel %vm5825, %v5670, %v5674
    %v5976 = vsel %vm5825, %v5671, %v5675
    %v5977 = vsel %vm5825, %v5672, %v5676
    %v5978 = vsel %vm5825, %v5665, %v5669
    %v5979 = vsel %vm5825, %v5666, %v5670
    %v5980 = vsel %vm5825, %v5667, %v5671
    %v5981 = vsel %vm5825, %v5668, %v5672
    %v5982 = vsel %vm5825, %v5661, %v5665
    %v5983 = vsel %vm5825, %v5662, %v5666
    %v5984 = vsel %vm5825, %v5663, %v5667
    %v5985 = vsel %vm5825, %v5664, %v5668
    %v5986 = vsel %vm5825, %v5657, %v5661
    %v5987 = vsel %vm5825, %v5658, %v5662
    %v5988 = vsel %vm5825, %v5659, %v5663
    %v5989 = vsel %vm5825, %v5660, %v5664
    %v5990 = vsel %vm5825, %v5653, %v5657
    %v5991 = vsel %vm5825, %v5654, %v5658
    %v5992 = vsel %vm5825, %v5655, %v5659
    %v5993 = vsel %vm5825, %v5656, %v5660
    %v5994 = vsel %vm5825, %v5649, %v5653
    %v5995 = vsel %vm5825, %v5650, %v5654
    %v5996 = vsel %vm5825, %v5651, %v5655
    %v5997 = vsel %vm5825, %v5652, %v5656
    %v5998 = vsel %vm5825, %v5645, %v5649
    %v5999 = vsel %vm5825, %v5646, %v5650
    %v6000 = vsel %vm5825, %v5647, %v5651
    %v6001 = vsel %vm5825, %v5648, %v5652
    %v6002 = vsel %vm5825, %v5641, %v5645
    %v6003 = vsel %vm5825, %v5642, %v5646
    %v6004 = vsel %vm5825, %v5643, %v5647
    %v6005 = vsel %vm5825, %v5644, %v5648
    %v6006 = vsel %vm5825, %v5637, %v5641
    %v6007 = vsel %vm5825, %v5638, %v5642
    %v6008 = vsel %vm5825, %v5639, %v5643
    %v6009 = vsel %vm5825, %v5640, %v5644
    %v6010 = vsel %vm5825, %v5633, %v5637
    %v6011 = vsel %vm5825, %v5634, %v5638
    %v6012 = vsel %vm5825, %v5635, %v5639
    %v6013 = vsel %vm5825, %v5636, %v5640
    %v6014 = vsel %vm5825, %v5629, %v5633
    %v6015 = vsel %vm5825, %v5630, %v5634
    %v6016 = vsel %vm5825, %v5631, %v5635
    %v6017 = vsel %vm5825, %v5632, %v5636
    %v6018 = vsel %vm5825, %v5625, %v5629
    %v6019 = vsel %vm5825, %v5626, %v5630
    %v6020 = vsel %vm5825, %v5627, %v5631
    %v6021 = vsel %vm5825, %v5628, %v5632
    %v6022 = vsel %vm5825, %v5821, %v5625
    %v6023 = vsel %vm5825, %v5822, %v5626
    %v6024 = vsel %vm5825, %v5823, %v5627
    %v6025 = vsel %vm5825, %v5824, %v5628
    %v6026 = vadd.f32 %v4811, %v6018
    %v6027 = vadd.f32 %v4813, %v6019
    %v6028 = vadd.f32 %v5377, %v6020
    %v6029 = vadd.f32 %v5379, %v6021
    %v6030 = vadd.f32 %v4815, %v6014
    %v6031 = vadd.f32 %v4817, %v6015
    %v6032 = vadd.f32 %v5381, %v6016
    %v6033 = vadd.f32 %v5383, %v6017
    %v6034 = vadd.f32 %v4821, %v6010
    %v6035 = vadd.f32 %v4823, %v6011
    %v6036 = vadd.f32 %v5387, %v6012
    %v6037 = vadd.f32 %v5389, %v6013
    %v6038 = vadd.f32 %v4825, %v6006
    %v6039 = vadd.f32 %v4827, %v6007
    %v6040 = vadd.f32 %v5391, %v6008
    %v6041 = vadd.f32 %v5393, %v6009
    %v6042 = vadd.f32 %v4831, %v6002
    %v6043 = vadd.f32 %v4833, %v6003
    %v6044 = vadd.f32 %v5397, %v6004
    %v6045 = vadd.f32 %v5399, %v6005
    %v6046 = vadd.f32 %v4835, %v5998
    %v6047 = vadd.f32 %v4837, %v5999
    %v6048 = vadd.f32 %v5401, %v6000
    %v6049 = vadd.f32 %v5403, %v6001
    %v6050 = vadd.f32 %v4841, %v5994
    %v6051 = vadd.f32 %v4843, %v5995
    %v6052 = vadd.f32 %v5407, %v5996
    %v6053 = vadd.f32 %v5409, %v5997
    %v6054 = vadd.f32 %v4845, %v5990
    %v6055 = vadd.f32 %v4847, %v5991
    %v6056 = vadd.f32 %v5411, %v5992
    %v6057 = vadd.f32 %v5413, %v5993
    %v6058 = vadd.f32 %v4851, %v5986
    %v6059 = vadd.f32 %v4853, %v5987
    %v6060 = vadd.f32 %v5417, %v5988
    %v6061 = vadd.f32 %v5419, %v5989
    %v6062 = vadd.f32 %v4855, %v5982
    %v6063 = vadd.f32 %v4857, %v5983
    %v6064 = vadd.f32 %v5421, %v5984
    %v6065 = vadd.f32 %v5423, %v5985
    %v6066 = vadd.f32 %v4861, %v5978
    %v6067 = vadd.f32 %v4863, %v5979
    %v6068 = vadd.f32 %v5427, %v5980
    %v6069 = vadd.f32 %v5429, %v5981
    %v6070 = vadd.f32 %v4865, %v5974
    %v6071 = vadd.f32 %v4867, %v5975
    %v6072 = vadd.f32 %v5431, %v5976
    %v6073 = vadd.f32 %v5433, %v5977
    %v6074 = vadd.f32 %v4871, %v5970
    %v6075 = vadd.f32 %v4873, %v5971
    %v6076 = vadd.f32 %v5437, %v5972
    %v6077 = vadd.f32 %v5439, %v5973
    %v6078 = vadd.f32 %v4875, %v5966
    %v6079 = vadd.f32 %v4877, %v5967
    %v6080 = vadd.f32 %v5441, %v5968
    %v6081 = vadd.f32 %v5443, %v5969
    %v6082 = vadd.f32 %v4881, %v5962
    %v6083 = vadd.f32 %v4883, %v5963
    %v6084 = vadd.f32 %v5447, %v5964
    %v6085 = vadd.f32 %v5449, %v5965
    %v6086 = vadd.f32 %v4885, %v5958
    %v6087 = vadd.f32 %v4887, %v5959
    %v6088 = vadd.f32 %v5451, %v5960
    %v6089 = vadd.f32 %v5453, %v5961
    %v6090 = vadd.f32 %v4891, %v5954
    %v6091 = vadd.f32 %v4893, %v5955
    %v6092 = vadd.f32 %v5457, %v5956
    %v6093 = vadd.f32 %v5459, %v5957
    %v6094 = vadd.f32 %v4895, %v5950
    %v6095 = vadd.f32 %v4897, %v5951
    %v6096 = vadd.f32 %v5461, %v5952
    %v6097 = vadd.f32 %v5463, %v5953
    %v6098 = vadd.f32 %v4901, %v5946
    %v6099 = vadd.f32 %v4903, %v5947
    %v6100 = vadd.f32 %v5467, %v5948
    %v6101 = vadd.f32 %v5469, %v5949
    %v6102 = vadd.f32 %v4905, %v5942
    %v6103 = vadd.f32 %v4907, %v5943
    %v6104 = vadd.f32 %v5471, %v5944
    %v6105 = vadd.f32 %v5473, %v5945
    %v6106 = vadd.f32 %v4911, %v5938
    %v6107 = vadd.f32 %v4913, %v5939
    %v6108 = vadd.f32 %v5477, %v5940
    %v6109 = vadd.f32 %v5479, %v5941
    %v6110 = vadd.f32 %v4915, %v5934
    %v6111 = vadd.f32 %v4917, %v5935
    %v6112 = vadd.f32 %v5481, %v5936
    %v6113 = vadd.f32 %v5483, %v5937
    %v6114 = vadd.f32 %v4921, %v5930
    %v6115 = vadd.f32 %v4923, %v5931
    %v6116 = vadd.f32 %v5487, %v5932
    %v6117 = vadd.f32 %v5489, %v5933
    %v6118 = vadd.f32 %v4925, %v5926
    %v6119 = vadd.f32 %v4927, %v5927
    %v6120 = vadd.f32 %v5491, %v5928
    %v6121 = vadd.f32 %v5493, %v5929
    %v6122 = vadd.f32 %v4931, %v5922
    %v6123 = vadd.f32 %v4933, %v5923
    %v6124 = vadd.f32 %v5497, %v5924
    %v6125 = vadd.f32 %v5499, %v5925
    %v6126 = vadd.f32 %v4935, %v5918
    %v6127 = vadd.f32 %v4937, %v5919
    %v6128 = vadd.f32 %v5501, %v5920
    %v6129 = vadd.f32 %v5503, %v5921
    %v6130 = vadd.f32 %v4941, %v5914
    %v6131 = vadd.f32 %v4943, %v5915
    %v6132 = vadd.f32 %v5507, %v5916
    %v6133 = vadd.f32 %v5509, %v5917
    %v6134 = vadd.f32 %v4945, %v5910
    %v6135 = vadd.f32 %v4947, %v5911
    %v6136 = vadd.f32 %v5511, %v5912
    %v6137 = vadd.f32 %v5513, %v5913
    %v6138 = vadd.f32 %v4951, %v5906
    %v6139 = vadd.f32 %v4953, %v5907
    %v6140 = vadd.f32 %v5517, %v5908
    %v6141 = vadd.f32 %v5519, %v5909
    %v6142 = vadd.f32 %v4955, %v5902
    %v6143 = vadd.f32 %v4957, %v5903
    %v6144 = vadd.f32 %v5521, %v5904
    %v6145 = vadd.f32 %v5523, %v5905
    %v6146 = vadd.f32 %v4961, %v5898
    %v6147 = vadd.f32 %v4963, %v5899
    %v6148 = vadd.f32 %v5527, %v5900
    %v6149 = vadd.f32 %v5529, %v5901
    %v6150 = vadd.f32 %v4965, %v5894
    %v6151 = vadd.f32 %v4967, %v5895
    %v6152 = vadd.f32 %v5531, %v5896
    %v6153 = vadd.f32 %v5533, %v5897
    %v6154 = vadd.f32 %v4971, %v5890
    %v6155 = vadd.f32 %v4973, %v5891
    %v6156 = vadd.f32 %v5537, %v5892
    %v6157 = vadd.f32 %v5539, %v5893
    %v6158 = vadd.f32 %v4975, %v5886
    %v6159 = vadd.f32 %v4977, %v5887
    %v6160 = vadd.f32 %v5541, %v5888
    %v6161 = vadd.f32 %v5543, %v5889
    %v6162 = vadd.f32 %v4981, %v5882
    %v6163 = vadd.f32 %v4983, %v5883
    %v6164 = vadd.f32 %v5547, %v5884
    %v6165 = vadd.f32 %v5549, %v5885
    %v6166 = vadd.f32 %v4985, %v5878
    %v6167 = vadd.f32 %v4987, %v5879
    %v6168 = vadd.f32 %v5551, %v5880
    %v6169 = vadd.f32 %v5553, %v5881
    %v6170 = vadd.f32 %v4991, %v5874
    %v6171 = vadd.f32 %v4993, %v5875
    %v6172 = vadd.f32 %v5557, %v5876
    %v6173 = vadd.f32 %v5559, %v5877
    %v6174 = vadd.f32 %v4995, %v5870
    %v6175 = vadd.f32 %v4997, %v5871
    %v6176 = vadd.f32 %v5561, %v5872
    %v6177 = vadd.f32 %v5563, %v5873
    %v6178 = vadd.f32 %v5001, %v5866
    %v6179 = vadd.f32 %v5003, %v5867
    %v6180 = vadd.f32 %v5567, %v5868
    %v6181 = vadd.f32 %v5569, %v5869
    %v6182 = vadd.f32 %v5005, %v5862
    %v6183 = vadd.f32 %v5007, %v5863
    %v6184 = vadd.f32 %v5571, %v5864
    %v6185 = vadd.f32 %v5573, %v5865
    %v6186 = vadd.f32 %v5011, %v5858
    %v6187 = vadd.f32 %v5013, %v5859
    %v6188 = vadd.f32 %v5577, %v5860
    %v6189 = vadd.f32 %v5579, %v5861
    %v6190 = vadd.f32 %v5015, %v5854
    %v6191 = vadd.f32 %v5017, %v5855
    %v6192 = vadd.f32 %v5581, %v5856
    %v6193 = vadd.f32 %v5583, %v5857
    %v6194 = vadd.f32 %v5021, %v5850
    %v6195 = vadd.f32 %v5023, %v5851
    %v6196 = vadd.f32 %v5587, %v5852
    %v6197 = vadd.f32 %v5589, %v5853
    %v6198 = vadd.f32 %v5025, %v5846
    %v6199 = vadd.f32 %v5027, %v5847
    %v6200 = vadd.f32 %v5591, %v5848
    %v6201 = vadd.f32 %v5593, %v5849
    %v6202 = vadd.f32 %v5031, %v5842
    %v6203 = vadd.f32 %v5033, %v5843
    %v6204 = vadd.f32 %v5597, %v5844
    %v6205 = vadd.f32 %v5599, %v5845
    %v6206 = vadd.f32 %v5035, %v5838
    %v6207 = vadd.f32 %v5037, %v5839
    %v6208 = vadd.f32 %v5601, %v5840
    %v6209 = vadd.f32 %v5603, %v5841
    %v6210 = vadd.f32 %v5041, %v5834
    %v6211 = vadd.f32 %v5043, %v5835
    %v6212 = vadd.f32 %v5607, %v5836
    %v6213 = vadd.f32 %v5609, %v5837
    %v6214 = vadd.f32 %v5045, %v5830
    %v6215 = vadd.f32 %v5047, %v5831
    %v6216 = vadd.f32 %v5611, %v5832
    %v6217 = vadd.f32 %v5613, %v5833
    %v6218 = vadd.f32 %v5051, %v5826
    %v6219 = vadd.f32 %v5053, %v5827
    %v6220 = vadd.f32 %v5617, %v5828
    %v6221 = vadd.f32 %v5619, %v5829
    %v6222 = vadd.f32 %v5055, %v6022
    %v6223 = vadd.f32 %v5057, %v6023
    %v6224 = vadd.f32 %v5621, %v6024
    %v6225 = vadd.f32 %v5623, %v6025
    %v6226 = vadd.s32 %v3951, 8
    %v6227 = vadd.s32 %v3951, 16
    %v6228 = vadd.s32 %v3951, 24
    %v6229 = vadd.s32 %v3951, 32
    %v6230 = vadd.s32 %v3951, 40
    %v6231 = vadd.s32 %v3951, 48
    %v6232 = vadd.s32 %v3951, 56
    %v6233 = vadd.s32 %v3951, 64
    %v6234 = vadd.s32 %v3951, 72
    %v6235 = vadd.s32 %v3951, 80
    %v6236 = vadd.s32 %v3951, 88
    %v6237 = vadd.s32 %v3951, 96
    %v6238 = vadd.s32 %v3951, 104
    %v6239 = vadd.s32 %v3951, 112
    %v6240 = vadd.s32 %v3951, 120
    %v6241 = vadd.s32 %v3951, 128
    %v6242 = vadd.s32 %v3951, 136
    %v6243 = vadd.s32 %v3951, 144
    %v6244 = vadd.s32 %v3951, 152
    %v6245 = vadd.s32 %v3951, 160
    %v6246 = vadd.s32 %v3951, 168
    %v6247 = vadd.s32 %v3951, 176
    %v6248 = vadd.s32 %v3951, 184
    %v6249 = vadd.s32 %v3951, 192
    %v6250 = vadd.s32 %v3951, 200
    %v6251 = vadd.s32 %v3951, 208
    %v6252 = vadd.s32 %v3951, 216
    %v6253 = vadd.s32 %v3951, 224
    %v6254 = vadd.s32 %v3951, 232
    %v6255 = vadd.s32 %v3951, 240
    %v6256 = vadd.s32 %v3951, 248
    %v6257 = vadd.s32 %v3951, 256
    %v6258 = vadd.s32 %v3951, 264
    %v6259 = vadd.s32 %v3951, 272
    %v6260 = vadd.s32 %v3951, 280
    %v6261 = vadd.s32 %v3951, 288
    %v6262 = vadd.s32 %v3951, 296
    %v6263 = vadd.s32 %v3951, 304
    %v6264 = vadd.s32 %v3951, 312
    %v6265 = vadd.s32 %v3951, 320
    %v6266 = vadd.s32 %v3951, 328
    %v6267 = vadd.s32 %v3951, 336
    %v6268 = vadd.s32 %v3951, 344
    %v6269 = vadd.s32 %v3951, 352
    %v6270 = vadd.s32 %v3951, 360
    %v6271 = vadd.s32 %v3951, 368
    %v6272 = vadd.s32 %v3951, 376
    %v6273 = vadd.s32 %v3951, 384
    %v6274 = vadd.s32 %v3951, 392
    %v6275 = vld [vmem:[%s4] sm:$0xf]
    %v6276 = vlaneseq
    %v6277 = vshrl.u32 %v6276, 7
    %v6278 = vsub.s32 0, %v6277
    %v6279 = vrot.slane %v6275, %v6278
    %v6280 = vlaneseq
    %v6281 = vshrl.u32 %v6280, 7
    %v6282 = vsub.s32 1, %v6281
    %v6283 = vrot.slane %v6275, %v6282
    %v6284 = vlaneseq
    %v6285 = vshrl.u32 %v6284, 7
    %v6286 = vsub.s32 2, %v6285
    %v6287 = vrot.slane %v6275, %v6286
    %v6288 = vlaneseq
    %v6289 = vshrl.u32 %v6288, 7
    %v6290 = vsub.s32 3, %v6289
    %v6291 = vrot.slane %v6275, %v6290
    %vm6292 = vcmp.lt.s32.totalorder %v3951, %v6279
    %vm6293 = vcmp.lt.s32.totalorder %v3951, %v6283
    %vm6294 = vcmp.lt.s32.totalorder %v3951, %v6287
    %vm6295 = vcmp.lt.s32.totalorder %v3951, %v6291
    %vm6296 = vcmp.lt.s32.totalorder %v6226, %v6279
    %vm6297 = vcmp.lt.s32.totalorder %v6226, %v6283
    %vm6298 = vcmp.lt.s32.totalorder %v6226, %v6287
    %vm6299 = vcmp.lt.s32.totalorder %v6226, %v6291
    %vm6300 = vcmp.lt.s32.totalorder %v6227, %v6279
    %vm6301 = vcmp.lt.s32.totalorder %v6227, %v6283
    %vm6302 = vcmp.lt.s32.totalorder %v6227, %v6287
    %vm6303 = vcmp.lt.s32.totalorder %v6227, %v6291
    %vm6304 = vcmp.lt.s32.totalorder %v6228, %v6279
    %vm6305 = vcmp.lt.s32.totalorder %v6228, %v6283
    %vm6306 = vcmp.lt.s32.totalorder %v6228, %v6287
    %vm6307 = vcmp.lt.s32.totalorder %v6228, %v6291
    %vm6308 = vcmp.lt.s32.totalorder %v6229, %v6279
    %vm6309 = vcmp.lt.s32.totalorder %v6229, %v6283
    %vm6310 = vcmp.lt.s32.totalorder %v6229, %v6287
    %vm6311 = vcmp.lt.s32.totalorder %v6229, %v6291
    %vm6312 = vcmp.lt.s32.totalorder %v6230, %v6279
    %vm6313 = vcmp.lt.s32.totalorder %v6230, %v6283
    %vm6314 = vcmp.lt.s32.totalorder %v6230, %v6287
    %vm6315 = vcmp.lt.s32.totalorder %v6230, %v6291
    %vm6316 = vcmp.lt.s32.totalorder %v6231, %v6279
    %vm6317 = vcmp.lt.s32.totalorder %v6231, %v6283
    %vm6318 = vcmp.lt.s32.totalorder %v6231, %v6287
    %vm6319 = vcmp.lt.s32.totalorder %v6231, %v6291
    %vm6320 = vcmp.lt.s32.totalorder %v6232, %v6279
    %vm6321 = vcmp.lt.s32.totalorder %v6232, %v6283
    %vm6322 = vcmp.lt.s32.totalorder %v6232, %v6287
    %vm6323 = vcmp.lt.s32.totalorder %v6232, %v6291
    %vm6324 = vcmp.lt.s32.totalorder %v6233, %v6279
    %vm6325 = vcmp.lt.s32.totalorder %v6233, %v6283
    %vm6326 = vcmp.lt.s32.totalorder %v6233, %v6287
    %vm6327 = vcmp.lt.s32.totalorder %v6233, %v6291
    %vm6328 = vcmp.lt.s32.totalorder %v6234, %v6279
    %vm6329 = vcmp.lt.s32.totalorder %v6234, %v6283
    %vm6330 = vcmp.lt.s32.totalorder %v6234, %v6287
    %vm6331 = vcmp.lt.s32.totalorder %v6234, %v6291
    %vm6332 = vcmp.lt.s32.totalorder %v6235, %v6279
    %vm6333 = vcmp.lt.s32.totalorder %v6235, %v6283
    %vm6334 = vcmp.lt.s32.totalorder %v6235, %v6287
    %vm6335 = vcmp.lt.s32.totalorder %v6235, %v6291
    %vm6336 = vcmp.lt.s32.totalorder %v6236, %v6279
    %vm6337 = vcmp.lt.s32.totalorder %v6236, %v6283
    %vm6338 = vcmp.lt.s32.totalorder %v6236, %v6287
    %vm6339 = vcmp.lt.s32.totalorder %v6236, %v6291
    %vm6340 = vcmp.lt.s32.totalorder %v6237, %v6279
    %vm6341 = vcmp.lt.s32.totalorder %v6237, %v6283
    %vm6342 = vcmp.lt.s32.totalorder %v6237, %v6287
    %vm6343 = vcmp.lt.s32.totalorder %v6237, %v6291
    %vm6344 = vcmp.lt.s32.totalorder %v6238, %v6279
    %vm6345 = vcmp.lt.s32.totalorder %v6238, %v6283
    %vm6346 = vcmp.lt.s32.totalorder %v6238, %v6287
    %vm6347 = vcmp.lt.s32.totalorder %v6238, %v6291
    %vm6348 = vcmp.lt.s32.totalorder %v6239, %v6279
    %vm6349 = vcmp.lt.s32.totalorder %v6239, %v6283
    %vm6350 = vcmp.lt.s32.totalorder %v6239, %v6287
    %vm6351 = vcmp.lt.s32.totalorder %v6239, %v6291
    %vm6352 = vcmp.lt.s32.totalorder %v6240, %v6279
    %vm6353 = vcmp.lt.s32.totalorder %v6240, %v6283
    %vm6354 = vcmp.lt.s32.totalorder %v6240, %v6287
    %vm6355 = vcmp.lt.s32.totalorder %v6240, %v6291
    %vm6356 = vcmp.lt.s32.totalorder %v6241, %v6279
    %vm6357 = vcmp.lt.s32.totalorder %v6241, %v6283
    %vm6358 = vcmp.lt.s32.totalorder %v6241, %v6287
    %vm6359 = vcmp.lt.s32.totalorder %v6241, %v6291
    %vm6360 = vcmp.lt.s32.totalorder %v6242, %v6279
    %vm6361 = vcmp.lt.s32.totalorder %v6242, %v6283
    %vm6362 = vcmp.lt.s32.totalorder %v6242, %v6287
    %vm6363 = vcmp.lt.s32.totalorder %v6242, %v6291
    %vm6364 = vcmp.lt.s32.totalorder %v6243, %v6279
    %vm6365 = vcmp.lt.s32.totalorder %v6243, %v6283
    %vm6366 = vcmp.lt.s32.totalorder %v6243, %v6287
    %vm6367 = vcmp.lt.s32.totalorder %v6243, %v6291
    %vm6368 = vcmp.lt.s32.totalorder %v6244, %v6279
    %vm6369 = vcmp.lt.s32.totalorder %v6244, %v6283
    %vm6370 = vcmp.lt.s32.totalorder %v6244, %v6287
    %vm6371 = vcmp.lt.s32.totalorder %v6244, %v6291
    %vm6372 = vcmp.lt.s32.totalorder %v6245, %v6279
    %vm6373 = vcmp.lt.s32.totalorder %v6245, %v6283
    %vm6374 = vcmp.lt.s32.totalorder %v6245, %v6287
    %vm6375 = vcmp.lt.s32.totalorder %v6245, %v6291
    %vm6376 = vcmp.lt.s32.totalorder %v6246, %v6279
    %vm6377 = vcmp.lt.s32.totalorder %v6246, %v6283
    %vm6378 = vcmp.lt.s32.totalorder %v6246, %v6287
    %vm6379 = vcmp.lt.s32.totalorder %v6246, %v6291
    %vm6380 = vcmp.lt.s32.totalorder %v6247, %v6279
    %vm6381 = vcmp.lt.s32.totalorder %v6247, %v6283
    %vm6382 = vcmp.lt.s32.totalorder %v6247, %v6287
    %vm6383 = vcmp.lt.s32.totalorder %v6247, %v6291
    %vm6384 = vcmp.lt.s32.totalorder %v6248, %v6279
    %vm6385 = vcmp.lt.s32.totalorder %v6248, %v6283
    %vm6386 = vcmp.lt.s32.totalorder %v6248, %v6287
    %vm6387 = vcmp.lt.s32.totalorder %v6248, %v6291
    %vm6388 = vcmp.lt.s32.totalorder %v6249, %v6279
    %vm6389 = vcmp.lt.s32.totalorder %v6249, %v6283
    %vm6390 = vcmp.lt.s32.totalorder %v6249, %v6287
    %vm6391 = vcmp.lt.s32.totalorder %v6249, %v6291
    %vm6392 = vcmp.lt.s32.totalorder %v6250, %v6279
    %vm6393 = vcmp.lt.s32.totalorder %v6250, %v6283
    %vm6394 = vcmp.lt.s32.totalorder %v6250, %v6287
    %vm6395 = vcmp.lt.s32.totalorder %v6250, %v6291
    %vm6396 = vcmp.lt.s32.totalorder %v6251, %v6279
    %vm6397 = vcmp.lt.s32.totalorder %v6251, %v6283
    %vm6398 = vcmp.lt.s32.totalorder %v6251, %v6287
    %vm6399 = vcmp.lt.s32.totalorder %v6251, %v6291
    %vm6400 = vcmp.lt.s32.totalorder %v6252, %v6279
    %vm6401 = vcmp.lt.s32.totalorder %v6252, %v6283
    %vm6402 = vcmp.lt.s32.totalorder %v6252, %v6287
    %vm6403 = vcmp.lt.s32.totalorder %v6252, %v6291
    %vm6404 = vcmp.lt.s32.totalorder %v6253, %v6279
    %vm6405 = vcmp.lt.s32.totalorder %v6253, %v6283
    %vm6406 = vcmp.lt.s32.totalorder %v6253, %v6287
    %vm6407 = vcmp.lt.s32.totalorder %v6253, %v6291
    %vm6408 = vcmp.lt.s32.totalorder %v6254, %v6279
    %vm6409 = vcmp.lt.s32.totalorder %v6254, %v6283
    %vm6410 = vcmp.lt.s32.totalorder %v6254, %v6287
    %vm6411 = vcmp.lt.s32.totalorder %v6254, %v6291
    %vm6412 = vcmp.lt.s32.totalorder %v6255, %v6279
    %vm6413 = vcmp.lt.s32.totalorder %v6255, %v6283
    %vm6414 = vcmp.lt.s32.totalorder %v6255, %v6287
    %vm6415 = vcmp.lt.s32.totalorder %v6255, %v6291
    %vm6416 = vcmp.lt.s32.totalorder %v6256, %v6279
    %vm6417 = vcmp.lt.s32.totalorder %v6256, %v6283
    %vm6418 = vcmp.lt.s32.totalorder %v6256, %v6287
    %vm6419 = vcmp.lt.s32.totalorder %v6256, %v6291
    %vm6420 = vcmp.lt.s32.totalorder %v6257, %v6279
    %vm6421 = vcmp.lt.s32.totalorder %v6257, %v6283
    %vm6422 = vcmp.lt.s32.totalorder %v6257, %v6287
    %vm6423 = vcmp.lt.s32.totalorder %v6257, %v6291
    %vm6424 = vcmp.lt.s32.totalorder %v6258, %v6279
    %vm6425 = vcmp.lt.s32.totalorder %v6258, %v6283
    %vm6426 = vcmp.lt.s32.totalorder %v6258, %v6287
    %vm6427 = vcmp.lt.s32.totalorder %v6258, %v6291
    %vm6428 = vcmp.lt.s32.totalorder %v6259, %v6279
    %vm6429 = vcmp.lt.s32.totalorder %v6259, %v6283
    %vm6430 = vcmp.lt.s32.totalorder %v6259, %v6287
    %vm6431 = vcmp.lt.s32.totalorder %v6259, %v6291
    %vm6432 = vcmp.lt.s32.totalorder %v6260, %v6279
    %vm6433 = vcmp.lt.s32.totalorder %v6260, %v6283
    %vm6434 = vcmp.lt.s32.totalorder %v6260, %v6287
    %vm6435 = vcmp.lt.s32.totalorder %v6260, %v6291
    %vm6436 = vcmp.lt.s32.totalorder %v6261, %v6279
    %vm6437 = vcmp.lt.s32.totalorder %v6261, %v6283
    %vm6438 = vcmp.lt.s32.totalorder %v6261, %v6287
    %vm6439 = vcmp.lt.s32.totalorder %v6261, %v6291
    %vm6440 = vcmp.lt.s32.totalorder %v6262, %v6279
    %vm6441 = vcmp.lt.s32.totalorder %v6262, %v6283
    %vm6442 = vcmp.lt.s32.totalorder %v6262, %v6287
    %vm6443 = vcmp.lt.s32.totalorder %v6262, %v6291
    %vm6444 = vcmp.lt.s32.totalorder %v6263, %v6279
    %vm6445 = vcmp.lt.s32.totalorder %v6263, %v6283
    %vm6446 = vcmp.lt.s32.totalorder %v6263, %v6287
    %vm6447 = vcmp.lt.s32.totalorder %v6263, %v6291
    %vm6448 = vcmp.lt.s32.totalorder %v6264, %v6279
    %vm6449 = vcmp.lt.s32.totalorder %v6264, %v6283
    %vm6450 = vcmp.lt.s32.totalorder %v6264, %v6287
    %vm6451 = vcmp.lt.s32.totalorder %v6264, %v6291
    %vm6452 = vcmp.lt.s32.totalorder %v6265, %v6279
    %vm6453 = vcmp.lt.s32.totalorder %v6265, %v6283
    %vm6454 = vcmp.lt.s32.totalorder %v6265, %v6287
    %vm6455 = vcmp.lt.s32.totalorder %v6265, %v6291
    %vm6456 = vcmp.lt.s32.totalorder %v6266, %v6279
    %vm6457 = vcmp.lt.s32.totalorder %v6266, %v6283
    %vm6458 = vcmp.lt.s32.totalorder %v6266, %v6287
    %vm6459 = vcmp.lt.s32.totalorder %v6266, %v6291
    %vm6460 = vcmp.lt.s32.totalorder %v6267, %v6279
    %vm6461 = vcmp.lt.s32.totalorder %v6267, %v6283
    %vm6462 = vcmp.lt.s32.totalorder %v6267, %v6287
    %vm6463 = vcmp.lt.s32.totalorder %v6267, %v6291
    %vm6464 = vcmp.lt.s32.totalorder %v6268, %v6279
    %vm6465 = vcmp.lt.s32.totalorder %v6268, %v6283
    %vm6466 = vcmp.lt.s32.totalorder %v6268, %v6287
    %vm6467 = vcmp.lt.s32.totalorder %v6268, %v6291
    %vm6468 = vcmp.lt.s32.totalorder %v6269, %v6279
    %vm6469 = vcmp.lt.s32.totalorder %v6269, %v6283
    %vm6470 = vcmp.lt.s32.totalorder %v6269, %v6287
    %vm6471 = vcmp.lt.s32.totalorder %v6269, %v6291
    %vm6472 = vcmp.lt.s32.totalorder %v6270, %v6279
    %vm6473 = vcmp.lt.s32.totalorder %v6270, %v6283
    %vm6474 = vcmp.lt.s32.totalorder %v6270, %v6287
    %vm6475 = vcmp.lt.s32.totalorder %v6270, %v6291
    %vm6476 = vcmp.lt.s32.totalorder %v6271, %v6279
    %vm6477 = vcmp.lt.s32.totalorder %v6271, %v6283
    %vm6478 = vcmp.lt.s32.totalorder %v6271, %v6287
    %vm6479 = vcmp.lt.s32.totalorder %v6271, %v6291
    %vm6480 = vcmp.lt.s32.totalorder %v6272, %v6279
    %vm6481 = vcmp.lt.s32.totalorder %v6272, %v6283
    %vm6482 = vcmp.lt.s32.totalorder %v6272, %v6287
    %vm6483 = vcmp.lt.s32.totalorder %v6272, %v6291
    %vm6484 = vcmp.lt.s32.totalorder %v6273, %v6279
    %vm6485 = vcmp.lt.s32.totalorder %v6273, %v6283
    %vm6486 = vcmp.lt.s32.totalorder %v6273, %v6287
    %vm6487 = vcmp.lt.s32.totalorder %v6273, %v6291
    %vm6488 = vcmp.lt.s32.totalorder %v6274, %v6279
    %vm6489 = vcmp.lt.s32.totalorder %v6274, %v6283
    %vm6490 = vcmp.lt.s32.totalorder %v6274, %v6287
    %vm6491 = vcmp.lt.s32.totalorder %v6274, %v6291
    %v6492 = vsel %vm6292, %v6026, -inf
    %v6493 = vsel %vm6293, %v6027, -inf
    %v6494 = vsel %vm6294, %v6028, -inf
    %v6495 = vsel %vm6295, %v6029, -inf
    %v6496 = vsel %vm6296, %v6030, -inf
    %v6497 = vsel %vm6297, %v6031, -inf
    %v6498 = vsel %vm6298, %v6032, -inf
    %v6499 = vsel %vm6299, %v6033, -inf
    %v6500 = vsel %vm6300, %v6034, -inf
    %v6501 = vsel %vm6301, %v6035, -inf
    %v6502 = vsel %vm6302, %v6036, -inf
    %v6503 = vsel %vm6303, %v6037, -inf
    %v6504 = vsel %vm6304, %v6038, -inf
    %v6505 = vsel %vm6305, %v6039, -inf
    %v6506 = vsel %vm6306, %v6040, -inf
    %v6507 = vsel %vm6307, %v6041, -inf
    %v6508 = vsel %vm6308, %v6042, -inf
    %v6509 = vsel %vm6309, %v6043, -inf
    %v6510 = vsel %vm6310, %v6044, -inf
    %v6511 = vsel %vm6311, %v6045, -inf
    %v6512 = vsel %vm6312, %v6046, -inf
    %v6513 = vsel %vm6313, %v6047, -inf
    %v6514 = vsel %vm6314, %v6048, -inf
    %v6515 = vsel %vm6315, %v6049, -inf
    %v6516 = vsel %vm6316, %v6050, -inf
    %v6517 = vsel %vm6317, %v6051, -inf
    %v6518 = vsel %vm6318, %v6052, -inf
    %v6519 = vsel %vm6319, %v6053, -inf
    %v6520 = vsel %vm6320, %v6054, -inf
    %v6521 = vsel %vm6321, %v6055, -inf
    %v6522 = vsel %vm6322, %v6056, -inf
    %v6523 = vsel %vm6323, %v6057, -inf
    %v6524 = vsel %vm6324, %v6058, -inf
    %v6525 = vsel %vm6325, %v6059, -inf
    %v6526 = vsel %vm6326, %v6060, -inf
    %v6527 = vsel %vm6327, %v6061, -inf
    %v6528 = vsel %vm6328, %v6062, -inf
    %v6529 = vsel %vm6329, %v6063, -inf
    %v6530 = vsel %vm6330, %v6064, -inf
    %v6531 = vsel %vm6331, %v6065, -inf
    %v6532 = vsel %vm6332, %v6066, -inf
    %v6533 = vsel %vm6333, %v6067, -inf
    %v6534 = vsel %vm6334, %v6068, -inf
    %v6535 = vsel %vm6335, %v6069, -inf
    %v6536 = vsel %vm6336, %v6070, -inf
    %v6537 = vsel %vm6337, %v6071, -inf
    %v6538 = vsel %vm6338, %v6072, -inf
    %v6539 = vsel %vm6339, %v6073, -inf
    %v6540 = vsel %vm6340, %v6074, -inf
    %v6541 = vsel %vm6341, %v6075, -inf
    %v6542 = vsel %vm6342, %v6076, -inf
    %v6543 = vsel %vm6343, %v6077, -inf
    %v6544 = vsel %vm6344, %v6078, -inf
    %v6545 = vsel %vm6345, %v6079, -inf
    %v6546 = vsel %vm6346, %v6080, -inf
    %v6547 = vsel %vm6347, %v6081, -inf
    %v6548 = vsel %vm6348, %v6082, -inf
    %v6549 = vsel %vm6349, %v6083, -inf
    %v6550 = vsel %vm6350, %v6084, -inf
    %v6551 = vsel %vm6351, %v6085, -inf
    %v6552 = vsel %vm6352, %v6086, -inf
    %v6553 = vsel %vm6353, %v6087, -inf
    %v6554 = vsel %vm6354, %v6088, -inf
    %v6555 = vsel %vm6355, %v6089, -inf
    %v6556 = vsel %vm6356, %v6090, -inf
    %v6557 = vsel %vm6357, %v6091, -inf
    %v6558 = vsel %vm6358, %v6092, -inf
    %v6559 = vsel %vm6359, %v6093, -inf
    %v6560 = vsel %vm6360, %v6094, -inf
    %v6561 = vsel %vm6361, %v6095, -inf
    %v6562 = vsel %vm6362, %v6096, -inf
    %v6563 = vsel %vm6363, %v6097, -inf
    %v6564 = vsel %vm6364, %v6098, -inf
    %v6565 = vsel %vm6365, %v6099, -inf
    %v6566 = vsel %vm6366, %v6100, -inf
    %v6567 = vsel %vm6367, %v6101, -inf
    %v6568 = vsel %vm6368, %v6102, -inf
    %v6569 = vsel %vm6369, %v6103, -inf
    %v6570 = vsel %vm6370, %v6104, -inf
    %v6571 = vsel %vm6371, %v6105, -inf
    %v6572 = vsel %vm6372, %v6106, -inf
    %v6573 = vsel %vm6373, %v6107, -inf
    %v6574 = vsel %vm6374, %v6108, -inf
    %v6575 = vsel %vm6375, %v6109, -inf
    %v6576 = vsel %vm6376, %v6110, -inf
    %v6577 = vsel %vm6377, %v6111, -inf
    %v6578 = vsel %vm6378, %v6112, -inf
    %v6579 = vsel %vm6379, %v6113, -inf
    %v6580 = vsel %vm6380, %v6114, -inf
    %v6581 = vsel %vm6381, %v6115, -inf
    %v6582 = vsel %vm6382, %v6116, -inf
    %v6583 = vsel %vm6383, %v6117, -inf
    %v6584 = vsel %vm6384, %v6118, -inf
    %v6585 = vsel %vm6385, %v6119, -inf
    %v6586 = vsel %vm6386, %v6120, -inf
    %v6587 = vsel %vm6387, %v6121, -inf
    %v6588 = vsel %vm6388, %v6122, -inf
    %v6589 = vsel %vm6389, %v6123, -inf
    %v6590 = vsel %vm6390, %v6124, -inf
    %v6591 = vsel %vm6391, %v6125, -inf
    %v6592 = vsel %vm6392, %v6126, -inf
    %v6593 = vsel %vm6393, %v6127, -inf
    %v6594 = vsel %vm6394, %v6128, -inf
    %v6595 = vsel %vm6395, %v6129, -inf
    %v6596 = vsel %vm6396, %v6130, -inf
    %v6597 = vsel %vm6397, %v6131, -inf
    %v6598 = vsel %vm6398, %v6132, -inf
    %v6599 = vsel %vm6399, %v6133, -inf
    %v6600 = vsel %vm6400, %v6134, -inf
    %v6601 = vsel %vm6401, %v6135, -inf
    %v6602 = vsel %vm6402, %v6136, -inf
    %v6603 = vsel %vm6403, %v6137, -inf
    %v6604 = vsel %vm6404, %v6138, -inf
    %v6605 = vsel %vm6405, %v6139, -inf
    %v6606 = vsel %vm6406, %v6140, -inf
    %v6607 = vsel %vm6407, %v6141, -inf
    %v6608 = vsel %vm6408, %v6142, -inf
    %v6609 = vsel %vm6409, %v6143, -inf
    %v6610 = vsel %vm6410, %v6144, -inf
    %v6611 = vsel %vm6411, %v6145, -inf
    %v6612 = vsel %vm6412, %v6146, -inf
    %v6613 = vsel %vm6413, %v6147, -inf
    %v6614 = vsel %vm6414, %v6148, -inf
    %v6615 = vsel %vm6415, %v6149, -inf
    %v6616 = vsel %vm6416, %v6150, -inf
    %v6617 = vsel %vm6417, %v6151, -inf
    %v6618 = vsel %vm6418, %v6152, -inf
    %v6619 = vsel %vm6419, %v6153, -inf
    %v6620 = vsel %vm6420, %v6154, -inf
    %v6621 = vsel %vm6421, %v6155, -inf
    %v6622 = vsel %vm6422, %v6156, -inf
    %v6623 = vsel %vm6423, %v6157, -inf
    %v6624 = vsel %vm6424, %v6158, -inf
    %v6625 = vsel %vm6425, %v6159, -inf
    %v6626 = vsel %vm6426, %v6160, -inf
    %v6627 = vsel %vm6427, %v6161, -inf
    %v6628 = vsel %vm6428, %v6162, -inf
    %v6629 = vsel %vm6429, %v6163, -inf
    %v6630 = vsel %vm6430, %v6164, -inf
    %v6631 = vsel %vm6431, %v6165, -inf
    %v6632 = vsel %vm6432, %v6166, -inf
    %v6633 = vsel %vm6433, %v6167, -inf
    %v6634 = vsel %vm6434, %v6168, -inf
    %v6635 = vsel %vm6435, %v6169, -inf
    %v6636 = vsel %vm6436, %v6170, -inf
    %v6637 = vsel %vm6437, %v6171, -inf
    %v6638 = vsel %vm6438, %v6172, -inf
    %v6639 = vsel %vm6439, %v6173, -inf
    %v6640 = vsel %vm6440, %v6174, -inf
    %v6641 = vsel %vm6441, %v6175, -inf
    %v6642 = vsel %vm6442, %v6176, -inf
    %v6643 = vsel %vm6443, %v6177, -inf
    %v6644 = vsel %vm6444, %v6178, -inf
    %v6645 = vsel %vm6445, %v6179, -inf
    %v6646 = vsel %vm6446, %v6180, -inf
    %v6647 = vsel %vm6447, %v6181, -inf
    %v6648 = vsel %vm6448, %v6182, -inf
    %v6649 = vsel %vm6449, %v6183, -inf
    %v6650 = vsel %vm6450, %v6184, -inf
    %v6651 = vsel %vm6451, %v6185, -inf
    %v6652 = vsel %vm6452, %v6186, -inf
    %v6653 = vsel %vm6453, %v6187, -inf
    %v6654 = vsel %vm6454, %v6188, -inf
    %v6655 = vsel %vm6455, %v6189, -inf
    %v6656 = vsel %vm6456, %v6190, -inf
    %v6657 = vsel %vm6457, %v6191, -inf
    %v6658 = vsel %vm6458, %v6192, -inf
    %v6659 = vsel %vm6459, %v6193, -inf
    %v6660 = vsel %vm6460, %v6194, -inf
    %v6661 = vsel %vm6461, %v6195, -inf
    %v6662 = vsel %vm6462, %v6196, -inf
    %v6663 = vsel %vm6463, %v6197, -inf
    %v6664 = vsel %vm6464, %v6198, -inf
    %v6665 = vsel %vm6465, %v6199, -inf
    %v6666 = vsel %vm6466, %v6200, -inf
    %v6667 = vsel %vm6467, %v6201, -inf
    %v6668 = vsel %vm6468, %v6202, -inf
    %v6669 = vsel %vm6469, %v6203, -inf
    %v6670 = vsel %vm6470, %v6204, -inf
    %v6671 = vsel %vm6471, %v6205, -inf
    %v6672 = vsel %vm6472, %v6206, -inf
    %v6673 = vsel %vm6473, %v6207, -inf
    %v6674 = vsel %vm6474, %v6208, -inf
    %v6675 = vsel %vm6475, %v6209, -inf
    %v6676 = vsel %vm6476, %v6210, -inf
    %v6677 = vsel %vm6477, %v6211, -inf
    %v6678 = vsel %vm6478, %v6212, -inf
    %v6679 = vsel %vm6479, %v6213, -inf
    %v6680 = vsel %vm6480, %v6214, -inf
    %v6681 = vsel %vm6481, %v6215, -inf
    %v6682 = vsel %vm6482, %v6216, -inf
    %v6683 = vsel %vm6483, %v6217, -inf
    %v6684 = vsel %vm6484, %v6218, -inf
    %v6685 = vsel %vm6485, %v6219, -inf
    %v6686 = vsel %vm6486, %v6220, -inf
    %v6687 = vsel %vm6487, %v6221, -inf
    %v6688 = vsel %vm6488, %v6222, -inf
    %v6689 = vsel %vm6489, %v6223, -inf
    %v6690 = vsel %vm6490, %v6224, -inf
    %v6691 = vsel %vm6491, %v6225, -inf
    %v6692 = vmax.f32 %v6492, %v6496
    %v6693 = vmax.f32 %v6692, %v6500
    %v6694 = vmax.f32 %v6693, %v6504
    %v6695 = vmax.f32 %v6694, %v6508
    %v6696 = vmax.f32 %v6695, %v6512
    %v6697 = vmax.f32 %v6696, %v6516
    %v6698 = vmax.f32 %v6697, %v6520
    %v6699 = vmax.f32 %v6698, %v6524
    %v6700 = vmax.f32 %v6699, %v6528
    %v6701 = vmax.f32 %v6700, %v6532
    %v6702 = vmax.f32 %v6701, %v6536
    %v6703 = vmax.f32 %v6702, %v6540
    %v6704 = vmax.f32 %v6703, %v6544
    %v6705 = vmax.f32 %v6704, %v6548
    %v6706 = vmax.f32 %v6705, %v6552
    %v6707 = vmax.f32 %v6706, %v6556
    %v6708 = vmax.f32 %v6707, %v6560
    %v6709 = vmax.f32 %v6708, %v6564
    %v6710 = vmax.f32 %v6709, %v6568
    %v6711 = vmax.f32 %v6710, %v6572
    %v6712 = vmax.f32 %v6711, %v6576
    %v6713 = vmax.f32 %v6712, %v6580
    %v6714 = vmax.f32 %v6713, %v6584
    %v6715 = vmax.f32 %v6714, %v6588
    %v6716 = vmax.f32 %v6715, %v6592
    %v6717 = vmax.f32 %v6716, %v6596
    %v6718 = vmax.f32 %v6717, %v6600
    %v6719 = vmax.f32 %v6718, %v6604
    %v6720 = vmax.f32 %v6719, %v6608
    %v6721 = vmax.f32 %v6720, %v6612
    %v6722 = vmax.f32 %v6721, %v6616
    %v6723 = vmax.f32 %v6722, %v6620
    %v6724 = vmax.f32 %v6723, %v6624
    %v6725 = vmax.f32 %v6724, %v6628
    %v6726 = vmax.f32 %v6725, %v6632
    %v6727 = vmax.f32 %v6726, %v6636
    %v6728 = vmax.f32 %v6727, %v6640
    %v6729 = vmax.f32 %v6728, %v6644
    %v6730 = vmax.f32 %v6729, %v6648
    %v6731 = vmax.f32 %v6730, %v6652
    %v6732 = vmax.f32 %v6731, %v6656
    %v6733 = vmax.f32 %v6732, %v6660
    %v6734 = vmax.f32 %v6733, %v6664
    %v6735 = vmax.f32 %v6734, %v6668
    %v6736 = vmax.f32 %v6735, %v6672
    %v6737 = vmax.f32 %v6736, %v6676
    %v6738 = vmax.f32 %v6737, %v6680
    %v6739 = vmax.f32 %v6738, %v6684
    %v6740 = vmax.f32 %v6739, %v6688
    %v6741 = vrot.slane %v6740, 4
    %v6742 = vmax.f32 %v6740, %v6741
    %v6743 = vrot.slane %v6742, 2
    %v6744 = vmax.f32 %v6742, %v6743
    %v6745 = vrot.slane %v6744, 1
    %v6746 = vmax.f32 %v6744, %v6745
    %v6747 = vmax.f32 %v6493, %v6497
    %v6748 = vmax.f32 %v6747, %v6501
    %v6749 = vmax.f32 %v6748, %v6505
    %v6750 = vmax.f32 %v6749, %v6509
    %v6751 = vmax.f32 %v6750, %v6513
    %v6752 = vmax.f32 %v6751, %v6517
    %v6753 = vmax.f32 %v6752, %v6521
    %v6754 = vmax.f32 %v6753, %v6525
    %v6755 = vmax.f32 %v6754, %v6529
    %v6756 = vmax.f32 %v6755, %v6533
    %v6757 = vmax.f32 %v6756, %v6537
    %v6758 = vmax.f32 %v6757, %v6541
    %v6759 = vmax.f32 %v6758, %v6545
    %v6760 = vmax.f32 %v6759, %v6549
    %v6761 = vmax.f32 %v6760, %v6553
    %v6762 = vmax.f32 %v6761, %v6557
    %v6763 = vmax.f32 %v6762, %v6561
    %v6764 = vmax.f32 %v6763, %v6565
    %v6765 = vmax.f32 %v6764, %v6569
    %v6766 = vmax.f32 %v6765, %v6573
    %v6767 = vmax.f32 %v6766, %v6577
    %v6768 = vmax.f32 %v6767, %v6581
    %v6769 = vmax.f32 %v6768, %v6585
    %v6770 = vmax.f32 %v6769, %v6589
    %v6771 = vmax.f32 %v6770, %v6593
    %v6772 = vmax.f32 %v6771, %v6597
    %v6773 = vmax.f32 %v6772, %v6601
    %v6774 = vmax.f32 %v6773, %v6605
    %v6775 = vmax.f32 %v6774, %v6609
    %v6776 = vmax.f32 %v6775, %v6613
    %v6777 = vmax.f32 %v6776, %v6617
    %v6778 = vmax.f32 %v6777, %v6621
    %v6779 = vmax.f32 %v6778, %v6625
    %v6780 = vmax.f32 %v6779, %v6629
    %v6781 = vmax.f32 %v6780, %v6633
    %v6782 = vmax.f32 %v6781, %v6637
    %v6783 = vmax.f32 %v6782, %v6641
    %v6784 = vmax.f32 %v6783, %v6645
    %v6785 = vmax.f32 %v6784, %v6649
    %v6786 = vmax.f32 %v6785, %v6653
    %v6787 = vmax.f32 %v6786, %v6657
    %v6788 = vmax.f32 %v6787, %v6661
    %v6789 = vmax.f32 %v6788, %v6665
    %v6790 = vmax.f32 %v6789, %v6669
    %v6791 = vmax.f32 %v6790, %v6673
    %v6792 = vmax.f32 %v6791, %v6677
    %v6793 = vmax.f32 %v6792, %v6681
    %v6794 = vmax.f32 %v6793, %v6685
    %v6795 = vmax.f32 %v6794, %v6689
    %v6796 = vrot.slane %v6795, 4
    %v6797 = vmax.f32 %v6795, %v6796
    %v6798 = vrot.slane %v6797, 2
    %v6799 = vmax.f32 %v6797, %v6798
    %v6800 = vrot.slane %v6799, 1
    %v6801 = vmax.f32 %v6799, %v6800
    %v6802 = vmax.f32 %v6494, %v6498
    %v6803 = vmax.f32 %v6802, %v6502
    %v6804 = vmax.f32 %v6803, %v6506
    %v6805 = vmax.f32 %v6804, %v6510
    %v6806 = vmax.f32 %v6805, %v6514
    %v6807 = vmax.f32 %v6806, %v6518
    %v6808 = vmax.f32 %v6807, %v6522
    %v6809 = vmax.f32 %v6808, %v6526
    %v6810 = vmax.f32 %v6809, %v6530
    %v6811 = vmax.f32 %v6810, %v6534
    %v6812 = vmax.f32 %v6811, %v6538
    %v6813 = vmax.f32 %v6812, %v6542
    %v6814 = vmax.f32 %v6813, %v6546
    %v6815 = vmax.f32 %v6814, %v6550
    %v6816 = vmax.f32 %v6815, %v6554
    %v6817 = vmax.f32 %v6816, %v6558
    %v6818 = vmax.f32 %v6817, %v6562
    %v6819 = vmax.f32 %v6818, %v6566
    %v6820 = vmax.f32 %v6819, %v6570
    %v6821 = vmax.f32 %v6820, %v6574
    %v6822 = vmax.f32 %v6821, %v6578
    %v6823 = vmax.f32 %v6822, %v6582
    %v6824 = vmax.f32 %v6823, %v6586
    %v6825 = vmax.f32 %v6824, %v6590
    %v6826 = vmax.f32 %v6825, %v6594
    %v6827 = vmax.f32 %v6826, %v6598
    %v6828 = vmax.f32 %v6827, %v6602
    %v6829 = vmax.f32 %v6828, %v6606
    %v6830 = vmax.f32 %v6829, %v6610
    %v6831 = vmax.f32 %v6830, %v6614
    %v6832 = vmax.f32 %v6831, %v6618
    %v6833 = vmax.f32 %v6832, %v6622
    %v6834 = vmax.f32 %v6833, %v6626
    %v6835 = vmax.f32 %v6834, %v6630
    %v6836 = vmax.f32 %v6835, %v6634
    %v6837 = vmax.f32 %v6836, %v6638
    %v6838 = vmax.f32 %v6837, %v6642
    %v6839 = vmax.f32 %v6838, %v6646
    %v6840 = vmax.f32 %v6839, %v6650
    %v6841 = vmax.f32 %v6840, %v6654
    %v6842 = vmax.f32 %v6841, %v6658
    %v6843 = vmax.f32 %v6842, %v6662
    %v6844 = vmax.f32 %v6843, %v6666
    %v6845 = vmax.f32 %v6844, %v6670
    %v6846 = vmax.f32 %v6845, %v6674
    %v6847 = vmax.f32 %v6846, %v6678
    %v6848 = vmax.f32 %v6847, %v6682
    %v6849 = vmax.f32 %v6848, %v6686
    %v6850 = vmax.f32 %v6849, %v6690
    %v6851 = vrot.slane %v6850, 4
    %v6852 = vmax.f32 %v6850, %v6851
    %v6853 = vrot.slane %v6852, 2
    %v6854 = vmax.f32 %v6852, %v6853
    %v6855 = vrot.slane %v6854, 1
    %v6856 = vmax.f32 %v6854, %v6855
    %vm6857 = vcmask 785408
    %v6858 = vsel %vm6857, %v6495, -inf
    %v6859 = vsel %vm6857, %v6499, -inf
    %v6860 = vmax.f32 %v6858, %v6859
    %v6861 = vsel %vm6857, %v6503, -inf
    %v6862 = vmax.f32 %v6860, %v6861
    %v6863 = vsel %vm6857, %v6507, -inf
    %v6864 = vmax.f32 %v6862, %v6863
    %v6865 = vsel %vm6857, %v6511, -inf
    %v6866 = vmax.f32 %v6864, %v6865
    %v6867 = vsel %vm6857, %v6515, -inf
    %v6868 = vmax.f32 %v6866, %v6867
    %v6869 = vsel %vm6857, %v6519, -inf
    %v6870 = vmax.f32 %v6868, %v6869
    %v6871 = vsel %vm6857, %v6523, -inf
    %v6872 = vmax.f32 %v6870, %v6871
    %v6873 = vsel %vm6857, %v6527, -inf
    %v6874 = vmax.f32 %v6872, %v6873
    %v6875 = vsel %vm6857, %v6531, -inf
    %v6876 = vmax.f32 %v6874, %v6875
    %v6877 = vsel %vm6857, %v6535, -inf
    %v6878 = vmax.f32 %v6876, %v6877
    %v6879 = vsel %vm6857, %v6539, -inf
    %v6880 = vmax.f32 %v6878, %v6879
    %v6881 = vsel %vm6857, %v6543, -inf
    %v6882 = vmax.f32 %v6880, %v6881
    %v6883 = vsel %vm6857, %v6547, -inf
    %v6884 = vmax.f32 %v6882, %v6883
    %v6885 = vsel %vm6857, %v6551, -inf
    %v6886 = vmax.f32 %v6884, %v6885
    %v6887 = vsel %vm6857, %v6555, -inf
    %v6888 = vmax.f32 %v6886, %v6887
    %v6889 = vsel %vm6857, %v6559, -inf
    %v6890 = vmax.f32 %v6888, %v6889
    %v6891 = vsel %vm6857, %v6563, -inf
    %v6892 = vmax.f32 %v6890, %v6891
    %v6893 = vsel %vm6857, %v6567, -inf
    %v6894 = vmax.f32 %v6892, %v6893
    %v6895 = vsel %vm6857, %v6571, -inf
    %v6896 = vmax.f32 %v6894, %v6895
    %v6897 = vsel %vm6857, %v6575, -inf
    %v6898 = vmax.f32 %v6896, %v6897
    %v6899 = vsel %vm6857, %v6579, -inf
    %v6900 = vmax.f32 %v6898, %v6899
    %v6901 = vsel %vm6857, %v6583, -inf
    %v6902 = vmax.f32 %v6900, %v6901
    %v6903 = vsel %vm6857, %v6587, -inf
    %v6904 = vmax.f32 %v6902, %v6903
    %v6905 = vsel %vm6857, %v6591, -inf
    %v6906 = vmax.f32 %v6904, %v6905
    %v6907 = vsel %vm6857, %v6595, -inf
    %v6908 = vmax.f32 %v6906, %v6907
    %v6909 = vsel %vm6857, %v6599, -inf
    %v6910 = vmax.f32 %v6908, %v6909
    %v6911 = vsel %vm6857, %v6603, -inf
    %v6912 = vmax.f32 %v6910, %v6911
    %v6913 = vsel %vm6857, %v6607, -inf
    %v6914 = vmax.f32 %v6912, %v6913
    %v6915 = vsel %vm6857, %v6611, -inf
    %v6916 = vmax.f32 %v6914, %v6915
    %v6917 = vsel %vm6857, %v6615, -inf
    %v6918 = vmax.f32 %v6916, %v6917
    %v6919 = vsel %vm6857, %v6619, -inf
    %v6920 = vmax.f32 %v6918, %v6919
    %v6921 = vsel %vm6857, %v6623, -inf
    %v6922 = vmax.f32 %v6920, %v6921
    %v6923 = vsel %vm6857, %v6627, -inf
    %v6924 = vmax.f32 %v6922, %v6923
    %v6925 = vsel %vm6857, %v6631, -inf
    %v6926 = vmax.f32 %v6924, %v6925
    %v6927 = vsel %vm6857, %v6635, -inf
    %v6928 = vmax.f32 %v6926, %v6927
    %v6929 = vsel %vm6857, %v6639, -inf
    %v6930 = vmax.f32 %v6928, %v6929
    %v6931 = vsel %vm6857, %v6643, -inf
    %v6932 = vmax.f32 %v6930, %v6931
    %v6933 = vsel %vm6857, %v6647, -inf
    %v6934 = vmax.f32 %v6932, %v6933
    %v6935 = vsel %vm6857, %v6651, -inf
    %v6936 = vmax.f32 %v6934, %v6935
    %v6937 = vsel %vm6857, %v6655, -inf
    %v6938 = vmax.f32 %v6936, %v6937
    %v6939 = vsel %vm6857, %v6659, -inf
    %v6940 = vmax.f32 %v6938, %v6939
    %v6941 = vsel %vm6857, %v6663, -inf
    %v6942 = vmax.f32 %v6940, %v6941
    %v6943 = vsel %vm6857, %v6667, -inf
    %v6944 = vmax.f32 %v6942, %v6943
    %v6945 = vsel %vm6857, %v6671, -inf
    %v6946 = vmax.f32 %v6944, %v6945
    %v6947 = vsel %vm6857, %v6675, -inf
    %v6948 = vmax.f32 %v6946, %v6947
    %v6949 = vsel %vm6857, %v6679, -inf
    %v6950 = vmax.f32 %v6948, %v6949
    %v6951 = vsel %vm6857, %v6683, -inf
    %v6952 = vmax.f32 %v6950, %v6951
    %v6953 = vsel %vm6857, %v6687, -inf
    %v6954 = vmax.f32 %v6952, %v6953
    %v6955 = vsel %vm6857, %v6691, -inf
    %v6956 = vmax.f32 %v6954, %v6955
    %v6957 = vrot.slane %v6956, 4
    %v6958 = vmax.f32 %v6956, %v6957
    %v6959 = vrot.slane %v6958, 2
    %v6960 = vmax.f32 %v6958, %v6959
    %v6961 = vrot.slane %v6960, 1
    %v6962 = vmax.f32 %v6960, %v6961
    %6964 = vrot.lane.b32.xlu0 %v6746, 118
    %v6965 = vpop.permute.xlu0 %6964
    %v6967 = vmax.f32 %v6746, %v6965
    %6969 = vrot.lane.b32.xlu0 %v6967, 108
    %v6970 = vpop.permute.xlu0 %6969
    %v6972 = vmax.f32 %v6967, %v6970
    %6974 = vrot.lane.b32.xlu0 %v6972, 88
    %v6975 = vpop.permute.xlu0 %6974
    %v6977 = vmax.f32 %v6972, %v6975
    %6979 = vrot.lane.b32.xlu0 %v6801, 118
    %v6980 = vpop.permute.xlu0 %6979
    %v6982 = vmax.f32 %v6746, %v6980
    %v6983 = vmax.f32 %v6801, %v6980
    %6985 = vrot.lane.b32.xlu0 %v6983, 118
    %v6986 = vpop.permute.xlu0 %6985
    %v6988 = vmax.f32 %v6801, %v6986
    %6990 = vrot.lane.b32.xlu0 %v6988, 108
    %v6991 = vpop.permute.xlu0 %6990
    %v6993 = vmax.f32 %v6982, %v6991
    %v6994 = vmax.f32 %v6983, %v6991
    %6997 = vrot.lane.b32.xlu0 %v6993, 88
    %v6998 = vpop.permute.xlu0 %6997
    %6999 = vrot.lane.b32.xlu0 %v6994, 88
    %v7000 = vpop.permute.xlu0 %6999
    %vm7001 = vcmask 719872
    %v7002 = vsel %vm7001, %v6998, %v7000
    %v7004 = vmax.f32 %v6972, %v7002
    %7006 = vrot.lane.b32.xlu0 %v7004, 48
    %v7007 = vpop.permute.xlu0 %7006
    %v7009 = vmax.f32 %v6977, %v7007
    %v7010 = vld [vmem:[%s5] sm:$0x1]
    %v7011 = vadd.f32 %v7009, %v7010
    %v7012 = vmax.f32 %v7011, 0.0
    %7013 = vrot.lane.b32.xlu0 %v6983, 108
    %v7014 = vpop.permute.xlu0 %7013
    %v7016 = vmax.f32 %v6983, %v7014
    %7018 = vrot.lane.b32.xlu0 %v7016, 88
    %v7019 = vpop.permute.xlu0 %7018
    %v7021 = vmax.f32 %v7016, %v7019
    %7023 = vrot.lane.b32.xlu0 %v6856, 118
    %v7024 = vpop.permute.xlu0 %7023
    %v7026 = vmax.f32 %v6801, %v7024
    %v7027 = vmax.f32 %v6856, %v7024
    %7029 = vrot.lane.b32.xlu0 %v7027, 108
    %v7030 = vpop.permute.xlu0 %7029
    %v7032 = vmax.f32 %v7026, %v7030
    %v7033 = vmax.f32 %v7027, %v7030
    %7035 = vrot.lane.b32.xlu0 %v7033, 88
    %v7036 = vpop.permute.xlu0 %7035
    %v7038 = vmax.f32 %v7032, %v7036
    %v7039 = vmax.f32 %v7033, %v7036
    %7042 = vrot.lane.b32.xlu0 %v7038, 48
    %v7043 = vpop.permute.xlu0 %7042
    %7044 = vrot.lane.b32.xlu0 %v7039, 48
    %v7045 = vpop.permute.xlu0 %7044
    %vm7046 = vcmask 392192
    %v7047 = vsel %vm7046, %v7043, %v7045
    %v7049 = vmax.f32 %v7021, %v7047
    %v7050 = vld [vmem:[%s6] sm:$0x1]
    %v7052 = vlaneseq
    %v7053 = vshrl.u32 %v7052, 7
    %v7054 = vsub.s32 0, %v7053
    %v7055 = vrot.slane %v7050, %v7054
    %7056 = vrot.lane.b32.xlu0 %v7055, 42
    %v7057 = vpop.permute.xlu0 %7056
    %v7059 = vadd.f32 %v7049, %v7057
    %v7060 = vmax.f32 %v7059, 0.0
    %7061 = vrot.lane.b32.xlu0 %v7027, 118
    %v7062 = vpop.permute.xlu0 %7061
    %v7064 = vmax.f32 %v6856, %v7062
    %7066 = vrot.lane.b32.xlu0 %v6962, 118
    %v7067 = vpop.permute.xlu0 %7066
    %v7069 = vmax.f32 %v6856, %v7067
    %v7070 = vmax.f32 %v6962, %v7067
    %7073 = vrot.lane.b32.xlu0 %v7069, 108
    %v7074 = vpop.permute.xlu0 %7073
    %7075 = vrot.lane.b32.xlu0 %v7070, 108
    %v7076 = vpop.permute.xlu0 %7075
    %vm7077 = vcmask 883712
    %v7078 = vsel %vm7077, %v7074, %v7076
    %v7080 = vmax.f32 %v7027, %v7078
    %7082 = vrot.lane.b32.xlu0 %v7080, 98
    %v7083 = vpop.permute.xlu0 %7082
    %v7085 = vmax.f32 %v7064, %v7083
    %v7087 = vmax.f32 %v7070, %v7076
    %7089 = vrot.lane.b32.xlu0 %v7087, 88
    %v7090 = vpop.permute.xlu0 %7089
    %v7092 = vmax.f32 %v7087, %v7090
    %7094 = vrot.lane.b32.xlu0 %v7092, 58
    %v7095 = vpop.permute.xlu0 %7094
    %v7097 = vmax.f32 %v7085, %v7095
    %v7098 = vld [vmem:[%s7] sm:$0x1]
    %v7100 = vlaneseq
    %v7101 = vshrl.u32 %v7100, 7
    %v7102 = vsub.s32 0, %v7101
    %v7103 = vrot.slane %v7098, %v7102
    %7104 = vrot.lane.b32.xlu0 %v7103, 74
    %v7105 = vpop.permute.xlu0 %7104
    %v7107 = vadd.f32 %v7097, %v7105
    %v7108 = vmax.f32 %v7107, 0.0
    %7110 = vrot.lane.b32.xlu0 %v7060, 96
    %v7111 = vpop.permute.xlu0 %7110
    %7114 = vrot.lane.b32.xlu0 %v7108, 74
    %v7115 = vpop.permute.xlu0 %7114
    %vm7117 = vcmask 80896
    %v7118 = vsel %vm7117, %v7012, %v7111
    %vm7119 = vcmask 162816
    %v7120 = vsel %vm7119, %v7118, %v7115
    %vm7121 = vcmask 244736
    %v7122 = vsel %vm7121, %v7120, 0.0
    %v7123 = vld [vmem:[%s8] sm:$0xff]
    %v7124 = vld [vmem:[%s8 + $0x8] sm:$0xff]
    %v7125 = vld [vmem:[%s8 + $0x10] sm:$0xff]
    %v7126 = vld [vmem:[%s8 + $0x18] sm:$0xff]
    %v7127 = vld [vmem:[%s9] sm:$0x1]
    %vm7128 = vcmask 261120
    %v7130 = vsel %vm7128, %v7122, 0
    %7132 = vmatprep.subr.mxu0 0.0
    %7133 = vmatpush1.msra.mxu0 %v7123
    %7134 = vmatprep.subr.mxu0 0.0
    %7135 = vmatpush1.msra.mxu0 %v7124
    %7136 = vmatprep.subr.mxu0 0.0
    %7137 = vmatpush1.msra.mxu0 %v7125
    %7138 = vmatprep.subr.mxu0 0.0
    %7139 = vmatpush1.msra.mxu0 %v7126
    %7140 = vmatprep.subr.mxu0 0.0
    %7141 = vmatpush1.msra.mxu0 0.0
    %7142 = vmatprep.subr.mxu0 0.0
    %7143 = vmatpush1.msra.mxu0 0.0
    %7144 = vmatprep.subr.mxu0 0.0
    %7145 = vmatpush1.msra.mxu0 0.0
    %7146 = vmatprep.subr.mxu0 0.0
    %7147 = vmatpush1.msra.mxu0 0.0
    %7148 = vmatprep.subr.mxu0 0.0
    %7149 = vmatpush1.msra.mxu0 0.0
    %7150 = vmatprep.subr.mxu0 0.0
    %7151 = vmatpush1.msra.mxu0 0.0
    %7152 = vmatprep.subr.mxu0 0.0
    %7153 = vmatpush1.msra.mxu0 0.0
    %7154 = vmatprep.subr.mxu0 0.0
    %7155 = vmatpush1.msra.mxu0 0.0
    %7156 = vmatprep.subr.mxu0 0.0
    %7157 = vmatpush1.msra.mxu0 0.0
    %7158 = vmatprep.subr.mxu0 0.0
    %7159 = vmatpush1.msra.mxu0 0.0
    %7160 = vmatprep.subr.mxu0 0.0
    %7161 = vmatpush1.msra.mxu0 0.0
    %7162 = vmatprep.subr.mxu0 0.0
    %7163 = vmatpush1.msra.mxu0 0.0
    %7164 = vmatprep.subr.mxu0 0.0
    %7165 = vmatpush1.msra.mxu0 0.0
    %7166 = vmatprep.subr.mxu0 0.0
    %7167 = vmatpush1.msra.mxu0 0.0
    %7168 = vmatprep.subr.mxu0 0.0
    %7169 = vmatpush1.msra.mxu0 0.0
    %7170 = vmatprep.subr.mxu0 0.0
    %7171 = vmatpush1.msra.mxu0 0.0
    %7172 = vmatprep.subr.mxu0 0.0
    %7173 = vmatpush1.msra.mxu0 0.0
    %7174 = vmatprep.subr.mxu0 0.0
    %7175 = vmatpush1.msra.mxu0 0.0
    %7176 = vmatprep.subr.mxu0 0.0
    %7177 = vmatpush1.msra.mxu0 0.0
    %7178 = vmatprep.subr.mxu0 0.0
    %7179 = vmatpush1.msra.mxu0 0.0
    %7180 = vmatprep.subr.mxu0 0.0
    %7181 = vmatpush1.msra.mxu0 0.0
    %7182 = vmatprep.subr.mxu0 0.0
    %7183 = vmatpush1.msra.mxu0 0.0
    %7184 = vmatprep.subr.mxu0 0.0
    %7185 = vmatpush1.msra.mxu0 0.0
    %7186 = vmatprep.subr.mxu0 0.0
    %7187 = vmatpush1.msra.mxu0 0.0
    %7188 = vmatprep.subr.mxu0 0.0
    %7189 = vmatpush1.msra.mxu0 0.0
    %7190 = vmatprep.subr.mxu0 0.0
    %7191 = vmatpush1.msra.mxu0 0.0
    %7192 = vmatprep.subr.mxu0 0.0
    %7193 = vmatpush1.msra.mxu0 0.0
    %7194 = vmatprep.subr.mxu0 0.0
    %7195 = vmatpush1.msra.mxu0 0.0
    %7196 = vmatprep.mubr.f32.mxu0 0.0
    %7197 = vmatmul.mubr.f32.gmra.mrb[0].mxu0 %v7130
    %v7198 = vpop.f32.mrb[0].mxu0
    %v7199 = vadd.f32 %v7127, %v7198
    %v7200 = vpop.f32.mrb[0].mxu0
    %7201 = vdwg.mxu0
    %v7202 = vmax.f32 %v7199, 0.0
    %vm7203 = vcmask 122880
    %7204 = vst.msk [vmem:[#allocation5] sm:$0x1] %vm7203, %v7202
    // Predicated region
    $region46: #{tpu_custom_call.1} parent=1 // pred_check
      _
    $region47: #{tpu_custom_call.1} parent=1 // pred_check_branch
      %7206 = sbr.rel (0) target = $region49
    $region48: #{tpu_custom_call.1} parent=1 // pred_region
      %s7208 = ssub.s32 16, 16
      %7209 = vsyncadd [#allocation4], %s7208
      %s7211 = sshll.u32 [#allocation5], 4
      %s7212 = int_to_ptr.vmem [resolvable:$true] %s7211
      %7214 = dma.vmem_to_hbm [thread:$0]  %s7212, 16, %s10, [#allocation4]
    $region49: #{tpu_custom_call.1} parent=1 // pred_fallthru
      _
    // Predicated region
    $region50: #{tpu_custom_call.1} parent=1 // pred_check
      _
    $region51: #{tpu_custom_call.1} parent=1 // pred_check_branch
      %7216 = sbr.rel (0) target = $region53
    $region52: #{tpu_custom_call.1} parent=1 // pred_region
      %7217 = dma.done [#allocation4], 16
    $region53: #{tpu_custom_call.1} parent=1 // pred_fallthru
      _
    %7218 = vsyncpa [#allocation3], 1
    %7219 = vsyncpa [#allocation4], 1

</llo_original>
